<compile_context>
chip_gen: v6e
topology: v6e:2x2x1
jax: 0.10.0
libtpu: 0.0.40
codegen_flags: <defaults>
</compile_context>

<pallas_src>
import functools

import numpy as np
import jax
import jax.numpy as jnp
from jax import lax
from jax.experimental import pallas as pl
from jax.experimental.pallas import tpu as pltpu

# -------------------- synthetic deterministic config --------------------
ELE_NAME = ("O", "H")                       # cfg.DATA.ELE_NAME
CHANNELS = 8                                # cfg.MODEL.CHANNELS
Z = 4                                       # cfg.DATA.Z
REAL_SIZE = (25.0, 25.0, 3.0)               # cfg.DATA.REAL_SIZE
P_THRESHOLD = 0.5                           # cfg.OTHER.THRESHOLD
T_THRESHOLD = 0.5
ELE_DIAMETER = (0.74 * 1.4, 0.528 * 1.4)

SPACE = (CHANNELS, CHANNELS, Z)
NVOX = CHANNELS * CHANNELS * Z              # 256 voxels per element (lane friendly)
MAXP = NVOX                                 # padded point-set size
P_SENT = 1.0e6                              # sentinel position for padded prediction points
T_SENT = -1.0e6                             # distinct sentinel for padded target points

_PAR = pltpu.CompilerParams(dimension_semantics=("parallel",))


# -------------------- kernel 1: batched positions + confidence (lane-dense) --------------------
def _prep_kernel(vals_ref, pit_ref, lat_ref, pos_ref, conf_ref):
    vals = vals_ref[0]                                    # (4, NVOX)  channel x voxel(lanes)
    pos_ref[0] = (vals[0:3, :] + pit_ref[...]) * lat_ref[...]   # (3, NVOX)
    conf_ref[0] = vals[3:4, :]                            # (1, NVOX)


def _prep_call(vals_t, pit_t, lat_col):
    n2 = vals_t.shape[0]
    return pl.pallas_call(
        _prep_kernel,
        grid=(n2,),
        in_specs=[pl.BlockSpec((1, 4, NVOX), lambda n: (n, 0, 0)),
                  pl.BlockSpec((3, NVOX), lambda n: (0, 0)),
                  pl.BlockSpec((3, 1), lambda n: (0, 0))],
        out_specs=[pl.BlockSpec((1, 3, NVOX), lambda n: (n, 0, 0)),
                   pl.BlockSpec((1, 1, NVOX), lambda n: (n, 0, 0))],
        out_shape=[jax.ShapeDtypeStruct((n2, 3, NVOX), jnp.float32),
                   jax.ShapeDtypeStruct((n2, 1, NVOX), jnp.float32)],
        compiler_params=_PAR,
    )(vals_t, pit_t, lat_col)


# -------------------- kernel 2: fused NMS + (T vs P) + (T vs P_nms) matches --------------------
def _nms_match_kernel(diam_ref, tT_ref, sp_ref, spT_ref, p_ref,
                      sel_ref, hit_ref, amin_ref, hitn_ref, aminn_ref):
    diam = diam_ref[pl.program_id(0)]                     # per-slab diameter (SMEM scalar)
    diam2 = diam * diam

    tT = tT_ref[0]                                        # (3, MAXP)  targets along lanes
    sp = sp_ref[0]                                        # (MAXP, 3)  conf-sorted predictions
    spT = spT_ref[0]                                      # (3, MAXP)
    pp = p_ref[0]                                         # (MAXP, 3)  raw masked predictions

    def pair_d2(rows_pts, cols_t):                        # (MAXP, 3) x (3, MAXP) -> (MAXP, MAXP)
        return ((rows_pts[:, 0:1] - cols_t[0:1, :]) ** 2
                + (rows_pts[:, 1:2] - cols_t[1:2, :]) ** 2
                + (rows_pts[:, 2:3] - cols_t[2:3, :]) ** 2)

    # ---------- NMS over sorted prediction points (torch algebra, no matmul / sqrt) ----------
    d2s = pair_d2(sp, spT)
    within = (d2s < diam2).astype(jnp.float32)
    row = lax.broadcasted_iota(jnp.int32, (MAXP, MAXP), 0)
    col = lax.broadcasted_iota(jnp.int32, (MAXP, MAXP), 1)
    adj = within * (col > row).astype(jnp.float32)        # torch.triu(dist < diam, diagonal=1)
    low = within * (col < row).astype(jnp.float32)        # == adj.T (distance symmetry)
    restrain_row = jnp.sum(adj, axis=0, keepdims=True)    # (1, MAXP)
    restrain_col = jnp.sum(low, axis=1, keepdims=True)    # (MAXP, 1), same values
    r1_row = (restrain_row != 0.0).astype(jnp.float32)
    r1_col = (restrain_col != 0.0).astype(jnp.float32)
    correct_row = jnp.sum(adj * r1_col, axis=0, keepdims=True)   # replaces (1,N)x(N,N) matmul
    correct_col = jnp.sum(low * r1_row, axis=1, keepdims=True)
    sel_ref[0] = (restrain_row == correct_row).astype(jnp.float32)   # lane-dense selection row
    sel_col = restrain_col == correct_col                             # same values, column form

    # ---------- matches: hit mask + argmin per target voxel ----------
    def match(pred_pts, hit_out, amin_out):
        d2 = pair_d2(pred_pts, tT)                        # (pred, target)
        hits = jnp.sum((d2 < diam2).astype(jnp.float32), axis=0, keepdims=True)
        hit_out[0] = (hits > 0.0).astype(jnp.float32)     # (1, MAXP)
        minv = jnp.min(d2, axis=0, keepdims=True)
        ridx = lax.broadcasted_iota(jnp.int32, (MAXP, MAXP), 0).astype(jnp.float32)
        cand = jnp.where(d2 == minv, ridx, float(MAXP))
        amin_out[0] = jnp.min(cand, axis=0, keepdims=True).astype(jnp.int32)

    match(pp, hit_ref, amin_ref)                          # T vs raw prediction points
    pnms = jnp.where(sel_col, sp, P_SENT)                 # NMS-rejected points -> sentinel
    match(pnms, hitn_ref, aminn_ref)                      # T vs NMS-selected prediction points


def _nms_match_call(diam, t_t, sorted_p, sorted_pt, p_pts):
    n = t_t.shape[0]
    idx3 = lambda i, d_ref: (i, 0, 0)                     # index_maps get the prefetch ref too
    gs = pltpu.PrefetchScalarGridSpec(
        num_scalar_prefetch=1,
        grid=(n,),
        in_specs=[pl.BlockSpec((1, 3, MAXP), idx3),
                  pl.BlockSpec((1, MAXP, 3), idx3),
                  pl.BlockSpec((1, 3, MAXP), idx3),
                  pl.BlockSpec((1, MAXP, 3), idx3)],
        out_specs=[pl.BlockSpec((1, 1, MAXP), idx3) for _ in range(5)],
    )
    return pl.pallas_call(
        _nms_match_kernel,
        grid_spec=gs,
        out_shape=[jax.ShapeDtypeStruct((n, 1, MAXP), jnp.float32),   # NMS selection (sorted order)
                   jax.ShapeDtypeStruct((n, 1, MAXP), jnp.float32),   # hit  (T vs P)
                   jax.ShapeDtypeStruct((n, 1, MAXP), jnp.int32),     # amin (T vs P) voxel index
                   jax.ShapeDtypeStruct((n, 1, MAXP), jnp.float32),   # hit  (T vs P_nms)
                   jax.ShapeDtypeStruct((n, 1, MAXP), jnp.int32)],    # amin (T vs P_nms) sorted index
        compiler_params=_PAR,
    )(diam, t_t, sorted_p, sorted_pt, p_pts)


# -------------------- single jitted fixed-shape device pipeline --------------------
@jax.jit
def _device_forward(pred_flat, targ_flat, diam, pit_t, lat_col):
    n = pred_flat.shape[0]
    vals = jnp.concatenate([pred_flat, targ_flat], axis=0)        # (2N, NVOX, 4)
    vals_t = jnp.transpose(vals, (0, 2, 1))                       # (2N, 4, NVOX) lane-dense
    pos_t_all, conf_all = _prep_call(vals_t, pit_t, lat_col)
    pos = jnp.transpose(pos_t_all, (0, 2, 1))                     # (2N, NVOX, 3)
    conf = conf_all[:, 0, :]                                      # (2N, NVOX)

    pos_p, pos_tg = pos[:n], pos[n:]
    conf_p, conf_tg = conf[:n], conf[n:]
    mask_p = conf_p > P_THRESHOLD
    mask_t = conf_tg > T_THRESHOLD

    # padded point sets: masked-out points pushed to far (distinct) sentinels
    p_pts = jnp.where(mask_p[..., None], pos_p, P_SENT)           # (N, NVOX, 3)
    t_pts = jnp.where(mask_t[..., None], pos_tg, T_SENT)
    t_t = jnp.transpose(t_pts, (0, 2, 1))                         # (N, 3, NVOX)

    order = jnp.argsort(conf_p, axis=-1)                          # ascending, == torch.argsort
    sorted_p = jnp.take_along_axis(p_pts, order[..., None], axis=1)
    sorted_pt = jnp.transpose(sorted_p, (0, 2, 1))

    sel, hit, amin, hitn, aminn = _nms_match_call(diam, t_t, sorted_p, sorted_pt, p_pts)
    sel = sel[:, 0, :] > 0.5
    hit = hit[:, 0, :] > 0.5
    hitn = hitn[:, 0, :] > 0.5
    amin = amin[:, 0, :]
    aminn = aminn[:, 0, :]

    sorted_mask = jnp.take_along_axis(mask_p, order, axis=1)
    sel_real = sel & sorted_mask                                  # drop spurious padded selections

    def excl_cumsum(m):
        m = m.astype(jnp.int32)
        return jnp.cumsum(m, axis=1) - m

    # remap padded argmin indices to compacted (torch) indices
    amin_c = jnp.take_along_axis(excl_cumsum(mask_p), amin, axis=1)       # voxel -> compact P idx
    aminn_c = jnp.take_along_axis(excl_cumsum(sel_real), aminn, axis=1)   # sorted -> compact P_nms idx

    return (pos_p, pos_tg, mask_p, mask_t, order, sel_real, sorted_p,
            hit, amin_c, hitn, aminn_c)


# -------------------- Analyzer (forward only) --------------------
class AnalyzerPallas:
    def __init__(self):
        self.elem = ELE_NAME
        self.elem_num = len(self.elem)
        self.ele_diameter = list(ELE_DIAMETER)
        self.space_size = list(SPACE)
        self.output_shape = self.space_size + [self.elem_num, 4]
        self.real_size = jnp.asarray(REAL_SIZE, jnp.float32)
        self.lattice_expand = self.real_size / jnp.asarray(self.space_size, jnp.float32)
        self.P_threshold = P_THRESHOLD
        self.T_threshold = T_THRESHOLD
        ix, iy, iz = jnp.meshgrid(jnp.arange(SPACE[0]), jnp.arange(SPACE[1]),
                                  jnp.arange(SPACE[2]), indexing="ij")
        self.pit = jnp.stack([ix, iy, iz], axis=-1).astype(jnp.float32)   # (X,Y,Z,3)
        self.pit_flat = self.pit.reshape(-1, 3)
        self.pit_T = jnp.asarray(self.pit_flat.T)                          # (3, NVOX)
        self.lat_col = self.lattice_expand.reshape(3, 1)
        self.diam_vec = jnp.asarray(self.ele_diameter, jnp.float32)
        self.empty = jnp.zeros((0,), jnp.int32)

    def forward(self, predictions, targets):
        assert predictions.shape == targets.shape, \
            f"prediction shape {predictions.shape} doesn't match {targets.shape}"
        predictions = predictions.reshape([-1] + self.output_shape)
        targets = targets.reshape([-1] + self.output_shape)
        batch_size = predictions.shape[0]
        pred_be = jnp.transpose(predictions, (0, 4, 1, 2, 3, 5))   # [B,E,X,Y,Z,4]
        targ_be = jnp.transpose(targets, (0, 4, 1, 2, 3, 5))
        e_num = self.elem_num
        n_slab = batch_size * e_num
        pred_flat = pred_be.reshape(n_slab, NVOX, 4).astype(jnp.float32)
        targ_flat = targ_be.reshape(n_slab, NVOX, 4).astype(jnp.float32)
        diam = jnp.tile(self.diam_vec, batch_size)                 # diam[n], n = b*E + e

        dev_out = _device_forward(pred_flat, targ_flat, diam, self.pit_T, self.lat_col)
        # one host sync for all fixed-shape device results
        (pos_p, pos_t, mask_p, mask_t, order, sel_real, sorted_pos,
         hit, amin_c, hit_nms, aminn_c) = jax.device_get(dev_out)
        pred_np = np.asarray(pred_flat)
        targ_np = np.asarray(targ_flat)

        total_P_nms, total_T, total_TP_index_nms = [], [], []
        total_P_pos_nms, total_T_pos, total_P_pos = [], [], []
        total_TP_index, total_P = [], []

        # TODO(synk): ragged list-of-tensors compaction (data-dependent shapes) done once on host.
        for b in range(batch_size):
            T, P, P_nms, T_pos, P_pos, P_pos_nms, TP_index, TP_index_nms = \
                ([], [], [], [], [], [], [], [])
            for e in range(e_num):
                nidx = b * e_num + e
                mp, mt = mask_p[nidx], mask_t[nidx]
                ordn, selr = order[nidx], sel_real[nidx]

                P.append(jnp.asarray(pred_np[nidx][mp]))
                T.append(jnp.asarray(targ_np[nidx][mt]))
                P_pos.append(jnp.asarray(pos_p[nidx][mp]))
                T_pos.append(jnp.asarray(pos_t[nidx][mt]))
                P_nms.append(jnp.asarray(pred_np[nidx][ordn][selr]))
                P_pos_nms.append(jnp.asarray(sorted_pos[nidx][selr]))

                hit_c = hit[nidx][mt]
                if hit_c.any():
                    tp_t = jnp.asarray(np.nonzero(hit_c)[0].astype(np.int32))
                    tp_p = jnp.asarray(amin_c[nidx][mt][hit_c].astype(np.int32))
                else:
                    tp_t, tp_p = self.empty, self.empty
                TP_index.append([tp_t, tp_p])

                hitn_c = hit_nms[nidx][mt]
                if hitn_c.any():
                    tpn_t = jnp.asarray(np.nonzero(hitn_c)[0].astype(np.int32))
                    tpn_p = jnp.asarray(aminn_c[nidx][mt][hitn_c].astype(np.int32))
                else:
                    tpn_t, tpn_p = self.empty, self.empty
                TP_index_nms.append([tpn_t, tpn_p])

            total_P.append(P)
            total_P_nms.append(P_nms)
            total_T.append(T)
            total_TP_index.append(TP_index)
            total_TP_index_nms.append(TP_index_nms)
            total_P_pos.append(P_pos)
            total_P_pos_nms.append(P_pos_nms)
            total_T_pos.append(T_pos)

        return {'P_nms': total_P_nms, 'P': total_P, 'T': total_T,
                'TP_index': total_TP_index, 'TP_index_nms': total_TP_index_nms,
                'P_pos': total_P_pos, 'P_pos_nms': total_P_pos_nms, 'T_pos': total_T_pos}


# -------------------- main --------------------
if __name__ == "__main__":
    key = jax.random.PRNGKey(0)
    kp, kt = jax.random.split(key)
    B = 2
    E = len(ELE_NAME)
    shape = (B,) + SPACE + (E, 4)                        # (2, 8, 8, 4, 2, 4)
    predictions = jax.random.uniform(kp, shape, dtype=jnp.float32)
    targets = jax.random.uniform(kt, shape, dtype=jnp.float32)

    analyzer = AnalyzerPallas()
    result = analyzer.forward(predictions, targets)
    jax.block_until_ready(result)

    assert set(result.keys()) == {'P_nms', 'P', 'T', 'TP_index', 'TP_index_nms',
                                  'P_pos', 'P_pos_nms', 'T_pos'}

    # -------- numpy reference of the torch algorithm, checked for every (batch, element) --------
    pred_np = np.asarray(predictions, dtype=np.float32)
    targ_np = np.asarray(targets, dtype=np.float32)
    pred_bexyz = np.transpose(pred_np, (0, 4, 1, 2, 3, 5))
    targ_bexyz = np.transpose(targ_np, (0, 4, 1, 2, 3, 5))
    pit_np = np.asarray(analyzer.pit_flat)
    lat_np = np.asarray(analyzer.lattice_expand)
    empty_i = np.zeros((0,), np.int64)

    for b in range(B):
        for e, diameter in enumerate(ELE_DIAMETER):
            pv = pred_bexyz[b, e].reshape(-1, 4)
            tv = targ_bexyz[b, e].reshape(-1, 4)
            p_pos = (pv[:, :3] + pit_np) * lat_np
            t_pos = (tv[:, :3] + pit_np) * lat_np
            mp = pv[:, 3] > P_THRESHOLD
            mt = tv[:, 3] > T_THRESHOLD
            P_position, T_position = p_pos[mp], t_pos[mt]
            np.testing.assert_allclose(np.asarray(result['P_pos'][b][e]), P_position, atol=1e-4)
            np.testing.assert_allclose(np.asarray(result['T_pos'][b][e]), T_position, atol=1e-4)

            # reference match T vs P
            dist = np.sqrt(((T_position[:, None] - P_position[None]) ** 2).sum(-1))
            hit_ref = (dist < diameter).sum(1) > 0 if dist.size else np.zeros((len(T_position),), bool)
            tp_t_ref = np.nonzero(hit_ref)[0]
            tp_p_ref = dist[tp_t_ref].argmin(1) if tp_t_ref.size else empty_i
            tp_t, tp_p = result['TP_index'][b][e]
            assert np.array_equal(np.asarray(tp_t), tp_t_ref if tp_t_ref.size else empty_i)
            assert np.array_equal(np.asarray(tp_p), tp_p_ref)

            # reference NMS
            idx = np.argsort(pv[mp, 3], kind="stable")
            sp = P_position[idx]
            dm = np.sqrt(((sp[:, None] - sp[None]) ** 2).sum(-1))
            adj = np.triu(dm < diameter, k=1).astype(np.float32)
            restrain = adj.sum(0)
            correct = (restrain != 0).astype(np.float32) @ adj
            sel_ref = (restrain - correct) == 0
            np.testing.assert_allclose(np.asarray(result['P_pos_nms'][b][e]), sp[sel_ref], atol=1e-4)
            np.testing.assert_allclose(np.asarray(result['P_nms'][b][e]), pv[mp][idx][sel_ref], atol=1e-6)

            # reference match T vs P_nms
            spn = sp[sel_ref]
            distn = np.sqrt(((T_position[:, None] - spn[None]) ** 2).sum(-1))
            hitn_ref = (distn < diameter).sum(1) > 0 if distn.size else np.zeros((len(T_position),), bool)
            tpn_t_ref = np.nonzero(hitn_ref)[0]
            tpn_p_ref = distn[tpn_t_ref].argmin(1) if tpn_t_ref.size else empty_i
            tpn_t, tpn_p = result['TP_index_nms'][b][e]
            assert np.array_equal(np.asarray(tpn_t), tpn_t_ref if tpn_t_ref.size else empty_i)
            assert np.array_equal(np.asarray(tpn_p), tpn_p_ref)

    print("KERNEL_OK")
</pallas_src>

<mosaic_0001>
module attributes {stable_mosaic.version = 11 : i64} {
  func.func @_prep_kernel(%arg0: i32, %arg1: memref<1x4x256xf32, #tpu.memory_space<vmem>>, %arg2: memref<3x256xf32, #tpu.memory_space<vmem>>, %arg3: memref<3x1xf32, #tpu.memory_space<vmem>>, %arg4: memref<1x3x256xf32, #tpu.memory_space<vmem>>, %arg5: memref<1x1x256xf32, #tpu.memory_space<vmem>>) attributes {dimension_semantics = [#tpu.dimension_semantics<parallel>], iteration_bounds = array<i64: 8>, scalar_prefetch = 0 : i64, scratch_operands = 0 : i64, tpu.core_type = #tpu.core_type<tc>, window_params = [{transform_indices = @transform_0, window_bounds = array<i64: 1, 4, 256>}, {pipeline_mode = #tpu.pipeline_mode<synchronous>, transform_indices = @transform_1, window_bounds = array<i64: 3, 256>}, {pipeline_mode = #tpu.pipeline_mode<synchronous>, transform_indices = @transform_2, window_bounds = array<i64: 3, 1>}, {transform_indices = @transform_3, window_bounds = array<i64: 1, 3, 256>}, {transform_indices = @transform_4, window_bounds = array<i64: 1, 1, 256>}]} {
    %c0 = arith.constant 0 : index
    %c0_0 = arith.constant 0 : index
    %c0_1 = arith.constant 0 : index
    %0 = vector.load %arg1[%c0, %c0_0, %c0_1] : memref<1x4x256xf32, #tpu.memory_space<vmem>>, vector<1x4x256xf32>
    %1 = vector.shape_cast %0 : vector<1x4x256xf32> to vector<4x256xf32>
    %2 = vector.extract_strided_slice %1 {offsets = [0, 0], sizes = [3, 256], strides = [1, 1]} : vector<4x256xf32> to vector<3x256xf32>
    %c0_2 = arith.constant 0 : index
    %c0_3 = arith.constant 0 : index
    %3 = vector.load %arg2[%c0_2, %c0_3] : memref<3x256xf32, #tpu.memory_space<vmem>>, vector<3x256xf32>
    %4 = arith.addf %2, %3 : vector<3x256xf32>
    %c0_4 = arith.constant 0 : index
    %c0_5 = arith.constant 0 : index
    %5 = vector.load %arg3[%c0_4, %c0_5] : memref<3x1xf32, #tpu.memory_space<vmem>>, vector<3x1xf32>
    %6 = vector.broadcast %5 : vector<3x1xf32> to vector<3x256xf32>
    %7 = arith.mulf %4, %6 : vector<3x256xf32>
    %c0_6 = arith.constant 0 : index
    %c0_7 = arith.constant 0 : index
    %c0_8 = arith.constant 0 : index
    %8 = vector.load %arg4[%c0_6, %c0_7, %c0_8] : memref<1x3x256xf32, #tpu.memory_space<vmem>>, vector<1x3x256xf32>
    %9 = vector.shape_cast %8 : vector<1x3x256xf32> to vector<3x256xf32>
    %10 = vector.shape_cast %7 : vector<3x256xf32> to vector<1x3x256xf32>
    tpu.vector_store %arg4[%c0_6, %c0_7, %c0_8], %10 {strides = array<i32>} : memref<1x3x256xf32, #tpu.memory_space<vmem>>, vector<1x3x256xf32>,
    %11 = vector.extract_strided_slice %1 {offsets = [3, 0], sizes = [1, 256], strides = [1, 1]} : vector<4x256xf32> to vector<1x256xf32>
    %c0_9 = arith.constant 0 : index
    %c0_10 = arith.constant 0 : index
    %c0_11 = arith.constant 0 : index
    %12 = vector.load %arg5[%c0_9, %c0_10, %c0_11] : memref<1x1x256xf32, #tpu.memory_space<vmem>>, vector<1x1x256xf32>
    %13 = vector.shape_cast %12 : vector<1x1x256xf32> to vector<1x256xf32>
    %14 = vector.shape_cast %11 : vector<1x256xf32> to vector<1x1x256xf32>
    tpu.vector_store %arg5[%c0_9, %c0_10, %c0_11], %14 {strides = array<i32>} : memref<1x1x256xf32, #tpu.memory_space<vmem>>, vector<1x1x256xf32>,
    return
  }
  func.func @transform_0(%arg0: i32) -> (i32, i32, i32) {
    %c0_i32 = arith.constant 0 : i32
    %c0_i32_0 = arith.constant 0 : i32
    %c0_i32_1 = arith.constant 0 : i32
    return %arg0, %c0_i32, %c0_i32_0 : i32, i32, i32
  }
  func.func @transform_1(%arg0: i32) -> (i32, i32) {
    %c0_i32 = arith.constant 0 : i32
    %c0_i32_0 = arith.constant 0 : i32
    %c0_i32_1 = arith.constant 0 : i32
    return %c0_i32, %c0_i32_0 : i32, i32
  }
  func.func @transform_2(%arg0: i32) -> (i32, i32) {
    %c0_i32 = arith.constant 0 : i32
    %c0_i32_0 = arith.constant 0 : i32
    %c0_i32_1 = arith.constant 0 : i32
    return %c0_i32, %c0_i32_0 : i32, i32
  }
  func.func @transform_3(%arg0: i32) -> (i32, i32, i32) {
    %c0_i32 = arith.constant 0 : i32
    %c0_i32_0 = arith.constant 0 : i32
    %c0_i32_1 = arith.constant 0 : i32
    return %arg0, %c0_i32, %c0_i32_0 : i32, i32, i32
  }
  func.func @transform_4(%arg0: i32) -> (i32, i32, i32) {
    %c0_i32 = arith.constant 0 : i32
    %c0_i32_0 = arith.constant 0 : i32
    %c0_i32_1 = arith.constant 0 : i32
    return %arg0, %c0_i32, %c0_i32_0 : i32, i32, i32
  }
}

module attributes {stable_mosaic.version = 11 : i64} {
  func.func @_nms_match_kernel(%arg0: i32, %arg1: memref<4xf32, #tpu.memory_space<smem>>, %arg2: memref<1x3x256xf32, #tpu.memory_space<vmem>>, %arg3: memref<1x256x3xf32, #tpu.memory_space<vmem>>, %arg4: memref<1x3x256xf32, #tpu.memory_space<vmem>>, %arg5: memref<1x256x3xf32, #tpu.memory_space<vmem>>, %arg6: memref<1x1x256xf32, #tpu.memory_space<vmem>>, %arg7: memref<1x1x256xf32, #tpu.memory_space<vmem>>, %arg8: memref<1x1x256xi32, #tpu.memory_space<vmem>>, %arg9: memref<1x1x256xf32, #tpu.memory_space<vmem>>, %arg10: memref<1x1x256xi32, #tpu.memory_space<vmem>>) attributes {dimension_semantics = [#tpu.dimension_semantics<parallel>], iteration_bounds = array<i64: 4>, scalar_prefetch = 1 : i64, scratch_operands = 0 : i64, tpu.core_type = #tpu.core_type<tc>, window_params = [{transform_indices = @transform_0, window_bounds = array<i64: 1, 3, 256>}, {transform_indices = @transform_1, window_bounds = array<i64: 1, 256, 3>}, {transform_indices = @transform_2, window_bounds = array<i64: 1, 3, 256>}, {transform_indices = @transform_3, window_bounds = array<i64: 1, 256, 3>}, {transform_indices = @transform_4, window_bounds = array<i64: 1, 1, 256>}, {transform_indices = @transform_5, window_bounds = array<i64: 1, 1, 256>}, {transform_indices = @transform_6, window_bounds = array<i64: 1, 1, 256>}, {transform_indices = @transform_7, window_bounds = array<i64: 1, 1, 256>}, {transform_indices = @transform_8, window_bounds = array<i64: 1, 1, 256>}]} {
    %0 = arith.index_cast %arg0 : i32 to index
    %1 = memref.load %arg1[%0] : memref<4xf32, #tpu.memory_space<smem>>
    %2 = arith.mulf %1, %1 : f32
    %c0 = arith.constant 0 : index
    %c0_0 = arith.constant 0 : index
    %c0_1 = arith.constant 0 : index
    %3 = vector.load %arg2[%c0, %c0_0, %c0_1] : memref<1x3x256xf32, #tpu.memory_space<vmem>>, vector<1x3x256xf32>
    %4 = vector.shape_cast %3 : vector<1x3x256xf32> to vector<3x256xf32>
    %c0_2 = arith.constant 0 : index
    %c0_3 = arith.constant 0 : index
    %c0_4 = arith.constant 0 : index
    %5 = vector.load %arg3[%c0_2, %c0_3, %c0_4] : memref<1x256x3xf32, #tpu.memory_space<vmem>>, vector<1x256x3xf32>
    %6 = vector.shape_cast %5 : vector<1x256x3xf32> to vector<256x3xf32>
    %c0_5 = arith.constant 0 : index
    %c0_6 = arith.constant 0 : index
    %c0_7 = arith.constant 0 : index
    %7 = vector.load %arg4[%c0_5, %c0_6, %c0_7] : memref<1x3x256xf32, #tpu.memory_space<vmem>>, vector<1x3x256xf32>
    %8 = vector.shape_cast %7 : vector<1x3x256xf32> to vector<3x256xf32>
    %c0_8 = arith.constant 0 : index
    %c0_9 = arith.constant 0 : index
    %c0_10 = arith.constant 0 : index
    %9 = vector.load %arg5[%c0_8, %c0_9, %c0_10] : memref<1x256x3xf32, #tpu.memory_space<vmem>>, vector<1x256x3xf32>
    %10 = vector.shape_cast %9 : vector<1x256x3xf32> to vector<256x3xf32>
    %11 = vector.extract_strided_slice %6 {offsets = [0, 0], sizes = [256, 1], strides = [1, 1]} : vector<256x3xf32> to vector<256x1xf32>
    %12 = vector.extract_strided_slice %8 {offsets = [0, 0], sizes = [1, 256], strides = [1, 1]} : vector<3x256xf32> to vector<1x256xf32>
    %13 = vector.broadcast %11 : vector<256x1xf32> to vector<256x256xf32>
    %14 = vector.broadcast %12 : vector<1x256xf32> to vector<256x256xf32>
    %15 = arith.subf %13, %14 : vector<256x256xf32>
    %16 = arith.mulf %15, %15 : vector<256x256xf32>
    %17 = vector.extract_strided_slice %6 {offsets = [0, 1], sizes = [256, 1], strides = [1, 1]} : vector<256x3xf32> to vector<256x1xf32>
    %18 = vector.extract_strided_slice %8 {offsets = [1, 0], sizes = [1, 256], strides = [1, 1]} : vector<3x256xf32> to vector<1x256xf32>
    %19 = vector.broadcast %17 : vector<256x1xf32> to vector<256x256xf32>
    %20 = vector.broadcast %18 : vector<1x256xf32> to vector<256x256xf32>
    %21 = arith.subf %19, %20 : vector<256x256xf32>
    %22 = arith.mulf %21, %21 : vector<256x256xf32>
    %23 = arith.addf %16, %22 : vector<256x256xf32>
    %24 = vector.extract_strided_slice %6 {offsets = [0, 2], sizes = [256, 1], strides = [1, 1]} : vector<256x3xf32> to vector<256x1xf32>
    %25 = vector.extract_strided_slice %8 {offsets = [2, 0], sizes = [1, 256], strides = [1, 1]} : vector<3x256xf32> to vector<1x256xf32>
    %26 = vector.broadcast %24 : vector<256x1xf32> to vector<256x256xf32>
    %27 = vector.broadcast %25 : vector<1x256xf32> to vector<256x256xf32>
    %28 = arith.subf %26, %27 : vector<256x256xf32>
    %29 = arith.mulf %28, %28 : vector<256x256xf32>
    %30 = arith.addf %23, %29 : vector<256x256xf32>
    %31 = vector.broadcast %2 : f32 to vector<256x256xf32>
    %32 = arith.cmpf olt, %30, %31 : vector<256x256xf32>
    %33 = arith.extui %32 : vector<256x256xi1> to vector<256x256xi32>
    %34 = arith.sitofp %33 : vector<256x256xi32> to vector<256x256xf32>
    %35 = tpu.iota {dimensions = array<i32: 0>} : vector<256x256xi32>
    %36 = tpu.iota {dimensions = array<i32: 1>} : vector<256x256xi32>
    %37 = arith.cmpi sgt, %36, %35 : vector<256x256xi32>
    %38 = arith.extui %37 : vector<256x256xi1> to vector<256x256xi32>
    %39 = arith.sitofp %38 : vector<256x256xi32> to vector<256x256xf32>
    %40 = arith.mulf %34, %39 : vector<256x256xf32>
    %41 = arith.cmpi slt, %36, %35 : vector<256x256xi32>
    %42 = arith.extui %41 : vector<256x256xi1> to vector<256x256xi32>
    %43 = arith.sitofp %42 : vector<256x256xi32> to vector<256x256xf32>
    %44 = arith.mulf %34, %43 : vector<256x256xf32>
    %cst = arith.constant dense<0.000000e+00> : vector<256xf32>
    %45 = vector.multi_reduction <add>, %40, %cst [0] : vector<256x256xf32> to vector<256xf32>
    %46 = vector.shape_cast %45 : vector<256xf32> to vector<1x256xf32>
    %cst_11 = arith.constant dense<0.000000e+00> : vector<256xf32>
    %47 = vector.multi_reduction <add>, %44, %cst_11 [1] : vector<256x256xf32> to vector<256xf32>
    %48 = vector.shape_cast %47 : vector<256xf32> to vector<256x1xf32>
    %cst_12 = arith.constant 0.000000e+00 : f32
    %49 = vector.broadcast %cst_12 : f32 to vector<1x256xf32>
    %50 = arith.cmpf one, %46, %49 : vector<1x256xf32>
    %51 = arith.extui %50 : vector<1x256xi1> to vector<1x256xi32>
    %52 = arith.sitofp %51 : vector<1x256xi32> to vector<1x256xf32>
    %cst_13 = arith.constant 0.000000e+00 : f32
    %53 = vector.broadcast %cst_13 : f32 to vector<256x1xf32>
    %54 = arith.cmpf one, %48, %53 : vector<256x1xf32>
    %55 = arith.extui %54 : vector<256x1xi1> to vector<256x1xi32>
    %56 = arith.sitofp %55 : vector<256x1xi32> to vector<256x1xf32>
    %57 = vector.broadcast %56 : vector<256x1xf32> to vector<256x256xf32>
    %58 = arith.mulf %40, %57 : vector<256x256xf32>
    %cst_14 = arith.constant dense<0.000000e+00> : vector<256xf32>
    %59 = vector.multi_reduction <add>, %58, %cst_14 [0] : vector<256x256xf32> to vector<256xf32>
    %60 = vector.shape_cast %59 : vector<256xf32> to vector<1x256xf32>
    %61 = vector.broadcast %52 : vector<1x256xf32> to vector<256x256xf32>
    %62 = arith.mulf %44, %61 : vector<256x256xf32>
    %cst_15 = arith.constant dense<0.000000e+00> : vector<256xf32>
    %63 = vector.multi_reduction <add>, %62, %cst_15 [1] : vector<256x256xf32> to vector<256xf32>
    %64 = vector.shape_cast %63 : vector<256xf32> to vector<256x1xf32>
    %65 = arith.cmpf oeq, %46, %60 : vector<1x256xf32>
    %66 = arith.extui %65 : vector<1x256xi1> to vector<1x256xi32>
    %67 = arith.sitofp %66 : vector<1x256xi32> to vector<1x256xf32>
    %c0_16 = arith.constant 0 : index
    %c0_17 = arith.constant 0 : index
    %c0_18 = arith.constant 0 : index
    %68 = vector.load %arg6[%c0_16, %c0_17, %c0_18] : memref<1x1x256xf32, #tpu.memory_space<vmem>>, vector<1x1x256xf32>
    %69 = vector.shape_cast %68 : vector<1x1x256xf32> to vector<1x256xf32>
    %70 = vector.shape_cast %67 : vector<1x256xf32> to vector<1x1x256xf32>
    tpu.vector_store %arg6[%c0_16, %c0_17, %c0_18], %70 {strides = array<i32>} : memref<1x1x256xf32, #tpu.memory_space<vmem>>, vector<1x1x256xf32>,
    %71 = arith.cmpf oeq, %48, %64 : vector<256x1xf32>
    %72 = vector.extract_strided_slice %10 {offsets = [0, 0], sizes = [256, 1], strides = [1, 1]} : vector<256x3xf32> to vector<256x1xf32>
    %73 = vector.extract_strided_slice %4 {offsets = [0, 0], sizes = [1, 256], strides = [1, 1]} : vector<3x256xf32> to vector<1x256xf32>
    %74 = vector.broadcast %72 : vector<256x1xf32> to vector<256x256xf32>
    %75 = vector.broadcast %73 : vector<1x256xf32> to vector<256x256xf32>
    %76 = arith.subf %74, %75 : vector<256x256xf32>
    %77 = arith.mulf %76, %76 : vector<256x256xf32>
    %78 = vector.extract_strided_slice %10 {offsets = [0, 1], sizes = [256, 1], strides = [1, 1]} : vector<256x3xf32> to vector<256x1xf32>
    %79 = vector.extract_strided_slice %4 {offsets = [1, 0], sizes = [1, 256], strides = [1, 1]} : vector<3x256xf32> to vector<1x256xf32>
    %80 = vector.broadcast %78 : vector<256x1xf32> to vector<256x256xf32>
    %81 = vector.broadcast %79 : vector<1x256xf32> to vector<256x256xf32>
    %82 = arith.subf %80, %81 : vector<256x256xf32>
    %83 = arith.mulf %82, %82 : vector<256x256xf32>
    %84 = arith.addf %77, %83 : vector<256x256xf32>
    %85 = vector.extract_strided_slice %10 {offsets = [0, 2], sizes = [256, 1], strides = [1, 1]} : vector<256x3xf32> to vector<256x1xf32>
    %86 = vector.extract_strided_slice %4 {offsets = [2, 0], sizes = [1, 256], strides = [1, 1]} : vector<3x256xf32> to vector<1x256xf32>
    %87 = vector.broadcast %85 : vector<256x1xf32> to vector<256x256xf32>
    %88 = vector.broadcast %86 : vector<1x256xf32> to vector<256x256xf32>
    %89 = arith.subf %87, %88 : vector<256x256xf32>
    %90 = arith.mulf %89, %89 : vector<256x256xf32>
    %91 = arith.addf %84, %90 : vector<256x256xf32>
    %92 = vector.broadcast %2 : f32 to vector<256x256xf32>
    %93 = arith.cmpf olt, %91, %92 : vector<256x256xf32>
    %94 = arith.extui %93 : vector<256x256xi1> to vector<256x256xi32>
    %95 = arith.sitofp %94 : vector<256x256xi32> to vector<256x256xf32>
    %cst_19 = arith.constant dense<0.000000e+00> : vector<256xf32>
    %96 = vector.multi_reduction <add>, %95, %cst_19 [0] : vector<256x256xf32> to vector<256xf32>
    %97 = vector.shape_cast %96 : vector<256xf32> to vector<1x256xf32>
    %cst_20 = arith.constant 0.000000e+00 : f32
    %98 = vector.broadcast %cst_20 : f32 to vector<1x256xf32>
    %99 = arith.cmpf ogt, %97, %98 : vector<1x256xf32>
    %100 = arith.extui %99 : vector<1x256xi1> to vector<1x256xi32>
    %101 = arith.sitofp %100 : vector<1x256xi32> to vector<1x256xf32>
    %c0_21 = arith.constant 0 : index
    %c0_22 = arith.constant 0 : index
    %c0_23 = arith.constant 0 : index
    %102 = vector.load %arg7[%c0_21, %c0_22, %c0_23] : memref<1x1x256xf32, #tpu.memory_space<vmem>>, vector<1x1x256xf32>
    %103 = vector.shape_cast %102 : vector<1x1x256xf32> to vector<1x256xf32>
    %104 = vector.shape_cast %101 : vector<1x256xf32> to vector<1x1x256xf32>
    tpu.vector_store %arg7[%c0_21, %c0_22, %c0_23], %104 {strides = array<i32>} : memref<1x1x256xf32, #tpu.memory_space<vmem>>, vector<1x1x256xf32>,
    %cst_24 = arith.constant dense<0x7F800000> : vector<256xf32>
    %105 = vector.multi_reduction <minimumf>, %91, %cst_24 [0] : vector<256x256xf32> to vector<256xf32>
    %106 = vector.shape_cast %105 : vector<256xf32> to vector<1x256xf32>
    %107 = tpu.iota {dimensions = array<i32: 0>} : vector<256x256xi32>
    %108 = arith.sitofp %107 : vector<256x256xi32> to vector<256x256xf32>
    %109 = vector.broadcast %106 : vector<1x256xf32> to vector<256x256xf32>
    %110 = arith.cmpf oeq, %91, %109 : vector<256x256xf32>
    %cst_25 = arith.constant 2.560000e+02 : f32
    %111 = vector.broadcast %cst_25 : f32 to vector<256x256xf32>
    %112 = arith.select %110, %108, %111 : vector<256x256xi1>, vector<256x256xf32>
    %cst_26 = arith.constant dense<0x7F800000> : vector<256xf32>
    %113 = vector.multi_reduction <minimumf>, %112, %cst_26 [0] : vector<256x256xf32> to vector<256xf32>
    %114 = vector.shape_cast %113 : vector<256xf32> to vector<1x256xf32>
    %115 = arith.fptosi %114 : vector<1x256xf32> to vector<1x256xi32>
    %c0_27 = arith.constant 0 : index
    %c0_28 = arith.constant 0 : index
    %c0_29 = arith.constant 0 : index
    %116 = vector.load %arg8[%c0_27, %c0_28, %c0_29] : memref<1x1x256xi32, #tpu.memory_space<vmem>>, vector<1x1x256xi32>
    %117 = vector.shape_cast %116 : vector<1x1x256xi32> to vector<1x256xi32>
    %118 = vector.shape_cast %115 : vector<1x256xi32> to vector<1x1x256xi32>
    tpu.vector_store %arg8[%c0_27, %c0_28, %c0_29], %118 {strides = array<i32>} : memref<1x1x256xi32, #tpu.memory_space<vmem>>, vector<1x1x256xi32>,
    %cst_30 = arith.constant 1.000000e+06 : f32
    %119 = vector.shape_cast %71 : vector<256x1xi1> to vector<256x1xi1>
    %120 = vector.broadcast %119 : vector<256x1xi1> to vector<256x3xi1>
    %121 = vector.broadcast %cst_30 : f32 to vector<256x3xf32>
    %122 = arith.select %120, %6, %121 : vector<256x3xi1>, vector<256x3xf32>
    %123 = vector.extract_strided_slice %122 {offsets = [0, 0], sizes = [256, 1], strides = [1, 1]} : vector<256x3xf32> to vector<256x1xf32>
    %124 = vector.extract_strided_slice %4 {offsets = [0, 0], sizes = [1, 256], strides = [1, 1]} : vector<3x256xf32> to vector<1x256xf32>
    %125 = vector.broadcast %123 : vector<256x1xf32> to vector<256x256xf32>
    %126 = vector.broadcast %124 : vector<1x256xf32> to vector<256x256xf32>
    %127 = arith.subf %125, %126 : vector<256x256xf32>
    %128 = arith.mulf %127, %127 : vector<256x256xf32>
    %129 = vector.extract_strided_slice %122 {offsets = [0, 1], sizes = [256, 1], strides = [1, 1]} : vector<256x3xf32> to vector<256x1xf32>
    %130 = vector.extract_strided_slice %4 {offsets = [1, 0], sizes = [1, 256], strides = [1, 1]} : vector<3x256xf32> to vector<1x256xf32>
    %131 = vector.broadcast %129 : vector<256x1xf32> to vector<256x256xf32>
    %132 = vector.broadcast %130 : vector<1x256xf32> to vector<256x256xf32>
    %133 = arith.subf %131, %132 : vector<256x256xf32>
    %134 = arith.mulf %133, %133 : vector<256x256xf32>
    %135 = arith.addf %128, %134 : vector<256x256xf32>
    %136 = vector.extract_strided_slice %122 {offsets = [0, 2], sizes = [256, 1], strides = [1, 1]} : vector<256x3xf32> to vector<256x1xf32>
    %137 = vector.extract_strided_slice %4 {offsets = [2, 0], sizes = [1, 256], strides = [1, 1]} : vector<3x256xf32> to vector<1x256xf32>
    %138 = vector.broadcast %136 : vector<256x1xf32> to vector<256x256xf32>
    %139 = vector.broadcast %137 : vector<1x256xf32> to vector<256x256xf32>
    %140 = arith.subf %138, %139 : vector<256x256xf32>
    %141 = arith.mulf %140, %140 : vector<256x256xf32>
    %142 = arith.addf %135, %141 : vector<256x256xf32>
    %143 = vector.broadcast %2 : f32 to vector<256x256xf32>
    %144 = arith.cmpf olt, %142, %143 : vector<256x256xf32>
    %145 = arith.extui %144 : vector<256x256xi1> to vector<256x256xi32>
    %146 = arith.sitofp %145 : vector<256x256xi32> to vector<256x256xf32>
    %cst_31 = arith.constant dense<0.000000e+00> : vector<256xf32>
    %147 = vector.multi_reduction <add>, %146, %cst_31 [0] : vector<256x256xf32> to vector<256xf32>
    %148 = vector.shape_cast %147 : vector<256xf32> to vector<1x256xf32>
    %cst_32 = arith.constant 0.000000e+00 : f32
    %149 = vector.broadcast %cst_32 : f32 to vector<1x256xf32>
    %150 = arith.cmpf ogt, %148, %149 : vector<1x256xf32>
    %151 = arith.extui %150 : vector<1x256xi1> to vector<1x256xi32>
    %152 = arith.sitofp %151 : vector<1x256xi32> to vector<1x256xf32>
    %c0_33 = arith.constant 0 : index
    %c0_34 = arith.constant 0 : index
    %c0_35 = arith.constant 0 : index
    %153 = vector.load %arg9[%c0_33, %c0_34, %c0_35] : memref<1x1x256xf32, #tpu.memory_space<vmem>>, vector<1x1x256xf32>
    %154 = vector.shape_cast %153 : vector<1x1x256xf32> to vector<1x256xf32>
    %155 = vector.shape_cast %152 : vector<1x256xf32> to vector<1x1x256xf32>
    tpu.vector_store %arg9[%c0_33, %c0_34, %c0_35], %155 {strides = array<i32>} : memref<1x1x256xf32, #tpu.memory_space<vmem>>, vector<1x1x256xf32>,
    %cst_36 = arith.constant dense<0x7F800000> : vector<256xf32>
    %156 = vector.multi_reduction <minimumf>, %142, %cst_36 [0] : vector<256x256xf32> to vector<256xf32>
    %157 = vector.shape_cast %156 : vector<256xf32> to vector<1x256xf32>
    %158 = tpu.iota {dimensions = array<i32: 0>} : vector<256x256xi32>
    %159 = arith.sitofp %158 : vector<256x256xi32> to vector<256x256xf32>
    %160 = vector.broadcast %157 : vector<1x256xf32> to vector<256x256xf32>
    %161 = arith.cmpf oeq, %142, %160 : vector<256x256xf32>
    %cst_37 = arith.constant 2.560000e+02 : f32
    %162 = vector.broadcast %cst_37 : f32 to vector<256x256xf32>
    %163 = arith.select %161, %159, %162 : vector<256x256xi1>, vector<256x256xf32>
    %cst_38 = arith.constant dense<0x7F800000> : vector<256xf32>
    %164 = vector.multi_reduction <minimumf>, %163, %cst_38 [0] : vector<256x256xf32> to vector<256xf32>
    %165 = vector.shape_cast %164 : vector<256xf32> to vector<1x256xf32>
    %166 = arith.fptosi %165 : vector<1x256xf32> to vector<1x256xi32>
    %c0_39 = arith.constant 0 : index
    %c0_40 = arith.constant 0 : index
    %c0_41 = arith.constant 0 : index
    %167 = vector.load %arg10[%c0_39, %c0_40, %c0_41] : memref<1x1x256xi32, #tpu.memory_space<vmem>>, vector<1x1x256xi32>
    %168 = vector.shape_cast %167 : vector<1x1x256xi32> to vector<1x256xi32>
    %169 = vector.shape_cast %166 : vector<1x256xi32> to vector<1x1x256xi32>
    tpu.vector_store %arg10[%c0_39, %c0_40, %c0_41], %169 {strides = array<i32>} : memref<1x1x256xi32, #tpu.memory_space<vmem>>, vector<1x1x256xi32>,
    return
  }
  func.func @transform_0(%arg0: i32, %arg1: memref<4xf32, #tpu.memory_space<smem>>) -> (i32, i32, i32) {
    %c0_i32 = arith.constant 0 : i32
    %c0_i32_0 = arith.constant 0 : i32
    %c0_i32_1 = arith.constant 0 : i32
    return %arg0, %c0_i32, %c0_i32_0 : i32, i32, i32
  }
  func.func @transform_1(%arg0: i32, %arg1: memref<4xf32, #tpu.memory_space<smem>>) -> (i32, i32, i32) {
    %c0_i32 = arith.constant 0 : i32
    %c0_i32_0 = arith.constant 0 : i32
    %c0_i32_1 = arith.constant 0 : i32
    return %arg0, %c0_i32, %c0_i32_0 : i32, i32, i32
  }
  func.func @transform_2(%arg0: i32, %arg1: memref<4xf32, #tpu.memory_space<smem>>) -> (i32, i32, i32) {
    %c0_i32 = arith.constant 0 : i32
    %c0_i32_0 = arith.constant 0 : i32
    %c0_i32_1 = arith.constant 0 : i32
    return %arg0, %c0_i32, %c0_i32_0 : i32, i32, i32
  }
  func.func @transform_3(%arg0: i32, %arg1: memref<4xf32, #tpu.memory_space<smem>>) -> (i32, i32, i32) {
    %c0_i32 = arith.constant 0 : i32
    %c0_i32_0 = arith.constant 0 : i32
    %c0_i32_1 = arith.constant 0 : i32
    return %arg0, %c0_i32, %c0_i32_0 : i32, i32, i32
  }
  func.func @transform_4(%arg0: i32, %arg1: memref<4xf32, #tpu.memory_space<smem>>) -> (i32, i32, i32) {
    %c0_i32 = arith.constant 0 : i32
    %c0_i32_0 = arith.constant 0 : i32
    %c0_i32_1 = arith.constant 0 : i32
    return %arg0, %c0_i32, %c0_i32_0 : i32, i32, i32
  }
  func.func @transform_5(%arg0: i32, %arg1: memref<4xf32, #tpu.memory_space<smem>>) -> (i32, i32, i32) {
    %c0_i32 = arith.constant 0 : i32
    %c0_i32_0 = arith.constant 0 : i32
    %c0_i32_1 = arith.constant 0 : i32
    return %arg0, %c0_i32, %c0_i32_0 : i32, i32, i32
  }
  func.func @transform_6(%arg0: i32, %arg1: memref<4xf32, #tpu.memory_space<smem>>) -> (i32, i32, i32) {
    %c0_i32 = arith.constant 0 : i32
    %c0_i32_0 = arith.constant 0 : i32
    %c0_i32_1 = arith.constant 0 : i32
    return %arg0, %c0_i32, %c0_i32_0 : i32, i32, i32
  }
  func.func @transform_7(%arg0: i32, %arg1: memref<4xf32, #tpu.memory_space<smem>>) -> (i32, i32, i32) {
    %c0_i32 = arith.constant 0 : i32
    %c0_i32_0 = arith.constant 0 : i32
    %c0_i32_1 = arith.constant 0 : i32
    return %arg0, %c0_i32, %c0_i32_0 : i32, i32, i32
  }
  func.func @transform_8(%arg0: i32, %arg1: memref<4xf32, #tpu.memory_space<smem>>) -> (i32, i32, i32) {
    %c0_i32 = arith.constant 0 : i32
    %c0_i32_0 = arith.constant 0 : i32
    %c0_i32_1 = arith.constant 0 : i32
    return %arg0, %c0_i32, %c0_i32_0 : i32, i32, i32
  }
}

</mosaic_0001>

<llo_original>
// kernel: _device_forward.2
$region0: #{_device_forward.2}
  #allocation0 [shape = 'u32[]', space=smem, size = 0x4, offset = 0x4, fixed_abs, tag = 'smem constant byte address 0x4 - core index']
  #allocation1 [shape = 'u32[144,128]{1,0:T(1,128)}', space=vmem, size = 0x12000, scoped, tag = 'internal scratch']
  %s0 = inlined_call_operand.vmem [shape: f32[8,4,256], index: 0, kind: input, shape index: {}]
  %s1 = inlined_call_operand.vmem [shape: f32[3,256], index: 1, kind: input, shape index: {}]
  %s2 = inlined_call_operand.vmem [shape: f32[3,1], index: 2, kind: input, shape index: {}]
  %s3 = inlined_call_operand.vmem [shape: f32[8,3,256], index: 3, kind: output, shape index: {0}]
  %s4 = inlined_call_operand.vmem [shape: f32[8,1,256], index: 4, kind: output, shape index: {1}]
  %5 = xla_tuple %s3, %s4
  %s6 = sld [smem:[#allocation0]]
  $region53: #{_device_forward.2} parent=0
    _
  %s8 = ssub.s32 1, %s6
  %s9 = scalar_select 0, %s8, %s6
  loop: start=0, step=1, limit=10
  $region2: #{_device_forward.2} parent=0 // loop_pre_header
    _
  $region3: #{_device_forward.2} parent=0 // loop_header
    %s11 = sphi 0, %s15
    %p12 = scmp.ge.s32.totalorder %s11, 10
    %s21 = sphi 0, %s23
    %s24 = sphi 0, %s21
    %s25 = sphi 0, %s24
    %s41 = sphi 0, %s25
    %s45 = sphi 0, %s45
    %s47 = sphi 0, %s45
    %s48 = sphi 0, %s47
    %s62 = sphi 0, %s48
    %s66 = sphi 0, %s66
    %s68 = sphi 0, %s66
    %s69 = sphi 0, %s68
    %s83 = sphi 0, %s69
    %s89 = sphi 0, %s91
    %s92 = sphi 0, %s89
    %s93 = sphi 0, %s92
    %s109 = sphi 0, %s93
    %s115 = sphi 0, %s117
    %s118 = sphi 0, %s115
    %s119 = sphi 0, %s118
    %s135 = sphi 0, %s119
  $region4: #{_device_forward.2} parent=0 // loop_header_branch
    %14 = sbr.rel (%p12) target = $region8
  $region5: #{_device_forward.2} parent=0 // loop_body
    %s16 = ssub.s32 %s11, 1
    %s17 = ssub.s32 %s11, 2
    %s18 = sadd.s32 %s11, 1
    %s19 = ssub.s32 %s11, %s18
    %p20 = scmp.eq.s32.totalorder %s19, 0
    %s22 = sadd.s32 %s21, 1
    %s23 = scalar_select %p20, %s21, %s22
    %p26 = pneg %p20
    %p27 = scmp.eq.s32.totalorder %s11, 7
    %p28 = por %p26, %p27
    %p29 = scmp.ne.s32.totalorder %s21, %s24
    %p30 = scmp.eq.s32.totalorder %s11, 0
    %p31 = por %p29, %p30
    %p32 = scmp.ne.s32.totalorder %s21, %s24
    %p33 = scmp.eq.s32.totalorder %s16, 7
    %p34 = por %p32, %p33
    %p35 = scmp.ne.s32.totalorder %s24, %s25
    %p36 = scmp.eq.s32.totalorder %s16, 0
    %p37 = por %p35, %p36
    %p38 = scmp.ne.s32.totalorder %s24, %s25
    %p39 = scmp.eq.s32.totalorder %s17, 7
    %p40 = por %p38, %p39
    %p42 = scmp.ne.s32.totalorder %s25, %s41
    %p43 = scmp.eq.s32.totalorder %s17, 0
    %p44 = por %p42, %p43
    %s46 = sadd.s32 %s45, 1
    %p49 = scmp.eq.s32.totalorder %s11, 7
    %p50 = scmp.ne.s32.totalorder %s45, %s47
    %p51 = scmp.eq.s32.totalorder %s11, 0
    %p52 = por %p50, %p51
    %p53 = scmp.ne.s32.totalorder %s45, %s47
    %p54 = scmp.eq.s32.totalorder %s16, 7
    %p55 = por %p53, %p54
    %p56 = scmp.ne.s32.totalorder %s47, %s48
    %p57 = scmp.eq.s32.totalorder %s16, 0
    %p58 = por %p56, %p57
    %p59 = scmp.ne.s32.totalorder %s47, %s48
    %p60 = scmp.eq.s32.totalorder %s17, 7
    %p61 = por %p59, %p60
    %p63 = scmp.ne.s32.totalorder %s48, %s62
    %p64 = scmp.eq.s32.totalorder %s17, 0
    %p65 = por %p63, %p64
    %s67 = sadd.s32 %s66, 1
    %p70 = scmp.eq.s32.totalorder %s11, 7
    %p71 = scmp.ne.s32.totalorder %s66, %s68
    %p72 = scmp.eq.s32.totalorder %s11, 0
    %p73 = por %p71, %p72
    %p74 = scmp.ne.s32.totalorder %s66, %s68
    %p75 = scmp.eq.s32.totalorder %s16, 7
    %p76 = por %p74, %p75
    %p77 = scmp.ne.s32.totalorder %s68, %s69
    %p78 = scmp.eq.s32.totalorder %s16, 0
    %p79 = por %p77, %p78
    %p80 = scmp.ne.s32.totalorder %s68, %s69
    %p81 = scmp.eq.s32.totalorder %s17, 7
    %p82 = por %p80, %p81
    %p84 = scmp.ne.s32.totalorder %s69, %s83
    %p85 = scmp.eq.s32.totalorder %s17, 0
    %p86 = por %p84, %p85
    %s87 = ssub.s32 %s11, %s18
    %p88 = scmp.eq.s32.totalorder %s87, 0
    %s90 = sadd.s32 %s89, 1
    %s91 = scalar_select %p88, %s89, %s90
    %p94 = pneg %p88
    %p95 = scmp.eq.s32.totalorder %s11, 7
    %p96 = por %p94, %p95
    %p97 = scmp.ne.s32.totalorder %s89, %s92
    %p98 = scmp.eq.s32.totalorder %s11, 0
    %p99 = por %p97, %p98
    %p100 = scmp.ne.s32.totalorder %s89, %s92
    %p101 = scmp.eq.s32.totalorder %s16, 7
    %p102 = por %p100, %p101
    %p103 = scmp.ne.s32.totalorder %s92, %s93
    %p104 = scmp.eq.s32.totalorder %s16, 0
    %p105 = por %p103, %p104
    %p106 = scmp.ne.s32.totalorder %s92, %s93
    %p107 = scmp.eq.s32.totalorder %s17, 7
    %p108 = por %p106, %p107
    %p110 = scmp.ne.s32.totalorder %s93, %s109
    %p111 = scmp.eq.s32.totalorder %s17, 0
    %p112 = por %p110, %p111
    %s113 = ssub.s32 %s11, %s18
    %p114 = scmp.eq.s32.totalorder %s113, 0
    %s116 = sadd.s32 %s115, 1
    %s117 = scalar_select %p114, %s115, %s116
    %p120 = pneg %p114
    %p121 = scmp.eq.s32.totalorder %s11, 7
    %p122 = por %p120, %p121
    %p123 = scmp.ne.s32.totalorder %s115, %s118
    %p124 = scmp.eq.s32.totalorder %s11, 0
    %p125 = por %p123, %p124
    %p126 = scmp.ne.s32.totalorder %s115, %s118
    %p127 = scmp.eq.s32.totalorder %s16, 7
    %p128 = por %p126, %p127
    %p129 = scmp.ne.s32.totalorder %s118, %s119
    %p130 = scmp.eq.s32.totalorder %s16, 0
    %p131 = por %p129, %p130
    %p132 = scmp.ne.s32.totalorder %s118, %s119
    %p133 = scmp.eq.s32.totalorder %s17, 7
    %p134 = por %p132, %p133
    %p136 = scmp.ne.s32.totalorder %s119, %s135
    %p137 = scmp.eq.s32.totalorder %s17, 0
    %p138 = por %p136, %p137
    %p139 = scmp.le.s32.totalorder 1, %s11
    %p140 = scmp.lt.s32.totalorder %s11, 9
    %p141 = pnand %p139, %p140
    %p142 = pneg %p141
    // Predicated region
    $region9: #{_device_forward.2} parent=5 // pred_check
      _
    $region10: #{_device_forward.2} parent=5 // pred_check_branch
      %144 = sbr.rel (%p141) target = $region12
    $region11: #{_device_forward.2} parent=5 // pred_region
      %s145 = ssub.s32 %s11, 1
      // Predicated region
      $region13: #{_device_forward.2} parent=11 // pred_check
        %p146 = pneg %p58
      $region14: #{_device_forward.2} parent=11 // pred_check_branch
        %148 = sbr.rel (%p146) target = $region16
      $region15: #{_device_forward.2} parent=11 // pred_region
        _
      $region16: #{_device_forward.2} parent=11 // pred_fallthru
        _
      // Predicated region
      $region17: #{_device_forward.2} parent=11 // pred_check
        %p149 = pneg %p79
      $region18: #{_device_forward.2} parent=11 // pred_check_branch
        %151 = sbr.rel (%p149) target = $region20
      $region19: #{_device_forward.2} parent=11 // pred_region
        _
      $region20: #{_device_forward.2} parent=11 // pred_fallthru
        _
    $region12: #{_device_forward.2} parent=5 // pred_fallthru
      _
    %p152 = scmp.lt.s32.totalorder %s11, 8
    // Predicated region
    $region21: #{_device_forward.2} parent=5 // pred_check
      %p153 = pneg %p152
    $region22: #{_device_forward.2} parent=5 // pred_check_branch
      %155 = sbr.rel (%p153) target = $region24
    $region23: #{_device_forward.2} parent=5 // pred_region
      // Predicated region
      $region25: #{_device_forward.2} parent=23 // pred_check
        %p156 = pneg %p31
      $region26: #{_device_forward.2} parent=23 // pred_check_branch
        %158 = sbr.rel (%p156) target = $region28
      $region27: #{_device_forward.2} parent=23 // pred_region
        %p159 = scmp.lt.s32.totalorder %s11, 7
        %s160 = scalar_select %p159, %s11, 7
        %s161 = smul.addr %s160, 2
        %s162 = smul.addr %s161, 4
        %s163 = scalar_lea.vmem %s0, %s162
      $region28: #{_device_forward.2} parent=23 // pred_fallthru
        _
    $region24: #{_device_forward.2} parent=5 // pred_fallthru
      _
    %p164 = scmp.le.s32.totalorder 1, %s11
    %p165 = scmp.lt.s32.totalorder %s11, 9
    %p166 = pnand %p164, %p165
    %p167 = pneg %p166
    // Predicated region
    $region29: #{_device_forward.2} parent=5 // pred_check
      _
    $region30: #{_device_forward.2} parent=5 // pred_check_branch
      %169 = sbr.rel (%p166) target = $region32
    $region31: #{_device_forward.2} parent=5 // pred_region
      %s170 = ssub.s32 %s11, 1
      %p171 = scmp.lt.s32.totalorder %s16, 7
      %s172 = scalar_select %p171, %s16, 7
      %s173 = smul.addr %s172, 2
      %s174 = smul.addr %s173, 4
      %s175 = scalar_lea.vmem %s0, %s174
      %p176 = pneg %p37
      %p177 = pneg %p34
      %p178 = pneg %p58
      %p179 = pneg %p55
      %p180 = pneg %p79
      %p181 = pneg %p76
      %p182 = pneg %p105
      %p183 = pneg %p102
      %p184 = scmp.lt.s32.totalorder %s16, 7
      %s185 = scalar_select %p184, %s16, 7
      %s186 = smul.addr %s185, 2
      %s187 = smul.addr %s186, 4
      %s188 = scalar_lea.vmem %s3, %s187
      %p189 = pneg %p131
      %p190 = pneg %p128
      %p191 = scmp.lt.s32.totalorder %s16, 7
      %s192 = scalar_select %p191, %s16, 7
      %s193 = smul.addr %s192, 2
      %s194 = scalar_lea.vmem %s4, %s193
      %p195 = scmp.lt.s32.totalorder %s16, 7
      %s196 = scalar_select %p195, %s16, 7
      %s197 = smul.addr %s196, 2
      %s198 = smul.addr %s197, 4
      %s199 = scalar_lea.vmem %s0, %s198
      %p200 = scmp.lt.s32.totalorder %s16, 7
      %s201 = scalar_select %p200, %s16, 7
      %s202 = smul.addr %s201, 2
      %s203 = smul.addr %s202, 4
      %s204 = scalar_lea.vmem %s3, %s203
      %p205 = scmp.lt.s32.totalorder %s16, 7
      %s206 = scalar_select %p205, %s16, 7
      %s207 = smul.addr %s206, 2
      %s208 = scalar_lea.vmem %s4, %s207
      %v209 = vld [vmem:[%s199] sm:$0xff]
      %v210 = vld [vmem:[%s1] sm:$0x77]
      %v211 = vadd.f32 %v209, %v210
      %v212 = vld [vmem:[%s2] sm:$0x7]
      %214 = vset.pattern.permute.xlu0 0
      %215 = vperm.xlu0 %214, %v212
      %v216 = vpop.permute.xlu0 %215
      %v218 = vunpack.c.l.s4 839922192
      %v219 = vunpack.c.0.s8 %v218
      %v220 = vlaneseq
      %v221 = vshrl.u32 %v220, 7
      %v222 = vsub.s32 %v219, %v221
      %v223 = vrot.slane %v216, %v222
      %v225 = vmul.f32 %v211, %v223
      %226 = vst [vmem:[%s204] sm:$0x77] %v225
      %v229 = vunpack.c.l.s4 1966171168
      %v230 = vunpack.c.0.s8 %v229
      %v231 = vlaneseq
      %v232 = vshrl.u32 %v231, 7
      %v233 = vsub.s32 %v230, %v232
      %v234 = vrot.slane %v209, %v233
      %v235 = vcombine.high %v234, %v234
      %v237 = vunpack.c.l.s4 1966171168
      %v238 = vunpack.c.0.s8 %v237
      %v239 = vlaneseq
      %v240 = vshrl.u32 %v239, 7
      %v241 = vsub.s32 %v238, %v240
      %v242 = vrot.slane %v235, %v241
      %v243 = vcombine.high %v242, %v242
      %v245 = vlaneseq
      %vm246 = vcmp.ge.s32.totalorder %v245, 0
      %vm247 = vcmp.lt.s32.totalorder %v245, 256
      %vm248 = vmand %vm246, %vm247
      %249 = vst.msk [vmem:[%s208] sm:$0x3] %vm248, %v243
      %p250 = scmp.lt.s32.totalorder %s16, 7
      %s251 = scalar_select %p250, %s16, 7
      %s252 = smul.addr %s251, 2
      %s253 = smul.addr %s252, 4
      %s254 = scalar_lea.vmem %s3, %s253
      %p255 = scmp.lt.s32.totalorder %s16, 7
      %s256 = scalar_select %p255, %s16, 7
      %s257 = smul.addr %s256, 2
      %s258 = scalar_lea.vmem %s4, %s257
      // Predicated region
      $region33: #{_device_forward.2} parent=31 // pred_check
        %p259 = pneg %p102
      $region34: #{_device_forward.2} parent=31 // pred_check_branch
        %261 = sbr.rel (%p259) target = $region36
      $region35: #{_device_forward.2} parent=31 // pred_region
        _
      $region36: #{_device_forward.2} parent=31 // pred_fallthru
        _
      // Predicated region
      $region37: #{_device_forward.2} parent=31 // pred_check
        %p262 = pneg %p128
      $region38: #{_device_forward.2} parent=31 // pred_check_branch
        %264 = sbr.rel (%p262) target = $region40
      $region39: #{_device_forward.2} parent=31 // pred_region
        _
      $region40: #{_device_forward.2} parent=31 // pred_fallthru
        _
    $region32: #{_device_forward.2} parent=5 // pred_fallthru
      _
    %p265 = scmp.le.s32.totalorder 2, %s11
    // Predicated region
    $region41: #{_device_forward.2} parent=5 // pred_check
      %p266 = pneg %p265
    $region42: #{_device_forward.2} parent=5 // pred_check_branch
      %268 = sbr.rel (%p266) target = $region44
    $region43: #{_device_forward.2} parent=5 // pred_region
      %s269 = ssub.s32 %s11, 2
      // Predicated region
      $region45: #{_device_forward.2} parent=43 // pred_check
        %p270 = pneg %p108
      $region46: #{_device_forward.2} parent=43 // pred_check_branch
        %272 = sbr.rel (%p270) target = $region48
      $region47: #{_device_forward.2} parent=43 // pred_region
        %p273 = scmp.lt.s32.totalorder %s17, 7
        %s274 = scalar_select %p273, %s17, 7
        %s275 = smul.addr %s274, 2
        %s276 = smul.addr %s275, 4
        %s277 = scalar_lea.vmem %s3, %s276
      $region48: #{_device_forward.2} parent=43 // pred_fallthru
        _
      // Predicated region
      $region49: #{_device_forward.2} parent=43 // pred_check
        %p278 = pneg %p134
      $region50: #{_device_forward.2} parent=43 // pred_check_branch
        %280 = sbr.rel (%p278) target = $region52
      $region51: #{_device_forward.2} parent=43 // pred_region
        %p281 = scmp.lt.s32.totalorder %s17, 7
        %s282 = scalar_select %p281, %s17, 7
        %s283 = smul.addr %s282, 2
        %s284 = scalar_lea.vmem %s4, %s283
      $region52: #{_device_forward.2} parent=43 // pred_fallthru
        _
    $region44: #{_device_forward.2} parent=5 // pred_fallthru
      _
  $region6: #{_device_forward.2} parent=0 // loop_footer
    %s15 = sadd.s32 1, %s11
  $region7: #{_device_forward.2} parent=0 // loop_footer_branch
    %10 = sbr.rel target = $region3
  $region8: #{_device_forward.2} parent=0 // loop_exit
    _

// kernel: _device_forward.3
$region0: #{_device_forward.3}
  #allocation0 [shape = 'u32[]', space=smem, size = 0x4, offset = 0x4, fixed_abs, tag = 'smem constant byte address 0x4 - core index']
  #allocation1 [shape = 'u32[144,128]{1,0:T(1,128)}', space=vmem, size = 0x12000, scoped, tag = 'internal scratch']
  #allocation2 [shape = 's32[1]{0}', space=sflag, size = 0x4, scoped, tag = 'scoped memory for _device_forward.3']
  #allocation3 [shape = 'u8[512]{0}', space=smem, size = 0x200, scoped, tag = 'prefetched SMEM operand 0']
  %s0 = inlined_call_operand.vmem [shape: f32[4], index: 0, kind: input, shape index: {}]
  %s1 = inlined_call_operand.vmem [shape: f32[4,3,256], index: 1, kind: input, shape index: {}]
  %s2 = inlined_call_operand.vmem [shape: f32[4,256,3], index: 2, kind: input, shape index: {}]
  %s3 = inlined_call_operand.vmem [shape: f32[4,3,256], index: 3, kind: input, shape index: {}]
  %s4 = inlined_call_operand.vmem [shape: f32[4,256,3], index: 4, kind: input, shape index: {}]
  %s5 = inlined_call_operand.vmem [shape: f32[4,1,256], index: 5, kind: output, shape index: {0}]
  %s6 = inlined_call_operand.vmem [shape: f32[4,1,256], index: 6, kind: output, shape index: {1}]
  %s7 = inlined_call_operand.vmem [shape: s32[4,1,256], index: 7, kind: output, shape index: {2}]
  %s8 = inlined_call_operand.vmem [shape: f32[4,1,256], index: 8, kind: output, shape index: {3}]
  %s9 = inlined_call_operand.vmem [shape: s32[4,1,256], index: 9, kind: output, shape index: {4}]
  %10 = xla_tuple %s5, %s6, %s7, %s8, %s9
  %s11 = sld [smem:[#allocation0]]
  $region81: #{_device_forward.3} parent=0
    _
  %s13 = ssub.s32 1, %s11
  %s14 = scalar_select 0, %s13, %s11
  %s15 = sshll.u32 %s0, 4
  %s16 = int_to_ptr.vmem [resolvable:$true] %s15
  %18 = dma.vmem_to_smem %s16, 16, [#allocation3], [#allocation2]
  %19 = dma.done [#allocation2], 16
  %20 = sfence
  loop: start=0, step=1, limit=6
  $region2: #{_device_forward.3} parent=0 // loop_pre_header
    _
  $region3: #{_device_forward.3} parent=0 // loop_header
    %s22 = sphi 0, %s26
    %p23 = scmp.ge.s32.totalorder %s22, 6
    %s32 = sphi 0, %s34
    %s35 = sphi 0, %s32
    %s36 = sphi 0, %s35
    %s52 = sphi 0, %s36
    %s58 = sphi 0, %s60
    %s61 = sphi 0, %s58
    %s62 = sphi 0, %s61
    %s78 = sphi 0, %s62
    %s84 = sphi 0, %s86
    %s87 = sphi 0, %s84
    %s88 = sphi 0, %s87
    %s104 = sphi 0, %s88
    %s110 = sphi 0, %s112
    %s113 = sphi 0, %s110
    %s114 = sphi 0, %s113
    %s130 = sphi 0, %s114
    %s136 = sphi 0, %s138
    %s139 = sphi 0, %s136
    %s140 = sphi 0, %s139
    %s156 = sphi 0, %s140
    %s162 = sphi 0, %s164
    %s165 = sphi 0, %s162
    %s166 = sphi 0, %s165
    %s182 = sphi 0, %s166
    %s188 = sphi 0, %s190
    %s191 = sphi 0, %s188
    %s192 = sphi 0, %s191
    %s208 = sphi 0, %s192
    %s214 = sphi 0, %s216
    %s217 = sphi 0, %s214
    %s218 = sphi 0, %s217
    %s234 = sphi 0, %s218
    %s240 = sphi 0, %s242
    %s243 = sphi 0, %s240
    %s244 = sphi 0, %s243
    %s260 = sphi 0, %s244
  $region4: #{_device_forward.3} parent=0 // loop_header_branch
    %25 = sbr.rel (%p23) target = $region8
  $region5: #{_device_forward.3} parent=0 // loop_body
    %s27 = ssub.s32 %s22, 1
    %s28 = ssub.s32 %s22, 2
    %s29 = sadd.s32 %s22, 1
    %s30 = ssub.s32 %s22, %s29
    %p31 = scmp.eq.s32.totalorder %s30, 0
    %s33 = sadd.s32 %s32, 1
    %s34 = scalar_select %p31, %s32, %s33
    %p37 = pneg %p31
    %p38 = scmp.eq.s32.totalorder %s22, 3
    %p39 = por %p37, %p38
    %p40 = scmp.ne.s32.totalorder %s32, %s35
    %p41 = scmp.eq.s32.totalorder %s22, 0
    %p42 = por %p40, %p41
    %p43 = scmp.ne.s32.totalorder %s32, %s35
    %p44 = scmp.eq.s32.totalorder %s27, 3
    %p45 = por %p43, %p44
    %p46 = scmp.ne.s32.totalorder %s35, %s36
    %p47 = scmp.eq.s32.totalorder %s27, 0
    %p48 = por %p46, %p47
    %p49 = scmp.ne.s32.totalorder %s35, %s36
    %p50 = scmp.eq.s32.totalorder %s28, 3
    %p51 = por %p49, %p50
    %p53 = scmp.ne.s32.totalorder %s36, %s52
    %p54 = scmp.eq.s32.totalorder %s28, 0
    %p55 = por %p53, %p54
    %s56 = ssub.s32 %s22, %s29
    %p57 = scmp.eq.s32.totalorder %s56, 0
    %s59 = sadd.s32 %s58, 1
    %s60 = scalar_select %p57, %s58, %s59
    %p63 = pneg %p57
    %p64 = scmp.eq.s32.totalorder %s22, 3
    %p65 = por %p63, %p64
    %p66 = scmp.ne.s32.totalorder %s58, %s61
    %p67 = scmp.eq.s32.totalorder %s22, 0
    %p68 = por %p66, %p67
    %p69 = scmp.ne.s32.totalorder %s58, %s61
    %p70 = scmp.eq.s32.totalorder %s27, 3
    %p71 = por %p69, %p70
    %p72 = scmp.ne.s32.totalorder %s61, %s62
    %p73 = scmp.eq.s32.totalorder %s27, 0
    %p74 = por %p72, %p73
    %p75 = scmp.ne.s32.totalorder %s61, %s62
    %p76 = scmp.eq.s32.totalorder %s28, 3
    %p77 = por %p75, %p76
    %p79 = scmp.ne.s32.totalorder %s62, %s78
    %p80 = scmp.eq.s32.totalorder %s28, 0
    %p81 = por %p79, %p80
    %s82 = ssub.s32 %s22, %s29
    %p83 = scmp.eq.s32.totalorder %s82, 0
    %s85 = sadd.s32 %s84, 1
    %s86 = scalar_select %p83, %s84, %s85
    %p89 = pneg %p83
    %p90 = scmp.eq.s32.totalorder %s22, 3
    %p91 = por %p89, %p90
    %p92 = scmp.ne.s32.totalorder %s84, %s87
    %p93 = scmp.eq.s32.totalorder %s22, 0
    %p94 = por %p92, %p93
    %p95 = scmp.ne.s32.totalorder %s84, %s87
    %p96 = scmp.eq.s32.totalorder %s27, 3
    %p97 = por %p95, %p96
    %p98 = scmp.ne.s32.totalorder %s87, %s88
    %p99 = scmp.eq.s32.totalorder %s27, 0
    %p100 = por %p98, %p99
    %p101 = scmp.ne.s32.totalorder %s87, %s88
    %p102 = scmp.eq.s32.totalorder %s28, 3
    %p103 = por %p101, %p102
    %p105 = scmp.ne.s32.totalorder %s88, %s104
    %p106 = scmp.eq.s32.totalorder %s28, 0
    %p107 = por %p105, %p106
    %s108 = ssub.s32 %s22, %s29
    %p109 = scmp.eq.s32.totalorder %s108, 0
    %s111 = sadd.s32 %s110, 1
    %s112 = scalar_select %p109, %s110, %s111
    %p115 = pneg %p109
    %p116 = scmp.eq.s32.totalorder %s22, 3
    %p117 = por %p115, %p116
    %p118 = scmp.ne.s32.totalorder %s110, %s113
    %p119 = scmp.eq.s32.totalorder %s22, 0
    %p120 = por %p118, %p119
    %p121 = scmp.ne.s32.totalorder %s110, %s113
    %p122 = scmp.eq.s32.totalorder %s27, 3
    %p123 = por %p121, %p122
    %p124 = scmp.ne.s32.totalorder %s113, %s114
    %p125 = scmp.eq.s32.totalorder %s27, 0
    %p126 = por %p124, %p125
    %p127 = scmp.ne.s32.totalorder %s113, %s114
    %p128 = scmp.eq.s32.totalorder %s28, 3
    %p129 = por %p127, %p128
    %p131 = scmp.ne.s32.totalorder %s114, %s130
    %p132 = scmp.eq.s32.totalorder %s28, 0
    %p133 = por %p131, %p132
    %s134 = ssub.s32 %s22, %s29
    %p135 = scmp.eq.s32.totalorder %s134, 0
    %s137 = sadd.s32 %s136, 1
    %s138 = scalar_select %p135, %s136, %s137
    %p141 = pneg %p135
    %p142 = scmp.eq.s32.totalorder %s22, 3
    %p143 = por %p141, %p142
    %p144 = scmp.ne.s32.totalorder %s136, %s139
    %p145 = scmp.eq.s32.totalorder %s22, 0
    %p146 = por %p144, %p145
    %p147 = scmp.ne.s32.totalorder %s136, %s139
    %p148 = scmp.eq.s32.totalorder %s27, 3
    %p149 = por %p147, %p148
    %p150 = scmp.ne.s32.totalorder %s139, %s140
    %p151 = scmp.eq.s32.totalorder %s27, 0
    %p152 = por %p150, %p151
    %p153 = scmp.ne.s32.totalorder %s139, %s140
    %p154 = scmp.eq.s32.totalorder %s28, 3
    %p155 = por %p153, %p154
    %p157 = scmp.ne.s32.totalorder %s140, %s156
    %p158 = scmp.eq.s32.totalorder %s28, 0
    %p159 = por %p157, %p158
    %s160 = ssub.s32 %s22, %s29
    %p161 = scmp.eq.s32.totalorder %s160, 0
    %s163 = sadd.s32 %s162, 1
    %s164 = scalar_select %p161, %s162, %s163
    %p167 = pneg %p161
    %p168 = scmp.eq.s32.totalorder %s22, 3
    %p169 = por %p167, %p168
    %p170 = scmp.ne.s32.totalorder %s162, %s165
    %p171 = scmp.eq.s32.totalorder %s22, 0
    %p172 = por %p170, %p171
    %p173 = scmp.ne.s32.totalorder %s162, %s165
    %p174 = scmp.eq.s32.totalorder %s27, 3
    %p175 = por %p173, %p174
    %p176 = scmp.ne.s32.totalorder %s165, %s166
    %p177 = scmp.eq.s32.totalorder %s27, 0
    %p178 = por %p176, %p177
    %p179 = scmp.ne.s32.totalorder %s165, %s166
    %p180 = scmp.eq.s32.totalorder %s28, 3
    %p181 = por %p179, %p180
    %p183 = scmp.ne.s32.totalorder %s166, %s182
    %p184 = scmp.eq.s32.totalorder %s28, 0
    %p185 = por %p183, %p184
    %s186 = ssub.s32 %s22, %s29
    %p187 = scmp.eq.s32.totalorder %s186, 0
    %s189 = sadd.s32 %s188, 1
    %s190 = scalar_select %p187, %s188, %s189
    %p193 = pneg %p187
    %p194 = scmp.eq.s32.totalorder %s22, 3
    %p195 = por %p193, %p194
    %p196 = scmp.ne.s32.totalorder %s188, %s191
    %p197 = scmp.eq.s32.totalorder %s22, 0
    %p198 = por %p196, %p197
    %p199 = scmp.ne.s32.totalorder %s188, %s191
    %p200 = scmp.eq.s32.totalorder %s27, 3
    %p201 = por %p199, %p200
    %p202 = scmp.ne.s32.totalorder %s191, %s192
    %p203 = scmp.eq.s32.totalorder %s27, 0
    %p204 = por %p202, %p203
    %p205 = scmp.ne.s32.totalorder %s191, %s192
    %p206 = scmp.eq.s32.totalorder %s28, 3
    %p207 = por %p205, %p206
    %p209 = scmp.ne.s32.totalorder %s192, %s208
    %p210 = scmp.eq.s32.totalorder %s28, 0
    %p211 = por %p209, %p210
    %s212 = ssub.s32 %s22, %s29
    %p213 = scmp.eq.s32.totalorder %s212, 0
    %s215 = sadd.s32 %s214, 1
    %s216 = scalar_select %p213, %s214, %s215
    %p219 = pneg %p213
    %p220 = scmp.eq.s32.totalorder %s22, 3
    %p221 = por %p219, %p220
    %p222 = scmp.ne.s32.totalorder %s214, %s217
    %p223 = scmp.eq.s32.totalorder %s22, 0
    %p224 = por %p222, %p223
    %p225 = scmp.ne.s32.totalorder %s214, %s217
    %p226 = scmp.eq.s32.totalorder %s27, 3
    %p227 = por %p225, %p226
    %p228 = scmp.ne.s32.totalorder %s217, %s218
    %p229 = scmp.eq.s32.totalorder %s27, 0
    %p230 = por %p228, %p229
    %p231 = scmp.ne.s32.totalorder %s217, %s218
    %p232 = scmp.eq.s32.totalorder %s28, 3
    %p233 = por %p231, %p232
    %p235 = scmp.ne.s32.totalorder %s218, %s234
    %p236 = scmp.eq.s32.totalorder %s28, 0
    %p237 = por %p235, %p236
    %s238 = ssub.s32 %s22, %s29
    %p239 = scmp.eq.s32.totalorder %s238, 0
    %s241 = sadd.s32 %s240, 1
    %s242 = scalar_select %p239, %s240, %s241
    %p245 = pneg %p239
    %p246 = scmp.eq.s32.totalorder %s22, 3
    %p247 = por %p245, %p246
    %p248 = scmp.ne.s32.totalorder %s240, %s243
    %p249 = scmp.eq.s32.totalorder %s22, 0
    %p250 = por %p248, %p249
    %p251 = scmp.ne.s32.totalorder %s240, %s243
    %p252 = scmp.eq.s32.totalorder %s27, 3
    %p253 = por %p251, %p252
    %p254 = scmp.ne.s32.totalorder %s243, %s244
    %p255 = scmp.eq.s32.totalorder %s27, 0
    %p256 = por %p254, %p255
    %p257 = scmp.ne.s32.totalorder %s243, %s244
    %p258 = scmp.eq.s32.totalorder %s28, 3
    %p259 = por %p257, %p258
    %p261 = scmp.ne.s32.totalorder %s244, %s260
    %p262 = scmp.eq.s32.totalorder %s28, 0
    %p263 = por %p261, %p262
    %p264 = scmp.le.s32.totalorder 1, %s22
    %p265 = scmp.lt.s32.totalorder %s22, 5
    %p266 = pnand %p264, %p265
    %p267 = pneg %p266
    // Predicated region
    $region9: #{_device_forward.3} parent=5 // pred_check
      _
    $region10: #{_device_forward.3} parent=5 // pred_check_branch
      %269 = sbr.rel (%p266) target = $region12
    $region11: #{_device_forward.3} parent=5 // pred_region
      %s270 = ssub.s32 %s22, 1
    $region12: #{_device_forward.3} parent=5 // pred_fallthru
      _
    %p271 = scmp.lt.s32.totalorder %s22, 4
    // Predicated region
    $region13: #{_device_forward.3} parent=5 // pred_check
      %p272 = pneg %p271
    $region14: #{_device_forward.3} parent=5 // pred_check_branch
      %274 = sbr.rel (%p272) target = $region16
    $region15: #{_device_forward.3} parent=5 // pred_region
      // Predicated region
      $region17: #{_device_forward.3} parent=15 // pred_check
        %p275 = pneg %p42
      $region18: #{_device_forward.3} parent=15 // pred_check_branch
        %277 = sbr.rel (%p275) target = $region20
      $region19: #{_device_forward.3} parent=15 // pred_region
        %p278 = scmp.lt.s32.totalorder %s22, 3
        %s279 = scalar_select %p278, %s22, 3
        %s280 = smul.addr %s279, 2
        %s281 = smul.addr %s280, 4
        %s282 = scalar_lea.vmem %s1, %s281
      $region20: #{_device_forward.3} parent=15 // pred_fallthru
        _
      // Predicated region
      $region21: #{_device_forward.3} parent=15 // pred_check
        %p283 = pneg %p68
      $region22: #{_device_forward.3} parent=15 // pred_check_branch
        %285 = sbr.rel (%p283) target = $region24
      $region23: #{_device_forward.3} parent=15 // pred_region
        %p286 = scmp.lt.s32.totalorder %s22, 3
        %s287 = scalar_select %p286, %s22, 3
        %s288 = smul.addr %s287, 32
        %s289 = smul.addr %s288, 8
        %s290 = scalar_lea.vmem %s2, %s289
      $region24: #{_device_forward.3} parent=15 // pred_fallthru
        _
      // Predicated region
      $region25: #{_device_forward.3} parent=15 // pred_check
        %p291 = pneg %p94
      $region26: #{_device_forward.3} parent=15 // pred_check_branch
        %293 = sbr.rel (%p291) target = $region28
      $region27: #{_device_forward.3} parent=15 // pred_region
        %p294 = scmp.lt.s32.totalorder %s22, 3
        %s295 = scalar_select %p294, %s22, 3
        %s296 = smul.addr %s295, 2
        %s297 = smul.addr %s296, 4
        %s298 = scalar_lea.vmem %s3, %s297
      $region28: #{_device_forward.3} parent=15 // pred_fallthru
        _
      // Predicated region
      $region29: #{_device_forward.3} parent=15 // pred_check
        %p299 = pneg %p120
      $region30: #{_device_forward.3} parent=15 // pred_check_branch
        %301 = sbr.rel (%p299) target = $region32
      $region31: #{_device_forward.3} parent=15 // pred_region
        %p302 = scmp.lt.s32.totalorder %s22, 3
        %s303 = scalar_select %p302, %s22, 3
        %s304 = smul.addr %s303, 32
        %s305 = smul.addr %s304, 8
        %s306 = scalar_lea.vmem %s4, %s305
      $region32: #{_device_forward.3} parent=15 // pred_fallthru
        _
    $region16: #{_device_forward.3} parent=5 // pred_fallthru
      _
    %p307 = scmp.le.s32.totalorder 1, %s22
    %p308 = scmp.lt.s32.totalorder %s22, 5
    %p309 = pnand %p307, %p308
    %p310 = pneg %p309
    // Predicated region
    $region33: #{_device_forward.3} parent=5 // pred_check
      _
    $region34: #{_device_forward.3} parent=5 // pred_check_branch
      %312 = sbr.rel (%p309) target = $region36
    $region35: #{_device_forward.3} parent=5 // pred_region
      %s313 = ssub.s32 %s22, 1
      %p314 = scmp.lt.s32.totalorder %s27, 3
      %s315 = scalar_select %p314, %s27, 3
      %s316 = smul.addr %s315, 2
      %s317 = smul.addr %s316, 4
      %s318 = scalar_lea.vmem %s1, %s317
      %p319 = pneg %p48
      %p320 = pneg %p45
      %p321 = scmp.lt.s32.totalorder %s27, 3
      %s322 = scalar_select %p321, %s27, 3
      %s323 = smul.addr %s322, 32
      %s324 = smul.addr %s323, 8
      %s325 = scalar_lea.vmem %s2, %s324
      %p326 = pneg %p74
      %p327 = pneg %p71
      %p328 = scmp.lt.s32.totalorder %s27, 3
      %s329 = scalar_select %p328, %s27, 3
      %s330 = smul.addr %s329, 2
      %s331 = smul.addr %s330, 4
      %s332 = scalar_lea.vmem %s3, %s331
      %p333 = pneg %p100
      %p334 = pneg %p97
      %p335 = scmp.lt.s32.totalorder %s27, 3
      %s336 = scalar_select %p335, %s27, 3
      %s337 = smul.addr %s336, 32
      %s338 = smul.addr %s337, 8
      %s339 = scalar_lea.vmem %s4, %s338
      %p340 = pneg %p126
      %p341 = pneg %p123
      %p342 = pneg %p152
      %p343 = pneg %p149
      %p344 = scmp.lt.s32.totalorder %s27, 3
      %s345 = scalar_select %p344, %s27, 3
      %s346 = smul.addr %s345, 2
      %s347 = scalar_lea.vmem %s5, %s346
      %p348 = pneg %p178
      %p349 = pneg %p175
      %p350 = scmp.lt.s32.totalorder %s27, 3
      %s351 = scalar_select %p350, %s27, 3
      %s352 = smul.addr %s351, 2
      %s353 = scalar_lea.vmem %s6, %s352
      %p354 = pneg %p204
      %p355 = pneg %p201
      %p356 = scmp.lt.s32.totalorder %s27, 3
      %s357 = scalar_select %p356, %s27, 3
      %s358 = smul.addr %s357, 2
      %s359 = scalar_lea.vmem %s7, %s358
      %p360 = pneg %p230
      %p361 = pneg %p227
      %p362 = scmp.lt.s32.totalorder %s27, 3
      %s363 = scalar_select %p362, %s27, 3
      %s364 = smul.addr %s363, 2
      %s365 = scalar_lea.vmem %s8, %s364
      %p366 = pneg %p256
      %p367 = pneg %p253
      %p368 = scmp.lt.s32.totalorder %s27, 3
      %s369 = scalar_select %p368, %s27, 3
      %s370 = smul.addr %s369, 2
      %s371 = scalar_lea.vmem %s9, %s370
      %p372 = scmp.lt.s32.totalorder %s27, 3
      %s373 = scalar_select %p372, %s27, 3
      %s374 = smul.addr %s373, 2
      %s375 = smul.addr %s374, 4
      %s376 = scalar_lea.vmem %s1, %s375
      %p377 = scmp.lt.s32.totalorder %s27, 3
      %s378 = scalar_select %p377, %s27, 3
      %s379 = smul.addr %s378, 32
      %s380 = smul.addr %s379, 8
      %s381 = scalar_lea.vmem %s2, %s380
      %p382 = scmp.lt.s32.totalorder %s27, 3
      %s383 = scalar_select %p382, %s27, 3
      %s384 = smul.addr %s383, 2
      %s385 = smul.addr %s384, 4
      %s386 = scalar_lea.vmem %s3, %s385
      %p387 = scmp.lt.s32.totalorder %s27, 3
      %s388 = scalar_select %p387, %s27, 3
      %s389 = smul.addr %s388, 32
      %s390 = smul.addr %s389, 8
      %s391 = scalar_lea.vmem %s4, %s390
      %p392 = scmp.lt.s32.totalorder %s27, 3
      %s393 = scalar_select %p392, %s27, 3
      %s394 = smul.addr %s393, 2
      %s395 = scalar_lea.vmem %s5, %s394
      %p396 = scmp.lt.s32.totalorder %s27, 3
      %s397 = scalar_select %p396, %s27, 3
      %s398 = smul.addr %s397, 2
      %s399 = scalar_lea.vmem %s6, %s398
      %p400 = scmp.lt.s32.totalorder %s27, 3
      %s401 = scalar_select %p400, %s27, 3
      %s402 = smul.addr %s401, 2
      %s403 = scalar_lea.vmem %s7, %s402
      %p404 = scmp.lt.s32.totalorder %s27, 3
      %s405 = scalar_select %p404, %s27, 3
      %s406 = smul.addr %s405, 2
      %s407 = scalar_lea.vmem %s8, %s406
      %p408 = scmp.lt.s32.totalorder %s27, 3
      %s409 = scalar_select %p408, %s27, 3
      %s410 = smul.addr %s409, 2
      %s411 = scalar_lea.vmem %s9, %s410
      %s412 = sld [smem:[#allocation3 + %s27]]
      %s413 = smul.f32 %s412, %s412
      %v414 = vld [vmem:[%s376] sm:$0x77]
      %v415 = vld [vmem:[%s381] sm:$0xff]
      %v416 = vld [vmem:[%s381 + $0x8] sm:$0xff]
      %v417 = vld [vmem:[%s381 + $0x10] sm:$0xff]
      %v418 = vld [vmem:[%s381 + $0x18] sm:$0xff]
      %v419 = vld [vmem:[%s381 + $0x20] sm:$0xff]
      %v420 = vld [vmem:[%s381 + $0x28] sm:$0xff]
      %v421 = vld [vmem:[%s381 + $0x30] sm:$0xff]
      %v422 = vld [vmem:[%s381 + $0x38] sm:$0xff]
      %v423 = vld [vmem:[%s381 + $0x40] sm:$0xff]
      %v424 = vld [vmem:[%s381 + $0x48] sm:$0xff]
      %v425 = vld [vmem:[%s381 + $0x50] sm:$0xff]
      %v426 = vld [vmem:[%s381 + $0x58] sm:$0xff]
      %v427 = vld [vmem:[%s381 + $0x60] sm:$0xff]
      %v428 = vld [vmem:[%s381 + $0x68] sm:$0xff]
      %v429 = vld [vmem:[%s381 + $0x70] sm:$0xff]
      %v430 = vld [vmem:[%s381 + $0x78] sm:$0xff]
      %v431 = vld [vmem:[%s381 + $0x80] sm:$0xff]
      %v432 = vld [vmem:[%s381 + $0x88] sm:$0xff]
      %v433 = vld [vmem:[%s381 + $0x90] sm:$0xff]
      %v434 = vld [vmem:[%s381 + $0x98] sm:$0xff]
      %v435 = vld [vmem:[%s381 + $0xa0] sm:$0xff]
      %v436 = vld [vmem:[%s381 + $0xa8] sm:$0xff]
      %v437 = vld [vmem:[%s381 + $0xb0] sm:$0xff]
      %v438 = vld [vmem:[%s381 + $0xb8] sm:$0xff]
      %v439 = vld [vmem:[%s381 + $0xc0] sm:$0xff]
      %v440 = vld [vmem:[%s381 + $0xc8] sm:$0xff]
      %v441 = vld [vmem:[%s381 + $0xd0] sm:$0xff]
      %v442 = vld [vmem:[%s381 + $0xd8] sm:$0xff]
      %v443 = vld [vmem:[%s381 + $0xe0] sm:$0xff]
      %v444 = vld [vmem:[%s381 + $0xe8] sm:$0xff]
      %v445 = vld [vmem:[%s381 + $0xf0] sm:$0xff]
      %v446 = vld [vmem:[%s381 + $0xf8] sm:$0xff]
      %v447 = vld [vmem:[%s386] sm:$0x77]
      %v448 = vld [vmem:[%s391] sm:$0xff]
      %v449 = vld [vmem:[%s391 + $0x8] sm:$0xff]
      %v450 = vld [vmem:[%s391 + $0x10] sm:$0xff]
      %v451 = vld [vmem:[%s391 + $0x18] sm:$0xff]
      %v452 = vld [vmem:[%s391 + $0x20] sm:$0xff]
      %v453 = vld [vmem:[%s391 + $0x28] sm:$0xff]
      %v454 = vld [vmem:[%s391 + $0x30] sm:$0xff]
      %v455 = vld [vmem:[%s391 + $0x38] sm:$0xff]
      %v456 = vld [vmem:[%s391 + $0x40] sm:$0xff]
      %v457 = vld [vmem:[%s391 + $0x48] sm:$0xff]
      %v458 = vld [vmem:[%s391 + $0x50] sm:$0xff]
      %v459 = vld [vmem:[%s391 + $0x58] sm:$0xff]
      %v460 = vld [vmem:[%s391 + $0x60] sm:$0xff]
      %v461 = vld [vmem:[%s391 + $0x68] sm:$0xff]
      %v462 = vld [vmem:[%s391 + $0x70] sm:$0xff]
      %v463 = vld [vmem:[%s391 + $0x78] sm:$0xff]
      %v464 = vld [vmem:[%s391 + $0x80] sm:$0xff]
      %v465 = vld [vmem:[%s391 + $0x88] sm:$0xff]
      %v466 = vld [vmem:[%s391 + $0x90] sm:$0xff]
      %v467 = vld [vmem:[%s391 + $0x98] sm:$0xff]
      %v468 = vld [vmem:[%s391 + $0xa0] sm:$0xff]
      %v469 = vld [vmem:[%s391 + $0xa8] sm:$0xff]
      %v470 = vld [vmem:[%s391 + $0xb0] sm:$0xff]
      %v471 = vld [vmem:[%s391 + $0xb8] sm:$0xff]
      %v472 = vld [vmem:[%s391 + $0xc0] sm:$0xff]
      %v473 = vld [vmem:[%s391 + $0xc8] sm:$0xff]
      %v474 = vld [vmem:[%s391 + $0xd0] sm:$0xff]
      %v475 = vld [vmem:[%s391 + $0xd8] sm:$0xff]
      %v476 = vld [vmem:[%s391 + $0xe0] sm:$0xff]
      %v477 = vld [vmem:[%s391 + $0xe8] sm:$0xff]
      %v478 = vld [vmem:[%s391 + $0xf0] sm:$0xff]
      %v479 = vld [vmem:[%s391 + $0xf8] sm:$0xff]
      %481 = vset.pattern.permute.xlu0 0
      %482 = vperm.xlu0 %481, %v415
      %v483 = vpop.permute.xlu0 %482
      %486 = vset.pattern.permute.xlu0 0
      %487 = vperm.xlu0 %486, %v416
      %v488 = vpop.permute.xlu0 %487
      %491 = vset.pattern.permute.xlu0 0
      %492 = vperm.xlu0 %491, %v417
      %v493 = vpop.permute.xlu0 %492
      %496 = vset.pattern.permute.xlu0 0
      %497 = vperm.xlu0 %496, %v418
      %v498 = vpop.permute.xlu0 %497
      %501 = vset.pattern.permute.xlu0 0
      %502 = vperm.xlu0 %501, %v419
      %v503 = vpop.permute.xlu0 %502
      %506 = vset.pattern.permute.xlu0 0
      %507 = vperm.xlu0 %506, %v420
      %v508 = vpop.permute.xlu0 %507
      %511 = vset.pattern.permute.xlu0 0
      %512 = vperm.xlu0 %511, %v421
      %v513 = vpop.permute.xlu0 %512
      %516 = vset.pattern.permute.xlu0 0
      %517 = vperm.xlu0 %516, %v422
      %v518 = vpop.permute.xlu0 %517
      %521 = vset.pattern.permute.xlu0 0
      %522 = vperm.xlu0 %521, %v423
      %v523 = vpop.permute.xlu0 %522
      %526 = vset.pattern.permute.xlu0 0
      %527 = vperm.xlu0 %526, %v424
      %v528 = vpop.permute.xlu0 %527
      %531 = vset.pattern.permute.xlu0 0
      %532 = vperm.xlu0 %531, %v425
      %v533 = vpop.permute.xlu0 %532
      %536 = vset.pattern.permute.xlu0 0
      %537 = vperm.xlu0 %536, %v426
      %v538 = vpop.permute.xlu0 %537
      %541 = vset.pattern.permute.xlu0 0
      %542 = vperm.xlu0 %541, %v427
      %v543 = vpop.permute.xlu0 %542
      %546 = vset.pattern.permute.xlu0 0
      %547 = vperm.xlu0 %546, %v428
      %v548 = vpop.permute.xlu0 %547
      %551 = vset.pattern.permute.xlu0 0
      %552 = vperm.xlu0 %551, %v429
      %v553 = vpop.permute.xlu0 %552
      %556 = vset.pattern.permute.xlu0 0
      %557 = vperm.xlu0 %556, %v430
      %v558 = vpop.permute.xlu0 %557
      %561 = vset.pattern.permute.xlu0 0
      %562 = vperm.xlu0 %561, %v431
      %v563 = vpop.permute.xlu0 %562
      %566 = vset.pattern.permute.xlu0 0
      %567 = vperm.xlu0 %566, %v432
      %v568 = vpop.permute.xlu0 %567
      %571 = vset.pattern.permute.xlu0 0
      %572 = vperm.xlu0 %571, %v433
      %v573 = vpop.permute.xlu0 %572
      %576 = vset.pattern.permute.xlu0 0
      %577 = vperm.xlu0 %576, %v434
      %v578 = vpop.permute.xlu0 %577
      %581 = vset.pattern.permute.xlu0 0
      %582 = vperm.xlu0 %581, %v435
      %v583 = vpop.permute.xlu0 %582
      %586 = vset.pattern.permute.xlu0 0
      %587 = vperm.xlu0 %586, %v436
      %v588 = vpop.permute.xlu0 %587
      %591 = vset.pattern.permute.xlu0 0
      %592 = vperm.xlu0 %591, %v437
      %v593 = vpop.permute.xlu0 %592
      %596 = vset.pattern.permute.xlu0 0
      %597 = vperm.xlu0 %596, %v438
      %v598 = vpop.permute.xlu0 %597
      %601 = vset.pattern.permute.xlu0 0
      %602 = vperm.xlu0 %601, %v439
      %v603 = vpop.permute.xlu0 %602
      %606 = vset.pattern.permute.xlu0 0
      %607 = vperm.xlu0 %606, %v440
      %v608 = vpop.permute.xlu0 %607
      %611 = vset.pattern.permute.xlu0 0
      %612 = vperm.xlu0 %611, %v441
      %v613 = vpop.permute.xlu0 %612
      %616 = vset.pattern.permute.xlu0 0
      %617 = vperm.xlu0 %616, %v442
      %v618 = vpop.permute.xlu0 %617
      %621 = vset.pattern.permute.xlu0 0
      %622 = vperm.xlu0 %621, %v443
      %v623 = vpop.permute.xlu0 %622
      %626 = vset.pattern.permute.xlu0 0
      %627 = vperm.xlu0 %626, %v444
      %v628 = vpop.permute.xlu0 %627
      %631 = vset.pattern.permute.xlu0 0
      %632 = vperm.xlu0 %631, %v445
      %v633 = vpop.permute.xlu0 %632
      %636 = vset.pattern.permute.xlu0 0
      %637 = vperm.xlu0 %636, %v446
      %v638 = vpop.permute.xlu0 %637
      %v641 = vlaneseq
      %v642 = vshrl.u32 %v641, 7
      %v643 = vsub.s32 0, %v642
      %v644 = vrot.slane %v447, %v643
      %v645 = vlaneseq
      %v646 = vshrl.u32 %v645, 7
      %v647 = vsub.s32 4, %v646
      %v648 = vrot.slane %v447, %v647
      %v651 = vlaneseq
      %v652 = vshrl.u32 %v651, 7
      %v653 = vsub.s32 0, %v652
      %v654 = vrot.slane %v644, %v653
      %v655 = vlaneseq
      %v656 = vshrl.u32 %v655, 7
      %v657 = vsub.s32 0, %v656
      %v658 = vrot.slane %v648, %v657
      %v659 = vsub.f32 %v483, %v654
      %v660 = vsub.f32 %v483, %v658
      %v661 = vsub.f32 %v488, %v654
      %v662 = vsub.f32 %v488, %v658
      %v663 = vsub.f32 %v493, %v654
      %v664 = vsub.f32 %v493, %v658
      %v665 = vsub.f32 %v498, %v654
      %v666 = vsub.f32 %v498, %v658
      %v667 = vsub.f32 %v503, %v654
      %v668 = vsub.f32 %v503, %v658
      %v669 = vsub.f32 %v508, %v654
      %v670 = vsub.f32 %v508, %v658
      %v671 = vsub.f32 %v513, %v654
      %v672 = vsub.f32 %v513, %v658
      %v673 = vsub.f32 %v518, %v654
      %v674 = vsub.f32 %v518, %v658
      %v675 = vsub.f32 %v523, %v654
      %v676 = vsub.f32 %v523, %v658
      %v677 = vsub.f32 %v528, %v654
      %v678 = vsub.f32 %v528, %v658
      %v679 = vsub.f32 %v533, %v654
      %v680 = vsub.f32 %v533, %v658
      %v681 = vsub.f32 %v538, %v654
      %v682 = vsub.f32 %v538, %v658
      %v683 = vsub.f32 %v543, %v654
      %v684 = vsub.f32 %v543, %v658
      %v685 = vsub.f32 %v548, %v654
      %v686 = vsub.f32 %v548, %v658
      %v687 = vsub.f32 %v553, %v654
      %v688 = vsub.f32 %v553, %v658
      %v689 = vsub.f32 %v558, %v654
      %v690 = vsub.f32 %v558, %v658
      %v691 = vsub.f32 %v563, %v654
      %v692 = vsub.f32 %v563, %v658
      %v693 = vsub.f32 %v568, %v654
      %v694 = vsub.f32 %v568, %v658
      %v695 = vsub.f32 %v573, %v654
      %v696 = vsub.f32 %v573, %v658
      %v697 = vsub.f32 %v578, %v654
      %v698 = vsub.f32 %v578, %v658
      %v699 = vsub.f32 %v583, %v654
      %v700 = vsub.f32 %v583, %v658
      %v701 = vsub.f32 %v588, %v654
      %v702 = vsub.f32 %v588, %v658
      %v703 = vsub.f32 %v593, %v654
      %v704 = vsub.f32 %v593, %v658
      %v705 = vsub.f32 %v598, %v654
      %v706 = vsub.f32 %v598, %v658
      %v707 = vsub.f32 %v603, %v654
      %v708 = vsub.f32 %v603, %v658
      %v709 = vsub.f32 %v608, %v654
      %v710 = vsub.f32 %v608, %v658
      %v711 = vsub.f32 %v613, %v654
      %v712 = vsub.f32 %v613, %v658
      %v713 = vsub.f32 %v618, %v654
      %v714 = vsub.f32 %v618, %v658
      %v715 = vsub.f32 %v623, %v654
      %v716 = vsub.f32 %v623, %v658
      %v717 = vsub.f32 %v628, %v654
      %v718 = vsub.f32 %v628, %v658
      %v719 = vsub.f32 %v633, %v654
      %v720 = vsub.f32 %v633, %v658
      %v721 = vsub.f32 %v638, %v654
      %v722 = vsub.f32 %v638, %v658
      %v723 = vmul.f32 %v659, %v659
      %v724 = vmul.f32 %v660, %v660
      %v725 = vmul.f32 %v661, %v661
      %v726 = vmul.f32 %v662, %v662
      %v727 = vmul.f32 %v663, %v663
      %v728 = vmul.f32 %v664, %v664
      %v729 = vmul.f32 %v665, %v665
      %v730 = vmul.f32 %v666, %v666
      %v731 = vmul.f32 %v667, %v667
      %v732 = vmul.f32 %v668, %v668
      %v733 = vmul.f32 %v669, %v669
      %v734 = vmul.f32 %v670, %v670
      %v735 = vmul.f32 %v671, %v671
      %v736 = vmul.f32 %v672, %v672
      %v737 = vmul.f32 %v673, %v673
      %v738 = vmul.f32 %v674, %v674
      %v739 = vmul.f32 %v675, %v675
      %v740 = vmul.f32 %v676, %v676
      %v741 = vmul.f32 %v677, %v677
      %v742 = vmul.f32 %v678, %v678
      %v743 = vmul.f32 %v679, %v679
      %v744 = vmul.f32 %v680, %v680
      %v745 = vmul.f32 %v681, %v681
      %v746 = vmul.f32 %v682, %v682
      %v747 = vmul.f32 %v683, %v683
      %v748 = vmul.f32 %v684, %v684
      %v749 = vmul.f32 %v685, %v685
      %v750 = vmul.f32 %v686, %v686
      %v751 = vmul.f32 %v687, %v687
      %v752 = vmul.f32 %v688, %v688
      %v753 = vmul.f32 %v689, %v689
      %v754 = vmul.f32 %v690, %v690
      %v755 = vmul.f32 %v691, %v691
      %v756 = vmul.f32 %v692, %v692
      %v757 = vmul.f32 %v693, %v693
      %v758 = vmul.f32 %v694, %v694
      %v759 = vmul.f32 %v695, %v695
      %v760 = vmul.f32 %v696, %v696
      %v761 = vmul.f32 %v697, %v697
      %v762 = vmul.f32 %v698, %v698
      %v763 = vmul.f32 %v699, %v699
      %v764 = vmul.f32 %v700, %v700
      %v765 = vmul.f32 %v701, %v701
      %v766 = vmul.f32 %v702, %v702
      %v767 = vmul.f32 %v703, %v703
      %v768 = vmul.f32 %v704, %v704
      %v769 = vmul.f32 %v705, %v705
      %v770 = vmul.f32 %v706, %v706
      %v771 = vmul.f32 %v707, %v707
      %v772 = vmul.f32 %v708, %v708
      %v773 = vmul.f32 %v709, %v709
      %v774 = vmul.f32 %v710, %v710
      %v775 = vmul.f32 %v711, %v711
      %v776 = vmul.f32 %v712, %v712
      %v777 = vmul.f32 %v713, %v713
      %v778 = vmul.f32 %v714, %v714
      %v779 = vmul.f32 %v715, %v715
      %v780 = vmul.f32 %v716, %v716
      %v781 = vmul.f32 %v717, %v717
      %v782 = vmul.f32 %v718, %v718
      %v783 = vmul.f32 %v719, %v719
      %v784 = vmul.f32 %v720, %v720
      %v785 = vmul.f32 %v721, %v721
      %v786 = vmul.f32 %v722, %v722
      %787 = vset.pattern.permute.xlu0 1
      %788 = vperm.xlu0 %787, %v415
      %v789 = vpop.permute.xlu0 %788
      %791 = vset.pattern.permute.xlu0 1
      %792 = vperm.xlu0 %791, %v416
      %v793 = vpop.permute.xlu0 %792
      %795 = vset.pattern.permute.xlu0 1
      %796 = vperm.xlu0 %795, %v417
      %v797 = vpop.permute.xlu0 %796
      %799 = vset.pattern.permute.xlu0 1
      %800 = vperm.xlu0 %799, %v418
      %v801 = vpop.permute.xlu0 %800
      %803 = vset.pattern.permute.xlu0 1
      %804 = vperm.xlu0 %803, %v419
      %v805 = vpop.permute.xlu0 %804
      %807 = vset.pattern.permute.xlu0 1
      %808 = vperm.xlu0 %807, %v420
      %v809 = vpop.permute.xlu0 %808
      %811 = vset.pattern.permute.xlu0 1
      %812 = vperm.xlu0 %811, %v421
      %v813 = vpop.permute.xlu0 %812
      %815 = vset.pattern.permute.xlu0 1
      %816 = vperm.xlu0 %815, %v422
      %v817 = vpop.permute.xlu0 %816
      %819 = vset.pattern.permute.xlu0 1
      %820 = vperm.xlu0 %819, %v423
      %v821 = vpop.permute.xlu0 %820
      %823 = vset.pattern.permute.xlu0 1
      %824 = vperm.xlu0 %823, %v424
      %v825 = vpop.permute.xlu0 %824
      %827 = vset.pattern.permute.xlu0 1
      %828 = vperm.xlu0 %827, %v425
      %v829 = vpop.permute.xlu0 %828
      %831 = vset.pattern.permute.xlu0 1
      %832 = vperm.xlu0 %831, %v426
      %v833 = vpop.permute.xlu0 %832
      %835 = vset.pattern.permute.xlu0 1
      %836 = vperm.xlu0 %835, %v427
      %v837 = vpop.permute.xlu0 %836
      %839 = vset.pattern.permute.xlu0 1
      %840 = vperm.xlu0 %839, %v428
      %v841 = vpop.permute.xlu0 %840
      %843 = vset.pattern.permute.xlu0 1
      %844 = vperm.xlu0 %843, %v429
      %v845 = vpop.permute.xlu0 %844
      %847 = vset.pattern.permute.xlu0 1
      %848 = vperm.xlu0 %847, %v430
      %v849 = vpop.permute.xlu0 %848
      %851 = vset.pattern.permute.xlu0 1
      %852 = vperm.xlu0 %851, %v431
      %v853 = vpop.permute.xlu0 %852
      %855 = vset.pattern.permute.xlu0 1
      %856 = vperm.xlu0 %855, %v432
      %v857 = vpop.permute.xlu0 %856
      %859 = vset.pattern.permute.xlu0 1
      %860 = vperm.xlu0 %859, %v433
      %v861 = vpop.permute.xlu0 %860
      %863 = vset.pattern.permute.xlu0 1
      %864 = vperm.xlu0 %863, %v434
      %v865 = vpop.permute.xlu0 %864
      %867 = vset.pattern.permute.xlu0 1
      %868 = vperm.xlu0 %867, %v435
      %v869 = vpop.permute.xlu0 %868
      %871 = vset.pattern.permute.xlu0 1
      %872 = vperm.xlu0 %871, %v436
      %v873 = vpop.permute.xlu0 %872
      %875 = vset.pattern.permute.xlu0 1
      %876 = vperm.xlu0 %875, %v437
      %v877 = vpop.permute.xlu0 %876
      %879 = vset.pattern.permute.xlu0 1
      %880 = vperm.xlu0 %879, %v438
      %v881 = vpop.permute.xlu0 %880
      %883 = vset.pattern.permute.xlu0 1
      %884 = vperm.xlu0 %883, %v439
      %v885 = vpop.permute.xlu0 %884
      %887 = vset.pattern.permute.xlu0 1
      %888 = vperm.xlu0 %887, %v440
      %v889 = vpop.permute.xlu0 %888
      %891 = vset.pattern.permute.xlu0 1
      %892 = vperm.xlu0 %891, %v441
      %v893 = vpop.permute.xlu0 %892
      %895 = vset.pattern.permute.xlu0 1
      %896 = vperm.xlu0 %895, %v442
      %v897 = vpop.permute.xlu0 %896
      %899 = vset.pattern.permute.xlu0 1
      %900 = vperm.xlu0 %899, %v443
      %v901 = vpop.permute.xlu0 %900
      %903 = vset.pattern.permute.xlu0 1
      %904 = vperm.xlu0 %903, %v444
      %v905 = vpop.permute.xlu0 %904
      %907 = vset.pattern.permute.xlu0 1
      %908 = vperm.xlu0 %907, %v445
      %v909 = vpop.permute.xlu0 %908
      %911 = vset.pattern.permute.xlu0 1
      %912 = vperm.xlu0 %911, %v446
      %v913 = vpop.permute.xlu0 %912
      %v915 = vlaneseq
      %v916 = vshrl.u32 %v915, 7
      %v917 = vsub.s32 1, %v916
      %v918 = vrot.slane %v447, %v917
      %v919 = vlaneseq
      %v920 = vshrl.u32 %v919, 7
      %v921 = vsub.s32 5, %v920
      %v922 = vrot.slane %v447, %v921
      %v925 = vlaneseq
      %v926 = vshrl.u32 %v925, 7
      %v927 = vsub.s32 1, %v926
      %v928 = vrot.slane %v918, %v927
      %v929 = vlaneseq
      %v930 = vshrl.u32 %v929, 7
      %v931 = vsub.s32 1, %v930
      %v932 = vrot.slane %v922, %v931
      %v933 = vsub.f32 %v789, %v928
      %v934 = vsub.f32 %v789, %v932
      %v935 = vsub.f32 %v793, %v928
      %v936 = vsub.f32 %v793, %v932
      %v937 = vsub.f32 %v797, %v928
      %v938 = vsub.f32 %v797, %v932
      %v939 = vsub.f32 %v801, %v928
      %v940 = vsub.f32 %v801, %v932
      %v941 = vsub.f32 %v805, %v928
      %v942 = vsub.f32 %v805, %v932
      %v943 = vsub.f32 %v809, %v928
      %v944 = vsub.f32 %v809, %v932
      %v945 = vsub.f32 %v813, %v928
      %v946 = vsub.f32 %v813, %v932
      %v947 = vsub.f32 %v817, %v928
      %v948 = vsub.f32 %v817, %v932
      %v949 = vsub.f32 %v821, %v928
      %v950 = vsub.f32 %v821, %v932
      %v951 = vsub.f32 %v825, %v928
      %v952 = vsub.f32 %v825, %v932
      %v953 = vsub.f32 %v829, %v928
      %v954 = vsub.f32 %v829, %v932
      %v955 = vsub.f32 %v833, %v928
      %v956 = vsub.f32 %v833, %v932
      %v957 = vsub.f32 %v837, %v928
      %v958 = vsub.f32 %v837, %v932
      %v959 = vsub.f32 %v841, %v928
      %v960 = vsub.f32 %v841, %v932
      %v961 = vsub.f32 %v845, %v928
      %v962 = vsub.f32 %v845, %v932
      %v963 = vsub.f32 %v849, %v928
      %v964 = vsub.f32 %v849, %v932
      %v965 = vsub.f32 %v853, %v928
      %v966 = vsub.f32 %v853, %v932
      %v967 = vsub.f32 %v857, %v928
      %v968 = vsub.f32 %v857, %v932
      %v969 = vsub.f32 %v861, %v928
      %v970 = vsub.f32 %v861, %v932
      %v971 = vsub.f32 %v865, %v928
      %v972 = vsub.f32 %v865, %v932
      %v973 = vsub.f32 %v869, %v928
      %v974 = vsub.f32 %v869, %v932
      %v975 = vsub.f32 %v873, %v928
      %v976 = vsub.f32 %v873, %v932
      %v977 = vsub.f32 %v877, %v928
      %v978 = vsub.f32 %v877, %v932
      %v979 = vsub.f32 %v881, %v928
      %v980 = vsub.f32 %v881, %v932
      %v981 = vsub.f32 %v885, %v928
      %v982 = vsub.f32 %v885, %v932
      %v983 = vsub.f32 %v889, %v928
      %v984 = vsub.f32 %v889, %v932
      %v985 = vsub.f32 %v893, %v928
      %v986 = vsub.f32 %v893, %v932
      %v987 = vsub.f32 %v897, %v928
      %v988 = vsub.f32 %v897, %v932
      %v989 = vsub.f32 %v901, %v928
      %v990 = vsub.f32 %v901, %v932
      %v991 = vsub.f32 %v905, %v928
      %v992 = vsub.f32 %v905, %v932
      %v993 = vsub.f32 %v909, %v928
      %v994 = vsub.f32 %v909, %v932
      %v995 = vsub.f32 %v913, %v928
      %v996 = vsub.f32 %v913, %v932
      %v997 = vmul.f32 %v933, %v933
      %v998 = vmul.f32 %v934, %v934
      %v999 = vmul.f32 %v935, %v935
      %v1000 = vmul.f32 %v936, %v936
      %v1001 = vmul.f32 %v937, %v937
      %v1002 = vmul.f32 %v938, %v938
      %v1003 = vmul.f32 %v939, %v939
      %v1004 = vmul.f32 %v940, %v940
      %v1005 = vmul.f32 %v941, %v941
      %v1006 = vmul.f32 %v942, %v942
      %v1007 = vmul.f32 %v943, %v943
      %v1008 = vmul.f32 %v944, %v944
      %v1009 = vmul.f32 %v945, %v945
      %v1010 = vmul.f32 %v946, %v946
      %v1011 = vmul.f32 %v947, %v947
      %v1012 = vmul.f32 %v948, %v948
      %v1013 = vmul.f32 %v949, %v949
      %v1014 = vmul.f32 %v950, %v950
      %v1015 = vmul.f32 %v951, %v951
      %v1016 = vmul.f32 %v952, %v952
      %v1017 = vmul.f32 %v953, %v953
      %v1018 = vmul.f32 %v954, %v954
      %v1019 = vmul.f32 %v955, %v955
      %v1020 = vmul.f32 %v956, %v956
      %v1021 = vmul.f32 %v957, %v957
      %v1022 = vmul.f32 %v958, %v958
      %v1023 = vmul.f32 %v959, %v959
      %v1024 = vmul.f32 %v960, %v960
      %v1025 = vmul.f32 %v961, %v961
      %v1026 = vmul.f32 %v962, %v962
      %v1027 = vmul.f32 %v963, %v963
      %v1028 = vmul.f32 %v964, %v964
      %v1029 = vmul.f32 %v965, %v965
      %v1030 = vmul.f32 %v966, %v966
      %v1031 = vmul.f32 %v967, %v967
      %v1032 = vmul.f32 %v968, %v968
      %v1033 = vmul.f32 %v969, %v969
      %v1034 = vmul.f32 %v970, %v970
      %v1035 = vmul.f32 %v971, %v971
      %v1036 = vmul.f32 %v972, %v972
      %v1037 = vmul.f32 %v973, %v973
      %v1038 = vmul.f32 %v974, %v974
      %v1039 = vmul.f32 %v975, %v975
      %v1040 = vmul.f32 %v976, %v976
      %v1041 = vmul.f32 %v977, %v977
      %v1042 = vmul.f32 %v978, %v978
      %v1043 = vmul.f32 %v979, %v979
      %v1044 = vmul.f32 %v980, %v980
      %v1045 = vmul.f32 %v981, %v981
      %v1046 = vmul.f32 %v982, %v982
      %v1047 = vmul.f32 %v983, %v983
      %v1048 = vmul.f32 %v984, %v984
      %v1049 = vmul.f32 %v985, %v985
      %v1050 = vmul.f32 %v986, %v986
      %v1051 = vmul.f32 %v987, %v987
      %v1052 = vmul.f32 %v988, %v988
      %v1053 = vmul.f32 %v989, %v989
      %v1054 = vmul.f32 %v990, %v990
      %v1055 = vmul.f32 %v991, %v991
      %v1056 = vmul.f32 %v992, %v992
      %v1057 = vmul.f32 %v993, %v993
      %v1058 = vmul.f32 %v994, %v994
      %v1059 = vmul.f32 %v995, %v995
      %v1060 = vmul.f32 %v996, %v996
      %v1061 = vadd.f32 %v723, %v997
      %v1062 = vadd.f32 %v724, %v998
      %v1063 = vadd.f32 %v725, %v999
      %v1064 = vadd.f32 %v726, %v1000
      %v1065 = vadd.f32 %v727, %v1001
      %v1066 = vadd.f32 %v728, %v1002
      %v1067 = vadd.f32 %v729, %v1003
      %v1068 = vadd.f32 %v730, %v1004
      %v1069 = vadd.f32 %v731, %v1005
      %v1070 = vadd.f32 %v732, %v1006
      %v1071 = vadd.f32 %v733, %v1007
      %v1072 = vadd.f32 %v734, %v1008
      %v1073 = vadd.f32 %v735, %v1009
      %v1074 = vadd.f32 %v736, %v1010
      %v1075 = vadd.f32 %v737, %v1011
      %v1076 = vadd.f32 %v738, %v1012
      %v1077 = vadd.f32 %v739, %v1013
      %v1078 = vadd.f32 %v740, %v1014
      %v1079 = vadd.f32 %v741, %v1015
      %v1080 = vadd.f32 %v742, %v1016
      %v1081 = vadd.f32 %v743, %v1017
      %v1082 = vadd.f32 %v744, %v1018
      %v1083 = vadd.f32 %v745, %v1019
      %v1084 = vadd.f32 %v746, %v1020
      %v1085 = vadd.f32 %v747, %v1021
      %v1086 = vadd.f32 %v748, %v1022
      %v1087 = vadd.f32 %v749, %v1023
      %v1088 = vadd.f32 %v750, %v1024
      %v1089 = vadd.f32 %v751, %v1025
      %v1090 = vadd.f32 %v752, %v1026
      %v1091 = vadd.f32 %v753, %v1027
      %v1092 = vadd.f32 %v754, %v1028
      %v1093 = vadd.f32 %v755, %v1029
      %v1094 = vadd.f32 %v756, %v1030
      %v1095 = vadd.f32 %v757, %v1031
      %v1096 = vadd.f32 %v758, %v1032
      %v1097 = vadd.f32 %v759, %v1033
      %v1098 = vadd.f32 %v760, %v1034
      %v1099 = vadd.f32 %v761, %v1035
      %v1100 = vadd.f32 %v762, %v1036
      %v1101 = vadd.f32 %v763, %v1037
      %v1102 = vadd.f32 %v764, %v1038
      %v1103 = vadd.f32 %v765, %v1039
      %v1104 = vadd.f32 %v766, %v1040
      %v1105 = vadd.f32 %v767, %v1041
      %v1106 = vadd.f32 %v768, %v1042
      %v1107 = vadd.f32 %v769, %v1043
      %v1108 = vadd.f32 %v770, %v1044
      %v1109 = vadd.f32 %v771, %v1045
      %v1110 = vadd.f32 %v772, %v1046
      %v1111 = vadd.f32 %v773, %v1047
      %v1112 = vadd.f32 %v774, %v1048
      %v1113 = vadd.f32 %v775, %v1049
      %v1114 = vadd.f32 %v776, %v1050
      %v1115 = vadd.f32 %v777, %v1051
      %v1116 = vadd.f32 %v778, %v1052
      %v1117 = vadd.f32 %v779, %v1053
      %v1118 = vadd.f32 %v780, %v1054
      %v1119 = vadd.f32 %v781, %v1055
      %v1120 = vadd.f32 %v782, %v1056
      %v1121 = vadd.f32 %v783, %v1057
      %v1122 = vadd.f32 %v784, %v1058
      %v1123 = vadd.f32 %v785, %v1059
      %v1124 = vadd.f32 %v786, %v1060
      %1125 = vset.pattern.permute.xlu0 2
      %1126 = vperm.xlu0 %1125, %v415
      %v1127 = vpop.permute.xlu0 %1126
      %1129 = vset.pattern.permute.xlu0 2
      %1130 = vperm.xlu0 %1129, %v416
      %v1131 = vpop.permute.xlu0 %1130
      %1133 = vset.pattern.permute.xlu0 2
      %1134 = vperm.xlu0 %1133, %v417
      %v1135 = vpop.permute.xlu0 %1134
      %1137 = vset.pattern.permute.xlu0 2
      %1138 = vperm.xlu0 %1137, %v418
      %v1139 = vpop.permute.xlu0 %1138
      %1141 = vset.pattern.permute.xlu0 2
      %1142 = vperm.xlu0 %1141, %v419
      %v1143 = vpop.permute.xlu0 %1142
      %1145 = vset.pattern.permute.xlu0 2
      %1146 = vperm.xlu0 %1145, %v420
      %v1147 = vpop.permute.xlu0 %1146
      %1149 = vset.pattern.permute.xlu0 2
      %1150 = vperm.xlu0 %1149, %v421
      %v1151 = vpop.permute.xlu0 %1150
      %1153 = vset.pattern.permute.xlu0 2
      %1154 = vperm.xlu0 %1153, %v422
      %v1155 = vpop.permute.xlu0 %1154
      %1157 = vset.pattern.permute.xlu0 2
      %1158 = vperm.xlu0 %1157, %v423
      %v1159 = vpop.permute.xlu0 %1158
      %1161 = vset.pattern.permute.xlu0 2
      %1162 = vperm.xlu0 %1161, %v424
      %v1163 = vpop.permute.xlu0 %1162
      %1165 = vset.pattern.permute.xlu0 2
      %1166 = vperm.xlu0 %1165, %v425
      %v1167 = vpop.permute.xlu0 %1166
      %1169 = vset.pattern.permute.xlu0 2
      %1170 = vperm.xlu0 %1169, %v426
      %v1171 = vpop.permute.xlu0 %1170
      %1173 = vset.pattern.permute.xlu0 2
      %1174 = vperm.xlu0 %1173, %v427
      %v1175 = vpop.permute.xlu0 %1174
      %1177 = vset.pattern.permute.xlu0 2
      %1178 = vperm.xlu0 %1177, %v428
      %v1179 = vpop.permute.xlu0 %1178
      %1181 = vset.pattern.permute.xlu0 2
      %1182 = vperm.xlu0 %1181, %v429
      %v1183 = vpop.permute.xlu0 %1182
      %1185 = vset.pattern.permute.xlu0 2
      %1186 = vperm.xlu0 %1185, %v430
      %v1187 = vpop.permute.xlu0 %1186
      %1189 = vset.pattern.permute.xlu0 2
      %1190 = vperm.xlu0 %1189, %v431
      %v1191 = vpop.permute.xlu0 %1190
      %1193 = vset.pattern.permute.xlu0 2
      %1194 = vperm.xlu0 %1193, %v432
      %v1195 = vpop.permute.xlu0 %1194
      %1197 = vset.pattern.permute.xlu0 2
      %1198 = vperm.xlu0 %1197, %v433
      %v1199 = vpop.permute.xlu0 %1198
      %1201 = vset.pattern.permute.xlu0 2
      %1202 = vperm.xlu0 %1201, %v434
      %v1203 = vpop.permute.xlu0 %1202
      %1205 = vset.pattern.permute.xlu0 2
      %1206 = vperm.xlu0 %1205, %v435
      %v1207 = vpop.permute.xlu0 %1206
      %1209 = vset.pattern.permute.xlu0 2
      %1210 = vperm.xlu0 %1209, %v436
      %v1211 = vpop.permute.xlu0 %1210
      %1213 = vset.pattern.permute.xlu0 2
      %1214 = vperm.xlu0 %1213, %v437
      %v1215 = vpop.permute.xlu0 %1214
      %1217 = vset.pattern.permute.xlu0 2
      %1218 = vperm.xlu0 %1217, %v438
      %v1219 = vpop.permute.xlu0 %1218
      %1221 = vset.pattern.permute.xlu0 2
      %1222 = vperm.xlu0 %1221, %v439
      %v1223 = vpop.permute.xlu0 %1222
      %1225 = vset.pattern.permute.xlu0 2
      %1226 = vperm.xlu0 %1225, %v440
      %v1227 = vpop.permute.xlu0 %1226
      %1229 = vset.pattern.permute.xlu0 2
      %1230 = vperm.xlu0 %1229, %v441
      %v1231 = vpop.permute.xlu0 %1230
      %1233 = vset.pattern.permute.xlu0 2
      %1234 = vperm.xlu0 %1233, %v442
      %v1235 = vpop.permute.xlu0 %1234
      %1237 = vset.pattern.permute.xlu0 2
      %1238 = vperm.xlu0 %1237, %v443
      %v1239 = vpop.permute.xlu0 %1238
      %1241 = vset.pattern.permute.xlu0 2
      %1242 = vperm.xlu0 %1241, %v444
      %v1243 = vpop.permute.xlu0 %1242
      %1245 = vset.pattern.permute.xlu0 2
      %1246 = vperm.xlu0 %1245, %v445
      %v1247 = vpop.permute.xlu0 %1246
      %1249 = vset.pattern.permute.xlu0 2
      %1250 = vperm.xlu0 %1249, %v446
      %v1251 = vpop.permute.xlu0 %1250
      %v1253 = vlaneseq
      %v1254 = vshrl.u32 %v1253, 7
      %v1255 = vsub.s32 2, %v1254
      %v1256 = vrot.slane %v447, %v1255
      %v1257 = vlaneseq
      %v1258 = vshrl.u32 %v1257, 7
      %v1259 = vsub.s32 6, %v1258
      %v1260 = vrot.slane %v447, %v1259
      %v1263 = vlaneseq
      %v1264 = vshrl.u32 %v1263, 7
      %v1265 = vsub.s32 2, %v1264
      %v1266 = vrot.slane %v1256, %v1265
      %v1267 = vlaneseq
      %v1268 = vshrl.u32 %v1267, 7
      %v1269 = vsub.s32 2, %v1268
      %v1270 = vrot.slane %v1260, %v1269
      %v1271 = vsub.f32 %v1127, %v1266
      %v1272 = vsub.f32 %v1127, %v1270
      %v1273 = vsub.f32 %v1131, %v1266
      %v1274 = vsub.f32 %v1131, %v1270
      %v1275 = vsub.f32 %v1135, %v1266
      %v1276 = vsub.f32 %v1135, %v1270
      %v1277 = vsub.f32 %v1139, %v1266
      %v1278 = vsub.f32 %v1139, %v1270
      %v1279 = vsub.f32 %v1143, %v1266
      %v1280 = vsub.f32 %v1143, %v1270
      %v1281 = vsub.f32 %v1147, %v1266
      %v1282 = vsub.f32 %v1147, %v1270
      %v1283 = vsub.f32 %v1151, %v1266
      %v1284 = vsub.f32 %v1151, %v1270
      %v1285 = vsub.f32 %v1155, %v1266
      %v1286 = vsub.f32 %v1155, %v1270
      %v1287 = vsub.f32 %v1159, %v1266
      %v1288 = vsub.f32 %v1159, %v1270
      %v1289 = vsub.f32 %v1163, %v1266
      %v1290 = vsub.f32 %v1163, %v1270
      %v1291 = vsub.f32 %v1167, %v1266
      %v1292 = vsub.f32 %v1167, %v1270
      %v1293 = vsub.f32 %v1171, %v1266
      %v1294 = vsub.f32 %v1171, %v1270
      %v1295 = vsub.f32 %v1175, %v1266
      %v1296 = vsub.f32 %v1175, %v1270
      %v1297 = vsub.f32 %v1179, %v1266
      %v1298 = vsub.f32 %v1179, %v1270
      %v1299 = vsub.f32 %v1183, %v1266
      %v1300 = vsub.f32 %v1183, %v1270
      %v1301 = vsub.f32 %v1187, %v1266
      %v1302 = vsub.f32 %v1187, %v1270
      %v1303 = vsub.f32 %v1191, %v1266
      %v1304 = vsub.f32 %v1191, %v1270
      %v1305 = vsub.f32 %v1195, %v1266
      %v1306 = vsub.f32 %v1195, %v1270
      %v1307 = vsub.f32 %v1199, %v1266
      %v1308 = vsub.f32 %v1199, %v1270
      %v1309 = vsub.f32 %v1203, %v1266
      %v1310 = vsub.f32 %v1203, %v1270
      %v1311 = vsub.f32 %v1207, %v1266
      %v1312 = vsub.f32 %v1207, %v1270
      %v1313 = vsub.f32 %v1211, %v1266
      %v1314 = vsub.f32 %v1211, %v1270
      %v1315 = vsub.f32 %v1215, %v1266
      %v1316 = vsub.f32 %v1215, %v1270
      %v1317 = vsub.f32 %v1219, %v1266
      %v1318 = vsub.f32 %v1219, %v1270
      %v1319 = vsub.f32 %v1223, %v1266
      %v1320 = vsub.f32 %v1223, %v1270
      %v1321 = vsub.f32 %v1227, %v1266
      %v1322 = vsub.f32 %v1227, %v1270
      %v1323 = vsub.f32 %v1231, %v1266
      %v1324 = vsub.f32 %v1231, %v1270
      %v1325 = vsub.f32 %v1235, %v1266
      %v1326 = vsub.f32 %v1235, %v1270
      %v1327 = vsub.f32 %v1239, %v1266
      %v1328 = vsub.f32 %v1239, %v1270
      %v1329 = vsub.f32 %v1243, %v1266
      %v1330 = vsub.f32 %v1243, %v1270
      %v1331 = vsub.f32 %v1247, %v1266
      %v1332 = vsub.f32 %v1247, %v1270
      %v1333 = vsub.f32 %v1251, %v1266
      %v1334 = vsub.f32 %v1251, %v1270
      %v1335 = vmul.f32 %v1271, %v1271
      %v1336 = vmul.f32 %v1272, %v1272
      %v1337 = vmul.f32 %v1273, %v1273
      %v1338 = vmul.f32 %v1274, %v1274
      %v1339 = vmul.f32 %v1275, %v1275
      %v1340 = vmul.f32 %v1276, %v1276
      %v1341 = vmul.f32 %v1277, %v1277
      %v1342 = vmul.f32 %v1278, %v1278
      %v1343 = vmul.f32 %v1279, %v1279
      %v1344 = vmul.f32 %v1280, %v1280
      %v1345 = vmul.f32 %v1281, %v1281
      %v1346 = vmul.f32 %v1282, %v1282
      %v1347 = vmul.f32 %v1283, %v1283
      %v1348 = vmul.f32 %v1284, %v1284
      %v1349 = vmul.f32 %v1285, %v1285
      %v1350 = vmul.f32 %v1286, %v1286
      %v1351 = vmul.f32 %v1287, %v1287
      %v1352 = vmul.f32 %v1288, %v1288
      %v1353 = vmul.f32 %v1289, %v1289
      %v1354 = vmul.f32 %v1290, %v1290
      %v1355 = vmul.f32 %v1291, %v1291
      %v1356 = vmul.f32 %v1292, %v1292
      %v1357 = vmul.f32 %v1293, %v1293
      %v1358 = vmul.f32 %v1294, %v1294
      %v1359 = vmul.f32 %v1295, %v1295
      %v1360 = vmul.f32 %v1296, %v1296
      %v1361 = vmul.f32 %v1297, %v1297
      %v1362 = vmul.f32 %v1298, %v1298
      %v1363 = vmul.f32 %v1299, %v1299
      %v1364 = vmul.f32 %v1300, %v1300
      %v1365 = vmul.f32 %v1301, %v1301
      %v1366 = vmul.f32 %v1302, %v1302
      %v1367 = vmul.f32 %v1303, %v1303
      %v1368 = vmul.f32 %v1304, %v1304
      %v1369 = vmul.f32 %v1305, %v1305
      %v1370 = vmul.f32 %v1306, %v1306
      %v1371 = vmul.f32 %v1307, %v1307
      %v1372 = vmul.f32 %v1308, %v1308
      %v1373 = vmul.f32 %v1309, %v1309
      %v1374 = vmul.f32 %v1310, %v1310
      %v1375 = vmul.f32 %v1311, %v1311
      %v1376 = vmul.f32 %v1312, %v1312
      %v1377 = vmul.f32 %v1313, %v1313
      %v1378 = vmul.f32 %v1314, %v1314
      %v1379 = vmul.f32 %v1315, %v1315
      %v1380 = vmul.f32 %v1316, %v1316
      %v1381 = vmul.f32 %v1317, %v1317
      %v1382 = vmul.f32 %v1318, %v1318
      %v1383 = vmul.f32 %v1319, %v1319
      %v1384 = vmul.f32 %v1320, %v1320
      %v1385 = vmul.f32 %v1321, %v1321
      %v1386 = vmul.f32 %v1322, %v1322
      %v1387 = vmul.f32 %v1323, %v1323
      %v1388 = vmul.f32 %v1324, %v1324
      %v1389 = vmul.f32 %v1325, %v1325
      %v1390 = vmul.f32 %v1326, %v1326
      %v1391 = vmul.f32 %v1327, %v1327
      %v1392 = vmul.f32 %v1328, %v1328
      %v1393 = vmul.f32 %v1329, %v1329
      %v1394 = vmul.f32 %v1330, %v1330
      %v1395 = vmul.f32 %v1331, %v1331
      %v1396 = vmul.f32 %v1332, %v1332
      %v1397 = vmul.f32 %v1333, %v1333
      %v1398 = vmul.f32 %v1334, %v1334
      %v1399 = vadd.f32 %v1061, %v1335
      %v1400 = vadd.f32 %v1062, %v1336
      %v1401 = vadd.f32 %v1063, %v1337
      %v1402 = vadd.f32 %v1064, %v1338
      %v1403 = vadd.f32 %v1065, %v1339
      %v1404 = vadd.f32 %v1066, %v1340
      %v1405 = vadd.f32 %v1067, %v1341
      %v1406 = vadd.f32 %v1068, %v1342
      %v1407 = vadd.f32 %v1069, %v1343
      %v1408 = vadd.f32 %v1070, %v1344
      %v1409 = vadd.f32 %v1071, %v1345
      %v1410 = vadd.f32 %v1072, %v1346
      %v1411 = vadd.f32 %v1073, %v1347
      %v1412 = vadd.f32 %v1074, %v1348
      %v1413 = vadd.f32 %v1075, %v1349
      %v1414 = vadd.f32 %v1076, %v1350
      %v1415 = vadd.f32 %v1077, %v1351
      %v1416 = vadd.f32 %v1078, %v1352
      %v1417 = vadd.f32 %v1079, %v1353
      %v1418 = vadd.f32 %v1080, %v1354
      %v1419 = vadd.f32 %v1081, %v1355
      %v1420 = vadd.f32 %v1082, %v1356
      %v1421 = vadd.f32 %v1083, %v1357
      %v1422 = vadd.f32 %v1084, %v1358
      %v1423 = vadd.f32 %v1085, %v1359
      %v1424 = vadd.f32 %v1086, %v1360
      %v1425 = vadd.f32 %v1087, %v1361
      %v1426 = vadd.f32 %v1088, %v1362
      %v1427 = vadd.f32 %v1089, %v1363
      %v1428 = vadd.f32 %v1090, %v1364
      %v1429 = vadd.f32 %v1091, %v1365
      %v1430 = vadd.f32 %v1092, %v1366
      %v1431 = vadd.f32 %v1093, %v1367
      %v1432 = vadd.f32 %v1094, %v1368
      %v1433 = vadd.f32 %v1095, %v1369
      %v1434 = vadd.f32 %v1096, %v1370
      %v1435 = vadd.f32 %v1097, %v1371
      %v1436 = vadd.f32 %v1098, %v1372
      %v1437 = vadd.f32 %v1099, %v1373
      %v1438 = vadd.f32 %v1100, %v1374
      %v1439 = vadd.f32 %v1101, %v1375
      %v1440 = vadd.f32 %v1102, %v1376
      %v1441 = vadd.f32 %v1103, %v1377
      %v1442 = vadd.f32 %v1104, %v1378
      %v1443 = vadd.f32 %v1105, %v1379
      %v1444 = vadd.f32 %v1106, %v1380
      %v1445 = vadd.f32 %v1107, %v1381
      %v1446 = vadd.f32 %v1108, %v1382
      %v1447 = vadd.f32 %v1109, %v1383
      %v1448 = vadd.f32 %v1110, %v1384
      %v1449 = vadd.f32 %v1111, %v1385
      %v1450 = vadd.f32 %v1112, %v1386
      %v1451 = vadd.f32 %v1113, %v1387
      %v1452 = vadd.f32 %v1114, %v1388
      %v1453 = vadd.f32 %v1115, %v1389
      %v1454 = vadd.f32 %v1116, %v1390
      %v1455 = vadd.f32 %v1117, %v1391
      %v1456 = vadd.f32 %v1118, %v1392
      %v1457 = vadd.f32 %v1119, %v1393
      %v1458 = vadd.f32 %v1120, %v1394
      %v1459 = vadd.f32 %v1121, %v1395
      %v1460 = vadd.f32 %v1122, %v1396
      %v1461 = vadd.f32 %v1123, %v1397
      %v1462 = vadd.f32 %v1124, %v1398
      %v1463 = vstv %s413
      %vm1464 = vcmp.lt.f32.partialorder %v1399, %v1463
      %vm1465 = vcmp.lt.f32.partialorder %v1400, %v1463
      %vm1466 = vcmp.lt.f32.partialorder %v1401, %v1463
      %vm1467 = vcmp.lt.f32.partialorder %v1402, %v1463
      %vm1468 = vcmp.lt.f32.partialorder %v1403, %v1463
      %vm1469 = vcmp.lt.f32.partialorder %v1404, %v1463
      %vm1470 = vcmp.lt.f32.partialorder %v1405, %v1463
      %vm1471 = vcmp.lt.f32.partialorder %v1406, %v1463
      %vm1472 = vcmp.lt.f32.partialorder %v1407, %v1463
      %vm1473 = vcmp.lt.f32.partialorder %v1408, %v1463
      %vm1474 = vcmp.lt.f32.partialorder %v1409, %v1463
      %vm1475 = vcmp.lt.f32.partialorder %v1410, %v1463
      %vm1476 = vcmp.lt.f32.partialorder %v1411, %v1463
      %vm1477 = vcmp.lt.f32.partialorder %v1412, %v1463
      %vm1478 = vcmp.lt.f32.partialorder %v1413, %v1463
      %vm1479 = vcmp.lt.f32.partialorder %v1414, %v1463
      %vm1480 = vcmp.lt.f32.partialorder %v1415, %v1463
      %vm1481 = vcmp.lt.f32.partialorder %v1416, %v1463
      %vm1482 = vcmp.lt.f32.partialorder %v1417, %v1463
      %vm1483 = vcmp.lt.f32.partialorder %v1418, %v1463
      %vm1484 = vcmp.lt.f32.partialorder %v1419, %v1463
      %vm1485 = vcmp.lt.f32.partialorder %v1420, %v1463
      %vm1486 = vcmp.lt.f32.partialorder %v1421, %v1463
      %vm1487 = vcmp.lt.f32.partialorder %v1422, %v1463
      %vm1488 = vcmp.lt.f32.partialorder %v1423, %v1463
      %vm1489 = vcmp.lt.f32.partialorder %v1424, %v1463
      %vm1490 = vcmp.lt.f32.partialorder %v1425, %v1463
      %vm1491 = vcmp.lt.f32.partialorder %v1426, %v1463
      %vm1492 = vcmp.lt.f32.partialorder %v1427, %v1463
      %vm1493 = vcmp.lt.f32.partialorder %v1428, %v1463
      %vm1494 = vcmp.lt.f32.partialorder %v1429, %v1463
      %vm1495 = vcmp.lt.f32.partialorder %v1430, %v1463
      %vm1496 = vcmp.lt.f32.partialorder %v1431, %v1463
      %vm1497 = vcmp.lt.f32.partialorder %v1432, %v1463
      %vm1498 = vcmp.lt.f32.partialorder %v1433, %v1463
      %vm1499 = vcmp.lt.f32.partialorder %v1434, %v1463
      %vm1500 = vcmp.lt.f32.partialorder %v1435, %v1463
      %vm1501 = vcmp.lt.f32.partialorder %v1436, %v1463
      %vm1502 = vcmp.lt.f32.partialorder %v1437, %v1463
      %vm1503 = vcmp.lt.f32.partialorder %v1438, %v1463
      %vm1504 = vcmp.lt.f32.partialorder %v1439, %v1463
      %vm1505 = vcmp.lt.f32.partialorder %v1440, %v1463
      %vm1506 = vcmp.lt.f32.partialorder %v1441, %v1463
      %vm1507 = vcmp.lt.f32.partialorder %v1442, %v1463
      %vm1508 = vcmp.lt.f32.partialorder %v1443, %v1463
      %vm1509 = vcmp.lt.f32.partialorder %v1444, %v1463
      %vm1510 = vcmp.lt.f32.partialorder %v1445, %v1463
      %vm1511 = vcmp.lt.f32.partialorder %v1446, %v1463
      %vm1512 = vcmp.lt.f32.partialorder %v1447, %v1463
      %vm1513 = vcmp.lt.f32.partialorder %v1448, %v1463
      %vm1514 = vcmp.lt.f32.partialorder %v1449, %v1463
      %vm1515 = vcmp.lt.f32.partialorder %v1450, %v1463
      %vm1516 = vcmp.lt.f32.partialorder %v1451, %v1463
      %vm1517 = vcmp.lt.f32.partialorder %v1452, %v1463
      %vm1518 = vcmp.lt.f32.partialorder %v1453, %v1463
      %vm1519 = vcmp.lt.f32.partialorder %v1454, %v1463
      %vm1520 = vcmp.lt.f32.partialorder %v1455, %v1463
      %vm1521 = vcmp.lt.f32.partialorder %v1456, %v1463
      %vm1522 = vcmp.lt.f32.partialorder %v1457, %v1463
      %vm1523 = vcmp.lt.f32.partialorder %v1458, %v1463
      %vm1524 = vcmp.lt.f32.partialorder %v1459, %v1463
      %vm1525 = vcmp.lt.f32.partialorder %v1460, %v1463
      %vm1526 = vcmp.lt.f32.partialorder %v1461, %v1463
      %vm1527 = vcmp.lt.f32.partialorder %v1462, %v1463
      %v1528 = vsel %vm1464, 1, 0
      %v1529 = vsel %vm1465, 1, 0
      %v1530 = vsel %vm1466, 1, 0
      %v1531 = vsel %vm1467, 1, 0
      %v1532 = vsel %vm1468, 1, 0
      %v1533 = vsel %vm1469, 1, 0
      %v1534 = vsel %vm1470, 1, 0
      %v1535 = vsel %vm1471, 1, 0
      %v1536 = vsel %vm1472, 1, 0
      %v1537 = vsel %vm1473, 1, 0
      %v1538 = vsel %vm1474, 1, 0
      %v1539 = vsel %vm1475, 1, 0
      %v1540 = vsel %vm1476, 1, 0
      %v1541 = vsel %vm1477, 1, 0
      %v1542 = vsel %vm1478, 1, 0
      %v1543 = vsel %vm1479, 1, 0
      %v1544 = vsel %vm1480, 1, 0
      %v1545 = vsel %vm1481, 1, 0
      %v1546 = vsel %vm1482, 1, 0
      %v1547 = vsel %vm1483, 1, 0
      %v1548 = vsel %vm1484, 1, 0
      %v1549 = vsel %vm1485, 1, 0
      %v1550 = vsel %vm1486, 1, 0
      %v1551 = vsel %vm1487, 1, 0
      %v1552 = vsel %vm1488, 1, 0
      %v1553 = vsel %vm1489, 1, 0
      %v1554 = vsel %vm1490, 1, 0
      %v1555 = vsel %vm1491, 1, 0
      %v1556 = vsel %vm1492, 1, 0
      %v1557 = vsel %vm1493, 1, 0
      %v1558 = vsel %vm1494, 1, 0
      %v1559 = vsel %vm1495, 1, 0
      %v1560 = vsel %vm1496, 1, 0
      %v1561 = vsel %vm1497, 1, 0
      %v1562 = vsel %vm1498, 1, 0
      %v1563 = vsel %vm1499, 1, 0
      %v1564 = vsel %vm1500, 1, 0
      %v1565 = vsel %vm1501, 1, 0
      %v1566 = vsel %vm1502, 1, 0
      %v1567 = vsel %vm1503, 1, 0
      %v1568 = vsel %vm1504, 1, 0
      %v1569 = vsel %vm1505, 1, 0
      %v1570 = vsel %vm1506, 1, 0
      %v1571 = vsel %vm1507, 1, 0
      %v1572 = vsel %vm1508, 1, 0
      %v1573 = vsel %vm1509, 1, 0
      %v1574 = vsel %vm1510, 1, 0
      %v1575 = vsel %vm1511, 1, 0
      %v1576 = vsel %vm1512, 1, 0
      %v1577 = vsel %vm1513, 1, 0
      %v1578 = vsel %vm1514, 1, 0
      %v1579 = vsel %vm1515, 1, 0
      %v1580 = vsel %vm1516, 1, 0
      %v1581 = vsel %vm1517, 1, 0
      %v1582 = vsel %vm1518, 1, 0
      %v1583 = vsel %vm1519, 1, 0
      %v1584 = vsel %vm1520, 1, 0
      %v1585 = vsel %vm1521, 1, 0
      %v1586 = vsel %vm1522, 1, 0
      %v1587 = vsel %vm1523, 1, 0
      %v1588 = vsel %vm1524, 1, 0
      %v1589 = vsel %vm1525, 1, 0
      %v1590 = vsel %vm1526, 1, 0
      %v1591 = vsel %vm1527, 1, 0
      %v1592 = vcvt.s32.f32 %v1528
      %v1593 = vcvt.s32.f32 %v1529
      %v1594 = vcvt.s32.f32 %v1530
      %v1595 = vcvt.s32.f32 %v1531
      %v1596 = vcvt.s32.f32 %v1532
      %v1597 = vcvt.s32.f32 %v1533
      %v1598 = vcvt.s32.f32 %v1534
      %v1599 = vcvt.s32.f32 %v1535
      %v1600 = vcvt.s32.f32 %v1536
      %v1601 = vcvt.s32.f32 %v1537
      %v1602 = vcvt.s32.f32 %v1538
      %v1603 = vcvt.s32.f32 %v1539
      %v1604 = vcvt.s32.f32 %v1540
      %v1605 = vcvt.s32.f32 %v1541
      %v1606 = vcvt.s32.f32 %v1542
      %v1607 = vcvt.s32.f32 %v1543
      %v1608 = vcvt.s32.f32 %v1544
      %v1609 = vcvt.s32.f32 %v1545
      %v1610 = vcvt.s32.f32 %v1546
      %v1611 = vcvt.s32.f32 %v1547
      %v1612 = vcvt.s32.f32 %v1548
      %v1613 = vcvt.s32.f32 %v1549
      %v1614 = vcvt.s32.f32 %v1550
      %v1615 = vcvt.s32.f32 %v1551
      %v1616 = vcvt.s32.f32 %v1552
      %v1617 = vcvt.s32.f32 %v1553
      %v1618 = vcvt.s32.f32 %v1554
      %v1619 = vcvt.s32.f32 %v1555
      %v1620 = vcvt.s32.f32 %v1556
      %v1621 = vcvt.s32.f32 %v1557
      %v1622 = vcvt.s32.f32 %v1558
      %v1623 = vcvt.s32.f32 %v1559
      %v1624 = vcvt.s32.f32 %v1560
      %v1625 = vcvt.s32.f32 %v1561
      %v1626 = vcvt.s32.f32 %v1562
      %v1627 = vcvt.s32.f32 %v1563
      %v1628 = vcvt.s32.f32 %v1564
      %v1629 = vcvt.s32.f32 %v1565
      %v1630 = vcvt.s32.f32 %v1566
      %v1631 = vcvt.s32.f32 %v1567
      %v1632 = vcvt.s32.f32 %v1568
      %v1633 = vcvt.s32.f32 %v1569
      %v1634 = vcvt.s32.f32 %v1570
      %v1635 = vcvt.s32.f32 %v1571
      %v1636 = vcvt.s32.f32 %v1572
      %v1637 = vcvt.s32.f32 %v1573
      %v1638 = vcvt.s32.f32 %v1574
      %v1639 = vcvt.s32.f32 %v1575
      %v1640 = vcvt.s32.f32 %v1576
      %v1641 = vcvt.s32.f32 %v1577
      %v1642 = vcvt.s32.f32 %v1578
      %v1643 = vcvt.s32.f32 %v1579
      %v1644 = vcvt.s32.f32 %v1580
      %v1645 = vcvt.s32.f32 %v1581
      %v1646 = vcvt.s32.f32 %v1582
      %v1647 = vcvt.s32.f32 %v1583
      %v1648 = vcvt.s32.f32 %v1584
      %v1649 = vcvt.s32.f32 %v1585
      %v1650 = vcvt.s32.f32 %v1586
      %v1651 = vcvt.s32.f32 %v1587
      %v1652 = vcvt.s32.f32 %v1588
      %v1653 = vcvt.s32.f32 %v1589
      %v1654 = vcvt.s32.f32 %v1590
      %v1655 = vcvt.s32.f32 %v1591
      %v1656 = vlaneseq
      %v1657 = vshrl.u32 %v1656, 7
      %v1658 = vadd.s32 %v1657, 8
      %v1659 = vadd.s32 %v1657, 16
      %v1660 = vadd.s32 %v1657, 24
      %v1661 = vadd.s32 %v1657, 32
      %v1662 = vadd.s32 %v1657, 40
      %v1663 = vadd.s32 %v1657, 48
      %v1664 = vadd.s32 %v1657, 56
      %v1665 = vadd.s32 %v1657, 64
      %v1666 = vadd.s32 %v1657, 72
      %v1667 = vadd.s32 %v1657, 80
      %v1668 = vadd.s32 %v1657, 88
      %v1669 = vadd.s32 %v1657, 96
      %v1670 = vadd.s32 %v1657, 104
      %v1671 = vadd.s32 %v1657, 112
      %v1672 = vadd.s32 %v1657, 120
      %v1673 = vadd.s32 %v1657, 128
      %v1674 = vadd.s32 %v1657, 136
      %v1675 = vadd.s32 %v1657, 144
      %v1676 = vadd.s32 %v1657, 152
      %v1677 = vadd.s32 %v1657, 160
      %v1678 = vadd.s32 %v1657, 168
      %v1679 = vadd.s32 %v1657, 176
      %v1680 = vadd.s32 %v1657, 184
      %v1681 = vadd.s32 %v1657, 192
      %v1682 = vadd.s32 %v1657, 200
      %v1683 = vadd.s32 %v1657, 208
      %v1684 = vadd.s32 %v1657, 216
      %v1685 = vadd.s32 %v1657, 224
      %v1686 = vadd.s32 %v1657, 232
      %v1687 = vadd.s32 %v1657, 240
      %v1688 = vadd.s32 %v1657, 248
      %v1689 = vlaneseq
      %v1690 = vand.u32 %v1689, 127
      %v1691 = vadd.s32 %v1690, 128
      %vm1692 = vcmp.gt.s32.totalorder %v1690, %v1657
      %vm1693 = vcmp.gt.s32.totalorder %v1691, %v1657
      %vm1694 = vcmp.gt.s32.totalorder %v1690, %v1658
      %vm1695 = vcmp.gt.s32.totalorder %v1691, %v1658
      %vm1696 = vcmp.gt.s32.totalorder %v1690, %v1659
      %vm1697 = vcmp.gt.s32.totalorder %v1691, %v1659
      %vm1698 = vcmp.gt.s32.totalorder %v1690, %v1660
      %vm1699 = vcmp.gt.s32.totalorder %v1691, %v1660
      %vm1700 = vcmp.gt.s32.totalorder %v1690, %v1661
      %vm1701 = vcmp.gt.s32.totalorder %v1691, %v1661
      %vm1702 = vcmp.gt.s32.totalorder %v1690, %v1662
      %vm1703 = vcmp.gt.s32.totalorder %v1691, %v1662
      %vm1704 = vcmp.gt.s32.totalorder %v1690, %v1663
      %vm1705 = vcmp.gt.s32.totalorder %v1691, %v1663
      %vm1706 = vcmp.gt.s32.totalorder %v1690, %v1664
      %vm1707 = vcmp.gt.s32.totalorder %v1691, %v1664
      %vm1708 = vcmp.gt.s32.totalorder %v1690, %v1665
      %vm1709 = vcmp.gt.s32.totalorder %v1691, %v1665
      %vm1710 = vcmp.gt.s32.totalorder %v1690, %v1666
      %vm1711 = vcmp.gt.s32.totalorder %v1691, %v1666
      %vm1712 = vcmp.gt.s32.totalorder %v1690, %v1667
      %vm1713 = vcmp.gt.s32.totalorder %v1691, %v1667
      %vm1714 = vcmp.gt.s32.totalorder %v1690, %v1668
      %vm1715 = vcmp.gt.s32.totalorder %v1691, %v1668
      %vm1716 = vcmp.gt.s32.totalorder %v1690, %v1669
      %vm1717 = vcmp.gt.s32.totalorder %v1691, %v1669
      %vm1718 = vcmp.gt.s32.totalorder %v1690, %v1670
      %vm1719 = vcmp.gt.s32.totalorder %v1691, %v1670
      %vm1720 = vcmp.gt.s32.totalorder %v1690, %v1671
      %vm1721 = vcmp.gt.s32.totalorder %v1691, %v1671
      %vm1722 = vcmp.gt.s32.totalorder %v1690, %v1672
      %vm1723 = vcmp.gt.s32.totalorder %v1691, %v1672
      %vm1724 = vcmp.gt.s32.totalorder %v1690, %v1673
      %vm1725 = vcmp.gt.s32.totalorder %v1691, %v1673
      %vm1726 = vcmp.gt.s32.totalorder %v1690, %v1674
      %vm1727 = vcmp.gt.s32.totalorder %v1691, %v1674
      %vm1728 = vcmp.gt.s32.totalorder %v1690, %v1675
      %vm1729 = vcmp.gt.s32.totalorder %v1691, %v1675
      %vm1730 = vcmp.gt.s32.totalorder %v1690, %v1676
      %vm1731 = vcmp.gt.s32.totalorder %v1691, %v1676
      %vm1732 = vcmp.gt.s32.totalorder %v1690, %v1677
      %vm1733 = vcmp.gt.s32.totalorder %v1691, %v1677
      %vm1734 = vcmp.gt.s32.totalorder %v1690, %v1678
      %vm1735 = vcmp.gt.s32.totalorder %v1691, %v1678
      %vm1736 = vcmp.gt.s32.totalorder %v1690, %v1679
      %vm1737 = vcmp.gt.s32.totalorder %v1691, %v1679
      %vm1738 = vcmp.gt.s32.totalorder %v1690, %v1680
      %vm1739 = vcmp.gt.s32.totalorder %v1691, %v1680
      %vm1740 = vcmp.gt.s32.totalorder %v1690, %v1681
      %vm1741 = vcmp.gt.s32.totalorder %v1691, %v1681
      %vm1742 = vcmp.gt.s32.totalorder %v1690, %v1682
      %vm1743 = vcmp.gt.s32.totalorder %v1691, %v1682
      %vm1744 = vcmp.gt.s32.totalorder %v1690, %v1683
      %vm1745 = vcmp.gt.s32.totalorder %v1691, %v1683
      %vm1746 = vcmp.gt.s32.totalorder %v1690, %v1684
      %vm1747 = vcmp.gt.s32.totalorder %v1691, %v1684
      %vm1748 = vcmp.gt.s32.totalorder %v1690, %v1685
      %vm1749 = vcmp.gt.s32.totalorder %v1691, %v1685
      %vm1750 = vcmp.gt.s32.totalorder %v1690, %v1686
      %vm1751 = vcmp.gt.s32.totalorder %v1691, %v1686
      %vm1752 = vcmp.gt.s32.totalorder %v1690, %v1687
      %vm1753 = vcmp.gt.s32.totalorder %v1691, %v1687
      %vm1754 = vcmp.gt.s32.totalorder %v1690, %v1688
      %vm1755 = vcmp.gt.s32.totalorder %v1691, %v1688
      %v1756 = vsel %vm1692, 1, 0
      %v1757 = vsel %vm1693, 1, 0
      %v1758 = vsel %vm1694, 1, 0
      %v1759 = vsel %vm1695, 1, 0
      %v1760 = vsel %vm1696, 1, 0
      %v1761 = vsel %vm1697, 1, 0
      %v1762 = vsel %vm1698, 1, 0
      %v1763 = vsel %vm1699, 1, 0
      %v1764 = vsel %vm1700, 1, 0
      %v1765 = vsel %vm1701, 1, 0
      %v1766 = vsel %vm1702, 1, 0
      %v1767 = vsel %vm1703, 1, 0
      %v1768 = vsel %vm1704, 1, 0
      %v1769 = vsel %vm1705, 1, 0
      %v1770 = vsel %vm1706, 1, 0
      %v1771 = vsel %vm1707, 1, 0
      %v1772 = vsel %vm1708, 1, 0
      %v1773 = vsel %vm1709, 1, 0
      %v1774 = vsel %vm1710, 1, 0
      %v1775 = vsel %vm1711, 1, 0
      %v1776 = vsel %vm1712, 1, 0
      %v1777 = vsel %vm1713, 1, 0
      %v1778 = vsel %vm1714, 1, 0
      %v1779 = vsel %vm1715, 1, 0
      %v1780 = vsel %vm1716, 1, 0
      %v1781 = vsel %vm1717, 1, 0
      %v1782 = vsel %vm1718, 1, 0
      %v1783 = vsel %vm1719, 1, 0
      %v1784 = vsel %vm1720, 1, 0
      %v1785 = vsel %vm1721, 1, 0
      %v1786 = vsel %vm1722, 1, 0
      %v1787 = vsel %vm1723, 1, 0
      %v1788 = vsel %vm1724, 1, 0
      %v1789 = vsel %vm1725, 1, 0
      %v1790 = vsel %vm1726, 1, 0
      %v1791 = vsel %vm1727, 1, 0
      %v1792 = vsel %vm1728, 1, 0
      %v1793 = vsel %vm1729, 1, 0
      %v1794 = vsel %vm1730, 1, 0
      %v1795 = vsel %vm1731, 1, 0
      %v1796 = vsel %vm1732, 1, 0
      %v1797 = vsel %vm1733, 1, 0
      %v1798 = vsel %vm1734, 1, 0
      %v1799 = vsel %vm1735, 1, 0
      %v1800 = vsel %vm1736, 1, 0
      %v1801 = vsel %vm1737, 1, 0
      %v1802 = vsel %vm1738, 1, 0
      %v1803 = vsel %vm1739, 1, 0
      %v1804 = vsel %vm1740, 1, 0
      %v1805 = vsel %vm1741, 1, 0
      %v1806 = vsel %vm1742, 1, 0
      %v1807 = vsel %vm1743, 1, 0
      %v1808 = vsel %vm1744, 1, 0
      %v1809 = vsel %vm1745, 1, 0
      %v1810 = vsel %vm1746, 1, 0
      %v1811 = vsel %vm1747, 1, 0
      %v1812 = vsel %vm1748, 1, 0
      %v1813 = vsel %vm1749, 1, 0
      %v1814 = vsel %vm1750, 1, 0
      %v1815 = vsel %vm1751, 1, 0
      %v1816 = vsel %vm1752, 1, 0
      %v1817 = vsel %vm1753, 1, 0
      %v1818 = vsel %vm1754, 1, 0
      %v1819 = vsel %vm1755, 1, 0
      %v1820 = vcvt.s32.f32 %v1756
      %v1821 = vcvt.s32.f32 %v1757
      %v1822 = vcvt.s32.f32 %v1758
      %v1823 = vcvt.s32.f32 %v1759
      %v1824 = vcvt.s32.f32 %v1760
      %v1825 = vcvt.s32.f32 %v1761
      %v1826 = vcvt.s32.f32 %v1762
      %v1827 = vcvt.s32.f32 %v1763
      %v1828 = vcvt.s32.f32 %v1764
      %v1829 = vcvt.s32.f32 %v1765
      %v1830 = vcvt.s32.f32 %v1766
      %v1831 = vcvt.s32.f32 %v1767
      %v1832 = vcvt.s32.f32 %v1768
      %v1833 = vcvt.s32.f32 %v1769
      %v1834 = vcvt.s32.f32 %v1770
      %v1835 = vcvt.s32.f32 %v1771
      %v1836 = vcvt.s32.f32 %v1772
      %v1837 = vcvt.s32.f32 %v1773
      %v1838 = vcvt.s32.f32 %v1774
      %v1839 = vcvt.s32.f32 %v1775
      %v1840 = vcvt.s32.f32 %v1776
      %v1841 = vcvt.s32.f32 %v1777
      %v1842 = vcvt.s32.f32 %v1778
      %v1843 = vcvt.s32.f32 %v1779
      %v1844 = vcvt.s32.f32 %v1780
      %v1845 = vcvt.s32.f32 %v1781
      %v1846 = vcvt.s32.f32 %v1782
      %v1847 = vcvt.s32.f32 %v1783
      %v1848 = vcvt.s32.f32 %v1784
      %v1849 = vcvt.s32.f32 %v1785
      %v1850 = vcvt.s32.f32 %v1786
      %v1851 = vcvt.s32.f32 %v1787
      %v1852 = vcvt.s32.f32 %v1788
      %v1853 = vcvt.s32.f32 %v1789
      %v1854 = vcvt.s32.f32 %v1790
      %v1855 = vcvt.s32.f32 %v1791
      %v1856 = vcvt.s32.f32 %v1792
      %v1857 = vcvt.s32.f32 %v1793
      %v1858 = vcvt.s32.f32 %v1794
      %v1859 = vcvt.s32.f32 %v1795
      %v1860 = vcvt.s32.f32 %v1796
      %v1861 = vcvt.s32.f32 %v1797
      %v1862 = vcvt.s32.f32 %v1798
      %v1863 = vcvt.s32.f32 %v1799
      %v1864 = vcvt.s32.f32 %v1800
      %v1865 = vcvt.s32.f32 %v1801
      %v1866 = vcvt.s32.f32 %v1802
      %v1867 = vcvt.s32.f32 %v1803
      %v1868 = vcvt.s32.f32 %v1804
      %v1869 = vcvt.s32.f32 %v1805
      %v1870 = vcvt.s32.f32 %v1806
      %v1871 = vcvt.s32.f32 %v1807
      %v1872 = vcvt.s32.f32 %v1808
      %v1873 = vcvt.s32.f32 %v1809
      %v1874 = vcvt.s32.f32 %v1810
      %v1875 = vcvt.s32.f32 %v1811
      %v1876 = vcvt.s32.f32 %v1812
      %v1877 = vcvt.s32.f32 %v1813
      %v1878 = vcvt.s32.f32 %v1814
      %v1879 = vcvt.s32.f32 %v1815
      %v1880 = vcvt.s32.f32 %v1816
      %v1881 = vcvt.s32.f32 %v1817
      %v1882 = vcvt.s32.f32 %v1818
      %v1883 = vcvt.s32.f32 %v1819
      %v1884 = vmul.f32 %v1592, %v1820
      %v1885 = vmul.f32 %v1593, %v1821
      %v1886 = vmul.f32 %v1594, %v1822
      %v1887 = vmul.f32 %v1595, %v1823
      %v1888 = vmul.f32 %v1596, %v1824
      %v1889 = vmul.f32 %v1597, %v1825
      %v1890 = vmul.f32 %v1598, %v1826
      %v1891 = vmul.f32 %v1599, %v1827
      %v1892 = vmul.f32 %v1600, %v1828
      %v1893 = vmul.f32 %v1601, %v1829
      %v1894 = vmul.f32 %v1602, %v1830
      %v1895 = vmul.f32 %v1603, %v1831
      %v1896 = vmul.f32 %v1604, %v1832
      %v1897 = vmul.f32 %v1605, %v1833
      %v1898 = vmul.f32 %v1606, %v1834
      %v1899 = vmul.f32 %v1607, %v1835
      %v1900 = vmul.f32 %v1608, %v1836
      %v1901 = vmul.f32 %v1609, %v1837
      %v1902 = vmul.f32 %v1610, %v1838
      %v1903 = vmul.f32 %v1611, %v1839
      %v1904 = vmul.f32 %v1612, %v1840
      %v1905 = vmul.f32 %v1613, %v1841
      %v1906 = vmul.f32 %v1614, %v1842
      %v1907 = vmul.f32 %v1615, %v1843
      %v1908 = vmul.f32 %v1616, %v1844
      %v1909 = vmul.f32 %v1617, %v1845
      %v1910 = vmul.f32 %v1618, %v1846
      %v1911 = vmul.f32 %v1619, %v1847
      %v1912 = vmul.f32 %v1620, %v1848
      %v1913 = vmul.f32 %v1621, %v1849
      %v1914 = vmul.f32 %v1622, %v1850
      %v1915 = vmul.f32 %v1623, %v1851
      %v1916 = vmul.f32 %v1624, %v1852
      %v1917 = vmul.f32 %v1625, %v1853
      %v1918 = vmul.f32 %v1626, %v1854
      %v1919 = vmul.f32 %v1627, %v1855
      %v1920 = vmul.f32 %v1628, %v1856
      %v1921 = vmul.f32 %v1629, %v1857
      %v1922 = vmul.f32 %v1630, %v1858
      %v1923 = vmul.f32 %v1631, %v1859
      %v1924 = vmul.f32 %v1632, %v1860
      %v1925 = vmul.f32 %v1633, %v1861
      %v1926 = vmul.f32 %v1634, %v1862
      %v1927 = vmul.f32 %v1635, %v1863
      %v1928 = vmul.f32 %v1636, %v1864
      %v1929 = vmul.f32 %v1637, %v1865
      %v1930 = vmul.f32 %v1638, %v1866
      %v1931 = vmul.f32 %v1639, %v1867
      %v1932 = vmul.f32 %v1640, %v1868
      %v1933 = vmul.f32 %v1641, %v1869
      %v1934 = vmul.f32 %v1642, %v1870
      %v1935 = vmul.f32 %v1643, %v1871
      %v1936 = vmul.f32 %v1644, %v1872
      %v1937 = vmul.f32 %v1645, %v1873
      %v1938 = vmul.f32 %v1646, %v1874
      %v1939 = vmul.f32 %v1647, %v1875
      %v1940 = vmul.f32 %v1648, %v1876
      %v1941 = vmul.f32 %v1649, %v1877
      %v1942 = vmul.f32 %v1650, %v1878
      %v1943 = vmul.f32 %v1651, %v1879
      %v1944 = vmul.f32 %v1652, %v1880
      %v1945 = vmul.f32 %v1653, %v1881
      %v1946 = vmul.f32 %v1654, %v1882
      %v1947 = vmul.f32 %v1655, %v1883
      %vm1948 = vcmp.lt.s32.totalorder %v1690, %v1657
      %vm1949 = vcmp.lt.s32.totalorder %v1691, %v1657
      %vm1950 = vcmp.lt.s32.totalorder %v1690, %v1658
      %vm1951 = vcmp.lt.s32.totalorder %v1691, %v1658
      %vm1952 = vcmp.lt.s32.totalorder %v1690, %v1659
      %vm1953 = vcmp.lt.s32.totalorder %v1691, %v1659
      %vm1954 = vcmp.lt.s32.totalorder %v1690, %v1660
      %vm1955 = vcmp.lt.s32.totalorder %v1691, %v1660
      %vm1956 = vcmp.lt.s32.totalorder %v1690, %v1661
      %vm1957 = vcmp.lt.s32.totalorder %v1691, %v1661
      %vm1958 = vcmp.lt.s32.totalorder %v1690, %v1662
      %vm1959 = vcmp.lt.s32.totalorder %v1691, %v1662
      %vm1960 = vcmp.lt.s32.totalorder %v1690, %v1663
      %vm1961 = vcmp.lt.s32.totalorder %v1691, %v1663
      %vm1962 = vcmp.lt.s32.totalorder %v1690, %v1664
      %vm1963 = vcmp.lt.s32.totalorder %v1691, %v1664
      %vm1964 = vcmp.lt.s32.totalorder %v1690, %v1665
      %vm1965 = vcmp.lt.s32.totalorder %v1691, %v1665
      %vm1966 = vcmp.lt.s32.totalorder %v1690, %v1666
      %vm1967 = vcmp.lt.s32.totalorder %v1691, %v1666
      %vm1968 = vcmp.lt.s32.totalorder %v1690, %v1667
      %vm1969 = vcmp.lt.s32.totalorder %v1691, %v1667
      %vm1970 = vcmp.lt.s32.totalorder %v1690, %v1668
      %vm1971 = vcmp.lt.s32.totalorder %v1691, %v1668
      %vm1972 = vcmp.lt.s32.totalorder %v1690, %v1669
      %vm1973 = vcmp.lt.s32.totalorder %v1691, %v1669
      %vm1974 = vcmp.lt.s32.totalorder %v1690, %v1670
      %vm1975 = vcmp.lt.s32.totalorder %v1691, %v1670
      %vm1976 = vcmp.lt.s32.totalorder %v1690, %v1671
      %vm1977 = vcmp.lt.s32.totalorder %v1691, %v1671
      %vm1978 = vcmp.lt.s32.totalorder %v1690, %v1672
      %vm1979 = vcmp.lt.s32.totalorder %v1691, %v1672
      %vm1980 = vcmp.lt.s32.totalorder %v1690, %v1673
      %vm1981 = vcmp.lt.s32.totalorder %v1691, %v1673
      %vm1982 = vcmp.lt.s32.totalorder %v1690, %v1674
      %vm1983 = vcmp.lt.s32.totalorder %v1691, %v1674
      %vm1984 = vcmp.lt.s32.totalorder %v1690, %v1675
      %vm1985 = vcmp.lt.s32.totalorder %v1691, %v1675
      %vm1986 = vcmp.lt.s32.totalorder %v1690, %v1676
      %vm1987 = vcmp.lt.s32.totalorder %v1691, %v1676
      %vm1988 = vcmp.lt.s32.totalorder %v1690, %v1677
      %vm1989 = vcmp.lt.s32.totalorder %v1691, %v1677
      %vm1990 = vcmp.lt.s32.totalorder %v1690, %v1678
      %vm1991 = vcmp.lt.s32.totalorder %v1691, %v1678
      %vm1992 = vcmp.lt.s32.totalorder %v1690, %v1679
      %vm1993 = vcmp.lt.s32.totalorder %v1691, %v1679
      %vm1994 = vcmp.lt.s32.totalorder %v1690, %v1680
      %vm1995 = vcmp.lt.s32.totalorder %v1691, %v1680
      %vm1996 = vcmp.lt.s32.totalorder %v1690, %v1681
      %vm1997 = vcmp.lt.s32.totalorder %v1691, %v1681
      %vm1998 = vcmp.lt.s32.totalorder %v1690, %v1682
      %vm1999 = vcmp.lt.s32.totalorder %v1691, %v1682
      %vm2000 = vcmp.lt.s32.totalorder %v1690, %v1683
      %vm2001 = vcmp.lt.s32.totalorder %v1691, %v1683
      %vm2002 = vcmp.lt.s32.totalorder %v1690, %v1684
      %vm2003 = vcmp.lt.s32.totalorder %v1691, %v1684
      %vm2004 = vcmp.lt.s32.totalorder %v1690, %v1685
      %vm2005 = vcmp.lt.s32.totalorder %v1691, %v1685
      %vm2006 = vcmp.lt.s32.totalorder %v1690, %v1686
      %vm2007 = vcmp.lt.s32.totalorder %v1691, %v1686
      %vm2008 = vcmp.lt.s32.totalorder %v1690, %v1687
      %vm2009 = vcmp.lt.s32.totalorder %v1691, %v1687
      %vm2010 = vcmp.lt.s32.totalorder %v1690, %v1688
      %vm2011 = vcmp.lt.s32.totalorder %v1691, %v1688
      %v2012 = vsel %vm1948, 1, 0
      %v2013 = vsel %vm1949, 1, 0
      %v2014 = vsel %vm1950, 1, 0
      %v2015 = vsel %vm1951, 1, 0
      %v2016 = vsel %vm1952, 1, 0
      %v2017 = vsel %vm1953, 1, 0
      %v2018 = vsel %vm1954, 1, 0
      %v2019 = vsel %vm1955, 1, 0
      %v2020 = vsel %vm1956, 1, 0
      %v2021 = vsel %vm1957, 1, 0
      %v2022 = vsel %vm1958, 1, 0
      %v2023 = vsel %vm1959, 1, 0
      %v2024 = vsel %vm1960, 1, 0
      %v2025 = vsel %vm1961, 1, 0
      %v2026 = vsel %vm1962, 1, 0
      %v2027 = vsel %vm1963, 1, 0
      %v2028 = vsel %vm1964, 1, 0
      %v2029 = vsel %vm1965, 1, 0
      %v2030 = vsel %vm1966, 1, 0
      %v2031 = vsel %vm1967, 1, 0
      %v2032 = vsel %vm1968, 1, 0
      %v2033 = vsel %vm1969, 1, 0
      %v2034 = vsel %vm1970, 1, 0
      %v2035 = vsel %vm1971, 1, 0
      %v2036 = vsel %vm1972, 1, 0
      %v2037 = vsel %vm1973, 1, 0
      %v2038 = vsel %vm1974, 1, 0
      %v2039 = vsel %vm1975, 1, 0
      %v2040 = vsel %vm1976, 1, 0
      %v2041 = vsel %vm1977, 1, 0
      %v2042 = vsel %vm1978, 1, 0
      %v2043 = vsel %vm1979, 1, 0
      %v2044 = vsel %vm1980, 1, 0
      %v2045 = vsel %vm1981, 1, 0
      %v2046 = vsel %vm1982, 1, 0
      %v2047 = vsel %vm1983, 1, 0
      %v2048 = vsel %vm1984, 1, 0
      %v2049 = vsel %vm1985, 1, 0
      %v2050 = vsel %vm1986, 1, 0
      %v2051 = vsel %vm1987, 1, 0
      %v2052 = vsel %vm1988, 1, 0
      %v2053 = vsel %vm1989, 1, 0
      %v2054 = vsel %vm1990, 1, 0
      %v2055 = vsel %vm1991, 1, 0
      %v2056 = vsel %vm1992, 1, 0
      %v2057 = vsel %vm1993, 1, 0
      %v2058 = vsel %vm1994, 1, 0
      %v2059 = vsel %vm1995, 1, 0
      %v2060 = vsel %vm1996, 1, 0
      %v2061 = vsel %vm1997, 1, 0
      %v2062 = vsel %vm1998, 1, 0
      %v2063 = vsel %vm1999, 1, 0
      %v2064 = vsel %vm2000, 1, 0
      %v2065 = vsel %vm2001, 1, 0
      %v2066 = vsel %vm2002, 1, 0
      %v2067 = vsel %vm2003, 1, 0
      %v2068 = vsel %vm2004, 1, 0
      %v2069 = vsel %vm2005, 1, 0
      %v2070 = vsel %vm2006, 1, 0
      %v2071 = vsel %vm2007, 1, 0
      %v2072 = vsel %vm2008, 1, 0
      %v2073 = vsel %vm2009, 1, 0
      %v2074 = vsel %vm2010, 1, 0
      %v2075 = vsel %vm2011, 1, 0
      %v2076 = vcvt.s32.f32 %v2012
      %v2077 = vcvt.s32.f32 %v2013
      %v2078 = vcvt.s32.f32 %v2014
      %v2079 = vcvt.s32.f32 %v2015
      %v2080 = vcvt.s32.f32 %v2016
      %v2081 = vcvt.s32.f32 %v2017
      %v2082 = vcvt.s32.f32 %v2018
      %v2083 = vcvt.s32.f32 %v2019
      %v2084 = vcvt.s32.f32 %v2020
      %v2085 = vcvt.s32.f32 %v2021
      %v2086 = vcvt.s32.f32 %v2022
      %v2087 = vcvt.s32.f32 %v2023
      %v2088 = vcvt.s32.f32 %v2024
      %v2089 = vcvt.s32.f32 %v2025
      %v2090 = vcvt.s32.f32 %v2026
      %v2091 = vcvt.s32.f32 %v2027
      %v2092 = vcvt.s32.f32 %v2028
      %v2093 = vcvt.s32.f32 %v2029
      %v2094 = vcvt.s32.f32 %v2030
      %v2095 = vcvt.s32.f32 %v2031
      %v2096 = vcvt.s32.f32 %v2032
      %v2097 = vcvt.s32.f32 %v2033
      %v2098 = vcvt.s32.f32 %v2034
      %v2099 = vcvt.s32.f32 %v2035
      %v2100 = vcvt.s32.f32 %v2036
      %v2101 = vcvt.s32.f32 %v2037
      %v2102 = vcvt.s32.f32 %v2038
      %v2103 = vcvt.s32.f32 %v2039
      %v2104 = vcvt.s32.f32 %v2040
      %v2105 = vcvt.s32.f32 %v2041
      %v2106 = vcvt.s32.f32 %v2042
      %v2107 = vcvt.s32.f32 %v2043
      %v2108 = vcvt.s32.f32 %v2044
      %v2109 = vcvt.s32.f32 %v2045
      %v2110 = vcvt.s32.f32 %v2046
      %v2111 = vcvt.s32.f32 %v2047
      %v2112 = vcvt.s32.f32 %v2048
      %v2113 = vcvt.s32.f32 %v2049
      %v2114 = vcvt.s32.f32 %v2050
      %v2115 = vcvt.s32.f32 %v2051
      %v2116 = vcvt.s32.f32 %v2052
      %v2117 = vcvt.s32.f32 %v2053
      %v2118 = vcvt.s32.f32 %v2054
      %v2119 = vcvt.s32.f32 %v2055
      %v2120 = vcvt.s32.f32 %v2056
      %v2121 = vcvt.s32.f32 %v2057
      %v2122 = vcvt.s32.f32 %v2058
      %v2123 = vcvt.s32.f32 %v2059
      %v2124 = vcvt.s32.f32 %v2060
      %v2125 = vcvt.s32.f32 %v2061
      %v2126 = vcvt.s32.f32 %v2062
      %v2127 = vcvt.s32.f32 %v2063
      %v2128 = vcvt.s32.f32 %v2064
      %v2129 = vcvt.s32.f32 %v2065
      %v2130 = vcvt.s32.f32 %v2066
      %v2131 = vcvt.s32.f32 %v2067
      %v2132 = vcvt.s32.f32 %v2068
      %v2133 = vcvt.s32.f32 %v2069
      %v2134 = vcvt.s32.f32 %v2070
      %v2135 = vcvt.s32.f32 %v2071
      %v2136 = vcvt.s32.f32 %v2072
      %v2137 = vcvt.s32.f32 %v2073
      %v2138 = vcvt.s32.f32 %v2074
      %v2139 = vcvt.s32.f32 %v2075
      %v2140 = vmul.f32 %v1592, %v2076
      %v2141 = vmul.f32 %v1593, %v2077
      %v2142 = vmul.f32 %v1594, %v2078
      %v2143 = vmul.f32 %v1595, %v2079
      %v2144 = vmul.f32 %v1596, %v2080
      %v2145 = vmul.f32 %v1597, %v2081
      %v2146 = vmul.f32 %v1598, %v2082
      %v2147 = vmul.f32 %v1599, %v2083
      %v2148 = vmul.f32 %v1600, %v2084
      %v2149 = vmul.f32 %v1601, %v2085
      %v2150 = vmul.f32 %v1602, %v2086
      %v2151 = vmul.f32 %v1603, %v2087
      %v2152 = vmul.f32 %v1604, %v2088
      %v2153 = vmul.f32 %v1605, %v2089
      %v2154 = vmul.f32 %v1606, %v2090
      %v2155 = vmul.f32 %v1607, %v2091
      %v2156 = vmul.f32 %v1608, %v2092
      %v2157 = vmul.f32 %v1609, %v2093
      %v2158 = vmul.f32 %v1610, %v2094
      %v2159 = vmul.f32 %v1611, %v2095
      %v2160 = vmul.f32 %v1612, %v2096
      %v2161 = vmul.f32 %v1613, %v2097
      %v2162 = vmul.f32 %v1614, %v2098
      %v2163 = vmul.f32 %v1615, %v2099
      %v2164 = vmul.f32 %v1616, %v2100
      %v2165 = vmul.f32 %v1617, %v2101
      %v2166 = vmul.f32 %v1618, %v2102
      %v2167 = vmul.f32 %v1619, %v2103
      %v2168 = vmul.f32 %v1620, %v2104
      %v2169 = vmul.f32 %v1621, %v2105
      %v2170 = vmul.f32 %v1622, %v2106
      %v2171 = vmul.f32 %v1623, %v2107
      %v2172 = vmul.f32 %v1624, %v2108
      %v2173 = vmul.f32 %v1625, %v2109
      %v2174 = vmul.f32 %v1626, %v2110
      %v2175 = vmul.f32 %v1627, %v2111
      %v2176 = vmul.f32 %v1628, %v2112
      %v2177 = vmul.f32 %v1629, %v2113
      %v2178 = vmul.f32 %v1630, %v2114
      %v2179 = vmul.f32 %v1631, %v2115
      %v2180 = vmul.f32 %v1632, %v2116
      %v2181 = vmul.f32 %v1633, %v2117
      %v2182 = vmul.f32 %v1634, %v2118
      %v2183 = vmul.f32 %v1635, %v2119
      %v2184 = vmul.f32 %v1636, %v2120
      %v2185 = vmul.f32 %v1637, %v2121
      %v2186 = vmul.f32 %v1638, %v2122
      %v2187 = vmul.f32 %v1639, %v2123
      %v2188 = vmul.f32 %v1640, %v2124
      %v2189 = vmul.f32 %v1641, %v2125
      %v2190 = vmul.f32 %v1642, %v2126
      %v2191 = vmul.f32 %v1643, %v2127
      %v2192 = vmul.f32 %v1644, %v2128
      %v2193 = vmul.f32 %v1645, %v2129
      %v2194 = vmul.f32 %v1646, %v2130
      %v2195 = vmul.f32 %v1647, %v2131
      %v2196 = vmul.f32 %v1648, %v2132
      %v2197 = vmul.f32 %v1649, %v2133
      %v2198 = vmul.f32 %v1650, %v2134
      %v2199 = vmul.f32 %v1651, %v2135
      %v2200 = vmul.f32 %v1652, %v2136
      %v2201 = vmul.f32 %v1653, %v2137
      %v2202 = vmul.f32 %v1654, %v2138
      %v2203 = vmul.f32 %v1655, %v2139
      %v2204 = vadd.f32 %v1884, %v1886
      %v2205 = vadd.f32 %v2204, %v1888
      %v2206 = vadd.f32 %v2205, %v1890
      %v2207 = vadd.f32 %v2206, %v1892
      %v2208 = vadd.f32 %v2207, %v1894
      %v2209 = vadd.f32 %v2208, %v1896
      %v2210 = vadd.f32 %v2209, %v1898
      %v2211 = vadd.f32 %v2210, %v1900
      %v2212 = vadd.f32 %v2211, %v1902
      %v2213 = vadd.f32 %v2212, %v1904
      %v2214 = vadd.f32 %v2213, %v1906
      %v2215 = vadd.f32 %v2214, %v1908
      %v2216 = vadd.f32 %v2215, %v1910
      %v2217 = vadd.f32 %v2216, %v1912
      %v2218 = vadd.f32 %v2217, %v1914
      %v2219 = vadd.f32 %v2218, %v1916
      %v2220 = vadd.f32 %v2219, %v1918
      %v2221 = vadd.f32 %v2220, %v1920
      %v2222 = vadd.f32 %v2221, %v1922
      %v2223 = vadd.f32 %v2222, %v1924
      %v2224 = vadd.f32 %v2223, %v1926
      %v2225 = vadd.f32 %v2224, %v1928
      %v2226 = vadd.f32 %v2225, %v1930
      %v2227 = vadd.f32 %v2226, %v1932
      %v2228 = vadd.f32 %v2227, %v1934
      %v2229 = vadd.f32 %v2228, %v1936
      %v2230 = vadd.f32 %v2229, %v1938
      %v2231 = vadd.f32 %v2230, %v1940
      %v2232 = vadd.f32 %v2231, %v1942
      %v2233 = vadd.f32 %v2232, %v1944
      %v2234 = vadd.f32 %v2233, %v1946
      %v2235 = vrot.slane %v2234, 4
      %v2236 = vadd.f32 %v2234, %v2235
      %v2237 = vrot.slane %v2236, 2
      %v2238 = vadd.f32 %v2236, %v2237
      %v2239 = vrot.slane %v2238, 1
      %v2240 = vadd.f32 %v2238, %v2239
      %v2241 = vadd.f32 %v1885, %v1887
      %v2242 = vadd.f32 %v2241, %v1889
      %v2243 = vadd.f32 %v2242, %v1891
      %v2244 = vadd.f32 %v2243, %v1893
      %v2245 = vadd.f32 %v2244, %v1895
      %v2246 = vadd.f32 %v2245, %v1897
      %v2247 = vadd.f32 %v2246, %v1899
      %v2248 = vadd.f32 %v2247, %v1901
      %v2249 = vadd.f32 %v2248, %v1903
      %v2250 = vadd.f32 %v2249, %v1905
      %v2251 = vadd.f32 %v2250, %v1907
      %v2252 = vadd.f32 %v2251, %v1909
      %v2253 = vadd.f32 %v2252, %v1911
      %v2254 = vadd.f32 %v2253, %v1913
      %v2255 = vadd.f32 %v2254, %v1915
      %v2256 = vadd.f32 %v2255, %v1917
      %v2257 = vadd.f32 %v2256, %v1919
      %v2258 = vadd.f32 %v2257, %v1921
      %v2259 = vadd.f32 %v2258, %v1923
      %v2260 = vadd.f32 %v2259, %v1925
      %v2261 = vadd.f32 %v2260, %v1927
      %v2262 = vadd.f32 %v2261, %v1929
      %v2263 = vadd.f32 %v2262, %v1931
      %v2264 = vadd.f32 %v2263, %v1933
      %v2265 = vadd.f32 %v2264, %v1935
      %v2266 = vadd.f32 %v2265, %v1937
      %v2267 = vadd.f32 %v2266, %v1939
      %v2268 = vadd.f32 %v2267, %v1941
      %v2269 = vadd.f32 %v2268, %v1943
      %v2270 = vadd.f32 %v2269, %v1945
      %v2271 = vadd.f32 %v2270, %v1947
      %v2272 = vrot.slane %v2271, 4
      %v2273 = vadd.f32 %v2271, %v2272
      %v2274 = vrot.slane %v2273, 2
      %v2275 = vadd.f32 %v2273, %v2274
      %v2276 = vrot.slane %v2275, 1
      %v2277 = vadd.f32 %v2275, %v2276
      %v2278 = vadd.f32 %v2140, %v2141
      %2279 = vadd.xlane.f32.xlu0 %v2278
      %v2280 = vpop.xlane.xlu0 %2279
      %v2281 = vadd.f32 %v2142, %v2143
      %2282 = vadd.xlane.f32.xlu0 %v2281
      %v2283 = vpop.xlane.xlu0 %2282
      %v2284 = vadd.f32 %v2144, %v2145
      %2285 = vadd.xlane.f32.xlu0 %v2284
      %v2286 = vpop.xlane.xlu0 %2285
      %v2287 = vadd.f32 %v2146, %v2147
      %2288 = vadd.xlane.f32.xlu0 %v2287
      %v2289 = vpop.xlane.xlu0 %2288
      %v2290 = vadd.f32 %v2148, %v2149
      %2291 = vadd.xlane.f32.xlu0 %v2290
      %v2292 = vpop.xlane.xlu0 %2291
      %v2293 = vadd.f32 %v2150, %v2151
      %2294 = vadd.xlane.f32.xlu0 %v2293
      %v2295 = vpop.xlane.xlu0 %2294
      %v2296 = vadd.f32 %v2152, %v2153
      %2297 = vadd.xlane.f32.xlu0 %v2296
      %v2298 = vpop.xlane.xlu0 %2297
      %v2299 = vadd.f32 %v2154, %v2155
      %2300 = vadd.xlane.f32.xlu0 %v2299
      %v2301 = vpop.xlane.xlu0 %2300
      %v2302 = vadd.f32 %v2156, %v2157
      %2303 = vadd.xlane.f32.xlu0 %v2302
      %v2304 = vpop.xlane.xlu0 %2303
      %v2305 = vadd.f32 %v2158, %v2159
      %2306 = vadd.xlane.f32.xlu0 %v2305
      %v2307 = vpop.xlane.xlu0 %2306
      %v2308 = vadd.f32 %v2160, %v2161
      %2309 = vadd.xlane.f32.xlu0 %v2308
      %v2310 = vpop.xlane.xlu0 %2309
      %v2311 = vadd.f32 %v2162, %v2163
      %2312 = vadd.xlane.f32.xlu0 %v2311
      %v2313 = vpop.xlane.xlu0 %2312
      %v2314 = vadd.f32 %v2164, %v2165
      %2315 = vadd.xlane.f32.xlu0 %v2314
      %v2316 = vpop.xlane.xlu0 %2315
      %v2317 = vadd.f32 %v2166, %v2167
      %2318 = vadd.xlane.f32.xlu0 %v2317
      %v2319 = vpop.xlane.xlu0 %2318
      %v2320 = vadd.f32 %v2168, %v2169
      %2321 = vadd.xlane.f32.xlu0 %v2320
      %v2322 = vpop.xlane.xlu0 %2321
      %v2323 = vadd.f32 %v2170, %v2171
      %2324 = vadd.xlane.f32.xlu0 %v2323
      %v2325 = vpop.xlane.xlu0 %2324
      %v2326 = vadd.f32 %v2172, %v2173
      %2327 = vadd.xlane.f32.xlu0 %v2326
      %v2328 = vpop.xlane.xlu0 %2327
      %v2329 = vadd.f32 %v2174, %v2175
      %2330 = vadd.xlane.f32.xlu0 %v2329
      %v2331 = vpop.xlane.xlu0 %2330
      %v2332 = vadd.f32 %v2176, %v2177
      %2333 = vadd.xlane.f32.xlu0 %v2332
      %v2334 = vpop.xlane.xlu0 %2333
      %v2335 = vadd.f32 %v2178, %v2179
      %2336 = vadd.xlane.f32.xlu0 %v2335
      %v2337 = vpop.xlane.xlu0 %2336
      %v2338 = vadd.f32 %v2180, %v2181
      %2339 = vadd.xlane.f32.xlu0 %v2338
      %v2340 = vpop.xlane.xlu0 %2339
      %v2341 = vadd.f32 %v2182, %v2183
      %2342 = vadd.xlane.f32.xlu0 %v2341
      %v2343 = vpop.xlane.xlu0 %2342
      %v2344 = vadd.f32 %v2184, %v2185
      %2345 = vadd.xlane.f32.xlu0 %v2344
      %v2346 = vpop.xlane.xlu0 %2345
      %v2347 = vadd.f32 %v2186, %v2187
      %2348 = vadd.xlane.f32.xlu0 %v2347
      %v2349 = vpop.xlane.xlu0 %2348
      %v2350 = vadd.f32 %v2188, %v2189
      %2351 = vadd.xlane.f32.xlu0 %v2350
      %v2352 = vpop.xlane.xlu0 %2351
      %v2353 = vadd.f32 %v2190, %v2191
      %2354 = vadd.xlane.f32.xlu0 %v2353
      %v2355 = vpop.xlane.xlu0 %2354
      %v2356 = vadd.f32 %v2192, %v2193
      %2357 = vadd.xlane.f32.xlu0 %v2356
      %v2358 = vpop.xlane.xlu0 %2357
      %v2359 = vadd.f32 %v2194, %v2195
      %2360 = vadd.xlane.f32.xlu0 %v2359
      %v2361 = vpop.xlane.xlu0 %2360
      %v2362 = vadd.f32 %v2196, %v2197
      %2363 = vadd.xlane.f32.xlu0 %v2362
      %v2364 = vpop.xlane.xlu0 %2363
      %v2365 = vadd.f32 %v2198, %v2199
      %2366 = vadd.xlane.f32.xlu0 %v2365
      %v2367 = vpop.xlane.xlu0 %2366
      %v2368 = vadd.f32 %v2200, %v2201
      %2369 = vadd.xlane.f32.xlu0 %v2368
      %v2370 = vpop.xlane.xlu0 %2369
      %v2371 = vadd.f32 %v2202, %v2203
      %2372 = vadd.xlane.f32.xlu0 %v2371
      %v2373 = vpop.xlane.xlu0 %2372
      %vm2374 = vcmp.ne.f32.partialorder %v2240, 0.0
      %vm2375 = vcmp.ne.f32.partialorder %v2277, 0.0
      %v2376 = vsel %vm2374, 1, 0
      %v2377 = vsel %vm2375, 1, 0
      %v2378 = vcvt.s32.f32 %v2376
      %v2379 = vcvt.s32.f32 %v2377
      %vm2380 = vcmp.ne.f32.partialorder %v2280, 0.0
      %vm2381 = vcmp.ne.f32.partialorder %v2283, 0.0
      %vm2382 = vcmp.ne.f32.partialorder %v2286, 0.0
      %vm2383 = vcmp.ne.f32.partialorder %v2289, 0.0
      %vm2384 = vcmp.ne.f32.partialorder %v2292, 0.0
      %vm2385 = vcmp.ne.f32.partialorder %v2295, 0.0
      %vm2386 = vcmp.ne.f32.partialorder %v2298, 0.0
      %vm2387 = vcmp.ne.f32.partialorder %v2301, 0.0
      %vm2388 = vcmp.ne.f32.partialorder %v2304, 0.0
      %vm2389 = vcmp.ne.f32.partialorder %v2307, 0.0
      %vm2390 = vcmp.ne.f32.partialorder %v2310, 0.0
      %vm2391 = vcmp.ne.f32.partialorder %v2313, 0.0
      %vm2392 = vcmp.ne.f32.partialorder %v2316, 0.0
      %vm2393 = vcmp.ne.f32.partialorder %v2319, 0.0
      %vm2394 = vcmp.ne.f32.partialorder %v2322, 0.0
      %vm2395 = vcmp.ne.f32.partialorder %v2325, 0.0
      %vm2396 = vcmp.ne.f32.partialorder %v2328, 0.0
      %vm2397 = vcmp.ne.f32.partialorder %v2331, 0.0
      %vm2398 = vcmp.ne.f32.partialorder %v2334, 0.0
      %vm2399 = vcmp.ne.f32.partialorder %v2337, 0.0
      %vm2400 = vcmp.ne.f32.partialorder %v2340, 0.0
      %vm2401 = vcmp.ne.f32.partialorder %v2343, 0.0
      %vm2402 = vcmp.ne.f32.partialorder %v2346, 0.0
      %vm2403 = vcmp.ne.f32.partialorder %v2349, 0.0
      %vm2404 = vcmp.ne.f32.partialorder %v2352, 0.0
      %vm2405 = vcmp.ne.f32.partialorder %v2355, 0.0
      %vm2406 = vcmp.ne.f32.partialorder %v2358, 0.0
      %vm2407 = vcmp.ne.f32.partialorder %v2361, 0.0
      %vm2408 = vcmp.ne.f32.partialorder %v2364, 0.0
      %vm2409 = vcmp.ne.f32.partialorder %v2367, 0.0
      %vm2410 = vcmp.ne.f32.partialorder %v2370, 0.0
      %vm2411 = vcmp.ne.f32.partialorder %v2373, 0.0
      %v2412 = vsel %vm2380, 1, 0
      %v2413 = vsel %vm2381, 1, 0
      %v2414 = vsel %vm2382, 1, 0
      %v2415 = vsel %vm2383, 1, 0
      %v2416 = vsel %vm2384, 1, 0
      %v2417 = vsel %vm2385, 1, 0
      %v2418 = vsel %vm2386, 1, 0
      %v2419 = vsel %vm2387, 1, 0
      %v2420 = vsel %vm2388, 1, 0
      %v2421 = vsel %vm2389, 1, 0
      %v2422 = vsel %vm2390, 1, 0
      %v2423 = vsel %vm2391, 1, 0
      %v2424 = vsel %vm2392, 1, 0
      %v2425 = vsel %vm2393, 1, 0
      %v2426 = vsel %vm2394, 1, 0
      %v2427 = vsel %vm2395, 1, 0
      %v2428 = vsel %vm2396, 1, 0
      %v2429 = vsel %vm2397, 1, 0
      %v2430 = vsel %vm2398, 1, 0
      %v2431 = vsel %vm2399, 1, 0
      %v2432 = vsel %vm2400, 1, 0
      %v2433 = vsel %vm2401, 1, 0
      %v2434 = vsel %vm2402, 1, 0
      %v2435 = vsel %vm2403, 1, 0
      %v2436 = vsel %vm2404, 1, 0
      %v2437 = vsel %vm2405, 1, 0
      %v2438 = vsel %vm2406, 1, 0
      %v2439 = vsel %vm2407, 1, 0
      %v2440 = vsel %vm2408, 1, 0
      %v2441 = vsel %vm2409, 1, 0
      %v2442 = vsel %vm2410, 1, 0
      %v2443 = vsel %vm2411, 1, 0
      %v2444 = vcvt.s32.f32 %v2412
      %v2445 = vcvt.s32.f32 %v2413
      %v2446 = vcvt.s32.f32 %v2414
      %v2447 = vcvt.s32.f32 %v2415
      %v2448 = vcvt.s32.f32 %v2416
      %v2449 = vcvt.s32.f32 %v2417
      %v2450 = vcvt.s32.f32 %v2418
      %v2451 = vcvt.s32.f32 %v2419
      %v2452 = vcvt.s32.f32 %v2420
      %v2453 = vcvt.s32.f32 %v2421
      %v2454 = vcvt.s32.f32 %v2422
      %v2455 = vcvt.s32.f32 %v2423
      %v2456 = vcvt.s32.f32 %v2424
      %v2457 = vcvt.s32.f32 %v2425
      %v2458 = vcvt.s32.f32 %v2426
      %v2459 = vcvt.s32.f32 %v2427
      %v2460 = vcvt.s32.f32 %v2428
      %v2461 = vcvt.s32.f32 %v2429
      %v2462 = vcvt.s32.f32 %v2430
      %v2463 = vcvt.s32.f32 %v2431
      %v2464 = vcvt.s32.f32 %v2432
      %v2465 = vcvt.s32.f32 %v2433
      %v2466 = vcvt.s32.f32 %v2434
      %v2467 = vcvt.s32.f32 %v2435
      %v2468 = vcvt.s32.f32 %v2436
      %v2469 = vcvt.s32.f32 %v2437
      %v2470 = vcvt.s32.f32 %v2438
      %v2471 = vcvt.s32.f32 %v2439
      %v2472 = vcvt.s32.f32 %v2440
      %v2473 = vcvt.s32.f32 %v2441
      %v2474 = vcvt.s32.f32 %v2442
      %v2475 = vcvt.s32.f32 %v2443
      %v2476 = vmul.f32 %v1884, %v2444
      %v2477 = vmul.f32 %v1885, %v2444
      %v2478 = vmul.f32 %v1886, %v2445
      %v2479 = vmul.f32 %v1887, %v2445
      %v2480 = vmul.f32 %v1888, %v2446
      %v2481 = vmul.f32 %v1889, %v2446
      %v2482 = vmul.f32 %v1890, %v2447
      %v2483 = vmul.f32 %v1891, %v2447
      %v2484 = vmul.f32 %v1892, %v2448
      %v2485 = vmul.f32 %v1893, %v2448
      %v2486 = vmul.f32 %v1894, %v2449
      %v2487 = vmul.f32 %v1895, %v2449
      %v2488 = vmul.f32 %v1896, %v2450
      %v2489 = vmul.f32 %v1897, %v2450
      %v2490 = vmul.f32 %v1898, %v2451
      %v2491 = vmul.f32 %v1899, %v2451
      %v2492 = vmul.f32 %v1900, %v2452
      %v2493 = vmul.f32 %v1901, %v2452
      %v2494 = vmul.f32 %v1902, %v2453
      %v2495 = vmul.f32 %v1903, %v2453
      %v2496 = vmul.f32 %v1904, %v2454
      %v2497 = vmul.f32 %v1905, %v2454
      %v2498 = vmul.f32 %v1906, %v2455
      %v2499 = vmul.f32 %v1907, %v2455
      %v2500 = vmul.f32 %v1908, %v2456
      %v2501 = vmul.f32 %v1909, %v2456
      %v2502 = vmul.f32 %v1910, %v2457
      %v2503 = vmul.f32 %v1911, %v2457
      %v2504 = vmul.f32 %v1912, %v2458
      %v2505 = vmul.f32 %v1913, %v2458
      %v2506 = vmul.f32 %v1914, %v2459
      %v2507 = vmul.f32 %v1915, %v2459
      %v2508 = vmul.f32 %v1916, %v2460
      %v2509 = vmul.f32 %v1917, %v2460
      %v2510 = vmul.f32 %v1918, %v2461
      %v2511 = vmul.f32 %v1919, %v2461
      %v2512 = vmul.f32 %v1920, %v2462
      %v2513 = vmul.f32 %v1921, %v2462
      %v2514 = vmul.f32 %v1922, %v2463
      %v2515 = vmul.f32 %v1923, %v2463
      %v2516 = vmul.f32 %v1924, %v2464
      %v2517 = vmul.f32 %v1925, %v2464
      %v2518 = vmul.f32 %v1926, %v2465
      %v2519 = vmul.f32 %v1927, %v2465
      %v2520 = vmul.f32 %v1928, %v2466
      %v2521 = vmul.f32 %v1929, %v2466
      %v2522 = vmul.f32 %v1930, %v2467
      %v2523 = vmul.f32 %v1931, %v2467
      %v2524 = vmul.f32 %v1932, %v2468
      %v2525 = vmul.f32 %v1933, %v2468
      %v2526 = vmul.f32 %v1934, %v2469
      %v2527 = vmul.f32 %v1935, %v2469
      %v2528 = vmul.f32 %v1936, %v2470
      %v2529 = vmul.f32 %v1937, %v2470
      %v2530 = vmul.f32 %v1938, %v2471
      %v2531 = vmul.f32 %v1939, %v2471
      %v2532 = vmul.f32 %v1940, %v2472
      %v2533 = vmul.f32 %v1941, %v2472
      %v2534 = vmul.f32 %v1942, %v2473
      %v2535 = vmul.f32 %v1943, %v2473
      %v2536 = vmul.f32 %v1944, %v2474
      %v2537 = vmul.f32 %v1945, %v2474
      %v2538 = vmul.f32 %v1946, %v2475
      %v2539 = vmul.f32 %v1947, %v2475
      %v2540 = vadd.f32 %v2476, %v2478
      %v2541 = vadd.f32 %v2540, %v2480
      %v2542 = vadd.f32 %v2541, %v2482
      %v2543 = vadd.f32 %v2542, %v2484
      %v2544 = vadd.f32 %v2543, %v2486
      %v2545 = vadd.f32 %v2544, %v2488
      %v2546 = vadd.f32 %v2545, %v2490
      %v2547 = vadd.f32 %v2546, %v2492
      %v2548 = vadd.f32 %v2547, %v2494
      %v2549 = vadd.f32 %v2548, %v2496
      %v2550 = vadd.f32 %v2549, %v2498
      %v2551 = vadd.f32 %v2550, %v2500
      %v2552 = vadd.f32 %v2551, %v2502
      %v2553 = vadd.f32 %v2552, %v2504
      %v2554 = vadd.f32 %v2553, %v2506
      %v2555 = vadd.f32 %v2554, %v2508
      %v2556 = vadd.f32 %v2555, %v2510
      %v2557 = vadd.f32 %v2556, %v2512
      %v2558 = vadd.f32 %v2557, %v2514
      %v2559 = vadd.f32 %v2558, %v2516
      %v2560 = vadd.f32 %v2559, %v2518
      %v2561 = vadd.f32 %v2560, %v2520
      %v2562 = vadd.f32 %v2561, %v2522
      %v2563 = vadd.f32 %v2562, %v2524
      %v2564 = vadd.f32 %v2563, %v2526
      %v2565 = vadd.f32 %v2564, %v2528
      %v2566 = vadd.f32 %v2565, %v2530
      %v2567 = vadd.f32 %v2566, %v2532
      %v2568 = vadd.f32 %v2567, %v2534
      %v2569 = vadd.f32 %v2568, %v2536
      %v2570 = vadd.f32 %v2569, %v2538
      %v2571 = vrot.slane %v2570, 4
      %v2572 = vadd.f32 %v2570, %v2571
      %v2573 = vrot.slane %v2572, 2
      %v2574 = vadd.f32 %v2572, %v2573
      %v2575 = vrot.slane %v2574, 1
      %v2576 = vadd.f32 %v2574, %v2575
      %v2577 = vadd.f32 %v2477, %v2479
      %v2578 = vadd.f32 %v2577, %v2481
      %v2579 = vadd.f32 %v2578, %v2483
      %v2580 = vadd.f32 %v2579, %v2485
      %v2581 = vadd.f32 %v2580, %v2487
      %v2582 = vadd.f32 %v2581, %v2489
      %v2583 = vadd.f32 %v2582, %v2491
      %v2584 = vadd.f32 %v2583, %v2493
      %v2585 = vadd.f32 %v2584, %v2495
      %v2586 = vadd.f32 %v2585, %v2497
      %v2587 = vadd.f32 %v2586, %v2499
      %v2588 = vadd.f32 %v2587, %v2501
      %v2589 = vadd.f32 %v2588, %v2503
      %v2590 = vadd.f32 %v2589, %v2505
      %v2591 = vadd.f32 %v2590, %v2507
      %v2592 = vadd.f32 %v2591, %v2509
      %v2593 = vadd.f32 %v2592, %v2511
      %v2594 = vadd.f32 %v2593, %v2513
      %v2595 = vadd.f32 %v2594, %v2515
      %v2596 = vadd.f32 %v2595, %v2517
      %v2597 = vadd.f32 %v2596, %v2519
      %v2598 = vadd.f32 %v2597, %v2521
      %v2599 = vadd.f32 %v2598, %v2523
      %v2600 = vadd.f32 %v2599, %v2525
      %v2601 = vadd.f32 %v2600, %v2527
      %v2602 = vadd.f32 %v2601, %v2529
      %v2603 = vadd.f32 %v2602, %v2531
      %v2604 = vadd.f32 %v2603, %v2533
      %v2605 = vadd.f32 %v2604, %v2535
      %v2606 = vadd.f32 %v2605, %v2537
      %v2607 = vadd.f32 %v2606, %v2539
      %v2608 = vrot.slane %v2607, 4
      %v2609 = vadd.f32 %v2607, %v2608
      %v2610 = vrot.slane %v2609, 2
      %v2611 = vadd.f32 %v2609, %v2610
      %v2612 = vrot.slane %v2611, 1
      %v2613 = vadd.f32 %v2611, %v2612
      %v2614 = vmul.f32 %v2140, %v2378
      %v2615 = vmul.f32 %v2141, %v2379
      %v2616 = vmul.f32 %v2142, %v2378
      %v2617 = vmul.f32 %v2143, %v2379
      %v2618 = vmul.f32 %v2144, %v2378
      %v2619 = vmul.f32 %v2145, %v2379
      %v2620 = vmul.f32 %v2146, %v2378
      %v2621 = vmul.f32 %v2147, %v2379
      %v2622 = vmul.f32 %v2148, %v2378
      %v2623 = vmul.f32 %v2149, %v2379
      %v2624 = vmul.f32 %v2150, %v2378
      %v2625 = vmul.f32 %v2151, %v2379
      %v2626 = vmul.f32 %v2152, %v2378
      %v2627 = vmul.f32 %v2153, %v2379
      %v2628 = vmul.f32 %v2154, %v2378
      %v2629 = vmul.f32 %v2155, %v2379
      %v2630 = vmul.f32 %v2156, %v2378
      %v2631 = vmul.f32 %v2157, %v2379
      %v2632 = vmul.f32 %v2158, %v2378
      %v2633 = vmul.f32 %v2159, %v2379
      %v2634 = vmul.f32 %v2160, %v2378
      %v2635 = vmul.f32 %v2161, %v2379
      %v2636 = vmul.f32 %v2162, %v2378
      %v2637 = vmul.f32 %v2163, %v2379
      %v2638 = vmul.f32 %v2164, %v2378
      %v2639 = vmul.f32 %v2165, %v2379
      %v2640 = vmul.f32 %v2166, %v2378
      %v2641 = vmul.f32 %v2167, %v2379
      %v2642 = vmul.f32 %v2168, %v2378
      %v2643 = vmul.f32 %v2169, %v2379
      %v2644 = vmul.f32 %v2170, %v2378
      %v2645 = vmul.f32 %v2171, %v2379
      %v2646 = vmul.f32 %v2172, %v2378
      %v2647 = vmul.f32 %v2173, %v2379
      %v2648 = vmul.f32 %v2174, %v2378
      %v2649 = vmul.f32 %v2175, %v2379
      %v2650 = vmul.f32 %v2176, %v2378
      %v2651 = vmul.f32 %v2177, %v2379
      %v2652 = vmul.f32 %v2178, %v2378
      %v2653 = vmul.f32 %v2179, %v2379
      %v2654 = vmul.f32 %v2180, %v2378
      %v2655 = vmul.f32 %v2181, %v2379
      %v2656 = vmul.f32 %v2182, %v2378
      %v2657 = vmul.f32 %v2183, %v2379
      %v2658 = vmul.f32 %v2184, %v2378
      %v2659 = vmul.f32 %v2185, %v2379
      %v2660 = vmul.f32 %v2186, %v2378
      %v2661 = vmul.f32 %v2187, %v2379
      %v2662 = vmul.f32 %v2188, %v2378
      %v2663 = vmul.f32 %v2189, %v2379
      %v2664 = vmul.f32 %v2190, %v2378
      %v2665 = vmul.f32 %v2191, %v2379
      %v2666 = vmul.f32 %v2192, %v2378
      %v2667 = vmul.f32 %v2193, %v2379
      %v2668 = vmul.f32 %v2194, %v2378
      %v2669 = vmul.f32 %v2195, %v2379
      %v2670 = vmul.f32 %v2196, %v2378
      %v2671 = vmul.f32 %v2197, %v2379
      %v2672 = vmul.f32 %v2198, %v2378
      %v2673 = vmul.f32 %v2199, %v2379
      %v2674 = vmul.f32 %v2200, %v2378
      %v2675 = vmul.f32 %v2201, %v2379
      %v2676 = vmul.f32 %v2202, %v2378
      %v2677 = vmul.f32 %v2203, %v2379
      %v2678 = vadd.f32 %v2614, %v2615
      %2679 = vadd.xlane.f32.xlu0 %v2678
      %v2680 = vpop.xlane.xlu0 %2679
      %v2681 = vadd.f32 %v2616, %v2617
      %2682 = vadd.xlane.f32.xlu0 %v2681
      %v2683 = vpop.xlane.xlu0 %2682
      %v2684 = vadd.f32 %v2618, %v2619
      %2685 = vadd.xlane.f32.xlu0 %v2684
      %v2686 = vpop.xlane.xlu0 %2685
      %v2687 = vadd.f32 %v2620, %v2621
      %2688 = vadd.xlane.f32.xlu0 %v2687
      %v2689 = vpop.xlane.xlu0 %2688
      %v2690 = vadd.f32 %v2622, %v2623
      %2691 = vadd.xlane.f32.xlu0 %v2690
      %v2692 = vpop.xlane.xlu0 %2691
      %v2693 = vadd.f32 %v2624, %v2625
      %2694 = vadd.xlane.f32.xlu0 %v2693
      %v2695 = vpop.xlane.xlu0 %2694
      %v2696 = vadd.f32 %v2626, %v2627
      %2697 = vadd.xlane.f32.xlu0 %v2696
      %v2698 = vpop.xlane.xlu0 %2697
      %v2699 = vadd.f32 %v2628, %v2629
      %2700 = vadd.xlane.f32.xlu0 %v2699
      %v2701 = vpop.xlane.xlu0 %2700
      %v2702 = vadd.f32 %v2630, %v2631
      %2703 = vadd.xlane.f32.xlu0 %v2702
      %v2704 = vpop.xlane.xlu0 %2703
      %v2705 = vadd.f32 %v2632, %v2633
      %2706 = vadd.xlane.f32.xlu0 %v2705
      %v2707 = vpop.xlane.xlu0 %2706
      %v2708 = vadd.f32 %v2634, %v2635
      %2709 = vadd.xlane.f32.xlu0 %v2708
      %v2710 = vpop.xlane.xlu0 %2709
      %v2711 = vadd.f32 %v2636, %v2637
      %2712 = vadd.xlane.f32.xlu0 %v2711
      %v2713 = vpop.xlane.xlu0 %2712
      %v2714 = vadd.f32 %v2638, %v2639
      %2715 = vadd.xlane.f32.xlu0 %v2714
      %v2716 = vpop.xlane.xlu0 %2715
      %v2717 = vadd.f32 %v2640, %v2641
      %2718 = vadd.xlane.f32.xlu0 %v2717
      %v2719 = vpop.xlane.xlu0 %2718
      %v2720 = vadd.f32 %v2642, %v2643
      %2721 = vadd.xlane.f32.xlu0 %v2720
      %v2722 = vpop.xlane.xlu0 %2721
      %v2723 = vadd.f32 %v2644, %v2645
      %2724 = vadd.xlane.f32.xlu0 %v2723
      %v2725 = vpop.xlane.xlu0 %2724
      %v2726 = vadd.f32 %v2646, %v2647
      %2727 = vadd.xlane.f32.xlu0 %v2726
      %v2728 = vpop.xlane.xlu0 %2727
      %v2729 = vadd.f32 %v2648, %v2649
      %2730 = vadd.xlane.f32.xlu0 %v2729
      %v2731 = vpop.xlane.xlu0 %2730
      %v2732 = vadd.f32 %v2650, %v2651
      %2733 = vadd.xlane.f32.xlu0 %v2732
      %v2734 = vpop.xlane.xlu0 %2733
      %v2735 = vadd.f32 %v2652, %v2653
      %2736 = vadd.xlane.f32.xlu0 %v2735
      %v2737 = vpop.xlane.xlu0 %2736
      %v2738 = vadd.f32 %v2654, %v2655
      %2739 = vadd.xlane.f32.xlu0 %v2738
      %v2740 = vpop.xlane.xlu0 %2739
      %v2741 = vadd.f32 %v2656, %v2657
      %2742 = vadd.xlane.f32.xlu0 %v2741
      %v2743 = vpop.xlane.xlu0 %2742
      %v2744 = vadd.f32 %v2658, %v2659
      %2745 = vadd.xlane.f32.xlu0 %v2744
      %v2746 = vpop.xlane.xlu0 %2745
      %v2747 = vadd.f32 %v2660, %v2661
      %2748 = vadd.xlane.f32.xlu0 %v2747
      %v2749 = vpop.xlane.xlu0 %2748
      %v2750 = vadd.f32 %v2662, %v2663
      %2751 = vadd.xlane.f32.xlu0 %v2750
      %v2752 = vpop.xlane.xlu0 %2751
      %v2753 = vadd.f32 %v2664, %v2665
      %2754 = vadd.xlane.f32.xlu0 %v2753
      %v2755 = vpop.xlane.xlu0 %2754
      %v2756 = vadd.f32 %v2666, %v2667
      %2757 = vadd.xlane.f32.xlu0 %v2756
      %v2758 = vpop.xlane.xlu0 %2757
      %v2759 = vadd.f32 %v2668, %v2669
      %2760 = vadd.xlane.f32.xlu0 %v2759
      %v2761 = vpop.xlane.xlu0 %2760
      %v2762 = vadd.f32 %v2670, %v2671
      %2763 = vadd.xlane.f32.xlu0 %v2762
      %v2764 = vpop.xlane.xlu0 %2763
      %v2765 = vadd.f32 %v2672, %v2673
      %2766 = vadd.xlane.f32.xlu0 %v2765
      %v2767 = vpop.xlane.xlu0 %2766
      %v2768 = vadd.f32 %v2674, %v2675
      %2769 = vadd.xlane.f32.xlu0 %v2768
      %v2770 = vpop.xlane.xlu0 %2769
      %v2771 = vadd.f32 %v2676, %v2677
      %2772 = vadd.xlane.f32.xlu0 %v2771
      %v2773 = vpop.xlane.xlu0 %2772
      %vm2774 = vcmp.eq.f32.partialorder %v2240, %v2576
      %vm2775 = vcmp.eq.f32.partialorder %v2277, %v2613
      %v2776 = vsel %vm2774, 1, 0
      %v2777 = vsel %vm2775, 1, 0
      %v2778 = vcvt.s32.f32 %v2776
      %v2779 = vcvt.s32.f32 %v2777
      %v2782 = vcombine.low %v2778, %v2779
      %v2784 = vunpack.c.l.s4 1966171168
      %v2785 = vunpack.c.0.s8 %v2784
      %v2786 = vlaneseq
      %v2787 = vshrl.u32 %v2786, 7
      %v2788 = vsub.s32 %v2785, %v2787
      %v2789 = vrot.slane %v2782, %v2788
      %v2791 = vunpack.c.l.s4 1966171168
      %v2792 = vunpack.c.0.s8 %v2791
      %v2793 = vlaneseq
      %v2794 = vshrl.u32 %v2793, 7
      %v2795 = vsub.s32 %v2792, %v2794
      %v2796 = vrot.slane %v2789, %v2795
      %v2798 = vlaneseq
      %vm2799 = vcmp.ge.s32.totalorder %v2798, 0
      %vm2800 = vcmp.lt.s32.totalorder %v2798, 256
      %vm2801 = vmand %vm2799, %vm2800
      %2802 = vst.msk [vmem:[%s395] sm:$0x3] %vm2801, %v2796
      %vm2803 = vcmp.eq.f32.partialorder %v2280, %v2680
      %vm2804 = vcmp.eq.f32.partialorder %v2283, %v2683
      %vm2805 = vcmp.eq.f32.partialorder %v2286, %v2686
      %vm2806 = vcmp.eq.f32.partialorder %v2289, %v2689
      %vm2807 = vcmp.eq.f32.partialorder %v2292, %v2692
      %vm2808 = vcmp.eq.f32.partialorder %v2295, %v2695
      %vm2809 = vcmp.eq.f32.partialorder %v2298, %v2698
      %vm2810 = vcmp.eq.f32.partialorder %v2301, %v2701
      %vm2811 = vcmp.eq.f32.partialorder %v2304, %v2704
      %vm2812 = vcmp.eq.f32.partialorder %v2307, %v2707
      %vm2813 = vcmp.eq.f32.partialorder %v2310, %v2710
      %vm2814 = vcmp.eq.f32.partialorder %v2313, %v2713
      %vm2815 = vcmp.eq.f32.partialorder %v2316, %v2716
      %vm2816 = vcmp.eq.f32.partialorder %v2319, %v2719
      %vm2817 = vcmp.eq.f32.partialorder %v2322, %v2722
      %vm2818 = vcmp.eq.f32.partialorder %v2325, %v2725
      %vm2819 = vcmp.eq.f32.partialorder %v2328, %v2728
      %vm2820 = vcmp.eq.f32.partialorder %v2331, %v2731
      %vm2821 = vcmp.eq.f32.partialorder %v2334, %v2734
      %vm2822 = vcmp.eq.f32.partialorder %v2337, %v2737
      %vm2823 = vcmp.eq.f32.partialorder %v2340, %v2740
      %vm2824 = vcmp.eq.f32.partialorder %v2343, %v2743
      %vm2825 = vcmp.eq.f32.partialorder %v2346, %v2746
      %vm2826 = vcmp.eq.f32.partialorder %v2349, %v2749
      %vm2827 = vcmp.eq.f32.partialorder %v2352, %v2752
      %vm2828 = vcmp.eq.f32.partialorder %v2355, %v2755
      %vm2829 = vcmp.eq.f32.partialorder %v2358, %v2758
      %vm2830 = vcmp.eq.f32.partialorder %v2361, %v2761
      %vm2831 = vcmp.eq.f32.partialorder %v2364, %v2764
      %vm2832 = vcmp.eq.f32.partialorder %v2367, %v2767
      %vm2833 = vcmp.eq.f32.partialorder %v2370, %v2770
      %vm2834 = vcmp.eq.f32.partialorder %v2373, %v2773
      %2836 = vset.pattern.permute.xlu0 0
      %2837 = vperm.xlu0 %2836, %v448
      %v2838 = vpop.permute.xlu0 %2837
      %2841 = vset.pattern.permute.xlu0 0
      %2842 = vperm.xlu0 %2841, %v449
      %v2843 = vpop.permute.xlu0 %2842
      %2846 = vset.pattern.permute.xlu0 0
      %2847 = vperm.xlu0 %2846, %v450
      %v2848 = vpop.permute.xlu0 %2847
      %2851 = vset.pattern.permute.xlu0 0
      %2852 = vperm.xlu0 %2851, %v451
      %v2853 = vpop.permute.xlu0 %2852
      %2856 = vset.pattern.permute.xlu0 0
      %2857 = vperm.xlu0 %2856, %v452
      %v2858 = vpop.permute.xlu0 %2857
      %2861 = vset.pattern.permute.xlu0 0
      %2862 = vperm.xlu0 %2861, %v453
      %v2863 = vpop.permute.xlu0 %2862
      %2866 = vset.pattern.permute.xlu0 0
      %2867 = vperm.xlu0 %2866, %v454
      %v2868 = vpop.permute.xlu0 %2867
      %2871 = vset.pattern.permute.xlu0 0
      %2872 = vperm.xlu0 %2871, %v455
      %v2873 = vpop.permute.xlu0 %2872
      %2876 = vset.pattern.permute.xlu0 0
      %2877 = vperm.xlu0 %2876, %v456
      %v2878 = vpop.permute.xlu0 %2877
      %2881 = vset.pattern.permute.xlu0 0
      %2882 = vperm.xlu0 %2881, %v457
      %v2883 = vpop.permute.xlu0 %2882
      %2886 = vset.pattern.permute.xlu0 0
      %2887 = vperm.xlu0 %2886, %v458
      %v2888 = vpop.permute.xlu0 %2887
      %2891 = vset.pattern.permute.xlu0 0
      %2892 = vperm.xlu0 %2891, %v459
      %v2893 = vpop.permute.xlu0 %2892
      %2896 = vset.pattern.permute.xlu0 0
      %2897 = vperm.xlu0 %2896, %v460
      %v2898 = vpop.permute.xlu0 %2897
      %2901 = vset.pattern.permute.xlu0 0
      %2902 = vperm.xlu0 %2901, %v461
      %v2903 = vpop.permute.xlu0 %2902
      %2906 = vset.pattern.permute.xlu0 0
      %2907 = vperm.xlu0 %2906, %v462
      %v2908 = vpop.permute.xlu0 %2907
      %2911 = vset.pattern.permute.xlu0 0
      %2912 = vperm.xlu0 %2911, %v463
      %v2913 = vpop.permute.xlu0 %2912
      %2916 = vset.pattern.permute.xlu0 0
      %2917 = vperm.xlu0 %2916, %v464
      %v2918 = vpop.permute.xlu0 %2917
      %2921 = vset.pattern.permute.xlu0 0
      %2922 = vperm.xlu0 %2921, %v465
      %v2923 = vpop.permute.xlu0 %2922
      %2926 = vset.pattern.permute.xlu0 0
      %2927 = vperm.xlu0 %2926, %v466
      %v2928 = vpop.permute.xlu0 %2927
      %2931 = vset.pattern.permute.xlu0 0
      %2932 = vperm.xlu0 %2931, %v467
      %v2933 = vpop.permute.xlu0 %2932
      %2936 = vset.pattern.permute.xlu0 0
      %2937 = vperm.xlu0 %2936, %v468
      %v2938 = vpop.permute.xlu0 %2937
      %2941 = vset.pattern.permute.xlu0 0
      %2942 = vperm.xlu0 %2941, %v469
      %v2943 = vpop.permute.xlu0 %2942
      %2946 = vset.pattern.permute.xlu0 0
      %2947 = vperm.xlu0 %2946, %v470
      %v2948 = vpop.permute.xlu0 %2947
      %2951 = vset.pattern.permute.xlu0 0
      %2952 = vperm.xlu0 %2951, %v471
      %v2953 = vpop.permute.xlu0 %2952
      %2956 = vset.pattern.permute.xlu0 0
      %2957 = vperm.xlu0 %2956, %v472
      %v2958 = vpop.permute.xlu0 %2957
      %2961 = vset.pattern.permute.xlu0 0
      %2962 = vperm.xlu0 %2961, %v473
      %v2963 = vpop.permute.xlu0 %2962
      %2966 = vset.pattern.permute.xlu0 0
      %2967 = vperm.xlu0 %2966, %v474
      %v2968 = vpop.permute.xlu0 %2967
      %2971 = vset.pattern.permute.xlu0 0
      %2972 = vperm.xlu0 %2971, %v475
      %v2973 = vpop.permute.xlu0 %2972
      %2976 = vset.pattern.permute.xlu0 0
      %2977 = vperm.xlu0 %2976, %v476
      %v2978 = vpop.permute.xlu0 %2977
      %2981 = vset.pattern.permute.xlu0 0
      %2982 = vperm.xlu0 %2981, %v477
      %v2983 = vpop.permute.xlu0 %2982
      %2986 = vset.pattern.permute.xlu0 0
      %2987 = vperm.xlu0 %2986, %v478
      %v2988 = vpop.permute.xlu0 %2987
      %2991 = vset.pattern.permute.xlu0 0
      %2992 = vperm.xlu0 %2991, %v479
      %v2993 = vpop.permute.xlu0 %2992
      %v2996 = vlaneseq
      %v2997 = vshrl.u32 %v2996, 7
      %v2998 = vsub.s32 0, %v2997
      %v2999 = vrot.slane %v414, %v2998
      %v3000 = vlaneseq
      %v3001 = vshrl.u32 %v3000, 7
      %v3002 = vsub.s32 4, %v3001
      %v3003 = vrot.slane %v414, %v3002
      %v3006 = vlaneseq
      %v3007 = vshrl.u32 %v3006, 7
      %v3008 = vsub.s32 0, %v3007
      %v3009 = vrot.slane %v2999, %v3008
      %v3010 = vlaneseq
      %v3011 = vshrl.u32 %v3010, 7
      %v3012 = vsub.s32 0, %v3011
      %v3013 = vrot.slane %v3003, %v3012
      %v3014 = vsub.f32 %v2838, %v3009
      %v3015 = vsub.f32 %v2838, %v3013
      %v3016 = vsub.f32 %v2843, %v3009
      %v3017 = vsub.f32 %v2843, %v3013
      %v3018 = vsub.f32 %v2848, %v3009
      %v3019 = vsub.f32 %v2848, %v3013
      %v3020 = vsub.f32 %v2853, %v3009
      %v3021 = vsub.f32 %v2853, %v3013
      %v3022 = vsub.f32 %v2858, %v3009
      %v3023 = vsub.f32 %v2858, %v3013
      %v3024 = vsub.f32 %v2863, %v3009
      %v3025 = vsub.f32 %v2863, %v3013
      %v3026 = vsub.f32 %v2868, %v3009
      %v3027 = vsub.f32 %v2868, %v3013
      %v3028 = vsub.f32 %v2873, %v3009
      %v3029 = vsub.f32 %v2873, %v3013
      %v3030 = vsub.f32 %v2878, %v3009
      %v3031 = vsub.f32 %v2878, %v3013
      %v3032 = vsub.f32 %v2883, %v3009
      %v3033 = vsub.f32 %v2883, %v3013
      %v3034 = vsub.f32 %v2888, %v3009
      %v3035 = vsub.f32 %v2888, %v3013
      %v3036 = vsub.f32 %v2893, %v3009
      %v3037 = vsub.f32 %v2893, %v3013
      %v3038 = vsub.f32 %v2898, %v3009
      %v3039 = vsub.f32 %v2898, %v3013
      %v3040 = vsub.f32 %v2903, %v3009
      %v3041 = vsub.f32 %v2903, %v3013
      %v3042 = vsub.f32 %v2908, %v3009
      %v3043 = vsub.f32 %v2908, %v3013
      %v3044 = vsub.f32 %v2913, %v3009
      %v3045 = vsub.f32 %v2913, %v3013
      %v3046 = vsub.f32 %v2918, %v3009
      %v3047 = vsub.f32 %v2918, %v3013
      %v3048 = vsub.f32 %v2923, %v3009
      %v3049 = vsub.f32 %v2923, %v3013
      %v3050 = vsub.f32 %v2928, %v3009
      %v3051 = vsub.f32 %v2928, %v3013
      %v3052 = vsub.f32 %v2933, %v3009
      %v3053 = vsub.f32 %v2933, %v3013
      %v3054 = vsub.f32 %v2938, %v3009
      %v3055 = vsub.f32 %v2938, %v3013
      %v3056 = vsub.f32 %v2943, %v3009
      %v3057 = vsub.f32 %v2943, %v3013
      %v3058 = vsub.f32 %v2948, %v3009
      %v3059 = vsub.f32 %v2948, %v3013
      %v3060 = vsub.f32 %v2953, %v3009
      %v3061 = vsub.f32 %v2953, %v3013
      %v3062 = vsub.f32 %v2958, %v3009
      %v3063 = vsub.f32 %v2958, %v3013
      %v3064 = vsub.f32 %v2963, %v3009
      %v3065 = vsub.f32 %v2963, %v3013
      %v3066 = vsub.f32 %v2968, %v3009
      %v3067 = vsub.f32 %v2968, %v3013
      %v3068 = vsub.f32 %v2973, %v3009
      %v3069 = vsub.f32 %v2973, %v3013
      %v3070 = vsub.f32 %v2978, %v3009
      %v3071 = vsub.f32 %v2978, %v3013
      %v3072 = vsub.f32 %v2983, %v3009
      %v3073 = vsub.f32 %v2983, %v3013
      %v3074 = vsub.f32 %v2988, %v3009
      %v3075 = vsub.f32 %v2988, %v3013
      %v3076 = vsub.f32 %v2993, %v3009
      %v3077 = vsub.f32 %v2993, %v3013
      %v3078 = vmul.f32 %v3014, %v3014
      %v3079 = vmul.f32 %v3015, %v3015
      %v3080 = vmul.f32 %v3016, %v3016
      %v3081 = vmul.f32 %v3017, %v3017
      %v3082 = vmul.f32 %v3018, %v3018
      %v3083 = vmul.f32 %v3019, %v3019
      %v3084 = vmul.f32 %v3020, %v3020
      %v3085 = vmul.f32 %v3021, %v3021
      %v3086 = vmul.f32 %v3022, %v3022
      %v3087 = vmul.f32 %v3023, %v3023
      %v3088 = vmul.f32 %v3024, %v3024
      %v3089 = vmul.f32 %v3025, %v3025
      %v3090 = vmul.f32 %v3026, %v3026
      %v3091 = vmul.f32 %v3027, %v3027
      %v3092 = vmul.f32 %v3028, %v3028
      %v3093 = vmul.f32 %v3029, %v3029
      %v3094 = vmul.f32 %v3030, %v3030
      %v3095 = vmul.f32 %v3031, %v3031
      %v3096 = vmul.f32 %v3032, %v3032
      %v3097 = vmul.f32 %v3033, %v3033
      %v3098 = vmul.f32 %v3034, %v3034
      %v3099 = vmul.f32 %v3035, %v3035
      %v3100 = vmul.f32 %v3036, %v3036
      %v3101 = vmul.f32 %v3037, %v3037
      %v3102 = vmul.f32 %v3038, %v3038
      %v3103 = vmul.f32 %v3039, %v3039
      %v3104 = vmul.f32 %v3040, %v3040
      %v3105 = vmul.f32 %v3041, %v3041
      %v3106 = vmul.f32 %v3042, %v3042
      %v3107 = vmul.f32 %v3043, %v3043
      %v3108 = vmul.f32 %v3044, %v3044
      %v3109 = vmul.f32 %v3045, %v3045
      %v3110 = vmul.f32 %v3046, %v3046
      %v3111 = vmul.f32 %v3047, %v3047
      %v3112 = vmul.f32 %v3048, %v3048
      %v3113 = vmul.f32 %v3049, %v3049
      %v3114 = vmul.f32 %v3050, %v3050
      %v3115 = vmul.f32 %v3051, %v3051
      %v3116 = vmul.f32 %v3052, %v3052
      %v3117 = vmul.f32 %v3053, %v3053
      %v3118 = vmul.f32 %v3054, %v3054
      %v3119 = vmul.f32 %v3055, %v3055
      %v3120 = vmul.f32 %v3056, %v3056
      %v3121 = vmul.f32 %v3057, %v3057
      %v3122 = vmul.f32 %v3058, %v3058
      %v3123 = vmul.f32 %v3059, %v3059
      %v3124 = vmul.f32 %v3060, %v3060
      %v3125 = vmul.f32 %v3061, %v3061
      %v3126 = vmul.f32 %v3062, %v3062
      %v3127 = vmul.f32 %v3063, %v3063
      %v3128 = vmul.f32 %v3064, %v3064
      %v3129 = vmul.f32 %v3065, %v3065
      %v3130 = vmul.f32 %v3066, %v3066
      %v3131 = vmul.f32 %v3067, %v3067
      %v3132 = vmul.f32 %v3068, %v3068
      %v3133 = vmul.f32 %v3069, %v3069
      %v3134 = vmul.f32 %v3070, %v3070
      %v3135 = vmul.f32 %v3071, %v3071
      %v3136 = vmul.f32 %v3072, %v3072
      %v3137 = vmul.f32 %v3073, %v3073
      %v3138 = vmul.f32 %v3074, %v3074
      %v3139 = vmul.f32 %v3075, %v3075
      %v3140 = vmul.f32 %v3076, %v3076
      %v3141 = vmul.f32 %v3077, %v3077
      %3142 = vset.pattern.permute.xlu0 1
      %3143 = vperm.xlu0 %3142, %v448
      %v3144 = vpop.permute.xlu0 %3143
      %3146 = vset.pattern.permute.xlu0 1
      %3147 = vperm.xlu0 %3146, %v449
      %v3148 = vpop.permute.xlu0 %3147
      %3150 = vset.pattern.permute.xlu0 1
      %3151 = vperm.xlu0 %3150, %v450
      %v3152 = vpop.permute.xlu0 %3151
      %3154 = vset.pattern.permute.xlu0 1
      %3155 = vperm.xlu0 %3154, %v451
      %v3156 = vpop.permute.xlu0 %3155
      %3158 = vset.pattern.permute.xlu0 1
      %3159 = vperm.xlu0 %3158, %v452
      %v3160 = vpop.permute.xlu0 %3159
      %3162 = vset.pattern.permute.xlu0 1
      %3163 = vperm.xlu0 %3162, %v453
      %v3164 = vpop.permute.xlu0 %3163
      %3166 = vset.pattern.permute.xlu0 1
      %3167 = vperm.xlu0 %3166, %v454
      %v3168 = vpop.permute.xlu0 %3167
      %3170 = vset.pattern.permute.xlu0 1
      %3171 = vperm.xlu0 %3170, %v455
      %v3172 = vpop.permute.xlu0 %3171
      %3174 = vset.pattern.permute.xlu0 1
      %3175 = vperm.xlu0 %3174, %v456
      %v3176 = vpop.permute.xlu0 %3175
      %3178 = vset.pattern.permute.xlu0 1
      %3179 = vperm.xlu0 %3178, %v457
      %v3180 = vpop.permute.xlu0 %3179
      %3182 = vset.pattern.permute.xlu0 1
      %3183 = vperm.xlu0 %3182, %v458
      %v3184 = vpop.permute.xlu0 %3183
      %3186 = vset.pattern.permute.xlu0 1
      %3187 = vperm.xlu0 %3186, %v459
      %v3188 = vpop.permute.xlu0 %3187
      %3190 = vset.pattern.permute.xlu0 1
      %3191 = vperm.xlu0 %3190, %v460
      %v3192 = vpop.permute.xlu0 %3191
      %3194 = vset.pattern.permute.xlu0 1
      %3195 = vperm.xlu0 %3194, %v461
      %v3196 = vpop.permute.xlu0 %3195
      %3198 = vset.pattern.permute.xlu0 1
      %3199 = vperm.xlu0 %3198, %v462
      %v3200 = vpop.permute.xlu0 %3199
      %3202 = vset.pattern.permute.xlu0 1
      %3203 = vperm.xlu0 %3202, %v463
      %v3204 = vpop.permute.xlu0 %3203
      %3206 = vset.pattern.permute.xlu0 1
      %3207 = vperm.xlu0 %3206, %v464
      %v3208 = vpop.permute.xlu0 %3207
      %3210 = vset.pattern.permute.xlu0 1
      %3211 = vperm.xlu0 %3210, %v465
      %v3212 = vpop.permute.xlu0 %3211
      %3214 = vset.pattern.permute.xlu0 1
      %3215 = vperm.xlu0 %3214, %v466
      %v3216 = vpop.permute.xlu0 %3215
      %3218 = vset.pattern.permute.xlu0 1
      %3219 = vperm.xlu0 %3218, %v467
      %v3220 = vpop.permute.xlu0 %3219
      %3222 = vset.pattern.permute.xlu0 1
      %3223 = vperm.xlu0 %3222, %v468
      %v3224 = vpop.permute.xlu0 %3223
      %3226 = vset.pattern.permute.xlu0 1
      %3227 = vperm.xlu0 %3226, %v469
      %v3228 = vpop.permute.xlu0 %3227
      %3230 = vset.pattern.permute.xlu0 1
      %3231 = vperm.xlu0 %3230, %v470
      %v3232 = vpop.permute.xlu0 %3231
      %3234 = vset.pattern.permute.xlu0 1
      %3235 = vperm.xlu0 %3234, %v471
      %v3236 = vpop.permute.xlu0 %3235
      %3238 = vset.pattern.permute.xlu0 1
      %3239 = vperm.xlu0 %3238, %v472
      %v3240 = vpop.permute.xlu0 %3239
      %3242 = vset.pattern.permute.xlu0 1
      %3243 = vperm.xlu0 %3242, %v473
      %v3244 = vpop.permute.xlu0 %3243
      %3246 = vset.pattern.permute.xlu0 1
      %3247 = vperm.xlu0 %3246, %v474
      %v3248 = vpop.permute.xlu0 %3247
      %3250 = vset.pattern.permute.xlu0 1
      %3251 = vperm.xlu0 %3250, %v475
      %v3252 = vpop.permute.xlu0 %3251
      %3254 = vset.pattern.permute.xlu0 1
      %3255 = vperm.xlu0 %3254, %v476
      %v3256 = vpop.permute.xlu0 %3255
      %3258 = vset.pattern.permute.xlu0 1
      %3259 = vperm.xlu0 %3258, %v477
      %v3260 = vpop.permute.xlu0 %3259
      %3262 = vset.pattern.permute.xlu0 1
      %3263 = vperm.xlu0 %3262, %v478
      %v3264 = vpop.permute.xlu0 %3263
      %3266 = vset.pattern.permute.xlu0 1
      %3267 = vperm.xlu0 %3266, %v479
      %v3268 = vpop.permute.xlu0 %3267
      %v3270 = vlaneseq
      %v3271 = vshrl.u32 %v3270, 7
      %v3272 = vsub.s32 1, %v3271
      %v3273 = vrot.slane %v414, %v3272
      %v3274 = vlaneseq
      %v3275 = vshrl.u32 %v3274, 7
      %v3276 = vsub.s32 5, %v3275
      %v3277 = vrot.slane %v414, %v3276
      %v3280 = vlaneseq
      %v3281 = vshrl.u32 %v3280, 7
      %v3282 = vsub.s32 1, %v3281
      %v3283 = vrot.slane %v3273, %v3282
      %v3284 = vlaneseq
      %v3285 = vshrl.u32 %v3284, 7
      %v3286 = vsub.s32 1, %v3285
      %v3287 = vrot.slane %v3277, %v3286
      %v3288 = vsub.f32 %v3144, %v3283
      %v3289 = vsub.f32 %v3144, %v3287
      %v3290 = vsub.f32 %v3148, %v3283
      %v3291 = vsub.f32 %v3148, %v3287
      %v3292 = vsub.f32 %v3152, %v3283
      %v3293 = vsub.f32 %v3152, %v3287
      %v3294 = vsub.f32 %v3156, %v3283
      %v3295 = vsub.f32 %v3156, %v3287
      %v3296 = vsub.f32 %v3160, %v3283
      %v3297 = vsub.f32 %v3160, %v3287
      %v3298 = vsub.f32 %v3164, %v3283
      %v3299 = vsub.f32 %v3164, %v3287
      %v3300 = vsub.f32 %v3168, %v3283
      %v3301 = vsub.f32 %v3168, %v3287
      %v3302 = vsub.f32 %v3172, %v3283
      %v3303 = vsub.f32 %v3172, %v3287
      %v3304 = vsub.f32 %v3176, %v3283
      %v3305 = vsub.f32 %v3176, %v3287
      %v3306 = vsub.f32 %v3180, %v3283
      %v3307 = vsub.f32 %v3180, %v3287
      %v3308 = vsub.f32 %v3184, %v3283
      %v3309 = vsub.f32 %v3184, %v3287
      %v3310 = vsub.f32 %v3188, %v3283
      %v3311 = vsub.f32 %v3188, %v3287
      %v3312 = vsub.f32 %v3192, %v3283
      %v3313 = vsub.f32 %v3192, %v3287
      %v3314 = vsub.f32 %v3196, %v3283
      %v3315 = vsub.f32 %v3196, %v3287
      %v3316 = vsub.f32 %v3200, %v3283
      %v3317 = vsub.f32 %v3200, %v3287
      %v3318 = vsub.f32 %v3204, %v3283
      %v3319 = vsub.f32 %v3204, %v3287
      %v3320 = vsub.f32 %v3208, %v3283
      %v3321 = vsub.f32 %v3208, %v3287
      %v3322 = vsub.f32 %v3212, %v3283
      %v3323 = vsub.f32 %v3212, %v3287
      %v3324 = vsub.f32 %v3216, %v3283
      %v3325 = vsub.f32 %v3216, %v3287
      %v3326 = vsub.f32 %v3220, %v3283
      %v3327 = vsub.f32 %v3220, %v3287
      %v3328 = vsub.f32 %v3224, %v3283
      %v3329 = vsub.f32 %v3224, %v3287
      %v3330 = vsub.f32 %v3228, %v3283
      %v3331 = vsub.f32 %v3228, %v3287
      %v3332 = vsub.f32 %v3232, %v3283
      %v3333 = vsub.f32 %v3232, %v3287
      %v3334 = vsub.f32 %v3236, %v3283
      %v3335 = vsub.f32 %v3236, %v3287
      %v3336 = vsub.f32 %v3240, %v3283
      %v3337 = vsub.f32 %v3240, %v3287
      %v3338 = vsub.f32 %v3244, %v3283
      %v3339 = vsub.f32 %v3244, %v3287
      %v3340 = vsub.f32 %v3248, %v3283
      %v3341 = vsub.f32 %v3248, %v3287
      %v3342 = vsub.f32 %v3252, %v3283
      %v3343 = vsub.f32 %v3252, %v3287
      %v3344 = vsub.f32 %v3256, %v3283
      %v3345 = vsub.f32 %v3256, %v3287
      %v3346 = vsub.f32 %v3260, %v3283
      %v3347 = vsub.f32 %v3260, %v3287
      %v3348 = vsub.f32 %v3264, %v3283
      %v3349 = vsub.f32 %v3264, %v3287
      %v3350 = vsub.f32 %v3268, %v3283
      %v3351 = vsub.f32 %v3268, %v3287
      %v3352 = vmul.f32 %v3288, %v3288
      %v3353 = vmul.f32 %v3289, %v3289
      %v3354 = vmul.f32 %v3290, %v3290
      %v3355 = vmul.f32 %v3291, %v3291
      %v3356 = vmul.f32 %v3292, %v3292
      %v3357 = vmul.f32 %v3293, %v3293
      %v3358 = vmul.f32 %v3294, %v3294
      %v3359 = vmul.f32 %v3295, %v3295
      %v3360 = vmul.f32 %v3296, %v3296
      %v3361 = vmul.f32 %v3297, %v3297
      %v3362 = vmul.f32 %v3298, %v3298
      %v3363 = vmul.f32 %v3299, %v3299
      %v3364 = vmul.f32 %v3300, %v3300
      %v3365 = vmul.f32 %v3301, %v3301
      %v3366 = vmul.f32 %v3302, %v3302
      %v3367 = vmul.f32 %v3303, %v3303
      %v3368 = vmul.f32 %v3304, %v3304
      %v3369 = vmul.f32 %v3305, %v3305
      %v3370 = vmul.f32 %v3306, %v3306
      %v3371 = vmul.f32 %v3307, %v3307
      %v3372 = vmul.f32 %v3308, %v3308
      %v3373 = vmul.f32 %v3309, %v3309
      %v3374 = vmul.f32 %v3310, %v3310
      %v3375 = vmul.f32 %v3311, %v3311
      %v3376 = vmul.f32 %v3312, %v3312
      %v3377 = vmul.f32 %v3313, %v3313
      %v3378 = vmul.f32 %v3314, %v3314
      %v3379 = vmul.f32 %v3315, %v3315
      %v3380 = vmul.f32 %v3316, %v3316
      %v3381 = vmul.f32 %v3317, %v3317
      %v3382 = vmul.f32 %v3318, %v3318
      %v3383 = vmul.f32 %v3319, %v3319
      %v3384 = vmul.f32 %v3320, %v3320
      %v3385 = vmul.f32 %v3321, %v3321
      %v3386 = vmul.f32 %v3322, %v3322
      %v3387 = vmul.f32 %v3323, %v3323
      %v3388 = vmul.f32 %v3324, %v3324
      %v3389 = vmul.f32 %v3325, %v3325
      %v3390 = vmul.f32 %v3326, %v3326
      %v3391 = vmul.f32 %v3327, %v3327
      %v3392 = vmul.f32 %v3328, %v3328
      %v3393 = vmul.f32 %v3329, %v3329
      %v3394 = vmul.f32 %v3330, %v3330
      %v3395 = vmul.f32 %v3331, %v3331
      %v3396 = vmul.f32 %v3332, %v3332
      %v3397 = vmul.f32 %v3333, %v3333
      %v3398 = vmul.f32 %v3334, %v3334
      %v3399 = vmul.f32 %v3335, %v3335
      %v3400 = vmul.f32 %v3336, %v3336
      %v3401 = vmul.f32 %v3337, %v3337
      %v3402 = vmul.f32 %v3338, %v3338
      %v3403 = vmul.f32 %v3339, %v3339
      %v3404 = vmul.f32 %v3340, %v3340
      %v3405 = vmul.f32 %v3341, %v3341
      %v3406 = vmul.f32 %v3342, %v3342
      %v3407 = vmul.f32 %v3343, %v3343
      %v3408 = vmul.f32 %v3344, %v3344
      %v3409 = vmul.f32 %v3345, %v3345
      %v3410 = vmul.f32 %v3346, %v3346
      %v3411 = vmul.f32 %v3347, %v3347
      %v3412 = vmul.f32 %v3348, %v3348
      %v3413 = vmul.f32 %v3349, %v3349
      %v3414 = vmul.f32 %v3350, %v3350
      %v3415 = vmul.f32 %v3351, %v3351
      %v3416 = vadd.f32 %v3078, %v3352
      %v3417 = vadd.f32 %v3079, %v3353
      %v3418 = vadd.f32 %v3080, %v3354
      %v3419 = vadd.f32 %v3081, %v3355
      %v3420 = vadd.f32 %v3082, %v3356
      %v3421 = vadd.f32 %v3083, %v3357
      %v3422 = vadd.f32 %v3084, %v3358
      %v3423 = vadd.f32 %v3085, %v3359
      %v3424 = vadd.f32 %v3086, %v3360
      %v3425 = vadd.f32 %v3087, %v3361
      %v3426 = vadd.f32 %v3088, %v3362
      %v3427 = vadd.f32 %v3089, %v3363
      %v3428 = vadd.f32 %v3090, %v3364
      %v3429 = vadd.f32 %v3091, %v3365
      %v3430 = vadd.f32 %v3092, %v3366
      %v3431 = vadd.f32 %v3093, %v3367
      %v3432 = vadd.f32 %v3094, %v3368
      %v3433 = vadd.f32 %v3095, %v3369
      %v3434 = vadd.f32 %v3096, %v3370
      %v3435 = vadd.f32 %v3097, %v3371
      %v3436 = vadd.f32 %v3098, %v3372
      %v3437 = vadd.f32 %v3099, %v3373
      %v3438 = vadd.f32 %v3100, %v3374
      %v3439 = vadd.f32 %v3101, %v3375
      %v3440 = vadd.f32 %v3102, %v3376
      %v3441 = vadd.f32 %v3103, %v3377
      %v3442 = vadd.f32 %v3104, %v3378
      %v3443 = vadd.f32 %v3105, %v3379
      %v3444 = vadd.f32 %v3106, %v3380
      %v3445 = vadd.f32 %v3107, %v3381
      %v3446 = vadd.f32 %v3108, %v3382
      %v3447 = vadd.f32 %v3109, %v3383
      %v3448 = vadd.f32 %v3110, %v3384
      %v3449 = vadd.f32 %v3111, %v3385
      %v3450 = vadd.f32 %v3112, %v3386
      %v3451 = vadd.f32 %v3113, %v3387
      %v3452 = vadd.f32 %v3114, %v3388
      %v3453 = vadd.f32 %v3115, %v3389
      %v3454 = vadd.f32 %v3116, %v3390
      %v3455 = vadd.f32 %v3117, %v3391
      %v3456 = vadd.f32 %v3118, %v3392
      %v3457 = vadd.f32 %v3119, %v3393
      %v3458 = vadd.f32 %v3120, %v3394
      %v3459 = vadd.f32 %v3121, %v3395
      %v3460 = vadd.f32 %v3122, %v3396
      %v3461 = vadd.f32 %v3123, %v3397
      %v3462 = vadd.f32 %v3124, %v3398
      %v3463 = vadd.f32 %v3125, %v3399
      %v3464 = vadd.f32 %v3126, %v3400
      %v3465 = vadd.f32 %v3127, %v3401
      %v3466 = vadd.f32 %v3128, %v3402
      %v3467 = vadd.f32 %v3129, %v3403
      %v3468 = vadd.f32 %v3130, %v3404
      %v3469 = vadd.f32 %v3131, %v3405
      %v3470 = vadd.f32 %v3132, %v3406
      %v3471 = vadd.f32 %v3133, %v3407
      %v3472 = vadd.f32 %v3134, %v3408
      %v3473 = vadd.f32 %v3135, %v3409
      %v3474 = vadd.f32 %v3136, %v3410
      %v3475 = vadd.f32 %v3137, %v3411
      %v3476 = vadd.f32 %v3138, %v3412
      %v3477 = vadd.f32 %v3139, %v3413
      %v3478 = vadd.f32 %v3140, %v3414
      %v3479 = vadd.f32 %v3141, %v3415
      %3480 = vset.pattern.permute.xlu0 2
      %3481 = vperm.xlu0 %3480, %v448
      %v3482 = vpop.permute.xlu0 %3481
      %3484 = vset.pattern.permute.xlu0 2
      %3485 = vperm.xlu0 %3484, %v449
      %v3486 = vpop.permute.xlu0 %3485
      %3488 = vset.pattern.permute.xlu0 2
      %3489 = vperm.xlu0 %3488, %v450
      %v3490 = vpop.permute.xlu0 %3489
      %3492 = vset.pattern.permute.xlu0 2
      %3493 = vperm.xlu0 %3492, %v451
      %v3494 = vpop.permute.xlu0 %3493
      %3496 = vset.pattern.permute.xlu0 2
      %3497 = vperm.xlu0 %3496, %v452
      %v3498 = vpop.permute.xlu0 %3497
      %3500 = vset.pattern.permute.xlu0 2
      %3501 = vperm.xlu0 %3500, %v453
      %v3502 = vpop.permute.xlu0 %3501
      %3504 = vset.pattern.permute.xlu0 2
      %3505 = vperm.xlu0 %3504, %v454
      %v3506 = vpop.permute.xlu0 %3505
      %3508 = vset.pattern.permute.xlu0 2
      %3509 = vperm.xlu0 %3508, %v455
      %v3510 = vpop.permute.xlu0 %3509
      %3512 = vset.pattern.permute.xlu0 2
      %3513 = vperm.xlu0 %3512, %v456
      %v3514 = vpop.permute.xlu0 %3513
      %3516 = vset.pattern.permute.xlu0 2
      %3517 = vperm.xlu0 %3516, %v457
      %v3518 = vpop.permute.xlu0 %3517
      %3520 = vset.pattern.permute.xlu0 2
      %3521 = vperm.xlu0 %3520, %v458
      %v3522 = vpop.permute.xlu0 %3521
      %3524 = vset.pattern.permute.xlu0 2
      %3525 = vperm.xlu0 %3524, %v459
      %v3526 = vpop.permute.xlu0 %3525
      %3528 = vset.pattern.permute.xlu0 2
      %3529 = vperm.xlu0 %3528, %v460
      %v3530 = vpop.permute.xlu0 %3529
      %3532 = vset.pattern.permute.xlu0 2
      %3533 = vperm.xlu0 %3532, %v461
      %v3534 = vpop.permute.xlu0 %3533
      %3536 = vset.pattern.permute.xlu0 2
      %3537 = vperm.xlu0 %3536, %v462
      %v3538 = vpop.permute.xlu0 %3537
      %3540 = vset.pattern.permute.xlu0 2
      %3541 = vperm.xlu0 %3540, %v463
      %v3542 = vpop.permute.xlu0 %3541
      %3544 = vset.pattern.permute.xlu0 2
      %3545 = vperm.xlu0 %3544, %v464
      %v3546 = vpop.permute.xlu0 %3545
      %3548 = vset.pattern.permute.xlu0 2
      %3549 = vperm.xlu0 %3548, %v465
      %v3550 = vpop.permute.xlu0 %3549
      %3552 = vset.pattern.permute.xlu0 2
      %3553 = vperm.xlu0 %3552, %v466
      %v3554 = vpop.permute.xlu0 %3553
      %3556 = vset.pattern.permute.xlu0 2
      %3557 = vperm.xlu0 %3556, %v467
      %v3558 = vpop.permute.xlu0 %3557
      %3560 = vset.pattern.permute.xlu0 2
      %3561 = vperm.xlu0 %3560, %v468
      %v3562 = vpop.permute.xlu0 %3561
      %3564 = vset.pattern.permute.xlu0 2
      %3565 = vperm.xlu0 %3564, %v469
      %v3566 = vpop.permute.xlu0 %3565
      %3568 = vset.pattern.permute.xlu0 2
      %3569 = vperm.xlu0 %3568, %v470
      %v3570 = vpop.permute.xlu0 %3569
      %3572 = vset.pattern.permute.xlu0 2
      %3573 = vperm.xlu0 %3572, %v471
      %v3574 = vpop.permute.xlu0 %3573
      %3576 = vset.pattern.permute.xlu0 2
      %3577 = vperm.xlu0 %3576, %v472
      %v3578 = vpop.permute.xlu0 %3577
      %3580 = vset.pattern.permute.xlu0 2
      %3581 = vperm.xlu0 %3580, %v473
      %v3582 = vpop.permute.xlu0 %3581
      %3584 = vset.pattern.permute.xlu0 2
      %3585 = vperm.xlu0 %3584, %v474
      %v3586 = vpop.permute.xlu0 %3585
      %3588 = vset.pattern.permute.xlu0 2
      %3589 = vperm.xlu0 %3588, %v475
      %v3590 = vpop.permute.xlu0 %3589
      %3592 = vset.pattern.permute.xlu0 2
      %3593 = vperm.xlu0 %3592, %v476
      %v3594 = vpop.permute.xlu0 %3593
      %3596 = vset.pattern.permute.xlu0 2
      %3597 = vperm.xlu0 %3596, %v477
      %v3598 = vpop.permute.xlu0 %3597
      %3600 = vset.pattern.permute.xlu0 2
      %3601 = vperm.xlu0 %3600, %v478
      %v3602 = vpop.permute.xlu0 %3601
      %3604 = vset.pattern.permute.xlu0 2
      %3605 = vperm.xlu0 %3604, %v479
      %v3606 = vpop.permute.xlu0 %3605
      %v3608 = vlaneseq
      %v3609 = vshrl.u32 %v3608, 7
      %v3610 = vsub.s32 2, %v3609
      %v3611 = vrot.slane %v414, %v3610
      %v3612 = vlaneseq
      %v3613 = vshrl.u32 %v3612, 7
      %v3614 = vsub.s32 6, %v3613
      %v3615 = vrot.slane %v414, %v3614
      %v3618 = vlaneseq
      %v3619 = vshrl.u32 %v3618, 7
      %v3620 = vsub.s32 2, %v3619
      %v3621 = vrot.slane %v3611, %v3620
      %v3622 = vlaneseq
      %v3623 = vshrl.u32 %v3622, 7
      %v3624 = vsub.s32 2, %v3623
      %v3625 = vrot.slane %v3615, %v3624
      %v3626 = vsub.f32 %v3482, %v3621
      %v3627 = vsub.f32 %v3482, %v3625
      %v3628 = vsub.f32 %v3486, %v3621
      %v3629 = vsub.f32 %v3486, %v3625
      %v3630 = vsub.f32 %v3490, %v3621
      %v3631 = vsub.f32 %v3490, %v3625
      %v3632 = vsub.f32 %v3494, %v3621
      %v3633 = vsub.f32 %v3494, %v3625
      %v3634 = vsub.f32 %v3498, %v3621
      %v3635 = vsub.f32 %v3498, %v3625
      %v3636 = vsub.f32 %v3502, %v3621
      %v3637 = vsub.f32 %v3502, %v3625
      %v3638 = vsub.f32 %v3506, %v3621
      %v3639 = vsub.f32 %v3506, %v3625
      %v3640 = vsub.f32 %v3510, %v3621
      %v3641 = vsub.f32 %v3510, %v3625
      %v3642 = vsub.f32 %v3514, %v3621
      %v3643 = vsub.f32 %v3514, %v3625
      %v3644 = vsub.f32 %v3518, %v3621
      %v3645 = vsub.f32 %v3518, %v3625
      %v3646 = vsub.f32 %v3522, %v3621
      %v3647 = vsub.f32 %v3522, %v3625
      %v3648 = vsub.f32 %v3526, %v3621
      %v3649 = vsub.f32 %v3526, %v3625
      %v3650 = vsub.f32 %v3530, %v3621
      %v3651 = vsub.f32 %v3530, %v3625
      %v3652 = vsub.f32 %v3534, %v3621
      %v3653 = vsub.f32 %v3534, %v3625
      %v3654 = vsub.f32 %v3538, %v3621
      %v3655 = vsub.f32 %v3538, %v3625
      %v3656 = vsub.f32 %v3542, %v3621
      %v3657 = vsub.f32 %v3542, %v3625
      %v3658 = vsub.f32 %v3546, %v3621
      %v3659 = vsub.f32 %v3546, %v3625
      %v3660 = vsub.f32 %v3550, %v3621
      %v3661 = vsub.f32 %v3550, %v3625
      %v3662 = vsub.f32 %v3554, %v3621
      %v3663 = vsub.f32 %v3554, %v3625
      %v3664 = vsub.f32 %v3558, %v3621
      %v3665 = vsub.f32 %v3558, %v3625
      %v3666 = vsub.f32 %v3562, %v3621
      %v3667 = vsub.f32 %v3562, %v3625
      %v3668 = vsub.f32 %v3566, %v3621
      %v3669 = vsub.f32 %v3566, %v3625
      %v3670 = vsub.f32 %v3570, %v3621
      %v3671 = vsub.f32 %v3570, %v3625
      %v3672 = vsub.f32 %v3574, %v3621
      %v3673 = vsub.f32 %v3574, %v3625
      %v3674 = vsub.f32 %v3578, %v3621
      %v3675 = vsub.f32 %v3578, %v3625
      %v3676 = vsub.f32 %v3582, %v3621
      %v3677 = vsub.f32 %v3582, %v3625
      %v3678 = vsub.f32 %v3586, %v3621
      %v3679 = vsub.f32 %v3586, %v3625
      %v3680 = vsub.f32 %v3590, %v3621
      %v3681 = vsub.f32 %v3590, %v3625
      %v3682 = vsub.f32 %v3594, %v3621
      %v3683 = vsub.f32 %v3594, %v3625
      %v3684 = vsub.f32 %v3598, %v3621
      %v3685 = vsub.f32 %v3598, %v3625
      %v3686 = vsub.f32 %v3602, %v3621
      %v3687 = vsub.f32 %v3602, %v3625
      %v3688 = vsub.f32 %v3606, %v3621
      %v3689 = vsub.f32 %v3606, %v3625
      %v3690 = vmul.f32 %v3626, %v3626
      %v3691 = vmul.f32 %v3627, %v3627
      %v3692 = vmul.f32 %v3628, %v3628
      %v3693 = vmul.f32 %v3629, %v3629
      %v3694 = vmul.f32 %v3630, %v3630
      %v3695 = vmul.f32 %v3631, %v3631
      %v3696 = vmul.f32 %v3632, %v3632
      %v3697 = vmul.f32 %v3633, %v3633
      %v3698 = vmul.f32 %v3634, %v3634
      %v3699 = vmul.f32 %v3635, %v3635
      %v3700 = vmul.f32 %v3636, %v3636
      %v3701 = vmul.f32 %v3637, %v3637
      %v3702 = vmul.f32 %v3638, %v3638
      %v3703 = vmul.f32 %v3639, %v3639
      %v3704 = vmul.f32 %v3640, %v3640
      %v3705 = vmul.f32 %v3641, %v3641
      %v3706 = vmul.f32 %v3642, %v3642
      %v3707 = vmul.f32 %v3643, %v3643
      %v3708 = vmul.f32 %v3644, %v3644
      %v3709 = vmul.f32 %v3645, %v3645
      %v3710 = vmul.f32 %v3646, %v3646
      %v3711 = vmul.f32 %v3647, %v3647
      %v3712 = vmul.f32 %v3648, %v3648
      %v3713 = vmul.f32 %v3649, %v3649
      %v3714 = vmul.f32 %v3650, %v3650
      %v3715 = vmul.f32 %v3651, %v3651
      %v3716 = vmul.f32 %v3652, %v3652
      %v3717 = vmul.f32 %v3653, %v3653
      %v3718 = vmul.f32 %v3654, %v3654
      %v3719 = vmul.f32 %v3655, %v3655
      %v3720 = vmul.f32 %v3656, %v3656
      %v3721 = vmul.f32 %v3657, %v3657
      %v3722 = vmul.f32 %v3658, %v3658
      %v3723 = vmul.f32 %v3659, %v3659
      %v3724 = vmul.f32 %v3660, %v3660
      %v3725 = vmul.f32 %v3661, %v3661
      %v3726 = vmul.f32 %v3662, %v3662
      %v3727 = vmul.f32 %v3663, %v3663
      %v3728 = vmul.f32 %v3664, %v3664
      %v3729 = vmul.f32 %v3665, %v3665
      %v3730 = vmul.f32 %v3666, %v3666
      %v3731 = vmul.f32 %v3667, %v3667
      %v3732 = vmul.f32 %v3668, %v3668
      %v3733 = vmul.f32 %v3669, %v3669
      %v3734 = vmul.f32 %v3670, %v3670
      %v3735 = vmul.f32 %v3671, %v3671
      %v3736 = vmul.f32 %v3672, %v3672
      %v3737 = vmul.f32 %v3673, %v3673
      %v3738 = vmul.f32 %v3674, %v3674
      %v3739 = vmul.f32 %v3675, %v3675
      %v3740 = vmul.f32 %v3676, %v3676
      %v3741 = vmul.f32 %v3677, %v3677
      %v3742 = vmul.f32 %v3678, %v3678
      %v3743 = vmul.f32 %v3679, %v3679
      %v3744 = vmul.f32 %v3680, %v3680
      %v3745 = vmul.f32 %v3681, %v3681
      %v3746 = vmul.f32 %v3682, %v3682
      %v3747 = vmul.f32 %v3683, %v3683
      %v3748 = vmul.f32 %v3684, %v3684
      %v3749 = vmul.f32 %v3685, %v3685
      %v3750 = vmul.f32 %v3686, %v3686
      %v3751 = vmul.f32 %v3687, %v3687
      %v3752 = vmul.f32 %v3688, %v3688
      %v3753 = vmul.f32 %v3689, %v3689
      %v3754 = vadd.f32 %v3416, %v3690
      %v3755 = vadd.f32 %v3417, %v3691
      %v3756 = vadd.f32 %v3418, %v3692
      %v3757 = vadd.f32 %v3419, %v3693
      %v3758 = vadd.f32 %v3420, %v3694
      %v3759 = vadd.f32 %v3421, %v3695
      %v3760 = vadd.f32 %v3422, %v3696
      %v3761 = vadd.f32 %v3423, %v3697
      %v3762 = vadd.f32 %v3424, %v3698
      %v3763 = vadd.f32 %v3425, %v3699
      %v3764 = vadd.f32 %v3426, %v3700
      %v3765 = vadd.f32 %v3427, %v3701
      %v3766 = vadd.f32 %v3428, %v3702
      %v3767 = vadd.f32 %v3429, %v3703
      %v3768 = vadd.f32 %v3430, %v3704
      %v3769 = vadd.f32 %v3431, %v3705
      %v3770 = vadd.f32 %v3432, %v3706
      %v3771 = vadd.f32 %v3433, %v3707
      %v3772 = vadd.f32 %v3434, %v3708
      %v3773 = vadd.f32 %v3435, %v3709
      %v3774 = vadd.f32 %v3436, %v3710
      %v3775 = vadd.f32 %v3437, %v3711
      %v3776 = vadd.f32 %v3438, %v3712
      %v3777 = vadd.f32 %v3439, %v3713
      %v3778 = vadd.f32 %v3440, %v3714
      %v3779 = vadd.f32 %v3441, %v3715
      %v3780 = vadd.f32 %v3442, %v3716
      %v3781 = vadd.f32 %v3443, %v3717
      %v3782 = vadd.f32 %v3444, %v3718
      %v3783 = vadd.f32 %v3445, %v3719
      %v3784 = vadd.f32 %v3446, %v3720
      %v3785 = vadd.f32 %v3447, %v3721
      %v3786 = vadd.f32 %v3448, %v3722
      %v3787 = vadd.f32 %v3449, %v3723
      %v3788 = vadd.f32 %v3450, %v3724
      %v3789 = vadd.f32 %v3451, %v3725
      %v3790 = vadd.f32 %v3452, %v3726
      %v3791 = vadd.f32 %v3453, %v3727
      %v3792 = vadd.f32 %v3454, %v3728
      %v3793 = vadd.f32 %v3455, %v3729
      %v3794 = vadd.f32 %v3456, %v3730
      %v3795 = vadd.f32 %v3457, %v3731
      %v3796 = vadd.f32 %v3458, %v3732
      %v3797 = vadd.f32 %v3459, %v3733
      %v3798 = vadd.f32 %v3460, %v3734
      %v3799 = vadd.f32 %v3461, %v3735
      %v3800 = vadd.f32 %v3462, %v3736
      %v3801 = vadd.f32 %v3463, %v3737
      %v3802 = vadd.f32 %v3464, %v3738
      %v3803 = vadd.f32 %v3465, %v3739
      %v3804 = vadd.f32 %v3466, %v3740
      %v3805 = vadd.f32 %v3467, %v3741
      %v3806 = vadd.f32 %v3468, %v3742
      %v3807 = vadd.f32 %v3469, %v3743
      %v3808 = vadd.f32 %v3470, %v3744
      %v3809 = vadd.f32 %v3471, %v3745
      %v3810 = vadd.f32 %v3472, %v3746
      %v3811 = vadd.f32 %v3473, %v3747
      %v3812 = vadd.f32 %v3474, %v3748
      %v3813 = vadd.f32 %v3475, %v3749
      %v3814 = vadd.f32 %v3476, %v3750
      %v3815 = vadd.f32 %v3477, %v3751
      %v3816 = vadd.f32 %v3478, %v3752
      %v3817 = vadd.f32 %v3479, %v3753
      %vm3818 = vcmp.lt.f32.partialorder %v3754, %v1463
      %vm3819 = vcmp.lt.f32.partialorder %v3755, %v1463
      %vm3820 = vcmp.lt.f32.partialorder %v3756, %v1463
      %vm3821 = vcmp.lt.f32.partialorder %v3757, %v1463
      %vm3822 = vcmp.lt.f32.partialorder %v3758, %v1463
      %vm3823 = vcmp.lt.f32.partialorder %v3759, %v1463
      %vm3824 = vcmp.lt.f32.partialorder %v3760, %v1463
      %vm3825 = vcmp.lt.f32.partialorder %v3761, %v1463
      %vm3826 = vcmp.lt.f32.partialorder %v3762, %v1463
      %vm3827 = vcmp.lt.f32.partialorder %v3763, %v1463
      %vm3828 = vcmp.lt.f32.partialorder %v3764, %v1463
      %vm3829 = vcmp.lt.f32.partialorder %v3765, %v1463
      %vm3830 = vcmp.lt.f32.partialorder %v3766, %v1463
      %vm3831 = vcmp.lt.f32.partialorder %v3767, %v1463
      %vm3832 = vcmp.lt.f32.partialorder %v3768, %v1463
      %vm3833 = vcmp.lt.f32.partialorder %v3769, %v1463
      %vm3834 = vcmp.lt.f32.partialorder %v3770, %v1463
      %vm3835 = vcmp.lt.f32.partialorder %v3771, %v1463
      %vm3836 = vcmp.lt.f32.partialorder %v3772, %v1463
      %vm3837 = vcmp.lt.f32.partialorder %v3773, %v1463
      %vm3838 = vcmp.lt.f32.partialorder %v3774, %v1463
      %vm3839 = vcmp.lt.f32.partialorder %v3775, %v1463
      %vm3840 = vcmp.lt.f32.partialorder %v3776, %v1463
      %vm3841 = vcmp.lt.f32.partialorder %v3777, %v1463
      %vm3842 = vcmp.lt.f32.partialorder %v3778, %v1463
      %vm3843 = vcmp.lt.f32.partialorder %v3779, %v1463
      %vm3844 = vcmp.lt.f32.partialorder %v3780, %v1463
      %vm3845 = vcmp.lt.f32.partialorder %v3781, %v1463
      %vm3846 = vcmp.lt.f32.partialorder %v3782, %v1463
      %vm3847 = vcmp.lt.f32.partialorder %v3783, %v1463
      %vm3848 = vcmp.lt.f32.partialorder %v3784, %v1463
      %vm3849 = vcmp.lt.f32.partialorder %v3785, %v1463
      %vm3850 = vcmp.lt.f32.partialorder %v3786, %v1463
      %vm3851 = vcmp.lt.f32.partialorder %v3787, %v1463
      %vm3852 = vcmp.lt.f32.partialorder %v3788, %v1463
      %vm3853 = vcmp.lt.f32.partialorder %v3789, %v1463
      %vm3854 = vcmp.lt.f32.partialorder %v3790, %v1463
      %vm3855 = vcmp.lt.f32.partialorder %v3791, %v1463
      %vm3856 = vcmp.lt.f32.partialorder %v3792, %v1463
      %vm3857 = vcmp.lt.f32.partialorder %v3793, %v1463
      %vm3858 = vcmp.lt.f32.partialorder %v3794, %v1463
      %vm3859 = vcmp.lt.f32.partialorder %v3795, %v1463
      %vm3860 = vcmp.lt.f32.partialorder %v3796, %v1463
      %vm3861 = vcmp.lt.f32.partialorder %v3797, %v1463
      %vm3862 = vcmp.lt.f32.partialorder %v3798, %v1463
      %vm3863 = vcmp.lt.f32.partialorder %v3799, %v1463
      %vm3864 = vcmp.lt.f32.partialorder %v3800, %v1463
      %vm3865 = vcmp.lt.f32.partialorder %v3801, %v1463
      %vm3866 = vcmp.lt.f32.partialorder %v3802, %v1463
      %vm3867 = vcmp.lt.f32.partialorder %v3803, %v1463
      %vm3868 = vcmp.lt.f32.partialorder %v3804, %v1463
      %vm3869 = vcmp.lt.f32.partialorder %v3805, %v1463
      %vm3870 = vcmp.lt.f32.partialorder %v3806, %v1463
      %vm3871 = vcmp.lt.f32.partialorder %v3807, %v1463
      %vm3872 = vcmp.lt.f32.partialorder %v3808, %v1463
      %vm3873 = vcmp.lt.f32.partialorder %v3809, %v1463
      %vm3874 = vcmp.lt.f32.partialorder %v3810, %v1463
      %vm3875 = vcmp.lt.f32.partialorder %v3811, %v1463
      %vm3876 = vcmp.lt.f32.partialorder %v3812, %v1463
      %vm3877 = vcmp.lt.f32.partialorder %v3813, %v1463
      %vm3878 = vcmp.lt.f32.partialorder %v3814, %v1463
      %vm3879 = vcmp.lt.f32.partialorder %v3815, %v1463
      %vm3880 = vcmp.lt.f32.partialorder %v3816, %v1463
      %vm3881 = vcmp.lt.f32.partialorder %v3817, %v1463
      %v3882 = vsel %vm3818, 1, 0
      %v3883 = vsel %vm3819, 1, 0
      %v3884 = vsel %vm3820, 1, 0
      %v3885 = vsel %vm3821, 1, 0
      %v3886 = vsel %vm3822, 1, 0
      %v3887 = vsel %vm3823, 1, 0
      %v3888 = vsel %vm3824, 1, 0
      %v3889 = vsel %vm3825, 1, 0
      %v3890 = vsel %vm3826, 1, 0
      %v3891 = vsel %vm3827, 1, 0
      %v3892 = vsel %vm3828, 1, 0
      %v3893 = vsel %vm3829, 1, 0
      %v3894 = vsel %vm3830, 1, 0
      %v3895 = vsel %vm3831, 1, 0
      %v3896 = vsel %vm3832, 1, 0
      %v3897 = vsel %vm3833, 1, 0
      %v3898 = vsel %vm3834, 1, 0
      %v3899 = vsel %vm3835, 1, 0
      %v3900 = vsel %vm3836, 1, 0
      %v3901 = vsel %vm3837, 1, 0
      %v3902 = vsel %vm3838, 1, 0
      %v3903 = vsel %vm3839, 1, 0
      %v3904 = vsel %vm3840, 1, 0
      %v3905 = vsel %vm3841, 1, 0
      %v3906 = vsel %vm3842, 1, 0
      %v3907 = vsel %vm3843, 1, 0
      %v3908 = vsel %vm3844, 1, 0
      %v3909 = vsel %vm3845, 1, 0
      %v3910 = vsel %vm3846, 1, 0
      %v3911 = vsel %vm3847, 1, 0
      %v3912 = vsel %vm3848, 1, 0
      %v3913 = vsel %vm3849, 1, 0
      %v3914 = vsel %vm3850, 1, 0
      %v3915 = vsel %vm3851, 1, 0
      %v3916 = vsel %vm3852, 1, 0
      %v3917 = vsel %vm3853, 1, 0
      %v3918 = vsel %vm3854, 1, 0
      %v3919 = vsel %vm3855, 1, 0
      %v3920 = vsel %vm3856, 1, 0
      %v3921 = vsel %vm3857, 1, 0
      %v3922 = vsel %vm3858, 1, 0
      %v3923 = vsel %vm3859, 1, 0
      %v3924 = vsel %vm3860, 1, 0
      %v3925 = vsel %vm3861, 1, 0
      %v3926 = vsel %vm3862, 1, 0
      %v3927 = vsel %vm3863, 1, 0
      %v3928 = vsel %vm3864, 1, 0
      %v3929 = vsel %vm3865, 1, 0
      %v3930 = vsel %vm3866, 1, 0
      %v3931 = vsel %vm3867, 1, 0
      %v3932 = vsel %vm3868, 1, 0
      %v3933 = vsel %vm3869, 1, 0
      %v3934 = vsel %vm3870, 1, 0
      %v3935 = vsel %vm3871, 1, 0
      %v3936 = vsel %vm3872, 1, 0
      %v3937 = vsel %vm3873, 1, 0
      %v3938 = vsel %vm3874, 1, 0
      %v3939 = vsel %vm3875, 1, 0
      %v3940 = vsel %vm3876, 1, 0
      %v3941 = vsel %vm3877, 1, 0
      %v3942 = vsel %vm3878, 1, 0
      %v3943 = vsel %vm3879, 1, 0
      %v3944 = vsel %vm3880, 1, 0
      %v3945 = vsel %vm3881, 1, 0
      %v3946 = vcvt.s32.f32 %v3882
      %v3947 = vcvt.s32.f32 %v3883
      %v3948 = vcvt.s32.f32 %v3884
      %v3949 = vcvt.s32.f32 %v3885
      %v3950 = vcvt.s32.f32 %v3886
      %v3951 = vcvt.s32.f32 %v3887
      %v3952 = vcvt.s32.f32 %v3888
      %v3953 = vcvt.s32.f32 %v3889
      %v3954 = vcvt.s32.f32 %v3890
      %v3955 = vcvt.s32.f32 %v3891
      %v3956 = vcvt.s32.f32 %v3892
      %v3957 = vcvt.s32.f32 %v3893
      %v3958 = vcvt.s32.f32 %v3894
      %v3959 = vcvt.s32.f32 %v3895
      %v3960 = vcvt.s32.f32 %v3896
      %v3961 = vcvt.s32.f32 %v3897
      %v3962 = vcvt.s32.f32 %v3898
      %v3963 = vcvt.s32.f32 %v3899
      %v3964 = vcvt.s32.f32 %v3900
      %v3965 = vcvt.s32.f32 %v3901
      %v3966 = vcvt.s32.f32 %v3902
      %v3967 = vcvt.s32.f32 %v3903
      %v3968 = vcvt.s32.f32 %v3904
      %v3969 = vcvt.s32.f32 %v3905
      %v3970 = vcvt.s32.f32 %v3906
      %v3971 = vcvt.s32.f32 %v3907
      %v3972 = vcvt.s32.f32 %v3908
      %v3973 = vcvt.s32.f32 %v3909
      %v3974 = vcvt.s32.f32 %v3910
      %v3975 = vcvt.s32.f32 %v3911
      %v3976 = vcvt.s32.f32 %v3912
      %v3977 = vcvt.s32.f32 %v3913
      %v3978 = vcvt.s32.f32 %v3914
      %v3979 = vcvt.s32.f32 %v3915
      %v3980 = vcvt.s32.f32 %v3916
      %v3981 = vcvt.s32.f32 %v3917
      %v3982 = vcvt.s32.f32 %v3918
      %v3983 = vcvt.s32.f32 %v3919
      %v3984 = vcvt.s32.f32 %v3920
      %v3985 = vcvt.s32.f32 %v3921
      %v3986 = vcvt.s32.f32 %v3922
      %v3987 = vcvt.s32.f32 %v3923
      %v3988 = vcvt.s32.f32 %v3924
      %v3989 = vcvt.s32.f32 %v3925
      %v3990 = vcvt.s32.f32 %v3926
      %v3991 = vcvt.s32.f32 %v3927
      %v3992 = vcvt.s32.f32 %v3928
      %v3993 = vcvt.s32.f32 %v3929
      %v3994 = vcvt.s32.f32 %v3930
      %v3995 = vcvt.s32.f32 %v3931
      %v3996 = vcvt.s32.f32 %v3932
      %v3997 = vcvt.s32.f32 %v3933
      %v3998 = vcvt.s32.f32 %v3934
      %v3999 = vcvt.s32.f32 %v3935
      %v4000 = vcvt.s32.f32 %v3936
      %v4001 = vcvt.s32.f32 %v3937
      %v4002 = vcvt.s32.f32 %v3938
      %v4003 = vcvt.s32.f32 %v3939
      %v4004 = vcvt.s32.f32 %v3940
      %v4005 = vcvt.s32.f32 %v3941
      %v4006 = vcvt.s32.f32 %v3942
      %v4007 = vcvt.s32.f32 %v3943
      %v4008 = vcvt.s32.f32 %v3944
      %v4009 = vcvt.s32.f32 %v3945
      %v4010 = vadd.f32 %v3946, %v3948
      %v4011 = vadd.f32 %v4010, %v3950
      %v4012 = vadd.f32 %v4011, %v3952
      %v4013 = vadd.f32 %v4012, %v3954
      %v4014 = vadd.f32 %v4013, %v3956
      %v4015 = vadd.f32 %v4014, %v3958
      %v4016 = vadd.f32 %v4015, %v3960
      %v4017 = vadd.f32 %v4016, %v3962
      %v4018 = vadd.f32 %v4017, %v3964
      %v4019 = vadd.f32 %v4018, %v3966
      %v4020 = vadd.f32 %v4019, %v3968
      %v4021 = vadd.f32 %v4020, %v3970
      %v4022 = vadd.f32 %v4021, %v3972
      %v4023 = vadd.f32 %v4022, %v3974
      %v4024 = vadd.f32 %v4023, %v3976
      %v4025 = vadd.f32 %v4024, %v3978
      %v4026 = vadd.f32 %v4025, %v3980
      %v4027 = vadd.f32 %v4026, %v3982
      %v4028 = vadd.f32 %v4027, %v3984
      %v4029 = vadd.f32 %v4028, %v3986
      %v4030 = vadd.f32 %v4029, %v3988
      %v4031 = vadd.f32 %v4030, %v3990
      %v4032 = vadd.f32 %v4031, %v3992
      %v4033 = vadd.f32 %v4032, %v3994
      %v4034 = vadd.f32 %v4033, %v3996
      %v4035 = vadd.f32 %v4034, %v3998
      %v4036 = vadd.f32 %v4035, %v4000
      %v4037 = vadd.f32 %v4036, %v4002
      %v4038 = vadd.f32 %v4037, %v4004
      %v4039 = vadd.f32 %v4038, %v4006
      %v4040 = vadd.f32 %v4039, %v4008
      %v4041 = vrot.slane %v4040, 4
      %v4042 = vadd.f32 %v4040, %v4041
      %v4043 = vrot.slane %v4042, 2
      %v4044 = vadd.f32 %v4042, %v4043
      %v4045 = vrot.slane %v4044, 1
      %v4046 = vadd.f32 %v4044, %v4045
      %v4047 = vadd.f32 %v3947, %v3949
      %v4048 = vadd.f32 %v4047, %v3951
      %v4049 = vadd.f32 %v4048, %v3953
      %v4050 = vadd.f32 %v4049, %v3955
      %v4051 = vadd.f32 %v4050, %v3957
      %v4052 = vadd.f32 %v4051, %v3959
      %v4053 = vadd.f32 %v4052, %v3961
      %v4054 = vadd.f32 %v4053, %v3963
      %v4055 = vadd.f32 %v4054, %v3965
      %v4056 = vadd.f32 %v4055, %v3967
      %v4057 = vadd.f32 %v4056, %v3969
      %v4058 = vadd.f32 %v4057, %v3971
      %v4059 = vadd.f32 %v4058, %v3973
      %v4060 = vadd.f32 %v4059, %v3975
      %v4061 = vadd.f32 %v4060, %v3977
      %v4062 = vadd.f32 %v4061, %v3979
      %v4063 = vadd.f32 %v4062, %v3981
      %v4064 = vadd.f32 %v4063, %v3983
      %v4065 = vadd.f32 %v4064, %v3985
      %v4066 = vadd.f32 %v4065, %v3987
      %v4067 = vadd.f32 %v4066, %v3989
      %v4068 = vadd.f32 %v4067, %v3991
      %v4069 = vadd.f32 %v4068, %v3993
      %v4070 = vadd.f32 %v4069, %v3995
      %v4071 = vadd.f32 %v4070, %v3997
      %v4072 = vadd.f32 %v4071, %v3999
      %v4073 = vadd.f32 %v4072, %v4001
      %v4074 = vadd.f32 %v4073, %v4003
      %v4075 = vadd.f32 %v4074, %v4005
      %v4076 = vadd.f32 %v4075, %v4007
      %v4077 = vadd.f32 %v4076, %v4009
      %v4078 = vrot.slane %v4077, 4
      %v4079 = vadd.f32 %v4077, %v4078
      %v4080 = vrot.slane %v4079, 2
      %v4081 = vadd.f32 %v4079, %v4080
      %v4082 = vrot.slane %v4081, 1
      %v4083 = vadd.f32 %v4081, %v4082
      %vm4084 = vcmp.gt.f32.partialorder %v4046, 0.0
      %vm4085 = vcmp.gt.f32.partialorder %v4083, 0.0
      %v4086 = vsel %vm4084, 1, 0
      %v4087 = vsel %vm4085, 1, 0
      %v4088 = vcvt.s32.f32 %v4086
      %v4089 = vcvt.s32.f32 %v4087
      %v4092 = vcombine.low %v4088, %v4089
      %v4094 = vunpack.c.l.s4 1966171168
      %v4095 = vunpack.c.0.s8 %v4094
      %v4096 = vlaneseq
      %v4097 = vshrl.u32 %v4096, 7
      %v4098 = vsub.s32 %v4095, %v4097
      %v4099 = vrot.slane %v4092, %v4098
      %v4101 = vunpack.c.l.s4 1966171168
      %v4102 = vunpack.c.0.s8 %v4101
      %v4103 = vlaneseq
      %v4104 = vshrl.u32 %v4103, 7
      %v4105 = vsub.s32 %v4102, %v4104
      %v4106 = vrot.slane %v4099, %v4105
      %4108 = vst.msk [vmem:[%s399] sm:$0x3] %vm2801, %v4106
      %v4109 = vmin.f32 %v3754, %v3758
      %v4110 = vmin.f32 %v3756, %v3760
      %v4111 = vmin.f32 %v4109, %v3762
      %v4112 = vmin.f32 %v4110, %v3764
      %v4113 = vmin.f32 %v4111, %v3766
      %v4114 = vmin.f32 %v4112, %v3768
      %v4115 = vmin.f32 %v4113, %v3770
      %v4116 = vmin.f32 %v4114, %v3772
      %v4117 = vmin.f32 %v4115, %v3774
      %v4118 = vmin.f32 %v4116, %v3776
      %v4119 = vmin.f32 %v4117, %v3778
      %v4120 = vmin.f32 %v4118, %v3780
      %v4121 = vmin.f32 %v4119, %v3782
      %v4122 = vmin.f32 %v4120, %v3784
      %v4123 = vmin.f32 %v4121, %v3786
      %v4124 = vmin.f32 %v4122, %v3788
      %v4125 = vmin.f32 %v4123, %v3790
      %v4126 = vmin.f32 %v4124, %v3792
      %v4127 = vmin.f32 %v4125, %v3794
      %v4128 = vmin.f32 %v4126, %v3796
      %v4129 = vmin.f32 %v4127, %v3798
      %v4130 = vmin.f32 %v4128, %v3800
      %v4131 = vmin.f32 %v4129, %v3802
      %v4132 = vmin.f32 %v4130, %v3804
      %v4133 = vmin.f32 %v4131, %v3806
      %v4134 = vmin.f32 %v4132, %v3808
      %v4135 = vmin.f32 %v4133, %v3810
      %v4136 = vmin.f32 %v4134, %v3812
      %v4137 = vmin.f32 %v4135, %v3814
      %v4138 = vmin.f32 %v4136, %v3816
      %v4139 = vmin.f32 %v4137, %v4138
      %v4140 = vrot.slane %v4139, 4
      %v4141 = vmin.f32 %v4139, %v4140
      %v4142 = vrot.slane %v4141, 2
      %v4143 = vmin.f32 %v4141, %v4142
      %v4144 = vrot.slane %v4143, 1
      %v4145 = vmin.f32 %v4143, %v4144
      %v4146 = vmin.f32 %v3755, %v3759
      %v4147 = vmin.f32 %v3757, %v3761
      %v4148 = vmin.f32 %v4146, %v3763
      %v4149 = vmin.f32 %v4147, %v3765
      %v4150 = vmin.f32 %v4148, %v3767
      %v4151 = vmin.f32 %v4149, %v3769
      %v4152 = vmin.f32 %v4150, %v3771
      %v4153 = vmin.f32 %v4151, %v3773
      %v4154 = vmin.f32 %v4152, %v3775
      %v4155 = vmin.f32 %v4153, %v3777
      %v4156 = vmin.f32 %v4154, %v3779
      %v4157 = vmin.f32 %v4155, %v3781
      %v4158 = vmin.f32 %v4156, %v3783
      %v4159 = vmin.f32 %v4157, %v3785
      %v4160 = vmin.f32 %v4158, %v3787
      %v4161 = vmin.f32 %v4159, %v3789
      %v4162 = vmin.f32 %v4160, %v3791
      %v4163 = vmin.f32 %v4161, %v3793
      %v4164 = vmin.f32 %v4162, %v3795
      %v4165 = vmin.f32 %v4163, %v3797
      %v4166 = vmin.f32 %v4164, %v3799
      %v4167 = vmin.f32 %v4165, %v3801
      %v4168 = vmin.f32 %v4166, %v3803
      %v4169 = vmin.f32 %v4167, %v3805
      %v4170 = vmin.f32 %v4168, %v3807
      %v4171 = vmin.f32 %v4169, %v3809
      %v4172 = vmin.f32 %v4170, %v3811
      %v4173 = vmin.f32 %v4171, %v3813
      %v4174 = vmin.f32 %v4172, %v3815
      %v4175 = vmin.f32 %v4173, %v3817
      %v4176 = vmin.f32 %v4174, %v4175
      %v4177 = vrot.slane %v4176, 4
      %v4178 = vmin.f32 %v4176, %v4177
      %v4179 = vrot.slane %v4178, 2
      %v4180 = vmin.f32 %v4178, %v4179
      %v4181 = vrot.slane %v4180, 1
      %v4182 = vmin.f32 %v4180, %v4181
      %v4183 = vcvt.s32.f32 %v1657
      %v4184 = vcvt.s32.f32 %v1658
      %v4185 = vcvt.s32.f32 %v1659
      %v4186 = vcvt.s32.f32 %v1660
      %v4187 = vcvt.s32.f32 %v1661
      %v4188 = vcvt.s32.f32 %v1662
      %v4189 = vcvt.s32.f32 %v1663
      %v4190 = vcvt.s32.f32 %v1664
      %v4191 = vcvt.s32.f32 %v1665
      %v4192 = vcvt.s32.f32 %v1666
      %v4193 = vcvt.s32.f32 %v1667
      %v4194 = vcvt.s32.f32 %v1668
      %v4195 = vcvt.s32.f32 %v1669
      %v4196 = vcvt.s32.f32 %v1670
      %v4197 = vcvt.s32.f32 %v1671
      %v4198 = vcvt.s32.f32 %v1672
      %v4199 = vcvt.s32.f32 %v1673
      %v4200 = vcvt.s32.f32 %v1674
      %v4201 = vcvt.s32.f32 %v1675
      %v4202 = vcvt.s32.f32 %v1676
      %v4203 = vcvt.s32.f32 %v1677
      %v4204 = vcvt.s32.f32 %v1678
      %v4205 = vcvt.s32.f32 %v1679
      %v4206 = vcvt.s32.f32 %v1680
      %v4207 = vcvt.s32.f32 %v1681
      %v4208 = vcvt.s32.f32 %v1682
      %v4209 = vcvt.s32.f32 %v1683
      %v4210 = vcvt.s32.f32 %v1684
      %v4211 = vcvt.s32.f32 %v1685
      %v4212 = vcvt.s32.f32 %v1686
      %v4213 = vcvt.s32.f32 %v1687
      %v4214 = vcvt.s32.f32 %v1688
      %vm4215 = vcmp.eq.f32.partialorder %v3754, %v4145
      %vm4216 = vcmp.eq.f32.partialorder %v3755, %v4182
      %vm4217 = vcmp.eq.f32.partialorder %v3756, %v4145
      %vm4218 = vcmp.eq.f32.partialorder %v3757, %v4182
      %vm4219 = vcmp.eq.f32.partialorder %v3758, %v4145
      %vm4220 = vcmp.eq.f32.partialorder %v3759, %v4182
      %vm4221 = vcmp.eq.f32.partialorder %v3760, %v4145
      %vm4222 = vcmp.eq.f32.partialorder %v3761, %v4182
      %vm4223 = vcmp.eq.f32.partialorder %v3762, %v4145
      %vm4224 = vcmp.eq.f32.partialorder %v3763, %v4182
      %vm4225 = vcmp.eq.f32.partialorder %v3764, %v4145
      %vm4226 = vcmp.eq.f32.partialorder %v3765, %v4182
      %vm4227 = vcmp.eq.f32.partialorder %v3766, %v4145
      %vm4228 = vcmp.eq.f32.partialorder %v3767, %v4182
      %vm4229 = vcmp.eq.f32.partialorder %v3768, %v4145
      %vm4230 = vcmp.eq.f32.partialorder %v3769, %v4182
      %vm4231 = vcmp.eq.f32.partialorder %v3770, %v4145
      %vm4232 = vcmp.eq.f32.partialorder %v3771, %v4182
      %vm4233 = vcmp.eq.f32.partialorder %v3772, %v4145
      %vm4234 = vcmp.eq.f32.partialorder %v3773, %v4182
      %vm4235 = vcmp.eq.f32.partialorder %v3774, %v4145
      %vm4236 = vcmp.eq.f32.partialorder %v3775, %v4182
      %vm4237 = vcmp.eq.f32.partialorder %v3776, %v4145
      %vm4238 = vcmp.eq.f32.partialorder %v3777, %v4182
      %vm4239 = vcmp.eq.f32.partialorder %v3778, %v4145
      %vm4240 = vcmp.eq.f32.partialorder %v3779, %v4182
      %vm4241 = vcmp.eq.f32.partialorder %v3780, %v4145
      %vm4242 = vcmp.eq.f32.partialorder %v3781, %v4182
      %vm4243 = vcmp.eq.f32.partialorder %v3782, %v4145
      %vm4244 = vcmp.eq.f32.partialorder %v3783, %v4182
      %vm4245 = vcmp.eq.f32.partialorder %v3784, %v4145
      %vm4246 = vcmp.eq.f32.partialorder %v3785, %v4182
      %vm4247 = vcmp.eq.f32.partialorder %v3786, %v4145
      %vm4248 = vcmp.eq.f32.partialorder %v3787, %v4182
      %vm4249 = vcmp.eq.f32.partialorder %v3788, %v4145
      %vm4250 = vcmp.eq.f32.partialorder %v3789, %v4182
      %vm4251 = vcmp.eq.f32.partialorder %v3790, %v4145
      %vm4252 = vcmp.eq.f32.partialorder %v3791, %v4182
      %vm4253 = vcmp.eq.f32.partialorder %v3792, %v4145
      %vm4254 = vcmp.eq.f32.partialorder %v3793, %v4182
      %vm4255 = vcmp.eq.f32.partialorder %v3794, %v4145
      %vm4256 = vcmp.eq.f32.partialorder %v3795, %v4182
      %vm4257 = vcmp.eq.f32.partialorder %v3796, %v4145
      %vm4258 = vcmp.eq.f32.partialorder %v3797, %v4182
      %vm4259 = vcmp.eq.f32.partialorder %v3798, %v4145
      %vm4260 = vcmp.eq.f32.partialorder %v3799, %v4182
      %vm4261 = vcmp.eq.f32.partialorder %v3800, %v4145
      %vm4262 = vcmp.eq.f32.partialorder %v3801, %v4182
      %vm4263 = vcmp.eq.f32.partialorder %v3802, %v4145
      %vm4264 = vcmp.eq.f32.partialorder %v3803, %v4182
      %vm4265 = vcmp.eq.f32.partialorder %v3804, %v4145
      %vm4266 = vcmp.eq.f32.partialorder %v3805, %v4182
      %vm4267 = vcmp.eq.f32.partialorder %v3806, %v4145
      %vm4268 = vcmp.eq.f32.partialorder %v3807, %v4182
      %vm4269 = vcmp.eq.f32.partialorder %v3808, %v4145
      %vm4270 = vcmp.eq.f32.partialorder %v3809, %v4182
      %vm4271 = vcmp.eq.f32.partialorder %v3810, %v4145
      %vm4272 = vcmp.eq.f32.partialorder %v3811, %v4182
      %vm4273 = vcmp.eq.f32.partialorder %v3812, %v4145
      %vm4274 = vcmp.eq.f32.partialorder %v3813, %v4182
      %vm4275 = vcmp.eq.f32.partialorder %v3814, %v4145
      %vm4276 = vcmp.eq.f32.partialorder %v3815, %v4182
      %vm4277 = vcmp.eq.f32.partialorder %v3816, %v4145
      %vm4278 = vcmp.eq.f32.partialorder %v3817, %v4182
      %v4279 = vsel %vm4215, %v4183, 256.0
      %v4280 = vsel %vm4216, %v4183, 256.0
      %v4281 = vsel %vm4217, %v4184, 256.0
      %v4282 = vsel %vm4218, %v4184, 256.0
      %v4283 = vsel %vm4219, %v4185, 256.0
      %v4284 = vsel %vm4220, %v4185, 256.0
      %v4285 = vsel %vm4221, %v4186, 256.0
      %v4286 = vsel %vm4222, %v4186, 256.0
      %v4287 = vsel %vm4223, %v4187, 256.0
      %v4288 = vsel %vm4224, %v4187, 256.0
      %v4289 = vsel %vm4225, %v4188, 256.0
      %v4290 = vsel %vm4226, %v4188, 256.0
      %v4291 = vsel %vm4227, %v4189, 256.0
      %v4292 = vsel %vm4228, %v4189, 256.0
      %v4293 = vsel %vm4229, %v4190, 256.0
      %v4294 = vsel %vm4230, %v4190, 256.0
      %v4295 = vsel %vm4231, %v4191, 256.0
      %v4296 = vsel %vm4232, %v4191, 256.0
      %v4297 = vsel %vm4233, %v4192, 256.0
      %v4298 = vsel %vm4234, %v4192, 256.0
      %v4299 = vsel %vm4235, %v4193, 256.0
      %v4300 = vsel %vm4236, %v4193, 256.0
      %v4301 = vsel %vm4237, %v4194, 256.0
      %v4302 = vsel %vm4238, %v4194, 256.0
      %v4303 = vsel %vm4239, %v4195, 256.0
      %v4304 = vsel %vm4240, %v4195, 256.0
      %v4305 = vsel %vm4241, %v4196, 256.0
      %v4306 = vsel %vm4242, %v4196, 256.0
      %v4307 = vsel %vm4243, %v4197, 256.0
      %v4308 = vsel %vm4244, %v4197, 256.0
      %v4309 = vsel %vm4245, %v4198, 256.0
      %v4310 = vsel %vm4246, %v4198, 256.0
      %v4311 = vsel %vm4247, %v4199, 256.0
      %v4312 = vsel %vm4248, %v4199, 256.0
      %v4313 = vsel %vm4249, %v4200, 256.0
      %v4314 = vsel %vm4250, %v4200, 256.0
      %v4315 = vsel %vm4251, %v4201, 256.0
      %v4316 = vsel %vm4252, %v4201, 256.0
      %v4317 = vsel %vm4253, %v4202, 256.0
      %v4318 = vsel %vm4254, %v4202, 256.0
      %v4319 = vsel %vm4255, %v4203, 256.0
      %v4320 = vsel %vm4256, %v4203, 256.0
      %v4321 = vsel %vm4257, %v4204, 256.0
      %v4322 = vsel %vm4258, %v4204, 256.0
      %v4323 = vsel %vm4259, %v4205, 256.0
      %v4324 = vsel %vm4260, %v4205, 256.0
      %v4325 = vsel %vm4261, %v4206, 256.0
      %v4326 = vsel %vm4262, %v4206, 256.0
      %v4327 = vsel %vm4263, %v4207, 256.0
      %v4328 = vsel %vm4264, %v4207, 256.0
      %v4329 = vsel %vm4265, %v4208, 256.0
      %v4330 = vsel %vm4266, %v4208, 256.0
      %v4331 = vsel %vm4267, %v4209, 256.0
      %v4332 = vsel %vm4268, %v4209, 256.0
      %v4333 = vsel %vm4269, %v4210, 256.0
      %v4334 = vsel %vm4270, %v4210, 256.0
      %v4335 = vsel %vm4271, %v4211, 256.0
      %v4336 = vsel %vm4272, %v4211, 256.0
      %v4337 = vsel %vm4273, %v4212, 256.0
      %v4338 = vsel %vm4274, %v4212, 256.0
      %v4339 = vsel %vm4275, %v4213, 256.0
      %v4340 = vsel %vm4276, %v4213, 256.0
      %v4341 = vsel %vm4277, %v4214, 256.0
      %v4342 = vsel %vm4278, %v4214, 256.0
      %v4343 = vmin.f32 %v4279, %v4283
      %v4344 = vmin.f32 %v4281, %v4285
      %v4345 = vmin.f32 %v4343, %v4287
      %v4346 = vmin.f32 %v4344, %v4289
      %v4347 = vmin.f32 %v4345, %v4291
      %v4348 = vmin.f32 %v4346, %v4293
      %v4349 = vmin.f32 %v4347, %v4295
      %v4350 = vmin.f32 %v4348, %v4297
      %v4351 = vmin.f32 %v4349, %v4299
      %v4352 = vmin.f32 %v4350, %v4301
      %v4353 = vmin.f32 %v4351, %v4303
      %v4354 = vmin.f32 %v4352, %v4305
      %v4355 = vmin.f32 %v4353, %v4307
      %v4356 = vmin.f32 %v4354, %v4309
      %v4357 = vmin.f32 %v4355, %v4311
      %v4358 = vmin.f32 %v4356, %v4313
      %v4359 = vmin.f32 %v4357, %v4315
      %v4360 = vmin.f32 %v4358, %v4317
      %v4361 = vmin.f32 %v4359, %v4319
      %v4362 = vmin.f32 %v4360, %v4321
      %v4363 = vmin.f32 %v4361, %v4323
      %v4364 = vmin.f32 %v4362, %v4325
      %v4365 = vmin.f32 %v4363, %v4327
      %v4366 = vmin.f32 %v4364, %v4329
      %v4367 = vmin.f32 %v4365, %v4331
      %v4368 = vmin.f32 %v4366, %v4333
      %v4369 = vmin.f32 %v4367, %v4335
      %v4370 = vmin.f32 %v4368, %v4337
      %v4371 = vmin.f32 %v4369, %v4339
      %v4372 = vmin.f32 %v4370, %v4341
      %v4373 = vmin.f32 %v4371, %v4372
      %v4374 = vrot.slane %v4373, 4
      %v4375 = vmin.f32 %v4373, %v4374
      %v4376 = vrot.slane %v4375, 2
      %v4377 = vmin.f32 %v4375, %v4376
      %v4378 = vrot.slane %v4377, 1
      %v4379 = vmin.f32 %v4377, %v4378
      %v4380 = vmin.f32 %v4280, %v4284
      %v4381 = vmin.f32 %v4282, %v4286
      %v4382 = vmin.f32 %v4380, %v4288
      %v4383 = vmin.f32 %v4381, %v4290
      %v4384 = vmin.f32 %v4382, %v4292
      %v4385 = vmin.f32 %v4383, %v4294
      %v4386 = vmin.f32 %v4384, %v4296
      %v4387 = vmin.f32 %v4385, %v4298
      %v4388 = vmin.f32 %v4386, %v4300
      %v4389 = vmin.f32 %v4387, %v4302
      %v4390 = vmin.f32 %v4388, %v4304
      %v4391 = vmin.f32 %v4389, %v4306
      %v4392 = vmin.f32 %v4390, %v4308
      %v4393 = vmin.f32 %v4391, %v4310
      %v4394 = vmin.f32 %v4392, %v4312
      %v4395 = vmin.f32 %v4393, %v4314
      %v4396 = vmin.f32 %v4394, %v4316
      %v4397 = vmin.f32 %v4395, %v4318
      %v4398 = vmin.f32 %v4396, %v4320
      %v4399 = vmin.f32 %v4397, %v4322
      %v4400 = vmin.f32 %v4398, %v4324
      %v4401 = vmin.f32 %v4399, %v4326
      %v4402 = vmin.f32 %v4400, %v4328
      %v4403 = vmin.f32 %v4401, %v4330
      %v4404 = vmin.f32 %v4402, %v4332
      %v4405 = vmin.f32 %v4403, %v4334
      %v4406 = vmin.f32 %v4404, %v4336
      %v4407 = vmin.f32 %v4405, %v4338
      %v4408 = vmin.f32 %v4406, %v4340
      %v4409 = vmin.f32 %v4407, %v4342
      %v4410 = vmin.f32 %v4408, %v4409
      %v4411 = vrot.slane %v4410, 4
      %v4412 = vmin.f32 %v4410, %v4411
      %v4413 = vrot.slane %v4412, 2
      %v4414 = vmin.f32 %v4412, %v4413
      %v4415 = vrot.slane %v4414, 1
      %v4416 = vmin.f32 %v4414, %v4415
      %v4417 = vcvt.f32.s32.to.zero.pseudo %v4379
      %v4418 = vcvt.f32.s32.to.zero.pseudo %v4416
      %v4419 = vcombine.low %v4417, %v4418
      %v4421 = vunpack.c.l.s4 1966171168
      %v4422 = vunpack.c.0.s8 %v4421
      %v4423 = vlaneseq
      %v4424 = vshrl.u32 %v4423, 7
      %v4425 = vsub.s32 %v4422, %v4424
      %v4426 = vrot.slane %v4419, %v4425
      %v4428 = vunpack.c.l.s4 1966171168
      %v4429 = vunpack.c.0.s8 %v4428
      %v4430 = vlaneseq
      %v4431 = vshrl.u32 %v4430, 7
      %v4432 = vsub.s32 %v4429, %v4431
      %v4433 = vrot.slane %v4426, %v4432
      %4434 = vst.msk [vmem:[%s403] sm:$0x3] %vm2801, %v4433
      %v4435 = vsel %vm2803, 1, 0
      %v4436 = vsel %vm2804, 1, 0
      %v4437 = vsel %vm2805, 1, 0
      %v4438 = vsel %vm2806, 1, 0
      %v4439 = vsel %vm2807, 1, 0
      %v4440 = vsel %vm2808, 1, 0
      %v4441 = vsel %vm2809, 1, 0
      %v4442 = vsel %vm2810, 1, 0
      %v4443 = vsel %vm2811, 1, 0
      %v4444 = vsel %vm2812, 1, 0
      %v4445 = vsel %vm2813, 1, 0
      %v4446 = vsel %vm2814, 1, 0
      %v4447 = vsel %vm2815, 1, 0
      %v4448 = vsel %vm2816, 1, 0
      %v4449 = vsel %vm2817, 1, 0
      %v4450 = vsel %vm2818, 1, 0
      %v4451 = vsel %vm2819, 1, 0
      %v4452 = vsel %vm2820, 1, 0
      %v4453 = vsel %vm2821, 1, 0
      %v4454 = vsel %vm2822, 1, 0
      %v4455 = vsel %vm2823, 1, 0
      %v4456 = vsel %vm2824, 1, 0
      %v4457 = vsel %vm2825, 1, 0
      %v4458 = vsel %vm2826, 1, 0
      %v4459 = vsel %vm2827, 1, 0
      %v4460 = vsel %vm2828, 1, 0
      %v4461 = vsel %vm2829, 1, 0
      %v4462 = vsel %vm2830, 1, 0
      %v4463 = vsel %vm2831, 1, 0
      %v4464 = vsel %vm2832, 1, 0
      %v4465 = vsel %vm2833, 1, 0
      %v4466 = vsel %vm2834, 1, 0
      %vm4467 = vcmp.eq.s32.totalorder %v4435, 1
      %vm4468 = vcmp.eq.s32.totalorder %v4436, 1
      %vm4469 = vcmp.eq.s32.totalorder %v4437, 1
      %vm4470 = vcmp.eq.s32.totalorder %v4438, 1
      %vm4471 = vcmp.eq.s32.totalorder %v4439, 1
      %vm4472 = vcmp.eq.s32.totalorder %v4440, 1
      %vm4473 = vcmp.eq.s32.totalorder %v4441, 1
      %vm4474 = vcmp.eq.s32.totalorder %v4442, 1
      %vm4475 = vcmp.eq.s32.totalorder %v4443, 1
      %vm4476 = vcmp.eq.s32.totalorder %v4444, 1
      %vm4477 = vcmp.eq.s32.totalorder %v4445, 1
      %vm4478 = vcmp.eq.s32.totalorder %v4446, 1
      %vm4479 = vcmp.eq.s32.totalorder %v4447, 1
      %vm4480 = vcmp.eq.s32.totalorder %v4448, 1
      %vm4481 = vcmp.eq.s32.totalorder %v4449, 1
      %vm4482 = vcmp.eq.s32.totalorder %v4450, 1
      %vm4483 = vcmp.eq.s32.totalorder %v4451, 1
      %vm4484 = vcmp.eq.s32.totalorder %v4452, 1
      %vm4485 = vcmp.eq.s32.totalorder %v4453, 1
      %vm4486 = vcmp.eq.s32.totalorder %v4454, 1
      %vm4487 = vcmp.eq.s32.totalorder %v4455, 1
      %vm4488 = vcmp.eq.s32.totalorder %v4456, 1
      %vm4489 = vcmp.eq.s32.totalorder %v4457, 1
      %vm4490 = vcmp.eq.s32.totalorder %v4458, 1
      %vm4491 = vcmp.eq.s32.totalorder %v4459, 1
      %vm4492 = vcmp.eq.s32.totalorder %v4460, 1
      %vm4493 = vcmp.eq.s32.totalorder %v4461, 1
      %vm4494 = vcmp.eq.s32.totalorder %v4462, 1
      %vm4495 = vcmp.eq.s32.totalorder %v4463, 1
      %vm4496 = vcmp.eq.s32.totalorder %v4464, 1
      %vm4497 = vcmp.eq.s32.totalorder %v4465, 1
      %vm4498 = vcmp.eq.s32.totalorder %v4466, 1
      %v4499 = vsel %vm4467, %v415, 1000000.0
      %v4500 = vsel %vm4468, %v416, 1000000.0
      %v4501 = vsel %vm4469, %v417, 1000000.0
      %v4502 = vsel %vm4470, %v418, 1000000.0
      %v4503 = vsel %vm4471, %v419, 1000000.0
      %v4504 = vsel %vm4472, %v420, 1000000.0
      %v4505 = vsel %vm4473, %v421, 1000000.0
      %v4506 = vsel %vm4474, %v422, 1000000.0
      %v4507 = vsel %vm4475, %v423, 1000000.0
      %v4508 = vsel %vm4476, %v424, 1000000.0
      %v4509 = vsel %vm4477, %v425, 1000000.0
      %v4510 = vsel %vm4478, %v426, 1000000.0
      %v4511 = vsel %vm4479, %v427, 1000000.0
      %v4512 = vsel %vm4480, %v428, 1000000.0
      %v4513 = vsel %vm4481, %v429, 1000000.0
      %v4514 = vsel %vm4482, %v430, 1000000.0
      %v4515 = vsel %vm4483, %v431, 1000000.0
      %v4516 = vsel %vm4484, %v432, 1000000.0
      %v4517 = vsel %vm4485, %v433, 1000000.0
      %v4518 = vsel %vm4486, %v434, 1000000.0
      %v4519 = vsel %vm4487, %v435, 1000000.0
      %v4520 = vsel %vm4488, %v436, 1000000.0
      %v4521 = vsel %vm4489, %v437, 1000000.0
      %v4522 = vsel %vm4490, %v438, 1000000.0
      %v4523 = vsel %vm4491, %v439, 1000000.0
      %v4524 = vsel %vm4492, %v440, 1000000.0
      %v4525 = vsel %vm4493, %v441, 1000000.0
      %v4526 = vsel %vm4494, %v442, 1000000.0
      %v4527 = vsel %vm4495, %v443, 1000000.0
      %v4528 = vsel %vm4496, %v444, 1000000.0
      %v4529 = vsel %vm4497, %v445, 1000000.0
      %v4530 = vsel %vm4498, %v446, 1000000.0
      %4532 = vset.pattern.permute.xlu0 0
      %4533 = vperm.xlu0 %4532, %v4499
      %v4534 = vpop.permute.xlu0 %4533
      %4537 = vset.pattern.permute.xlu0 0
      %4538 = vperm.xlu0 %4537, %v4500
      %v4539 = vpop.permute.xlu0 %4538
      %4542 = vset.pattern.permute.xlu0 0
      %4543 = vperm.xlu0 %4542, %v4501
      %v4544 = vpop.permute.xlu0 %4543
      %4547 = vset.pattern.permute.xlu0 0
      %4548 = vperm.xlu0 %4547, %v4502
      %v4549 = vpop.permute.xlu0 %4548
      %4552 = vset.pattern.permute.xlu0 0
      %4553 = vperm.xlu0 %4552, %v4503
      %v4554 = vpop.permute.xlu0 %4553
      %4557 = vset.pattern.permute.xlu0 0
      %4558 = vperm.xlu0 %4557, %v4504
      %v4559 = vpop.permute.xlu0 %4558
      %4562 = vset.pattern.permute.xlu0 0
      %4563 = vperm.xlu0 %4562, %v4505
      %v4564 = vpop.permute.xlu0 %4563
      %4567 = vset.pattern.permute.xlu0 0
      %4568 = vperm.xlu0 %4567, %v4506
      %v4569 = vpop.permute.xlu0 %4568
      %4572 = vset.pattern.permute.xlu0 0
      %4573 = vperm.xlu0 %4572, %v4507
      %v4574 = vpop.permute.xlu0 %4573
      %4577 = vset.pattern.permute.xlu0 0
      %4578 = vperm.xlu0 %4577, %v4508
      %v4579 = vpop.permute.xlu0 %4578
      %4582 = vset.pattern.permute.xlu0 0
      %4583 = vperm.xlu0 %4582, %v4509
      %v4584 = vpop.permute.xlu0 %4583
      %4587 = vset.pattern.permute.xlu0 0
      %4588 = vperm.xlu0 %4587, %v4510
      %v4589 = vpop.permute.xlu0 %4588
      %4592 = vset.pattern.permute.xlu0 0
      %4593 = vperm.xlu0 %4592, %v4511
      %v4594 = vpop.permute.xlu0 %4593
      %4597 = vset.pattern.permute.xlu0 0
      %4598 = vperm.xlu0 %4597, %v4512
      %v4599 = vpop.permute.xlu0 %4598
      %4602 = vset.pattern.permute.xlu0 0
      %4603 = vperm.xlu0 %4602, %v4513
      %v4604 = vpop.permute.xlu0 %4603
      %4607 = vset.pattern.permute.xlu0 0
      %4608 = vperm.xlu0 %4607, %v4514
      %v4609 = vpop.permute.xlu0 %4608
      %4612 = vset.pattern.permute.xlu0 0
      %4613 = vperm.xlu0 %4612, %v4515
      %v4614 = vpop.permute.xlu0 %4613
      %4617 = vset.pattern.permute.xlu0 0
      %4618 = vperm.xlu0 %4617, %v4516
      %v4619 = vpop.permute.xlu0 %4618
      %4622 = vset.pattern.permute.xlu0 0
      %4623 = vperm.xlu0 %4622, %v4517
      %v4624 = vpop.permute.xlu0 %4623
      %4627 = vset.pattern.permute.xlu0 0
      %4628 = vperm.xlu0 %4627, %v4518
      %v4629 = vpop.permute.xlu0 %4628
      %4632 = vset.pattern.permute.xlu0 0
      %4633 = vperm.xlu0 %4632, %v4519
      %v4634 = vpop.permute.xlu0 %4633
      %4637 = vset.pattern.permute.xlu0 0
      %4638 = vperm.xlu0 %4637, %v4520
      %v4639 = vpop.permute.xlu0 %4638
      %4642 = vset.pattern.permute.xlu0 0
      %4643 = vperm.xlu0 %4642, %v4521
      %v4644 = vpop.permute.xlu0 %4643
      %4647 = vset.pattern.permute.xlu0 0
      %4648 = vperm.xlu0 %4647, %v4522
      %v4649 = vpop.permute.xlu0 %4648
      %4652 = vset.pattern.permute.xlu0 0
      %4653 = vperm.xlu0 %4652, %v4523
      %v4654 = vpop.permute.xlu0 %4653
      %4657 = vset.pattern.permute.xlu0 0
      %4658 = vperm.xlu0 %4657, %v4524
      %v4659 = vpop.permute.xlu0 %4658
      %4662 = vset.pattern.permute.xlu0 0
      %4663 = vperm.xlu0 %4662, %v4525
      %v4664 = vpop.permute.xlu0 %4663
      %4667 = vset.pattern.permute.xlu0 0
      %4668 = vperm.xlu0 %4667, %v4526
      %v4669 = vpop.permute.xlu0 %4668
      %4672 = vset.pattern.permute.xlu0 0
      %4673 = vperm.xlu0 %4672, %v4527
      %v4674 = vpop.permute.xlu0 %4673
      %4677 = vset.pattern.permute.xlu0 0
      %4678 = vperm.xlu0 %4677, %v4528
      %v4679 = vpop.permute.xlu0 %4678
      %4682 = vset.pattern.permute.xlu0 0
      %4683 = vperm.xlu0 %4682, %v4529
      %v4684 = vpop.permute.xlu0 %4683
      %4687 = vset.pattern.permute.xlu0 0
      %4688 = vperm.xlu0 %4687, %v4530
      %v4689 = vpop.permute.xlu0 %4688
      %v4691 = vsub.f32 %v4534, %v3009
      %v4692 = vsub.f32 %v4534, %v3013
      %v4693 = vsub.f32 %v4539, %v3009
      %v4694 = vsub.f32 %v4539, %v3013
      %v4695 = vsub.f32 %v4544, %v3009
      %v4696 = vsub.f32 %v4544, %v3013
      %v4697 = vsub.f32 %v4549, %v3009
      %v4698 = vsub.f32 %v4549, %v3013
      %v4699 = vsub.f32 %v4554, %v3009
      %v4700 = vsub.f32 %v4554, %v3013
      %v4701 = vsub.f32 %v4559, %v3009
      %v4702 = vsub.f32 %v4559, %v3013
      %v4703 = vsub.f32 %v4564, %v3009
      %v4704 = vsub.f32 %v4564, %v3013
      %v4705 = vsub.f32 %v4569, %v3009
      %v4706 = vsub.f32 %v4569, %v3013
      %v4707 = vsub.f32 %v4574, %v3009
      %v4708 = vsub.f32 %v4574, %v3013
      %v4709 = vsub.f32 %v4579, %v3009
      %v4710 = vsub.f32 %v4579, %v3013
      %v4711 = vsub.f32 %v4584, %v3009
      %v4712 = vsub.f32 %v4584, %v3013
      %v4713 = vsub.f32 %v4589, %v3009
      %v4714 = vsub.f32 %v4589, %v3013
      %v4715 = vsub.f32 %v4594, %v3009
      %v4716 = vsub.f32 %v4594, %v3013
      %v4717 = vsub.f32 %v4599, %v3009
      %v4718 = vsub.f32 %v4599, %v3013
      %v4719 = vsub.f32 %v4604, %v3009
      %v4720 = vsub.f32 %v4604, %v3013
      %v4721 = vsub.f32 %v4609, %v3009
      %v4722 = vsub.f32 %v4609, %v3013
      %v4723 = vsub.f32 %v4614, %v3009
      %v4724 = vsub.f32 %v4614, %v3013
      %v4725 = vsub.f32 %v4619, %v3009
      %v4726 = vsub.f32 %v4619, %v3013
      %v4727 = vsub.f32 %v4624, %v3009
      %v4728 = vsub.f32 %v4624, %v3013
      %v4729 = vsub.f32 %v4629, %v3009
      %v4730 = vsub.f32 %v4629, %v3013
      %v4731 = vsub.f32 %v4634, %v3009
      %v4732 = vsub.f32 %v4634, %v3013
      %v4733 = vsub.f32 %v4639, %v3009
      %v4734 = vsub.f32 %v4639, %v3013
      %v4735 = vsub.f32 %v4644, %v3009
      %v4736 = vsub.f32 %v4644, %v3013
      %v4737 = vsub.f32 %v4649, %v3009
      %v4738 = vsub.f32 %v4649, %v3013
      %v4739 = vsub.f32 %v4654, %v3009
      %v4740 = vsub.f32 %v4654, %v3013
      %v4741 = vsub.f32 %v4659, %v3009
      %v4742 = vsub.f32 %v4659, %v3013
      %v4743 = vsub.f32 %v4664, %v3009
      %v4744 = vsub.f32 %v4664, %v3013
      %v4745 = vsub.f32 %v4669, %v3009
      %v4746 = vsub.f32 %v4669, %v3013
      %v4747 = vsub.f32 %v4674, %v3009
      %v4748 = vsub.f32 %v4674, %v3013
      %v4749 = vsub.f32 %v4679, %v3009
      %v4750 = vsub.f32 %v4679, %v3013
      %v4751 = vsub.f32 %v4684, %v3009
      %v4752 = vsub.f32 %v4684, %v3013
      %v4753 = vsub.f32 %v4689, %v3009
      %v4754 = vsub.f32 %v4689, %v3013
      %v4755 = vmul.f32 %v4691, %v4691
      %v4756 = vmul.f32 %v4692, %v4692
      %v4757 = vmul.f32 %v4693, %v4693
      %v4758 = vmul.f32 %v4694, %v4694
      %v4759 = vmul.f32 %v4695, %v4695
      %v4760 = vmul.f32 %v4696, %v4696
      %v4761 = vmul.f32 %v4697, %v4697
      %v4762 = vmul.f32 %v4698, %v4698
      %v4763 = vmul.f32 %v4699, %v4699
      %v4764 = vmul.f32 %v4700, %v4700
      %v4765 = vmul.f32 %v4701, %v4701
      %v4766 = vmul.f32 %v4702, %v4702
      %v4767 = vmul.f32 %v4703, %v4703
      %v4768 = vmul.f32 %v4704, %v4704
      %v4769 = vmul.f32 %v4705, %v4705
      %v4770 = vmul.f32 %v4706, %v4706
      %v4771 = vmul.f32 %v4707, %v4707
      %v4772 = vmul.f32 %v4708, %v4708
      %v4773 = vmul.f32 %v4709, %v4709
      %v4774 = vmul.f32 %v4710, %v4710
      %v4775 = vmul.f32 %v4711, %v4711
      %v4776 = vmul.f32 %v4712, %v4712
      %v4777 = vmul.f32 %v4713, %v4713
      %v4778 = vmul.f32 %v4714, %v4714
      %v4779 = vmul.f32 %v4715, %v4715
      %v4780 = vmul.f32 %v4716, %v4716
      %v4781 = vmul.f32 %v4717, %v4717
      %v4782 = vmul.f32 %v4718, %v4718
      %v4783 = vmul.f32 %v4719, %v4719
      %v4784 = vmul.f32 %v4720, %v4720
      %v4785 = vmul.f32 %v4721, %v4721
      %v4786 = vmul.f32 %v4722, %v4722
      %v4787 = vmul.f32 %v4723, %v4723
      %v4788 = vmul.f32 %v4724, %v4724
      %v4789 = vmul.f32 %v4725, %v4725
      %v4790 = vmul.f32 %v4726, %v4726
      %v4791 = vmul.f32 %v4727, %v4727
      %v4792 = vmul.f32 %v4728, %v4728
      %v4793 = vmul.f32 %v4729, %v4729
      %v4794 = vmul.f32 %v4730, %v4730
      %v4795 = vmul.f32 %v4731, %v4731
      %v4796 = vmul.f32 %v4732, %v4732
      %v4797 = vmul.f32 %v4733, %v4733
      %v4798 = vmul.f32 %v4734, %v4734
      %v4799 = vmul.f32 %v4735, %v4735
      %v4800 = vmul.f32 %v4736, %v4736
      %v4801 = vmul.f32 %v4737, %v4737
      %v4802 = vmul.f32 %v4738, %v4738
      %v4803 = vmul.f32 %v4739, %v4739
      %v4804 = vmul.f32 %v4740, %v4740
      %v4805 = vmul.f32 %v4741, %v4741
      %v4806 = vmul.f32 %v4742, %v4742
      %v4807 = vmul.f32 %v4743, %v4743
      %v4808 = vmul.f32 %v4744, %v4744
      %v4809 = vmul.f32 %v4745, %v4745
      %v4810 = vmul.f32 %v4746, %v4746
      %v4811 = vmul.f32 %v4747, %v4747
      %v4812 = vmul.f32 %v4748, %v4748
      %v4813 = vmul.f32 %v4749, %v4749
      %v4814 = vmul.f32 %v4750, %v4750
      %v4815 = vmul.f32 %v4751, %v4751
      %v4816 = vmul.f32 %v4752, %v4752
      %v4817 = vmul.f32 %v4753, %v4753
      %v4818 = vmul.f32 %v4754, %v4754
      %4819 = vset.pattern.permute.xlu0 1
      %4820 = vperm.xlu0 %4819, %v4499
      %v4821 = vpop.permute.xlu0 %4820
      %4823 = vset.pattern.permute.xlu0 1
      %4824 = vperm.xlu0 %4823, %v4500
      %v4825 = vpop.permute.xlu0 %4824
      %4827 = vset.pattern.permute.xlu0 1
      %4828 = vperm.xlu0 %4827, %v4501
      %v4829 = vpop.permute.xlu0 %4828
      %4831 = vset.pattern.permute.xlu0 1
      %4832 = vperm.xlu0 %4831, %v4502
      %v4833 = vpop.permute.xlu0 %4832
      %4835 = vset.pattern.permute.xlu0 1
      %4836 = vperm.xlu0 %4835, %v4503
      %v4837 = vpop.permute.xlu0 %4836
      %4839 = vset.pattern.permute.xlu0 1
      %4840 = vperm.xlu0 %4839, %v4504
      %v4841 = vpop.permute.xlu0 %4840
      %4843 = vset.pattern.permute.xlu0 1
      %4844 = vperm.xlu0 %4843, %v4505
      %v4845 = vpop.permute.xlu0 %4844
      %4847 = vset.pattern.permute.xlu0 1
      %4848 = vperm.xlu0 %4847, %v4506
      %v4849 = vpop.permute.xlu0 %4848
      %4851 = vset.pattern.permute.xlu0 1
      %4852 = vperm.xlu0 %4851, %v4507
      %v4853 = vpop.permute.xlu0 %4852
      %4855 = vset.pattern.permute.xlu0 1
      %4856 = vperm.xlu0 %4855, %v4508
      %v4857 = vpop.permute.xlu0 %4856
      %4859 = vset.pattern.permute.xlu0 1
      %4860 = vperm.xlu0 %4859, %v4509
      %v4861 = vpop.permute.xlu0 %4860
      %4863 = vset.pattern.permute.xlu0 1
      %4864 = vperm.xlu0 %4863, %v4510
      %v4865 = vpop.permute.xlu0 %4864
      %4867 = vset.pattern.permute.xlu0 1
      %4868 = vperm.xlu0 %4867, %v4511
      %v4869 = vpop.permute.xlu0 %4868
      %4871 = vset.pattern.permute.xlu0 1
      %4872 = vperm.xlu0 %4871, %v4512
      %v4873 = vpop.permute.xlu0 %4872
      %4875 = vset.pattern.permute.xlu0 1
      %4876 = vperm.xlu0 %4875, %v4513
      %v4877 = vpop.permute.xlu0 %4876
      %4879 = vset.pattern.permute.xlu0 1
      %4880 = vperm.xlu0 %4879, %v4514
      %v4881 = vpop.permute.xlu0 %4880
      %4883 = vset.pattern.permute.xlu0 1
      %4884 = vperm.xlu0 %4883, %v4515
      %v4885 = vpop.permute.xlu0 %4884
      %4887 = vset.pattern.permute.xlu0 1
      %4888 = vperm.xlu0 %4887, %v4516
      %v4889 = vpop.permute.xlu0 %4888
      %4891 = vset.pattern.permute.xlu0 1
      %4892 = vperm.xlu0 %4891, %v4517
      %v4893 = vpop.permute.xlu0 %4892
      %4895 = vset.pattern.permute.xlu0 1
      %4896 = vperm.xlu0 %4895, %v4518
      %v4897 = vpop.permute.xlu0 %4896
      %4899 = vset.pattern.permute.xlu0 1
      %4900 = vperm.xlu0 %4899, %v4519
      %v4901 = vpop.permute.xlu0 %4900
      %4903 = vset.pattern.permute.xlu0 1
      %4904 = vperm.xlu0 %4903, %v4520
      %v4905 = vpop.permute.xlu0 %4904
      %4907 = vset.pattern.permute.xlu0 1
      %4908 = vperm.xlu0 %4907, %v4521
      %v4909 = vpop.permute.xlu0 %4908
      %4911 = vset.pattern.permute.xlu0 1
      %4912 = vperm.xlu0 %4911, %v4522
      %v4913 = vpop.permute.xlu0 %4912
      %4915 = vset.pattern.permute.xlu0 1
      %4916 = vperm.xlu0 %4915, %v4523
      %v4917 = vpop.permute.xlu0 %4916
      %4919 = vset.pattern.permute.xlu0 1
      %4920 = vperm.xlu0 %4919, %v4524
      %v4921 = vpop.permute.xlu0 %4920
      %4923 = vset.pattern.permute.xlu0 1
      %4924 = vperm.xlu0 %4923, %v4525
      %v4925 = vpop.permute.xlu0 %4924
      %4927 = vset.pattern.permute.xlu0 1
      %4928 = vperm.xlu0 %4927, %v4526
      %v4929 = vpop.permute.xlu0 %4928
      %4931 = vset.pattern.permute.xlu0 1
      %4932 = vperm.xlu0 %4931, %v4527
      %v4933 = vpop.permute.xlu0 %4932
      %4935 = vset.pattern.permute.xlu0 1
      %4936 = vperm.xlu0 %4935, %v4528
      %v4937 = vpop.permute.xlu0 %4936
      %4939 = vset.pattern.permute.xlu0 1
      %4940 = vperm.xlu0 %4939, %v4529
      %v4941 = vpop.permute.xlu0 %4940
      %4943 = vset.pattern.permute.xlu0 1
      %4944 = vperm.xlu0 %4943, %v4530
      %v4945 = vpop.permute.xlu0 %4944
      %v4947 = vsub.f32 %v4821, %v3283
      %v4948 = vsub.f32 %v4821, %v3287
      %v4949 = vsub.f32 %v4825, %v3283
      %v4950 = vsub.f32 %v4825, %v3287
      %v4951 = vsub.f32 %v4829, %v3283
      %v4952 = vsub.f32 %v4829, %v3287
      %v4953 = vsub.f32 %v4833, %v3283
      %v4954 = vsub.f32 %v4833, %v3287
      %v4955 = vsub.f32 %v4837, %v3283
      %v4956 = vsub.f32 %v4837, %v3287
      %v4957 = vsub.f32 %v4841, %v3283
      %v4958 = vsub.f32 %v4841, %v3287
      %v4959 = vsub.f32 %v4845, %v3283
      %v4960 = vsub.f32 %v4845, %v3287
      %v4961 = vsub.f32 %v4849, %v3283
      %v4962 = vsub.f32 %v4849, %v3287
      %v4963 = vsub.f32 %v4853, %v3283
      %v4964 = vsub.f32 %v4853, %v3287
      %v4965 = vsub.f32 %v4857, %v3283
      %v4966 = vsub.f32 %v4857, %v3287
      %v4967 = vsub.f32 %v4861, %v3283
      %v4968 = vsub.f32 %v4861, %v3287
      %v4969 = vsub.f32 %v4865, %v3283
      %v4970 = vsub.f32 %v4865, %v3287
      %v4971 = vsub.f32 %v4869, %v3283
      %v4972 = vsub.f32 %v4869, %v3287
      %v4973 = vsub.f32 %v4873, %v3283
      %v4974 = vsub.f32 %v4873, %v3287
      %v4975 = vsub.f32 %v4877, %v3283
      %v4976 = vsub.f32 %v4877, %v3287
      %v4977 = vsub.f32 %v4881, %v3283
      %v4978 = vsub.f32 %v4881, %v3287
      %v4979 = vsub.f32 %v4885, %v3283
      %v4980 = vsub.f32 %v4885, %v3287
      %v4981 = vsub.f32 %v4889, %v3283
      %v4982 = vsub.f32 %v4889, %v3287
      %v4983 = vsub.f32 %v4893, %v3283
      %v4984 = vsub.f32 %v4893, %v3287
      %v4985 = vsub.f32 %v4897, %v3283
      %v4986 = vsub.f32 %v4897, %v3287
      %v4987 = vsub.f32 %v4901, %v3283
      %v4988 = vsub.f32 %v4901, %v3287
      %v4989 = vsub.f32 %v4905, %v3283
      %v4990 = vsub.f32 %v4905, %v3287
      %v4991 = vsub.f32 %v4909, %v3283
      %v4992 = vsub.f32 %v4909, %v3287
      %v4993 = vsub.f32 %v4913, %v3283
      %v4994 = vsub.f32 %v4913, %v3287
      %v4995 = vsub.f32 %v4917, %v3283
      %v4996 = vsub.f32 %v4917, %v3287
      %v4997 = vsub.f32 %v4921, %v3283
      %v4998 = vsub.f32 %v4921, %v3287
      %v4999 = vsub.f32 %v4925, %v3283
      %v5000 = vsub.f32 %v4925, %v3287
      %v5001 = vsub.f32 %v4929, %v3283
      %v5002 = vsub.f32 %v4929, %v3287
      %v5003 = vsub.f32 %v4933, %v3283
      %v5004 = vsub.f32 %v4933, %v3287
      %v5005 = vsub.f32 %v4937, %v3283
      %v5006 = vsub.f32 %v4937, %v3287
      %v5007 = vsub.f32 %v4941, %v3283
      %v5008 = vsub.f32 %v4941, %v3287
      %v5009 = vsub.f32 %v4945, %v3283
      %v5010 = vsub.f32 %v4945, %v3287
      %v5011 = vmul.f32 %v4947, %v4947
      %v5012 = vmul.f32 %v4948, %v4948
      %v5013 = vmul.f32 %v4949, %v4949
      %v5014 = vmul.f32 %v4950, %v4950
      %v5015 = vmul.f32 %v4951, %v4951
      %v5016 = vmul.f32 %v4952, %v4952
      %v5017 = vmul.f32 %v4953, %v4953
      %v5018 = vmul.f32 %v4954, %v4954
      %v5019 = vmul.f32 %v4955, %v4955
      %v5020 = vmul.f32 %v4956, %v4956
      %v5021 = vmul.f32 %v4957, %v4957
      %v5022 = vmul.f32 %v4958, %v4958
      %v5023 = vmul.f32 %v4959, %v4959
      %v5024 = vmul.f32 %v4960, %v4960
      %v5025 = vmul.f32 %v4961, %v4961
      %v5026 = vmul.f32 %v4962, %v4962
      %v5027 = vmul.f32 %v4963, %v4963
      %v5028 = vmul.f32 %v4964, %v4964
      %v5029 = vmul.f32 %v4965, %v4965
      %v5030 = vmul.f32 %v4966, %v4966
      %v5031 = vmul.f32 %v4967, %v4967
      %v5032 = vmul.f32 %v4968, %v4968
      %v5033 = vmul.f32 %v4969, %v4969
      %v5034 = vmul.f32 %v4970, %v4970
      %v5035 = vmul.f32 %v4971, %v4971
      %v5036 = vmul.f32 %v4972, %v4972
      %v5037 = vmul.f32 %v4973, %v4973
      %v5038 = vmul.f32 %v4974, %v4974
      %v5039 = vmul.f32 %v4975, %v4975
      %v5040 = vmul.f32 %v4976, %v4976
      %v5041 = vmul.f32 %v4977, %v4977
      %v5042 = vmul.f32 %v4978, %v4978
      %v5043 = vmul.f32 %v4979, %v4979
      %v5044 = vmul.f32 %v4980, %v4980
      %v5045 = vmul.f32 %v4981, %v4981
      %v5046 = vmul.f32 %v4982, %v4982
      %v5047 = vmul.f32 %v4983, %v4983
      %v5048 = vmul.f32 %v4984, %v4984
      %v5049 = vmul.f32 %v4985, %v4985
      %v5050 = vmul.f32 %v4986, %v4986
      %v5051 = vmul.f32 %v4987, %v4987
      %v5052 = vmul.f32 %v4988, %v4988
      %v5053 = vmul.f32 %v4989, %v4989
      %v5054 = vmul.f32 %v4990, %v4990
      %v5055 = vmul.f32 %v4991, %v4991
      %v5056 = vmul.f32 %v4992, %v4992
      %v5057 = vmul.f32 %v4993, %v4993
      %v5058 = vmul.f32 %v4994, %v4994
      %v5059 = vmul.f32 %v4995, %v4995
      %v5060 = vmul.f32 %v4996, %v4996
      %v5061 = vmul.f32 %v4997, %v4997
      %v5062 = vmul.f32 %v4998, %v4998
      %v5063 = vmul.f32 %v4999, %v4999
      %v5064 = vmul.f32 %v5000, %v5000
      %v5065 = vmul.f32 %v5001, %v5001
      %v5066 = vmul.f32 %v5002, %v5002
      %v5067 = vmul.f32 %v5003, %v5003
      %v5068 = vmul.f32 %v5004, %v5004
      %v5069 = vmul.f32 %v5005, %v5005
      %v5070 = vmul.f32 %v5006, %v5006
      %v5071 = vmul.f32 %v5007, %v5007
      %v5072 = vmul.f32 %v5008, %v5008
      %v5073 = vmul.f32 %v5009, %v5009
      %v5074 = vmul.f32 %v5010, %v5010
      %v5075 = vadd.f32 %v4755, %v5011
      %v5076 = vadd.f32 %v4756, %v5012
      %v5077 = vadd.f32 %v4757, %v5013
      %v5078 = vadd.f32 %v4758, %v5014
      %v5079 = vadd.f32 %v4759, %v5015
      %v5080 = vadd.f32 %v4760, %v5016
      %v5081 = vadd.f32 %v4761, %v5017
      %v5082 = vadd.f32 %v4762, %v5018
      %v5083 = vadd.f32 %v4763, %v5019
      %v5084 = vadd.f32 %v4764, %v5020
      %v5085 = vadd.f32 %v4765, %v5021
      %v5086 = vadd.f32 %v4766, %v5022
      %v5087 = vadd.f32 %v4767, %v5023
      %v5088 = vadd.f32 %v4768, %v5024
      %v5089 = vadd.f32 %v4769, %v5025
      %v5090 = vadd.f32 %v4770, %v5026
      %v5091 = vadd.f32 %v4771, %v5027
      %v5092 = vadd.f32 %v4772, %v5028
      %v5093 = vadd.f32 %v4773, %v5029
      %v5094 = vadd.f32 %v4774, %v5030
      %v5095 = vadd.f32 %v4775, %v5031
      %v5096 = vadd.f32 %v4776, %v5032
      %v5097 = vadd.f32 %v4777, %v5033
      %v5098 = vadd.f32 %v4778, %v5034
      %v5099 = vadd.f32 %v4779, %v5035
      %v5100 = vadd.f32 %v4780, %v5036
      %v5101 = vadd.f32 %v4781, %v5037
      %v5102 = vadd.f32 %v4782, %v5038
      %v5103 = vadd.f32 %v4783, %v5039
      %v5104 = vadd.f32 %v4784, %v5040
      %v5105 = vadd.f32 %v4785, %v5041
      %v5106 = vadd.f32 %v4786, %v5042
      %v5107 = vadd.f32 %v4787, %v5043
      %v5108 = vadd.f32 %v4788, %v5044
      %v5109 = vadd.f32 %v4789, %v5045
      %v5110 = vadd.f32 %v4790, %v5046
      %v5111 = vadd.f32 %v4791, %v5047
      %v5112 = vadd.f32 %v4792, %v5048
      %v5113 = vadd.f32 %v4793, %v5049
      %v5114 = vadd.f32 %v4794, %v5050
      %v5115 = vadd.f32 %v4795, %v5051
      %v5116 = vadd.f32 %v4796, %v5052
      %v5117 = vadd.f32 %v4797, %v5053
      %v5118 = vadd.f32 %v4798, %v5054
      %v5119 = vadd.f32 %v4799, %v5055
      %v5120 = vadd.f32 %v4800, %v5056
      %v5121 = vadd.f32 %v4801, %v5057
      %v5122 = vadd.f32 %v4802, %v5058
      %v5123 = vadd.f32 %v4803, %v5059
      %v5124 = vadd.f32 %v4804, %v5060
      %v5125 = vadd.f32 %v4805, %v5061
      %v5126 = vadd.f32 %v4806, %v5062
      %v5127 = vadd.f32 %v4807, %v5063
      %v5128 = vadd.f32 %v4808, %v5064
      %v5129 = vadd.f32 %v4809, %v5065
      %v5130 = vadd.f32 %v4810, %v5066
      %v5131 = vadd.f32 %v4811, %v5067
      %v5132 = vadd.f32 %v4812, %v5068
      %v5133 = vadd.f32 %v4813, %v5069
      %v5134 = vadd.f32 %v4814, %v5070
      %v5135 = vadd.f32 %v4815, %v5071
      %v5136 = vadd.f32 %v4816, %v5072
      %v5137 = vadd.f32 %v4817, %v5073
      %v5138 = vadd.f32 %v4818, %v5074
      %5139 = vset.pattern.permute.xlu0 2
      %5140 = vperm.xlu0 %5139, %v4499
      %v5141 = vpop.permute.xlu0 %5140
      %5143 = vset.pattern.permute.xlu0 2
      %5144 = vperm.xlu0 %5143, %v4500
      %v5145 = vpop.permute.xlu0 %5144
      %5147 = vset.pattern.permute.xlu0 2
      %5148 = vperm.xlu0 %5147, %v4501
      %v5149 = vpop.permute.xlu0 %5148
      %5151 = vset.pattern.permute.xlu0 2
      %5152 = vperm.xlu0 %5151, %v4502
      %v5153 = vpop.permute.xlu0 %5152
      %5155 = vset.pattern.permute.xlu0 2
      %5156 = vperm.xlu0 %5155, %v4503
      %v5157 = vpop.permute.xlu0 %5156
      %5159 = vset.pattern.permute.xlu0 2
      %5160 = vperm.xlu0 %5159, %v4504
      %v5161 = vpop.permute.xlu0 %5160
      %5163 = vset.pattern.permute.xlu0 2
      %5164 = vperm.xlu0 %5163, %v4505
      %v5165 = vpop.permute.xlu0 %5164
      %5167 = vset.pattern.permute.xlu0 2
      %5168 = vperm.xlu0 %5167, %v4506
      %v5169 = vpop.permute.xlu0 %5168
      %5171 = vset.pattern.permute.xlu0 2
      %5172 = vperm.xlu0 %5171, %v4507
      %v5173 = vpop.permute.xlu0 %5172
      %5175 = vset.pattern.permute.xlu0 2
      %5176 = vperm.xlu0 %5175, %v4508
      %v5177 = vpop.permute.xlu0 %5176
      %5179 = vset.pattern.permute.xlu0 2
      %5180 = vperm.xlu0 %5179, %v4509
      %v5181 = vpop.permute.xlu0 %5180
      %5183 = vset.pattern.permute.xlu0 2
      %5184 = vperm.xlu0 %5183, %v4510
      %v5185 = vpop.permute.xlu0 %5184
      %5187 = vset.pattern.permute.xlu0 2
      %5188 = vperm.xlu0 %5187, %v4511
      %v5189 = vpop.permute.xlu0 %5188
      %5191 = vset.pattern.permute.xlu0 2
      %5192 = vperm.xlu0 %5191, %v4512
      %v5193 = vpop.permute.xlu0 %5192
      %5195 = vset.pattern.permute.xlu0 2
      %5196 = vperm.xlu0 %5195, %v4513
      %v5197 = vpop.permute.xlu0 %5196
      %5199 = vset.pattern.permute.xlu0 2
      %5200 = vperm.xlu0 %5199, %v4514
      %v5201 = vpop.permute.xlu0 %5200
      %5203 = vset.pattern.permute.xlu0 2
      %5204 = vperm.xlu0 %5203, %v4515
      %v5205 = vpop.permute.xlu0 %5204
      %5207 = vset.pattern.permute.xlu0 2
      %5208 = vperm.xlu0 %5207, %v4516
      %v5209 = vpop.permute.xlu0 %5208
      %5211 = vset.pattern.permute.xlu0 2
      %5212 = vperm.xlu0 %5211, %v4517
      %v5213 = vpop.permute.xlu0 %5212
      %5215 = vset.pattern.permute.xlu0 2
      %5216 = vperm.xlu0 %5215, %v4518
      %v5217 = vpop.permute.xlu0 %5216
      %5219 = vset.pattern.permute.xlu0 2
      %5220 = vperm.xlu0 %5219, %v4519
      %v5221 = vpop.permute.xlu0 %5220
      %5223 = vset.pattern.permute.xlu0 2
      %5224 = vperm.xlu0 %5223, %v4520
      %v5225 = vpop.permute.xlu0 %5224
      %5227 = vset.pattern.permute.xlu0 2
      %5228 = vperm.xlu0 %5227, %v4521
      %v5229 = vpop.permute.xlu0 %5228
      %5231 = vset.pattern.permute.xlu0 2
      %5232 = vperm.xlu0 %5231, %v4522
      %v5233 = vpop.permute.xlu0 %5232
      %5235 = vset.pattern.permute.xlu0 2
      %5236 = vperm.xlu0 %5235, %v4523
      %v5237 = vpop.permute.xlu0 %5236
      %5239 = vset.pattern.permute.xlu0 2
      %5240 = vperm.xlu0 %5239, %v4524
      %v5241 = vpop.permute.xlu0 %5240
      %5243 = vset.pattern.permute.xlu0 2
      %5244 = vperm.xlu0 %5243, %v4525
      %v5245 = vpop.permute.xlu0 %5244
      %5247 = vset.pattern.permute.xlu0 2
      %5248 = vperm.xlu0 %5247, %v4526
      %v5249 = vpop.permute.xlu0 %5248
      %5251 = vset.pattern.permute.xlu0 2
      %5252 = vperm.xlu0 %5251, %v4527
      %v5253 = vpop.permute.xlu0 %5252
      %5255 = vset.pattern.permute.xlu0 2
      %5256 = vperm.xlu0 %5255, %v4528
      %v5257 = vpop.permute.xlu0 %5256
      %5259 = vset.pattern.permute.xlu0 2
      %5260 = vperm.xlu0 %5259, %v4529
      %v5261 = vpop.permute.xlu0 %5260
      %5263 = vset.pattern.permute.xlu0 2
      %5264 = vperm.xlu0 %5263, %v4530
      %v5265 = vpop.permute.xlu0 %5264
      %v5267 = vsub.f32 %v5141, %v3621
      %v5268 = vsub.f32 %v5141, %v3625
      %v5269 = vsub.f32 %v5145, %v3621
      %v5270 = vsub.f32 %v5145, %v3625
      %v5271 = vsub.f32 %v5149, %v3621
      %v5272 = vsub.f32 %v5149, %v3625
      %v5273 = vsub.f32 %v5153, %v3621
      %v5274 = vsub.f32 %v5153, %v3625
      %v5275 = vsub.f32 %v5157, %v3621
      %v5276 = vsub.f32 %v5157, %v3625
      %v5277 = vsub.f32 %v5161, %v3621
      %v5278 = vsub.f32 %v5161, %v3625
      %v5279 = vsub.f32 %v5165, %v3621
      %v5280 = vsub.f32 %v5165, %v3625
      %v5281 = vsub.f32 %v5169, %v3621
      %v5282 = vsub.f32 %v5169, %v3625
      %v5283 = vsub.f32 %v5173, %v3621
      %v5284 = vsub.f32 %v5173, %v3625
      %v5285 = vsub.f32 %v5177, %v3621
      %v5286 = vsub.f32 %v5177, %v3625
      %v5287 = vsub.f32 %v5181, %v3621
      %v5288 = vsub.f32 %v5181, %v3625
      %v5289 = vsub.f32 %v5185, %v3621
      %v5290 = vsub.f32 %v5185, %v3625
      %v5291 = vsub.f32 %v5189, %v3621
      %v5292 = vsub.f32 %v5189, %v3625
      %v5293 = vsub.f32 %v5193, %v3621
      %v5294 = vsub.f32 %v5193, %v3625
      %v5295 = vsub.f32 %v5197, %v3621
      %v5296 = vsub.f32 %v5197, %v3625
      %v5297 = vsub.f32 %v5201, %v3621
      %v5298 = vsub.f32 %v5201, %v3625
      %v5299 = vsub.f32 %v5205, %v3621
      %v5300 = vsub.f32 %v5205, %v3625
      %v5301 = vsub.f32 %v5209, %v3621
      %v5302 = vsub.f32 %v5209, %v3625
      %v5303 = vsub.f32 %v5213, %v3621
      %v5304 = vsub.f32 %v5213, %v3625
      %v5305 = vsub.f32 %v5217, %v3621
      %v5306 = vsub.f32 %v5217, %v3625
      %v5307 = vsub.f32 %v5221, %v3621
      %v5308 = vsub.f32 %v5221, %v3625
      %v5309 = vsub.f32 %v5225, %v3621
      %v5310 = vsub.f32 %v5225, %v3625
      %v5311 = vsub.f32 %v5229, %v3621
      %v5312 = vsub.f32 %v5229, %v3625
      %v5313 = vsub.f32 %v5233, %v3621
      %v5314 = vsub.f32 %v5233, %v3625
      %v5315 = vsub.f32 %v5237, %v3621
      %v5316 = vsub.f32 %v5237, %v3625
      %v5317 = vsub.f32 %v5241, %v3621
      %v5318 = vsub.f32 %v5241, %v3625
      %v5319 = vsub.f32 %v5245, %v3621
      %v5320 = vsub.f32 %v5245, %v3625
      %v5321 = vsub.f32 %v5249, %v3621
      %v5322 = vsub.f32 %v5249, %v3625
      %v5323 = vsub.f32 %v5253, %v3621
      %v5324 = vsub.f32 %v5253, %v3625
      %v5325 = vsub.f32 %v5257, %v3621
      %v5326 = vsub.f32 %v5257, %v3625
      %v5327 = vsub.f32 %v5261, %v3621
      %v5328 = vsub.f32 %v5261, %v3625
      %v5329 = vsub.f32 %v5265, %v3621
      %v5330 = vsub.f32 %v5265, %v3625
      %v5331 = vmul.f32 %v5267, %v5267
      %v5332 = vmul.f32 %v5268, %v5268
      %v5333 = vmul.f32 %v5269, %v5269
      %v5334 = vmul.f32 %v5270, %v5270
      %v5335 = vmul.f32 %v5271, %v5271
      %v5336 = vmul.f32 %v5272, %v5272
      %v5337 = vmul.f32 %v5273, %v5273
      %v5338 = vmul.f32 %v5274, %v5274
      %v5339 = vmul.f32 %v5275, %v5275
      %v5340 = vmul.f32 %v5276, %v5276
      %v5341 = vmul.f32 %v5277, %v5277
      %v5342 = vmul.f32 %v5278, %v5278
      %v5343 = vmul.f32 %v5279, %v5279
      %v5344 = vmul.f32 %v5280, %v5280
      %v5345 = vmul.f32 %v5281, %v5281
      %v5346 = vmul.f32 %v5282, %v5282
      %v5347 = vmul.f32 %v5283, %v5283
      %v5348 = vmul.f32 %v5284, %v5284
      %v5349 = vmul.f32 %v5285, %v5285
      %v5350 = vmul.f32 %v5286, %v5286
      %v5351 = vmul.f32 %v5287, %v5287
      %v5352 = vmul.f32 %v5288, %v5288
      %v5353 = vmul.f32 %v5289, %v5289
      %v5354 = vmul.f32 %v5290, %v5290
      %v5355 = vmul.f32 %v5291, %v5291
      %v5356 = vmul.f32 %v5292, %v5292
      %v5357 = vmul.f32 %v5293, %v5293
      %v5358 = vmul.f32 %v5294, %v5294
      %v5359 = vmul.f32 %v5295, %v5295
      %v5360 = vmul.f32 %v5296, %v5296
      %v5361 = vmul.f32 %v5297, %v5297
      %v5362 = vmul.f32 %v5298, %v5298
      %v5363 = vmul.f32 %v5299, %v5299
      %v5364 = vmul.f32 %v5300, %v5300
      %v5365 = vmul.f32 %v5301, %v5301
      %v5366 = vmul.f32 %v5302, %v5302
      %v5367 = vmul.f32 %v5303, %v5303
      %v5368 = vmul.f32 %v5304, %v5304
      %v5369 = vmul.f32 %v5305, %v5305
      %v5370 = vmul.f32 %v5306, %v5306
      %v5371 = vmul.f32 %v5307, %v5307
      %v5372 = vmul.f32 %v5308, %v5308
      %v5373 = vmul.f32 %v5309, %v5309
      %v5374 = vmul.f32 %v5310, %v5310
      %v5375 = vmul.f32 %v5311, %v5311
      %v5376 = vmul.f32 %v5312, %v5312
      %v5377 = vmul.f32 %v5313, %v5313
      %v5378 = vmul.f32 %v5314, %v5314
      %v5379 = vmul.f32 %v5315, %v5315
      %v5380 = vmul.f32 %v5316, %v5316
      %v5381 = vmul.f32 %v5317, %v5317
      %v5382 = vmul.f32 %v5318, %v5318
      %v5383 = vmul.f32 %v5319, %v5319
      %v5384 = vmul.f32 %v5320, %v5320
      %v5385 = vmul.f32 %v5321, %v5321
      %v5386 = vmul.f32 %v5322, %v5322
      %v5387 = vmul.f32 %v5323, %v5323
      %v5388 = vmul.f32 %v5324, %v5324
      %v5389 = vmul.f32 %v5325, %v5325
      %v5390 = vmul.f32 %v5326, %v5326
      %v5391 = vmul.f32 %v5327, %v5327
      %v5392 = vmul.f32 %v5328, %v5328
      %v5393 = vmul.f32 %v5329, %v5329
      %v5394 = vmul.f32 %v5330, %v5330
      %v5395 = vadd.f32 %v5075, %v5331
      %v5396 = vadd.f32 %v5076, %v5332
      %v5397 = vadd.f32 %v5077, %v5333
      %v5398 = vadd.f32 %v5078, %v5334
      %v5399 = vadd.f32 %v5079, %v5335
      %v5400 = vadd.f32 %v5080, %v5336
      %v5401 = vadd.f32 %v5081, %v5337
      %v5402 = vadd.f32 %v5082, %v5338
      %v5403 = vadd.f32 %v5083, %v5339
      %v5404 = vadd.f32 %v5084, %v5340
      %v5405 = vadd.f32 %v5085, %v5341
      %v5406 = vadd.f32 %v5086, %v5342
      %v5407 = vadd.f32 %v5087, %v5343
      %v5408 = vadd.f32 %v5088, %v5344
      %v5409 = vadd.f32 %v5089, %v5345
      %v5410 = vadd.f32 %v5090, %v5346
      %v5411 = vadd.f32 %v5091, %v5347
      %v5412 = vadd.f32 %v5092, %v5348
      %v5413 = vadd.f32 %v5093, %v5349
      %v5414 = vadd.f32 %v5094, %v5350
      %v5415 = vadd.f32 %v5095, %v5351
      %v5416 = vadd.f32 %v5096, %v5352
      %v5417 = vadd.f32 %v5097, %v5353
      %v5418 = vadd.f32 %v5098, %v5354
      %v5419 = vadd.f32 %v5099, %v5355
      %v5420 = vadd.f32 %v5100, %v5356
      %v5421 = vadd.f32 %v5101, %v5357
      %v5422 = vadd.f32 %v5102, %v5358
      %v5423 = vadd.f32 %v5103, %v5359
      %v5424 = vadd.f32 %v5104, %v5360
      %v5425 = vadd.f32 %v5105, %v5361
      %v5426 = vadd.f32 %v5106, %v5362
      %v5427 = vadd.f32 %v5107, %v5363
      %v5428 = vadd.f32 %v5108, %v5364
      %v5429 = vadd.f32 %v5109, %v5365
      %v5430 = vadd.f32 %v5110, %v5366
      %v5431 = vadd.f32 %v5111, %v5367
      %v5432 = vadd.f32 %v5112, %v5368
      %v5433 = vadd.f32 %v5113, %v5369
      %v5434 = vadd.f32 %v5114, %v5370
      %v5435 = vadd.f32 %v5115, %v5371
      %v5436 = vadd.f32 %v5116, %v5372
      %v5437 = vadd.f32 %v5117, %v5373
      %v5438 = vadd.f32 %v5118, %v5374
      %v5439 = vadd.f32 %v5119, %v5375
      %v5440 = vadd.f32 %v5120, %v5376
      %v5441 = vadd.f32 %v5121, %v5377
      %v5442 = vadd.f32 %v5122, %v5378
      %v5443 = vadd.f32 %v5123, %v5379
      %v5444 = vadd.f32 %v5124, %v5380
      %v5445 = vadd.f32 %v5125, %v5381
      %v5446 = vadd.f32 %v5126, %v5382
      %v5447 = vadd.f32 %v5127, %v5383
      %v5448 = vadd.f32 %v5128, %v5384
      %v5449 = vadd.f32 %v5129, %v5385
      %v5450 = vadd.f32 %v5130, %v5386
      %v5451 = vadd.f32 %v5131, %v5387
      %v5452 = vadd.f32 %v5132, %v5388
      %v5453 = vadd.f32 %v5133, %v5389
      %v5454 = vadd.f32 %v5134, %v5390
      %v5455 = vadd.f32 %v5135, %v5391
      %v5456 = vadd.f32 %v5136, %v5392
      %v5457 = vadd.f32 %v5137, %v5393
      %v5458 = vadd.f32 %v5138, %v5394
      %vm5459 = vcmp.lt.f32.partialorder %v5395, %v1463
      %vm5460 = vcmp.lt.f32.partialorder %v5396, %v1463
      %vm5461 = vcmp.lt.f32.partialorder %v5397, %v1463
      %vm5462 = vcmp.lt.f32.partialorder %v5398, %v1463
      %vm5463 = vcmp.lt.f32.partialorder %v5399, %v1463
      %vm5464 = vcmp.lt.f32.partialorder %v5400, %v1463
      %vm5465 = vcmp.lt.f32.partialorder %v5401, %v1463
      %vm5466 = vcmp.lt.f32.partialorder %v5402, %v1463
      %vm5467 = vcmp.lt.f32.partialorder %v5403, %v1463
      %vm5468 = vcmp.lt.f32.partialorder %v5404, %v1463
      %vm5469 = vcmp.lt.f32.partialorder %v5405, %v1463
      %vm5470 = vcmp.lt.f32.partialorder %v5406, %v1463
      %vm5471 = vcmp.lt.f32.partialorder %v5407, %v1463
      %vm5472 = vcmp.lt.f32.partialorder %v5408, %v1463
      %vm5473 = vcmp.lt.f32.partialorder %v5409, %v1463
      %vm5474 = vcmp.lt.f32.partialorder %v5410, %v1463
      %vm5475 = vcmp.lt.f32.partialorder %v5411, %v1463
      %vm5476 = vcmp.lt.f32.partialorder %v5412, %v1463
      %vm5477 = vcmp.lt.f32.partialorder %v5413, %v1463
      %vm5478 = vcmp.lt.f32.partialorder %v5414, %v1463
      %vm5479 = vcmp.lt.f32.partialorder %v5415, %v1463
      %vm5480 = vcmp.lt.f32.partialorder %v5416, %v1463
      %vm5481 = vcmp.lt.f32.partialorder %v5417, %v1463
      %vm5482 = vcmp.lt.f32.partialorder %v5418, %v1463
      %vm5483 = vcmp.lt.f32.partialorder %v5419, %v1463
      %vm5484 = vcmp.lt.f32.partialorder %v5420, %v1463
      %vm5485 = vcmp.lt.f32.partialorder %v5421, %v1463
      %vm5486 = vcmp.lt.f32.partialorder %v5422, %v1463
      %vm5487 = vcmp.lt.f32.partialorder %v5423, %v1463
      %vm5488 = vcmp.lt.f32.partialorder %v5424, %v1463
      %vm5489 = vcmp.lt.f32.partialorder %v5425, %v1463
      %vm5490 = vcmp.lt.f32.partialorder %v5426, %v1463
      %vm5491 = vcmp.lt.f32.partialorder %v5427, %v1463
      %vm5492 = vcmp.lt.f32.partialorder %v5428, %v1463
      %vm5493 = vcmp.lt.f32.partialorder %v5429, %v1463
      %vm5494 = vcmp.lt.f32.partialorder %v5430, %v1463
      %vm5495 = vcmp.lt.f32.partialorder %v5431, %v1463
      %vm5496 = vcmp.lt.f32.partialorder %v5432, %v1463
      %vm5497 = vcmp.lt.f32.partialorder %v5433, %v1463
      %vm5498 = vcmp.lt.f32.partialorder %v5434, %v1463
      %vm5499 = vcmp.lt.f32.partialorder %v5435, %v1463
      %vm5500 = vcmp.lt.f32.partialorder %v5436, %v1463
      %vm5501 = vcmp.lt.f32.partialorder %v5437, %v1463
      %vm5502 = vcmp.lt.f32.partialorder %v5438, %v1463
      %vm5503 = vcmp.lt.f32.partialorder %v5439, %v1463
      %vm5504 = vcmp.lt.f32.partialorder %v5440, %v1463
      %vm5505 = vcmp.lt.f32.partialorder %v5441, %v1463
      %vm5506 = vcmp.lt.f32.partialorder %v5442, %v1463
      %vm5507 = vcmp.lt.f32.partialorder %v5443, %v1463
      %vm5508 = vcmp.lt.f32.partialorder %v5444, %v1463
      %vm5509 = vcmp.lt.f32.partialorder %v5445, %v1463
      %vm5510 = vcmp.lt.f32.partialorder %v5446, %v1463
      %vm5511 = vcmp.lt.f32.partialorder %v5447, %v1463
      %vm5512 = vcmp.lt.f32.partialorder %v5448, %v1463
      %vm5513 = vcmp.lt.f32.partialorder %v5449, %v1463
      %vm5514 = vcmp.lt.f32.partialorder %v5450, %v1463
      %vm5515 = vcmp.lt.f32.partialorder %v5451, %v1463
      %vm5516 = vcmp.lt.f32.partialorder %v5452, %v1463
      %vm5517 = vcmp.lt.f32.partialorder %v5453, %v1463
      %vm5518 = vcmp.lt.f32.partialorder %v5454, %v1463
      %vm5519 = vcmp.lt.f32.partialorder %v5455, %v1463
      %vm5520 = vcmp.lt.f32.partialorder %v5456, %v1463
      %vm5521 = vcmp.lt.f32.partialorder %v5457, %v1463
      %vm5522 = vcmp.lt.f32.partialorder %v5458, %v1463
      %v5523 = vsel %vm5459, 1, 0
      %v5524 = vsel %vm5460, 1, 0
      %v5525 = vsel %vm5461, 1, 0
      %v5526 = vsel %vm5462, 1, 0
      %v5527 = vsel %vm5463, 1, 0
      %v5528 = vsel %vm5464, 1, 0
      %v5529 = vsel %vm5465, 1, 0
      %v5530 = vsel %vm5466, 1, 0
      %v5531 = vsel %vm5467, 1, 0
      %v5532 = vsel %vm5468, 1, 0
      %v5533 = vsel %vm5469, 1, 0
      %v5534 = vsel %vm5470, 1, 0
      %v5535 = vsel %vm5471, 1, 0
      %v5536 = vsel %vm5472, 1, 0
      %v5537 = vsel %vm5473, 1, 0
      %v5538 = vsel %vm5474, 1, 0
      %v5539 = vsel %vm5475, 1, 0
      %v5540 = vsel %vm5476, 1, 0
      %v5541 = vsel %vm5477, 1, 0
      %v5542 = vsel %vm5478, 1, 0
      %v5543 = vsel %vm5479, 1, 0
      %v5544 = vsel %vm5480, 1, 0
      %v5545 = vsel %vm5481, 1, 0
      %v5546 = vsel %vm5482, 1, 0
      %v5547 = vsel %vm5483, 1, 0
      %v5548 = vsel %vm5484, 1, 0
      %v5549 = vsel %vm5485, 1, 0
      %v5550 = vsel %vm5486, 1, 0
      %v5551 = vsel %vm5487, 1, 0
      %v5552 = vsel %vm5488, 1, 0
      %v5553 = vsel %vm5489, 1, 0
      %v5554 = vsel %vm5490, 1, 0
      %v5555 = vsel %vm5491, 1, 0
      %v5556 = vsel %vm5492, 1, 0
      %v5557 = vsel %vm5493, 1, 0
      %v5558 = vsel %vm5494, 1, 0
      %v5559 = vsel %vm5495, 1, 0
      %v5560 = vsel %vm5496, 1, 0
      %v5561 = vsel %vm5497, 1, 0
      %v5562 = vsel %vm5498, 1, 0
      %v5563 = vsel %vm5499, 1, 0
      %v5564 = vsel %vm5500, 1, 0
      %v5565 = vsel %vm5501, 1, 0
      %v5566 = vsel %vm5502, 1, 0
      %v5567 = vsel %vm5503, 1, 0
      %v5568 = vsel %vm5504, 1, 0
      %v5569 = vsel %vm5505, 1, 0
      %v5570 = vsel %vm5506, 1, 0
      %v5571 = vsel %vm5507, 1, 0
      %v5572 = vsel %vm5508, 1, 0
      %v5573 = vsel %vm5509, 1, 0
      %v5574 = vsel %vm5510, 1, 0
      %v5575 = vsel %vm5511, 1, 0
      %v5576 = vsel %vm5512, 1, 0
      %v5577 = vsel %vm5513, 1, 0
      %v5578 = vsel %vm5514, 1, 0
      %v5579 = vsel %vm5515, 1, 0
      %v5580 = vsel %vm5516, 1, 0
      %v5581 = vsel %vm5517, 1, 0
      %v5582 = vsel %vm5518, 1, 0
      %v5583 = vsel %vm5519, 1, 0
      %v5584 = vsel %vm5520, 1, 0
      %v5585 = vsel %vm5521, 1, 0
      %v5586 = vsel %vm5522, 1, 0
      %v5587 = vcvt.s32.f32 %v5523
      %v5588 = vcvt.s32.f32 %v5524
      %v5589 = vcvt.s32.f32 %v5525
      %v5590 = vcvt.s32.f32 %v5526
      %v5591 = vcvt.s32.f32 %v5527
      %v5592 = vcvt.s32.f32 %v5528
      %v5593 = vcvt.s32.f32 %v5529
      %v5594 = vcvt.s32.f32 %v5530
      %v5595 = vcvt.s32.f32 %v5531
      %v5596 = vcvt.s32.f32 %v5532
      %v5597 = vcvt.s32.f32 %v5533
      %v5598 = vcvt.s32.f32 %v5534
      %v5599 = vcvt.s32.f32 %v5535
      %v5600 = vcvt.s32.f32 %v5536
      %v5601 = vcvt.s32.f32 %v5537
      %v5602 = vcvt.s32.f32 %v5538
      %v5603 = vcvt.s32.f32 %v5539
      %v5604 = vcvt.s32.f32 %v5540
      %v5605 = vcvt.s32.f32 %v5541
      %v5606 = vcvt.s32.f32 %v5542
      %v5607 = vcvt.s32.f32 %v5543
      %v5608 = vcvt.s32.f32 %v5544
      %v5609 = vcvt.s32.f32 %v5545
      %v5610 = vcvt.s32.f32 %v5546
      %v5611 = vcvt.s32.f32 %v5547
      %v5612 = vcvt.s32.f32 %v5548
      %v5613 = vcvt.s32.f32 %v5549
      %v5614 = vcvt.s32.f32 %v5550
      %v5615 = vcvt.s32.f32 %v5551
      %v5616 = vcvt.s32.f32 %v5552
      %v5617 = vcvt.s32.f32 %v5553
      %v5618 = vcvt.s32.f32 %v5554
      %v5619 = vcvt.s32.f32 %v5555
      %v5620 = vcvt.s32.f32 %v5556
      %v5621 = vcvt.s32.f32 %v5557
      %v5622 = vcvt.s32.f32 %v5558
      %v5623 = vcvt.s32.f32 %v5559
      %v5624 = vcvt.s32.f32 %v5560
      %v5625 = vcvt.s32.f32 %v5561
      %v5626 = vcvt.s32.f32 %v5562
      %v5627 = vcvt.s32.f32 %v5563
      %v5628 = vcvt.s32.f32 %v5564
      %v5629 = vcvt.s32.f32 %v5565
      %v5630 = vcvt.s32.f32 %v5566
      %v5631 = vcvt.s32.f32 %v5567
      %v5632 = vcvt.s32.f32 %v5568
      %v5633 = vcvt.s32.f32 %v5569
      %v5634 = vcvt.s32.f32 %v5570
      %v5635 = vcvt.s32.f32 %v5571
      %v5636 = vcvt.s32.f32 %v5572
      %v5637 = vcvt.s32.f32 %v5573
      %v5638 = vcvt.s32.f32 %v5574
      %v5639 = vcvt.s32.f32 %v5575
      %v5640 = vcvt.s32.f32 %v5576
      %v5641 = vcvt.s32.f32 %v5577
      %v5642 = vcvt.s32.f32 %v5578
      %v5643 = vcvt.s32.f32 %v5579
      %v5644 = vcvt.s32.f32 %v5580
      %v5645 = vcvt.s32.f32 %v5581
      %v5646 = vcvt.s32.f32 %v5582
      %v5647 = vcvt.s32.f32 %v5583
      %v5648 = vcvt.s32.f32 %v5584
      %v5649 = vcvt.s32.f32 %v5585
      %v5650 = vcvt.s32.f32 %v5586
      %v5651 = vadd.f32 %v5587, %v5589
      %v5652 = vadd.f32 %v5651, %v5591
      %v5653 = vadd.f32 %v5652, %v5593
      %v5654 = vadd.f32 %v5653, %v5595
      %v5655 = vadd.f32 %v5654, %v5597
      %v5656 = vadd.f32 %v5655, %v5599
      %v5657 = vadd.f32 %v5656, %v5601
      %v5658 = vadd.f32 %v5657, %v5603
      %v5659 = vadd.f32 %v5658, %v5605
      %v5660 = vadd.f32 %v5659, %v5607
      %v5661 = vadd.f32 %v5660, %v5609
      %v5662 = vadd.f32 %v5661, %v5611
      %v5663 = vadd.f32 %v5662, %v5613
      %v5664 = vadd.f32 %v5663, %v5615
      %v5665 = vadd.f32 %v5664, %v5617
      %v5666 = vadd.f32 %v5665, %v5619
      %v5667 = vadd.f32 %v5666, %v5621
      %v5668 = vadd.f32 %v5667, %v5623
      %v5669 = vadd.f32 %v5668, %v5625
      %v5670 = vadd.f32 %v5669, %v5627
      %v5671 = vadd.f32 %v5670, %v5629
      %v5672 = vadd.f32 %v5671, %v5631
      %v5673 = vadd.f32 %v5672, %v5633
      %v5674 = vadd.f32 %v5673, %v5635
      %v5675 = vadd.f32 %v5674, %v5637
      %v5676 = vadd.f32 %v5675, %v5639
      %v5677 = vadd.f32 %v5676, %v5641
      %v5678 = vadd.f32 %v5677, %v5643
      %v5679 = vadd.f32 %v5678, %v5645
      %v5680 = vadd.f32 %v5679, %v5647
      %v5681 = vadd.f32 %v5680, %v5649
      %v5682 = vrot.slane %v5681, 4
      %v5683 = vadd.f32 %v5681, %v5682
      %v5684 = vrot.slane %v5683, 2
      %v5685 = vadd.f32 %v5683, %v5684
      %v5686 = vrot.slane %v5685, 1
      %v5687 = vadd.f32 %v5685, %v5686
      %v5688 = vadd.f32 %v5588, %v5590
      %v5689 = vadd.f32 %v5688, %v5592
      %v5690 = vadd.f32 %v5689, %v5594
      %v5691 = vadd.f32 %v5690, %v5596
      %v5692 = vadd.f32 %v5691, %v5598
      %v5693 = vadd.f32 %v5692, %v5600
      %v5694 = vadd.f32 %v5693, %v5602
      %v5695 = vadd.f32 %v5694, %v5604
      %v5696 = vadd.f32 %v5695, %v5606
      %v5697 = vadd.f32 %v5696, %v5608
      %v5698 = vadd.f32 %v5697, %v5610
      %v5699 = vadd.f32 %v5698, %v5612
      %v5700 = vadd.f32 %v5699, %v5614
      %v5701 = vadd.f32 %v5700, %v5616
      %v5702 = vadd.f32 %v5701, %v5618
      %v5703 = vadd.f32 %v5702, %v5620
      %v5704 = vadd.f32 %v5703, %v5622
      %v5705 = vadd.f32 %v5704, %v5624
      %v5706 = vadd.f32 %v5705, %v5626
      %v5707 = vadd.f32 %v5706, %v5628
      %v5708 = vadd.f32 %v5707, %v5630
      %v5709 = vadd.f32 %v5708, %v5632
      %v5710 = vadd.f32 %v5709, %v5634
      %v5711 = vadd.f32 %v5710, %v5636
      %v5712 = vadd.f32 %v5711, %v5638
      %v5713 = vadd.f32 %v5712, %v5640
      %v5714 = vadd.f32 %v5713, %v5642
      %v5715 = vadd.f32 %v5714, %v5644
      %v5716 = vadd.f32 %v5715, %v5646
      %v5717 = vadd.f32 %v5716, %v5648
      %v5718 = vadd.f32 %v5717, %v5650
      %v5719 = vrot.slane %v5718, 4
      %v5720 = vadd.f32 %v5718, %v5719
      %v5721 = vrot.slane %v5720, 2
      %v5722 = vadd.f32 %v5720, %v5721
      %v5723 = vrot.slane %v5722, 1
      %v5724 = vadd.f32 %v5722, %v5723
      %vm5725 = vcmp.gt.f32.partialorder %v5687, 0.0
      %vm5726 = vcmp.gt.f32.partialorder %v5724, 0.0
      %v5727 = vsel %vm5725, 1, 0
      %v5728 = vsel %vm5726, 1, 0
      %v5729 = vcvt.s32.f32 %v5727
      %v5730 = vcvt.s32.f32 %v5728
      %v5733 = vcombine.low %v5729, %v5730
      %v5735 = vunpack.c.l.s4 1966171168
      %v5736 = vunpack.c.0.s8 %v5735
      %v5737 = vlaneseq
      %v5738 = vshrl.u32 %v5737, 7
      %v5739 = vsub.s32 %v5736, %v5738
      %v5740 = vrot.slane %v5733, %v5739
      %v5742 = vunpack.c.l.s4 1966171168
      %v5743 = vunpack.c.0.s8 %v5742
      %v5744 = vlaneseq
      %v5745 = vshrl.u32 %v5744, 7
      %v5746 = vsub.s32 %v5743, %v5745
      %v5747 = vrot.slane %v5740, %v5746
      %5749 = vst.msk [vmem:[%s407] sm:$0x3] %vm2801, %v5747
      %v5750 = vmin.f32 %v5395, %v5399
      %v5751 = vmin.f32 %v5397, %v5401
      %v5752 = vmin.f32 %v5750, %v5403
      %v5753 = vmin.f32 %v5751, %v5405
      %v5754 = vmin.f32 %v5752, %v5407
      %v5755 = vmin.f32 %v5753, %v5409
      %v5756 = vmin.f32 %v5754, %v5411
      %v5757 = vmin.f32 %v5755, %v5413
      %v5758 = vmin.f32 %v5756, %v5415
      %v5759 = vmin.f32 %v5757, %v5417
      %v5760 = vmin.f32 %v5758, %v5419
      %v5761 = vmin.f32 %v5759, %v5421
      %v5762 = vmin.f32 %v5760, %v5423
      %v5763 = vmin.f32 %v5761, %v5425
      %v5764 = vmin.f32 %v5762, %v5427
      %v5765 = vmin.f32 %v5763, %v5429
      %v5766 = vmin.f32 %v5764, %v5431
      %v5767 = vmin.f32 %v5765, %v5433
      %v5768 = vmin.f32 %v5766, %v5435
      %v5769 = vmin.f32 %v5767, %v5437
      %v5770 = vmin.f32 %v5768, %v5439
      %v5771 = vmin.f32 %v5769, %v5441
      %v5772 = vmin.f32 %v5770, %v5443
      %v5773 = vmin.f32 %v5771, %v5445
      %v5774 = vmin.f32 %v5772, %v5447
      %v5775 = vmin.f32 %v5773, %v5449
      %v5776 = vmin.f32 %v5774, %v5451
      %v5777 = vmin.f32 %v5775, %v5453
      %v5778 = vmin.f32 %v5776, %v5455
      %v5779 = vmin.f32 %v5777, %v5457
      %v5780 = vmin.f32 %v5778, %v5779
      %v5781 = vrot.slane %v5780, 4
      %v5782 = vmin.f32 %v5780, %v5781
      %v5783 = vrot.slane %v5782, 2
      %v5784 = vmin.f32 %v5782, %v5783
      %v5785 = vrot.slane %v5784, 1
      %v5786 = vmin.f32 %v5784, %v5785
      %v5787 = vmin.f32 %v5396, %v5400
      %v5788 = vmin.f32 %v5398, %v5402
      %v5789 = vmin.f32 %v5787, %v5404
      %v5790 = vmin.f32 %v5788, %v5406
      %v5791 = vmin.f32 %v5789, %v5408
      %v5792 = vmin.f32 %v5790, %v5410
      %v5793 = vmin.f32 %v5791, %v5412
      %v5794 = vmin.f32 %v5792, %v5414
      %v5795 = vmin.f32 %v5793, %v5416
      %v5796 = vmin.f32 %v5794, %v5418
      %v5797 = vmin.f32 %v5795, %v5420
      %v5798 = vmin.f32 %v5796, %v5422
      %v5799 = vmin.f32 %v5797, %v5424
      %v5800 = vmin.f32 %v5798, %v5426
      %v5801 = vmin.f32 %v5799, %v5428
      %v5802 = vmin.f32 %v5800, %v5430
      %v5803 = vmin.f32 %v5801, %v5432
      %v5804 = vmin.f32 %v5802, %v5434
      %v5805 = vmin.f32 %v5803, %v5436
      %v5806 = vmin.f32 %v5804, %v5438
      %v5807 = vmin.f32 %v5805, %v5440
      %v5808 = vmin.f32 %v5806, %v5442
      %v5809 = vmin.f32 %v5807, %v5444
      %v5810 = vmin.f32 %v5808, %v5446
      %v5811 = vmin.f32 %v5809, %v5448
      %v5812 = vmin.f32 %v5810, %v5450
      %v5813 = vmin.f32 %v5811, %v5452
      %v5814 = vmin.f32 %v5812, %v5454
      %v5815 = vmin.f32 %v5813, %v5456
      %v5816 = vmin.f32 %v5814, %v5458
      %v5817 = vmin.f32 %v5815, %v5816
      %v5818 = vrot.slane %v5817, 4
      %v5819 = vmin.f32 %v5817, %v5818
      %v5820 = vrot.slane %v5819, 2
      %v5821 = vmin.f32 %v5819, %v5820
      %v5822 = vrot.slane %v5821, 1
      %v5823 = vmin.f32 %v5821, %v5822
      %vm5824 = vcmp.eq.f32.partialorder %v5395, %v5786
      %vm5825 = vcmp.eq.f32.partialorder %v5396, %v5823
      %vm5826 = vcmp.eq.f32.partialorder %v5397, %v5786
      %vm5827 = vcmp.eq.f32.partialorder %v5398, %v5823
      %vm5828 = vcmp.eq.f32.partialorder %v5399, %v5786
      %vm5829 = vcmp.eq.f32.partialorder %v5400, %v5823
      %vm5830 = vcmp.eq.f32.partialorder %v5401, %v5786
      %vm5831 = vcmp.eq.f32.partialorder %v5402, %v5823
      %vm5832 = vcmp.eq.f32.partialorder %v5403, %v5786
      %vm5833 = vcmp.eq.f32.partialorder %v5404, %v5823
      %vm5834 = vcmp.eq.f32.partialorder %v5405, %v5786
      %vm5835 = vcmp.eq.f32.partialorder %v5406, %v5823
      %vm5836 = vcmp.eq.f32.partialorder %v5407, %v5786
      %vm5837 = vcmp.eq.f32.partialorder %v5408, %v5823
      %vm5838 = vcmp.eq.f32.partialorder %v5409, %v5786
      %vm5839 = vcmp.eq.f32.partialorder %v5410, %v5823
      %vm5840 = vcmp.eq.f32.partialorder %v5411, %v5786
      %vm5841 = vcmp.eq.f32.partialorder %v5412, %v5823
      %vm5842 = vcmp.eq.f32.partialorder %v5413, %v5786
      %vm5843 = vcmp.eq.f32.partialorder %v5414, %v5823
      %vm5844 = vcmp.eq.f32.partialorder %v5415, %v5786
      %vm5845 = vcmp.eq.f32.partialorder %v5416, %v5823
      %vm5846 = vcmp.eq.f32.partialorder %v5417, %v5786
      %vm5847 = vcmp.eq.f32.partialorder %v5418, %v5823
      %vm5848 = vcmp.eq.f32.partialorder %v5419, %v5786
      %vm5849 = vcmp.eq.f32.partialorder %v5420, %v5823
      %vm5850 = vcmp.eq.f32.partialorder %v5421, %v5786
      %vm5851 = vcmp.eq.f32.partialorder %v5422, %v5823
      %vm5852 = vcmp.eq.f32.partialorder %v5423, %v5786
      %vm5853 = vcmp.eq.f32.partialorder %v5424, %v5823
      %vm5854 = vcmp.eq.f32.partialorder %v5425, %v5786
      %vm5855 = vcmp.eq.f32.partialorder %v5426, %v5823
      %vm5856 = vcmp.eq.f32.partialorder %v5427, %v5786
      %vm5857 = vcmp.eq.f32.partialorder %v5428, %v5823
      %vm5858 = vcmp.eq.f32.partialorder %v5429, %v5786
      %vm5859 = vcmp.eq.f32.partialorder %v5430, %v5823
      %vm5860 = vcmp.eq.f32.partialorder %v5431, %v5786
      %vm5861 = vcmp.eq.f32.partialorder %v5432, %v5823
      %vm5862 = vcmp.eq.f32.partialorder %v5433, %v5786
      %vm5863 = vcmp.eq.f32.partialorder %v5434, %v5823
      %vm5864 = vcmp.eq.f32.partialorder %v5435, %v5786
      %vm5865 = vcmp.eq.f32.partialorder %v5436, %v5823
      %vm5866 = vcmp.eq.f32.partialorder %v5437, %v5786
      %vm5867 = vcmp.eq.f32.partialorder %v5438, %v5823
      %vm5868 = vcmp.eq.f32.partialorder %v5439, %v5786
      %vm5869 = vcmp.eq.f32.partialorder %v5440, %v5823
      %vm5870 = vcmp.eq.f32.partialorder %v5441, %v5786
      %vm5871 = vcmp.eq.f32.partialorder %v5442, %v5823
      %vm5872 = vcmp.eq.f32.partialorder %v5443, %v5786
      %vm5873 = vcmp.eq.f32.partialorder %v5444, %v5823
      %vm5874 = vcmp.eq.f32.partialorder %v5445, %v5786
      %vm5875 = vcmp.eq.f32.partialorder %v5446, %v5823
      %vm5876 = vcmp.eq.f32.partialorder %v5447, %v5786
      %vm5877 = vcmp.eq.f32.partialorder %v5448, %v5823
      %vm5878 = vcmp.eq.f32.partialorder %v5449, %v5786
      %vm5879 = vcmp.eq.f32.partialorder %v5450, %v5823
      %vm5880 = vcmp.eq.f32.partialorder %v5451, %v5786
      %vm5881 = vcmp.eq.f32.partialorder %v5452, %v5823
      %vm5882 = vcmp.eq.f32.partialorder %v5453, %v5786
      %vm5883 = vcmp.eq.f32.partialorder %v5454, %v5823
      %vm5884 = vcmp.eq.f32.partialorder %v5455, %v5786
      %vm5885 = vcmp.eq.f32.partialorder %v5456, %v5823
      %vm5886 = vcmp.eq.f32.partialorder %v5457, %v5786
      %vm5887 = vcmp.eq.f32.partialorder %v5458, %v5823
      %v5888 = vsel %vm5824, %v4183, 256.0
      %v5889 = vsel %vm5825, %v4183, 256.0
      %v5890 = vsel %vm5826, %v4184, 256.0
      %v5891 = vsel %vm5827, %v4184, 256.0
      %v5892 = vsel %vm5828, %v4185, 256.0
      %v5893 = vsel %vm5829, %v4185, 256.0
      %v5894 = vsel %vm5830, %v4186, 256.0
      %v5895 = vsel %vm5831, %v4186, 256.0
      %v5896 = vsel %vm5832, %v4187, 256.0
      %v5897 = vsel %vm5833, %v4187, 256.0
      %v5898 = vsel %vm5834, %v4188, 256.0
      %v5899 = vsel %vm5835, %v4188, 256.0
      %v5900 = vsel %vm5836, %v4189, 256.0
      %v5901 = vsel %vm5837, %v4189, 256.0
      %v5902 = vsel %vm5838, %v4190, 256.0
      %v5903 = vsel %vm5839, %v4190, 256.0
      %v5904 = vsel %vm5840, %v4191, 256.0
      %v5905 = vsel %vm5841, %v4191, 256.0
      %v5906 = vsel %vm5842, %v4192, 256.0
      %v5907 = vsel %vm5843, %v4192, 256.0
      %v5908 = vsel %vm5844, %v4193, 256.0
      %v5909 = vsel %vm5845, %v4193, 256.0
      %v5910 = vsel %vm5846, %v4194, 256.0
      %v5911 = vsel %vm5847, %v4194, 256.0
      %v5912 = vsel %vm5848, %v4195, 256.0
      %v5913 = vsel %vm5849, %v4195, 256.0
      %v5914 = vsel %vm5850, %v4196, 256.0
      %v5915 = vsel %vm5851, %v4196, 256.0
      %v5916 = vsel %vm5852, %v4197, 256.0
      %v5917 = vsel %vm5853, %v4197, 256.0
      %v5918 = vsel %vm5854, %v4198, 256.0
      %v5919 = vsel %vm5855, %v4198, 256.0
      %v5920 = vsel %vm5856, %v4199, 256.0
      %v5921 = vsel %vm5857, %v4199, 256.0
      %v5922 = vsel %vm5858, %v4200, 256.0
      %v5923 = vsel %vm5859, %v4200, 256.0
      %v5924 = vsel %vm5860, %v4201, 256.0
      %v5925 = vsel %vm5861, %v4201, 256.0
      %v5926 = vsel %vm5862, %v4202, 256.0
      %v5927 = vsel %vm5863, %v4202, 256.0
      %v5928 = vsel %vm5864, %v4203, 256.0
      %v5929 = vsel %vm5865, %v4203, 256.0
      %v5930 = vsel %vm5866, %v4204, 256.0
      %v5931 = vsel %vm5867, %v4204, 256.0
      %v5932 = vsel %vm5868, %v4205, 256.0
      %v5933 = vsel %vm5869, %v4205, 256.0
      %v5934 = vsel %vm5870, %v4206, 256.0
      %v5935 = vsel %vm5871, %v4206, 256.0
      %v5936 = vsel %vm5872, %v4207, 256.0
      %v5937 = vsel %vm5873, %v4207, 256.0
      %v5938 = vsel %vm5874, %v4208, 256.0
      %v5939 = vsel %vm5875, %v4208, 256.0
      %v5940 = vsel %vm5876, %v4209, 256.0
      %v5941 = vsel %vm5877, %v4209, 256.0
      %v5942 = vsel %vm5878, %v4210, 256.0
      %v5943 = vsel %vm5879, %v4210, 256.0
      %v5944 = vsel %vm5880, %v4211, 256.0
      %v5945 = vsel %vm5881, %v4211, 256.0
      %v5946 = vsel %vm5882, %v4212, 256.0
      %v5947 = vsel %vm5883, %v4212, 256.0
      %v5948 = vsel %vm5884, %v4213, 256.0
      %v5949 = vsel %vm5885, %v4213, 256.0
      %v5950 = vsel %vm5886, %v4214, 256.0
      %v5951 = vsel %vm5887, %v4214, 256.0
      %v5952 = vmin.f32 %v5888, %v5892
      %v5953 = vmin.f32 %v5890, %v5894
      %v5954 = vmin.f32 %v5952, %v5896
      %v5955 = vmin.f32 %v5953, %v5898
      %v5956 = vmin.f32 %v5954, %v5900
      %v5957 = vmin.f32 %v5955, %v5902
      %v5958 = vmin.f32 %v5956, %v5904
      %v5959 = vmin.f32 %v5957, %v5906
      %v5960 = vmin.f32 %v5958, %v5908
      %v5961 = vmin.f32 %v5959, %v5910
      %v5962 = vmin.f32 %v5960, %v5912
      %v5963 = vmin.f32 %v5961, %v5914
      %v5964 = vmin.f32 %v5962, %v5916
      %v5965 = vmin.f32 %v5963, %v5918
      %v5966 = vmin.f32 %v5964, %v5920
      %v5967 = vmin.f32 %v5965, %v5922
      %v5968 = vmin.f32 %v5966, %v5924
      %v5969 = vmin.f32 %v5967, %v5926
      %v5970 = vmin.f32 %v5968, %v5928
      %v5971 = vmin.f32 %v5969, %v5930
      %v5972 = vmin.f32 %v5970, %v5932
      %v5973 = vmin.f32 %v5971, %v5934
      %v5974 = vmin.f32 %v5972, %v5936
      %v5975 = vmin.f32 %v5973, %v5938
      %v5976 = vmin.f32 %v5974, %v5940
      %v5977 = vmin.f32 %v5975, %v5942
      %v5978 = vmin.f32 %v5976, %v5944
      %v5979 = vmin.f32 %v5977, %v5946
      %v5980 = vmin.f32 %v5978, %v5948
      %v5981 = vmin.f32 %v5979, %v5950
      %v5982 = vmin.f32 %v5980, %v5981
      %v5983 = vrot.slane %v5982, 4
      %v5984 = vmin.f32 %v5982, %v5983
      %v5985 = vrot.slane %v5984, 2
      %v5986 = vmin.f32 %v5984, %v5985
      %v5987 = vrot.slane %v5986, 1
      %v5988 = vmin.f32 %v5986, %v5987
      %v5989 = vmin.f32 %v5889, %v5893
      %v5990 = vmin.f32 %v5891, %v5895
      %v5991 = vmin.f32 %v5989, %v5897
      %v5992 = vmin.f32 %v5990, %v5899
      %v5993 = vmin.f32 %v5991, %v5901
      %v5994 = vmin.f32 %v5992, %v5903
      %v5995 = vmin.f32 %v5993, %v5905
      %v5996 = vmin.f32 %v5994, %v5907
      %v5997 = vmin.f32 %v5995, %v5909
      %v5998 = vmin.f32 %v5996, %v5911
      %v5999 = vmin.f32 %v5997, %v5913
      %v6000 = vmin.f32 %v5998, %v5915
      %v6001 = vmin.f32 %v5999, %v5917
      %v6002 = vmin.f32 %v6000, %v5919
      %v6003 = vmin.f32 %v6001, %v5921
      %v6004 = vmin.f32 %v6002, %v5923
      %v6005 = vmin.f32 %v6003, %v5925
      %v6006 = vmin.f32 %v6004, %v5927
      %v6007 = vmin.f32 %v6005, %v5929
      %v6008 = vmin.f32 %v6006, %v5931
      %v6009 = vmin.f32 %v6007, %v5933
      %v6010 = vmin.f32 %v6008, %v5935
      %v6011 = vmin.f32 %v6009, %v5937
      %v6012 = vmin.f32 %v6010, %v5939
      %v6013 = vmin.f32 %v6011, %v5941
      %v6014 = vmin.f32 %v6012, %v5943
      %v6015 = vmin.f32 %v6013, %v5945
      %v6016 = vmin.f32 %v6014, %v5947
      %v6017 = vmin.f32 %v6015, %v5949
      %v6018 = vmin.f32 %v6016, %v5951
      %v6019 = vmin.f32 %v6017, %v6018
      %v6020 = vrot.slane %v6019, 4
      %v6021 = vmin.f32 %v6019, %v6020
      %v6022 = vrot.slane %v6021, 2
      %v6023 = vmin.f32 %v6021, %v6022
      %v6024 = vrot.slane %v6023, 1
      %v6025 = vmin.f32 %v6023, %v6024
      %v6026 = vcvt.f32.s32.to.zero.pseudo %v5988
      %v6027 = vcvt.f32.s32.to.zero.pseudo %v6025
      %v6028 = vcombine.low %v6026, %v6027
      %v6030 = vunpack.c.l.s4 1966171168
      %v6031 = vunpack.c.0.s8 %v6030
      %v6032 = vlaneseq
      %v6033 = vshrl.u32 %v6032, 7
      %v6034 = vsub.s32 %v6031, %v6033
      %v6035 = vrot.slane %v6028, %v6034
      %v6037 = vunpack.c.l.s4 1966171168
      %v6038 = vunpack.c.0.s8 %v6037
      %v6039 = vlaneseq
      %v6040 = vshrl.u32 %v6039, 7
      %v6041 = vsub.s32 %v6038, %v6040
      %v6042 = vrot.slane %v6035, %v6041
      %6043 = vst.msk [vmem:[%s411] sm:$0x3] %vm2801, %v6042
      %p6044 = scmp.lt.s32.totalorder %s27, 3
      %s6045 = scalar_select %p6044, %s27, 3
      %s6046 = smul.addr %s6045, 2
      %s6047 = scalar_lea.vmem %s5, %s6046
      %p6048 = scmp.lt.s32.totalorder %s27, 3
      %s6049 = scalar_select %p6048, %s27, 3
      %s6050 = smul.addr %s6049, 2
      %s6051 = scalar_lea.vmem %s6, %s6050
      %p6052 = scmp.lt.s32.totalorder %s27, 3
      %s6053 = scalar_select %p6052, %s27, 3
      %s6054 = smul.addr %s6053, 2
      %s6055 = scalar_lea.vmem %s7, %s6054
      %p6056 = scmp.lt.s32.totalorder %s27, 3
      %s6057 = scalar_select %p6056, %s27, 3
      %s6058 = smul.addr %s6057, 2
      %s6059 = scalar_lea.vmem %s8, %s6058
      %p6060 = scmp.lt.s32.totalorder %s27, 3
      %s6061 = scalar_select %p6060, %s27, 3
      %s6062 = smul.addr %s6061, 2
      %s6063 = scalar_lea.vmem %s9, %s6062
      // Predicated region
      $region37: #{_device_forward.3} parent=35 // pred_check
        %p6064 = pneg %p149
      $region38: #{_device_forward.3} parent=35 // pred_check_branch
        %6066 = sbr.rel (%p6064) target = $region40
      $region39: #{_device_forward.3} parent=35 // pred_region
        _
      $region40: #{_device_forward.3} parent=35 // pred_fallthru
        _
      // Predicated region
      $region41: #{_device_forward.3} parent=35 // pred_check
        %p6067 = pneg %p175
      $region42: #{_device_forward.3} parent=35 // pred_check_branch
        %6069 = sbr.rel (%p6067) target = $region44
      $region43: #{_device_forward.3} parent=35 // pred_region
        _
      $region44: #{_device_forward.3} parent=35 // pred_fallthru
        _
      // Predicated region
      $region45: #{_device_forward.3} parent=35 // pred_check
        %p6070 = pneg %p201
      $region46: #{_device_forward.3} parent=35 // pred_check_branch
        %6072 = sbr.rel (%p6070) target = $region48
      $region47: #{_device_forward.3} parent=35 // pred_region
        _
      $region48: #{_device_forward.3} parent=35 // pred_fallthru
        _
      // Predicated region
      $region49: #{_device_forward.3} parent=35 // pred_check
        %p6073 = pneg %p227
      $region50: #{_device_forward.3} parent=35 // pred_check_branch
        %6075 = sbr.rel (%p6073) target = $region52
      $region51: #{_device_forward.3} parent=35 // pred_region
        _
      $region52: #{_device_forward.3} parent=35 // pred_fallthru
        _
      // Predicated region
      $region53: #{_device_forward.3} parent=35 // pred_check
        %p6076 = pneg %p253
      $region54: #{_device_forward.3} parent=35 // pred_check_branch
        %6078 = sbr.rel (%p6076) target = $region56
      $region55: #{_device_forward.3} parent=35 // pred_region
        _
      $region56: #{_device_forward.3} parent=35 // pred_fallthru
        _
    $region36: #{_device_forward.3} parent=5 // pred_fallthru
      _
    %p6079 = scmp.le.s32.totalorder 2, %s22
    // Predicated region
    $region57: #{_device_forward.3} parent=5 // pred_check
      %p6080 = pneg %p6079
    $region58: #{_device_forward.3} parent=5 // pred_check_branch
      %6082 = sbr.rel (%p6080) target = $region60
    $region59: #{_device_forward.3} parent=5 // pred_region
      %s6083 = ssub.s32 %s22, 2
      // Predicated region
      $region61: #{_device_forward.3} parent=59 // pred_check
        %p6084 = pneg %p155
      $region62: #{_device_forward.3} parent=59 // pred_check_branch
        %6086 = sbr.rel (%p6084) target = $region64
      $region63: #{_device_forward.3} parent=59 // pred_region
        %p6087 = scmp.lt.s32.totalorder %s28, 3
        %s6088 = scalar_select %p6087, %s28, 3
        %s6089 = smul.addr %s6088, 2
        %s6090 = scalar_lea.vmem %s5, %s6089
      $region64: #{_device_forward.3} parent=59 // pred_fallthru
        _
      // Predicated region
      $region65: #{_device_forward.3} parent=59 // pred_check
        %p6091 = pneg %p181
      $region66: #{_device_forward.3} parent=59 // pred_check_branch
        %6093 = sbr.rel (%p6091) target = $region68
      $region67: #{_device_forward.3} parent=59 // pred_region
        %p6094 = scmp.lt.s32.totalorder %s28, 3
        %s6095 = scalar_select %p6094, %s28, 3
        %s6096 = smul.addr %s6095, 2
        %s6097 = scalar_lea.vmem %s6, %s6096
      $region68: #{_device_forward.3} parent=59 // pred_fallthru
        _
      // Predicated region
      $region69: #{_device_forward.3} parent=59 // pred_check
        %p6098 = pneg %p207
      $region70: #{_device_forward.3} parent=59 // pred_check_branch
        %6100 = sbr.rel (%p6098) target = $region72
      $region71: #{_device_forward.3} parent=59 // pred_region
        %p6101 = scmp.lt.s32.totalorder %s28, 3
        %s6102 = scalar_select %p6101, %s28, 3
        %s6103 = smul.addr %s6102, 2
        %s6104 = scalar_lea.vmem %s7, %s6103
      $region72: #{_device_forward.3} parent=59 // pred_fallthru
        _
      // Predicated region
      $region73: #{_device_forward.3} parent=59 // pred_check
        %p6105 = pneg %p233
      $region74: #{_device_forward.3} parent=59 // pred_check_branch
        %6107 = sbr.rel (%p6105) target = $region76
      $region75: #{_device_forward.3} parent=59 // pred_region
        %p6108 = scmp.lt.s32.totalorder %s28, 3
        %s6109 = scalar_select %p6108, %s28, 3
        %s6110 = smul.addr %s6109, 2
        %s6111 = scalar_lea.vmem %s8, %s6110
      $region76: #{_device_forward.3} parent=59 // pred_fallthru
        _
      // Predicated region
      $region77: #{_device_forward.3} parent=59 // pred_check
        %p6112 = pneg %p259
      $region78: #{_device_forward.3} parent=59 // pred_check_branch
        %6114 = sbr.rel (%p6112) target = $region80
      $region79: #{_device_forward.3} parent=59 // pred_region
        %p6115 = scmp.lt.s32.totalorder %s28, 3
        %s6116 = scalar_select %p6115, %s28, 3
        %s6117 = smul.addr %s6116, 2
        %s6118 = scalar_lea.vmem %s9, %s6117
      $region80: #{_device_forward.3} parent=59 // pred_fallthru
        _
    $region60: #{_device_forward.3} parent=5 // pred_fallthru
      _
  $region6: #{_device_forward.3} parent=0 // loop_footer
    %s26 = sadd.s32 1, %s22
  $region7: #{_device_forward.3} parent=0 // loop_footer_branch
    %21 = sbr.rel target = $region3
  $region8: #{_device_forward.3} parent=0 // loop_exit
    _

</llo_original>
